<compile_context>
chip_gen: v6e
topology: v6e:2x2x1
jax: 0.10.0
libtpu: 0.0.40
codegen_flags: <defaults>
</compile_context>

<pallas_src>
import functools

import jax
import jax.numpy as jnp
from jax import lax
from jax.experimental import pallas as pl
from jax.experimental.pallas import tpu as pltpu


def _make_kernel(Tb, H, Tc, JC, alpha, num_steps):
    n_jc = H // JC

    def kernel(ip_ref, x2c_ref, tb_ref, ctx0_ref, w_cc_ref, b_cc_ref, w_ct_hbm,
               out_ref, ctx_ref, w_ct_scr, dma_sem):
        c_idx = pl.program_id(1)

        @pl.when(c_idx == 0)
        def _init():
            # Single-buffered transform weight: one DMA per batch tile into persistent
            # VMEM scratch (instead of a double-buffered pipelined input block).
            cp = pltpu.make_async_copy(w_ct_hbm, w_ct_scr, dma_sem)
            cp.start()
            cp.wait()
            # Initialize the resident context carry for this batch tile.
            ctx_ref[...] = ctx0_ref[...]

        # --- per-grid-step loop invariants (hoisted out of the time loop) ---
        w_cc = w_cc_ref[...]                                    # (H, H)  f32
        b_cc = jnp.broadcast_to(b_cc_ref[...], (Tb, H))         # (Tb, H) f32

        def ctx_update(ctx, x2c):
            c_new = jnp.maximum(
                jnp.dot(ctx, w_cc, preferred_element_type=jnp.float32) + b_cc + x2c,
                0.0)
            return ctx * (1.0 - alpha) + c_new * alpha

        def time_body(step, ctx):
            ip = ip_ref[step]       # (Tb, H) input2h(x_t)        (precomputed in wrapper)
            x2c = x2c_ref[step]     # (Tb, H) input2context(x_t)  (precomputed in wrapper)
            ti = tb_ref[step]       # (Tb, H) ip @ B_ct  -> folded b_ct contribution

            # Only the context recurrence matters for the first num_steps-1 inner
            # iterations (their transformed_input is dead in the PyTorch recurrence).
            for _ in range(num_steps - 1):
                ctx = ctx_update(ctx, x2c)

            # transformed_input uses the context *before* the final context update.
            ctx_b16 = ctx.astype(jnp.bfloat16)
            for jc in range(n_jc):                               # j-chunked transform
                j0 = jc * JC
                # j-major chunk: tm_chunk[b, jj*H + i] = tm[b, i*H + (j0+jj)]
                tm_chunk = jnp.dot(
                    ctx_b16, w_ct_scr[:, j0 * H:(j0 + JC) * H],
                    preferred_element_type=jnp.float32)          # (Tb, JC*H) f32
                for jj in range(JC):
                    # f32 VPU FMA with an implicit lane-broadcast of ip[:, j].
                    ti = ti + (tm_chunk[:, jj * H:(jj + 1) * H]
                               * ip[:, j0 + jj:j0 + jj + 1])

            ctx = ctx_update(ctx, x2c)
            out_ref[step] = ti.astype(out_ref.dtype)             # hidden_t = transformed_input
            return ctx

        ctx = ctx_ref[...]
        if Tc <= 8:                          # short chunks: static unroll (LLO visibility)
            for step in range(Tc):
                ctx = time_body(step, ctx)
        else:                                # long chunks: bounded live ranges
            ctx = lax.fori_loop(0, Tc, time_body, ctx)
        ctx_ref[...] = ctx

    return kernel


def context_transform_rnn_forward(x, params, hidden=None, num_steps=1, dt=None,
                                  time_chunk=None, batch_tile=None):
    """Pallas implementation of ContextTransformRNNNet.forward.

    x: (seq, batch, input_size) float32.
    Returns (out, rnn_output): out (seq, batch, output_size), rnn_output (seq, batch, hidden).
    Note: a caller-supplied h0 is ignored (it only feeds dead code in the PyTorch recurrence).
    """
    assert num_steps >= 1
    T, B, I = x.shape
    H = params["w_cc"].shape[0]
    HH = H * H
    alpha = 1.0 if dt is None else float(dt) / 100.0            # tau = 100

    # ---- tile selection & batch padding -----------------------------------
    if batch_tile is None:
        B_pad = max(8, ((B + 7) // 8) * 8)
        if B_pad <= 256:
            Tb = B_pad                              # keep MXU M-utilization high (nb=1 for small B)
        else:
            Tb = max(t for t in range(8, 257, 8) if B_pad % t == 0)
    else:
        Tb = batch_tile
        assert Tb % 8 == 0, "batch_tile must be a multiple of 8 sublanes"
        B_pad = ((B + Tb - 1) // Tb) * Tb
    nb = B_pad // Tb

    # VMEM budget: ~85% of physical, capped at 100 MiB (v7x only has 64 MiB/TC).
    try:
        vmem_limit = min(int(pltpu.get_tpu_info().vmem_capacity_bytes * 0.85),
                         100 * 1024 * 1024)
    except Exception:
        vmem_limit = 48 * 1024 * 1024

    if time_chunk is None:
        budget = vmem_limit // 4                    # 3 input + 1 output chunk, double-buffered
        Tc = 1
        for d in range(T, 0, -1):
            if T % d == 0 and 4 * d * Tb * H * 4 * 2 <= budget:
                Tc = d
                break
    else:
        Tc = time_chunk
    assert T % Tc == 0, "time_chunk must divide seq length"
    nc = T // Tc

    # j-chunk width: target JC*H ~ 256 lanes (aligned slices when H is a power of two).
    jc_cap = max(1, min(8, 256 // max(H, 1)))
    JC = max(d for d in range(1, jc_cap + 1) if H % d == 0)

    # ---- hoisted projections (one large MXU matmul each, done by XLA) -----
    xf = x.reshape(T * B, I).astype(jnp.float32)
    ip = (xf @ params["w_ih"] + params["b_ih"]).reshape(T, B, H)      # input2h(x)
    x2c = (xf @ params["w_ic"] + params["b_ic"]).reshape(T, B, H)     # input2context(x)
    # Folded b_ct contribution to transformed_input: tbias[t,b,i] = sum_j b_ct[i*H+j]*ip[t,b,j]
    tbias = (ip.reshape(T * B, H) @ params["b_ct"].reshape(H, H).T).reshape(T, B, H)

    # j-major permuted transform weight (bf16 only on this non-recurrent path):
    # w_ct_perm[h, j*H + i] = w_ct[h, i*H + j]
    w_ct_perm = (params["w_ct"].reshape(H, H, H).transpose(0, 2, 1)
                 .reshape(H, HH).astype(jnp.bfloat16))
    w_cc = params["w_cc"]
    b_cc = params["b_cc"].reshape(1, H)

    if hidden is None:
        ctx0 = jnp.zeros((B, H), jnp.float32)
    else:
        _h0, ctx0 = hidden          # h0 only feeds dead code in the PyTorch recurrence
        ctx0 = ctx0.astype(jnp.float32)

    if B_pad != B:
        pad3 = ((0, 0), (0, B_pad - B), (0, 0))
        ip = jnp.pad(ip, pad3)
        x2c = jnp.pad(x2c, pad3)
        tbias = jnp.pad(tbias, pad3)
        ctx0 = jnp.pad(ctx0, ((0, B_pad - B), (0, 0)))

    kernel = _make_kernel(Tb, H, Tc, JC, alpha, num_steps)

    chunk_spec = pl.BlockSpec((Tc, Tb, H), lambda b, c: (c, b, 0))
    grid_spec = pltpu.PrefetchScalarGridSpec(
        num_scalar_prefetch=0,
        grid=(nb, nc),                                # time axis innermost (resident ctx carry)
        in_specs=[
            chunk_spec,                                           # ip      (Tc, Tb, H)
            chunk_spec,                                           # x2c     (Tc, Tb, H)
            chunk_spec,                                           # tbias   (Tc, Tb, H)
            pl.BlockSpec((Tb, H), lambda b, c: (b, 0)),           # initial context
            pl.BlockSpec((H, H), lambda b, c: (0, 0)),            # context2context W
            pl.BlockSpec((1, H), lambda b, c: (0, 0)),            # context2context b
            pl.BlockSpec(memory_space=pl.ANY),                    # context2transform W (HBM)
        ],
        out_specs=[
            pl.BlockSpec((Tc, Tb, H), lambda b, c: (c, b, 0)),    # hidden states (direct layout)
            pl.BlockSpec((Tb, H), lambda b, c: (b, 0)),           # final context (resident carry)
        ],
        scratch_shapes=[
            pltpu.VMEM((H, HH), jnp.bfloat16),                    # single-buffered w_ct
            pltpu.SemaphoreType.DMA(()),
        ],
    )

    rnn_padded, _ctx_final = pl.pallas_call(
        kernel,
        out_shape=(jax.ShapeDtypeStruct((T, B_pad, H), jnp.float32),
                   jax.ShapeDtypeStruct((B_pad, H), jnp.float32)),
        grid_spec=grid_spec,
        compiler_params=pltpu.CompilerParams(
            dimension_semantics=("parallel", "arbitrary"),
            vmem_limit_bytes=vmem_limit),
    )(ip, x2c, tbias, ctx0, w_cc, b_cc, w_ct_perm)

    rnn_output = rnn_padded[:, :B, :]
    # Final fc Linear over all T*B rows at once (one large MXU-friendly matmul).
    out = rnn_output @ params["w_fc"] + params["b_fc"]
    return out, rnn_output


def reference_forward(x, params, num_steps=1, dt=None):
    """Pure-JAX reference mirroring the PyTorch module exactly (incl. dead code)."""
    T, B, I = x.shape
    H = params["w_cc"].shape[0]
    alpha = 1.0 if dt is None else float(dt) / 100.0
    hidden = jnp.zeros((B, H), jnp.float32)
    context = jnp.zeros((B, H), jnp.float32)
    outs = []
    for t in range(T):
        xi = x[t]
        for _ in range(num_steps):
            input_proj = xi @ params["w_ih"] + params["b_ih"]
            tm = (context @ params["w_ct"] + params["b_ct"]).reshape(B, H, H)
            transformed = jnp.einsum("bij,bj->bi", tm, input_proj)
            h_new = jnp.maximum(context + transformed
                                + hidden @ params["w_hh"] + params["b_hh"], 0.0)
            hidden = hidden * (1.0 - alpha) + h_new * alpha
            ctx_in = xi @ params["w_ic"] + params["b_ic"]
            c_new = jnp.maximum(context @ params["w_cc"] + params["b_cc"] + ctx_in, 0.0)
            context = context * (1.0 - alpha) + c_new * alpha
            hidden = transformed          # matches the PyTorch recurrence (overwrite)
        outs.append(hidden)
    rnn_out = jnp.stack(outs, axis=0)
    out = rnn_out @ params["w_fc"] + params["b_fc"]
    return out, rnn_out


def init_params(key, input_size, hidden_size, output_size):
    """PyTorch-Linear-style init; weights stored (in_features, out_features)."""
    def linear(k, fan_in, fan_out):
        kw, kb = jax.random.split(k)
        bound = 1.0 / (fan_in ** 0.5)
        w = jax.random.uniform(kw, (fan_in, fan_out), jnp.float32, -bound, bound)
        b = jax.random.uniform(kb, (fan_out,), jnp.float32, -bound, bound)
        return w, b

    ks = jax.random.split(key, 6)
    w_ih, b_ih = linear(ks[0], input_size, hidden_size)        # input2h
    w_hh, b_hh = linear(ks[1], hidden_size, hidden_size)       # h2h (dead code in forward)
    w_ic, b_ic = linear(ks[2], input_size, hidden_size)        # input2context
    w_cc, b_cc = linear(ks[3], hidden_size, hidden_size)       # context2context
    w_ct, b_ct = linear(ks[4], hidden_size, hidden_size ** 2)  # context2transform
    w_fc, b_fc = linear(ks[5], hidden_size, output_size)       # fc
    return {
        "w_ih": w_ih, "b_ih": b_ih,
        "w_hh": w_hh, "b_hh": b_hh,
        "w_ic": w_ic, "b_ic": b_ic,
        "w_cc": w_cc, "b_cc": b_cc,
        "w_ct": w_ct, "b_ct": b_ct,
        "w_fc": w_fc, "b_fc": b_fc,
    }


if __name__ == "__main__":
    seq, batch = 8, 4
    input_size, hidden_size, output_size = 16, 32, 8

    key = jax.random.PRNGKey(0)
    k_x, k_p = jax.random.split(key)
    x = jax.random.normal(k_x, (seq, batch, input_size), dtype=jnp.float32)
    params = init_params(k_p, input_size, hidden_size, output_size)

    fwd = jax.jit(functools.partial(context_transform_rnn_forward, num_steps=1))
    out, rnn_out = fwd(x, params)
    jax.block_until_ready((out, rnn_out))

    ref_out, ref_rnn = reference_forward(x, params, num_steps=1)
    assert out.shape == (seq, batch, output_size)
    assert rnn_out.shape == (seq, batch, hidden_size)
    # bf16 is only used on the non-recurrent ctx @ w_ct matmul; group-sum stays f32.
    assert jnp.allclose(rnn_out, ref_rnn, atol=2e-2, rtol=2e-2), "rnn_output mismatch"
    assert jnp.allclose(out, ref_out, atol=2e-2, rtol=2e-2), "output mismatch"

    # num_steps > 1 exercises the inner context-recurrence loop.
    fwd2 = jax.jit(functools.partial(context_transform_rnn_forward, num_steps=2))
    out2, rnn2 = fwd2(x, params)
    jax.block_until_ready((out2, rnn2))
    ref_out2, ref_rnn2 = reference_forward(x, params, num_steps=2)
    assert jnp.allclose(rnn2, ref_rnn2, atol=2e-2, rtol=2e-2), "rnn_output mismatch (ns=2)"
    assert jnp.allclose(out2, ref_out2, atol=2e-2, rtol=2e-2), "output mismatch (ns=2)"

    print("KERNEL_OK")
</pallas_src>

<mosaic_0001>
module attributes {stable_mosaic.version = 11 : i64} {
  func.func @kernel(%arg0: i32, %arg1: i32, %arg2: memref<8x8x32xf32, #tpu.memory_space<vmem>>, %arg3: memref<8x8x32xf32, #tpu.memory_space<vmem>>, %arg4: memref<8x8x32xf32, #tpu.memory_space<vmem>>, %arg5: memref<8x32xf32, #tpu.memory_space<vmem>>, %arg6: memref<32x32xf32, #tpu.memory_space<vmem>>, %arg7: memref<1x32xf32, #tpu.memory_space<vmem>>, %arg8: memref<32x1024xbf16, #tpu.memory_space<any>>, %arg9: memref<8x8x32xf32, #tpu.memory_space<vmem>>, %arg10: memref<8x32xf32, #tpu.memory_space<vmem>>, %arg11: memref<32x1024xbf16, #tpu.memory_space<vmem>>, %arg12: memref<!tpu.dma_semaphore, #tpu.memory_space<semaphore_mem>>) attributes {dimension_semantics = [#tpu.dimension_semantics<parallel>, #tpu.dimension_semantics<arbitrary>], iteration_bounds = array<i64: 1, 1>, scalar_prefetch = 0 : i64, scratch_operands = 2 : i64, tpu.core_type = #tpu.core_type<tc>, window_params = [{transform_indices = @transform_0, window_bounds = array<i64: 8, 8, 32>}, {transform_indices = @transform_1, window_bounds = array<i64: 8, 8, 32>}, {transform_indices = @transform_2, window_bounds = array<i64: 8, 8, 32>}, {transform_indices = @transform_3, window_bounds = array<i64: 8, 32>}, {pipeline_mode = #tpu.pipeline_mode<synchronous>, transform_indices = @transform_4, window_bounds = array<i64: 32, 32>}, {pipeline_mode = #tpu.pipeline_mode<synchronous>, transform_indices = @transform_5, window_bounds = array<i64: 1, 32>}, {}, {transform_indices = @transform_7, window_bounds = array<i64: 8, 8, 32>}, {transform_indices = @transform_8, window_bounds = array<i64: 8, 32>}]} {
    %c0_i32 = arith.constant 0 : i32
    %0 = arith.cmpi eq, %arg1, %c0_i32 : i32
    %1 = arith.extui %0 : i1 to i32
    %c0_i32_0 = arith.constant 0 : i32
    %2 = arith.cmpi ne, %1, %c0_i32_0 : i32
    scf.if %2 {
      tpu.enqueue_dma source(%arg8 : memref<32x1024xbf16, #tpu.memory_space<any>>) target(%arg11 : memref<32x1024xbf16, #tpu.memory_space<vmem>>) target_semaphore(%arg12 : memref<!tpu.dma_semaphore, #tpu.memory_space<semaphore_mem>>)
      tpu.wait_dma2 semaphore(%arg12 : memref<!tpu.dma_semaphore, #tpu.memory_space<semaphore_mem>>) src(%arg8 : memref<32x1024xbf16, #tpu.memory_space<any>>) dst(%arg11 : memref<32x1024xbf16, #tpu.memory_space<vmem>>)
      %c0_221 = arith.constant 0 : index
      %c0_222 = arith.constant 0 : index
      %1513 = vector.load %arg5[%c0_221, %c0_222] : memref<8x32xf32, #tpu.memory_space<vmem>>, vector<8x32xf32>
      %c0_223 = arith.constant 0 : index
      %c0_224 = arith.constant 0 : index
      %1514 = vector.load %arg10[%c0_223, %c0_224] : memref<8x32xf32, #tpu.memory_space<vmem>>, vector<8x32xf32>
      tpu.vector_store %arg10[%c0_223, %c0_224], %1513 {strides = array<i32>} : memref<8x32xf32, #tpu.memory_space<vmem>>, vector<8x32xf32>,
    } else {
    }
    %c0 = arith.constant 0 : index
    %c0_1 = arith.constant 0 : index
    %3 = vector.load %arg6[%c0, %c0_1] : memref<32x32xf32, #tpu.memory_space<vmem>>, vector<32x32xf32>
    %c0_2 = arith.constant 0 : index
    %c0_3 = arith.constant 0 : index
    %4 = vector.load %arg7[%c0_2, %c0_3] : memref<1x32xf32, #tpu.memory_space<vmem>>, vector<1x32xf32>
    %5 = vector.shape_cast %4 : vector<1x32xf32> to vector<1x32xf32>
    %6 = vector.broadcast %5 : vector<1x32xf32> to vector<8x32xf32>
    %c0_4 = arith.constant 0 : index
    %c0_5 = arith.constant 0 : index
    %7 = vector.load %arg10[%c0_4, %c0_5] : memref<8x32xf32, #tpu.memory_space<vmem>>, vector<8x32xf32>
    %c0_6 = arith.constant 0 : index
    %c0_7 = arith.constant 0 : index
    %c0_8 = arith.constant 0 : index
    %8 = vector.load %arg2[%c0_6, %c0_7, %c0_8] : memref<8x8x32xf32, #tpu.memory_space<vmem>>, vector<1x8x32xf32>
    %9 = vector.shape_cast %8 : vector<1x8x32xf32> to vector<8x32xf32>
    %c0_9 = arith.constant 0 : index
    %c0_10 = arith.constant 0 : index
    %c0_11 = arith.constant 0 : index
    %10 = vector.load %arg3[%c0_9, %c0_10, %c0_11] : memref<8x8x32xf32, #tpu.memory_space<vmem>>, vector<1x8x32xf32>
    %11 = vector.shape_cast %10 : vector<1x8x32xf32> to vector<8x32xf32>
    %c0_12 = arith.constant 0 : index
    %c0_13 = arith.constant 0 : index
    %c0_14 = arith.constant 0 : index
    %12 = vector.load %arg4[%c0_12, %c0_13, %c0_14] : memref<8x8x32xf32, #tpu.memory_space<vmem>>, vector<1x8x32xf32>
    %13 = vector.shape_cast %12 : vector<1x8x32xf32> to vector<8x32xf32>
    %14 = arith.truncf %7 : vector<8x32xf32> to vector<8x32xbf16>
    %c0_15 = arith.constant 0 : index
    %c0_16 = arith.constant 0 : index
    %15 = vector.load %arg11[%c0_15, %c0_16] : memref<32x1024xbf16, #tpu.memory_space<vmem>>, vector<32x256xbf16>
    %cst = arith.constant dense<0.000000e+00> : vector<8x256xf32>
    %16 = tpu.matmul %14, %15, %cst {dimension_numbers = #tpu.dot_dimension_numbers<[1], [0], [0], [1], [0, 0, 1, 1], [], []>} : vector<8x32xbf16>, vector<32x256xbf16>, vector<8x256xf32> -> vector<8x256xf32>
    %17 = vector.extract_strided_slice %16 {offsets = [0, 0], sizes = [8, 32], strides = [1, 1]} : vector<8x256xf32> to vector<8x32xf32>
    %18 = vector.extract_strided_slice %9 {offsets = [0, 0], sizes = [8, 1], strides = [1, 1]} : vector<8x32xf32> to vector<8x1xf32>
    %19 = vector.broadcast %18 : vector<8x1xf32> to vector<8x32xf32>
    %20 = arith.mulf %17, %19 : vector<8x32xf32>
    %21 = arith.addf %13, %20 : vector<8x32xf32>
    %22 = vector.extract_strided_slice %16 {offsets = [0, 32], sizes = [8, 32], strides = [1, 1]} : vector<8x256xf32> to vector<8x32xf32>
    %23 = vector.extract_strided_slice %9 {offsets = [0, 1], sizes = [8, 1], strides = [1, 1]} : vector<8x32xf32> to vector<8x1xf32>
    %24 = vector.broadcast %23 : vector<8x1xf32> to vector<8x32xf32>
    %25 = arith.mulf %22, %24 : vector<8x32xf32>
    %26 = arith.addf %21, %25 : vector<8x32xf32>
    %27 = vector.extract_strided_slice %16 {offsets = [0, 64], sizes = [8, 32], strides = [1, 1]} : vector<8x256xf32> to vector<8x32xf32>
    %28 = vector.extract_strided_slice %9 {offsets = [0, 2], sizes = [8, 1], strides = [1, 1]} : vector<8x32xf32> to vector<8x1xf32>
    %29 = vector.broadcast %28 : vector<8x1xf32> to vector<8x32xf32>
    %30 = arith.mulf %27, %29 : vector<8x32xf32>
    %31 = arith.addf %26, %30 : vector<8x32xf32>
    %32 = vector.extract_strided_slice %16 {offsets = [0, 96], sizes = [8, 32], strides = [1, 1]} : vector<8x256xf32> to vector<8x32xf32>
    %33 = vector.extract_strided_slice %9 {offsets = [0, 3], sizes = [8, 1], strides = [1, 1]} : vector<8x32xf32> to vector<8x1xf32>
    %34 = vector.broadcast %33 : vector<8x1xf32> to vector<8x32xf32>
    %35 = arith.mulf %32, %34 : vector<8x32xf32>
    %36 = arith.addf %31, %35 : vector<8x32xf32>
    %37 = vector.extract_strided_slice %16 {offsets = [0, 128], sizes = [8, 32], strides = [1, 1]} : vector<8x256xf32> to vector<8x32xf32>
    %38 = vector.extract_strided_slice %9 {offsets = [0, 4], sizes = [8, 1], strides = [1, 1]} : vector<8x32xf32> to vector<8x1xf32>
    %39 = vector.broadcast %38 : vector<8x1xf32> to vector<8x32xf32>
    %40 = arith.mulf %37, %39 : vector<8x32xf32>
    %41 = arith.addf %36, %40 : vector<8x32xf32>
    %42 = vector.extract_strided_slice %16 {offsets = [0, 160], sizes = [8, 32], strides = [1, 1]} : vector<8x256xf32> to vector<8x32xf32>
    %43 = vector.extract_strided_slice %9 {offsets = [0, 5], sizes = [8, 1], strides = [1, 1]} : vector<8x32xf32> to vector<8x1xf32>
    %44 = vector.broadcast %43 : vector<8x1xf32> to vector<8x32xf32>
    %45 = arith.mulf %42, %44 : vector<8x32xf32>
    %46 = arith.addf %41, %45 : vector<8x32xf32>
    %47 = vector.extract_strided_slice %16 {offsets = [0, 192], sizes = [8, 32], strides = [1, 1]} : vector<8x256xf32> to vector<8x32xf32>
    %48 = vector.extract_strided_slice %9 {offsets = [0, 6], sizes = [8, 1], strides = [1, 1]} : vector<8x32xf32> to vector<8x1xf32>
    %49 = vector.broadcast %48 : vector<8x1xf32> to vector<8x32xf32>
    %50 = arith.mulf %47, %49 : vector<8x32xf32>
    %51 = arith.addf %46, %50 : vector<8x32xf32>
    %52 = vector.extract_strided_slice %16 {offsets = [0, 224], sizes = [8, 32], strides = [1, 1]} : vector<8x256xf32> to vector<8x32xf32>
    %53 = vector.extract_strided_slice %9 {offsets = [0, 7], sizes = [8, 1], strides = [1, 1]} : vector<8x32xf32> to vector<8x1xf32>
    %54 = vector.broadcast %53 : vector<8x1xf32> to vector<8x32xf32>
    %55 = arith.mulf %52, %54 : vector<8x32xf32>
    %56 = arith.addf %51, %55 : vector<8x32xf32>
    %c0_17 = arith.constant 0 : index
    %c256 = arith.constant 256 : index
    %57 = vector.load %arg11[%c0_17, %c256] : memref<32x1024xbf16, #tpu.memory_space<vmem>>, vector<32x256xbf16>
    %cst_18 = arith.constant dense<0.000000e+00> : vector<8x256xf32>
    %58 = tpu.matmul %14, %57, %cst_18 {dimension_numbers = #tpu.dot_dimension_numbers<[1], [0], [0], [1], [0, 0, 1, 1], [], []>} : vector<8x32xbf16>, vector<32x256xbf16>, vector<8x256xf32> -> vector<8x256xf32>
    %59 = vector.extract_strided_slice %58 {offsets = [0, 0], sizes = [8, 32], strides = [1, 1]} : vector<8x256xf32> to vector<8x32xf32>
    %60 = vector.extract_strided_slice %9 {offsets = [0, 8], sizes = [8, 1], strides = [1, 1]} : vector<8x32xf32> to vector<8x1xf32>
    %61 = vector.broadcast %60 : vector<8x1xf32> to vector<8x32xf32>
    %62 = arith.mulf %59, %61 : vector<8x32xf32>
    %63 = arith.addf %56, %62 : vector<8x32xf32>
    %64 = vector.extract_strided_slice %58 {offsets = [0, 32], sizes = [8, 32], strides = [1, 1]} : vector<8x256xf32> to vector<8x32xf32>
    %65 = vector.extract_strided_slice %9 {offsets = [0, 9], sizes = [8, 1], strides = [1, 1]} : vector<8x32xf32> to vector<8x1xf32>
    %66 = vector.broadcast %65 : vector<8x1xf32> to vector<8x32xf32>
    %67 = arith.mulf %64, %66 : vector<8x32xf32>
    %68 = arith.addf %63, %67 : vector<8x32xf32>
    %69 = vector.extract_strided_slice %58 {offsets = [0, 64], sizes = [8, 32], strides = [1, 1]} : vector<8x256xf32> to vector<8x32xf32>
    %70 = vector.extract_strided_slice %9 {offsets = [0, 10], sizes = [8, 1], strides = [1, 1]} : vector<8x32xf32> to vector<8x1xf32>
    %71 = vector.broadcast %70 : vector<8x1xf32> to vector<8x32xf32>
    %72 = arith.mulf %69, %71 : vector<8x32xf32>
    %73 = arith.addf %68, %72 : vector<8x32xf32>
    %74 = vector.extract_strided_slice %58 {offsets = [0, 96], sizes = [8, 32], strides = [1, 1]} : vector<8x256xf32> to vector<8x32xf32>
    %75 = vector.extract_strided_slice %9 {offsets = [0, 11], sizes = [8, 1], strides = [1, 1]} : vector<8x32xf32> to vector<8x1xf32>
    %76 = vector.broadcast %75 : vector<8x1xf32> to vector<8x32xf32>
    %77 = arith.mulf %74, %76 : vector<8x32xf32>
    %78 = arith.addf %73, %77 : vector<8x32xf32>
    %79 = vector.extract_strided_slice %58 {offsets = [0, 128], sizes = [8, 32], strides = [1, 1]} : vector<8x256xf32> to vector<8x32xf32>
    %80 = vector.extract_strided_slice %9 {offsets = [0, 12], sizes = [8, 1], strides = [1, 1]} : vector<8x32xf32> to vector<8x1xf32>
    %81 = vector.broadcast %80 : vector<8x1xf32> to vector<8x32xf32>
    %82 = arith.mulf %79, %81 : vector<8x32xf32>
    %83 = arith.addf %78, %82 : vector<8x32xf32>
    %84 = vector.extract_strided_slice %58 {offsets = [0, 160], sizes = [8, 32], strides = [1, 1]} : vector<8x256xf32> to vector<8x32xf32>
    %85 = vector.extract_strided_slice %9 {offsets = [0, 13], sizes = [8, 1], strides = [1, 1]} : vector<8x32xf32> to vector<8x1xf32>
    %86 = vector.broadcast %85 : vector<8x1xf32> to vector<8x32xf32>
    %87 = arith.mulf %84, %86 : vector<8x32xf32>
    %88 = arith.addf %83, %87 : vector<8x32xf32>
    %89 = vector.extract_strided_slice %58 {offsets = [0, 192], sizes = [8, 32], strides = [1, 1]} : vector<8x256xf32> to vector<8x32xf32>
    %90 = vector.extract_strided_slice %9 {offsets = [0, 14], sizes = [8, 1], strides = [1, 1]} : vector<8x32xf32> to vector<8x1xf32>
    %91 = vector.broadcast %90 : vector<8x1xf32> to vector<8x32xf32>
    %92 = arith.mulf %89, %91 : vector<8x32xf32>
    %93 = arith.addf %88, %92 : vector<8x32xf32>
    %94 = vector.extract_strided_slice %58 {offsets = [0, 224], sizes = [8, 32], strides = [1, 1]} : vector<8x256xf32> to vector<8x32xf32>
    %95 = vector.extract_strided_slice %9 {offsets = [0, 15], sizes = [8, 1], strides = [1, 1]} : vector<8x32xf32> to vector<8x1xf32>
    %96 = vector.broadcast %95 : vector<8x1xf32> to vector<8x32xf32>
    %97 = arith.mulf %94, %96 : vector<8x32xf32>
    %98 = arith.addf %93, %97 : vector<8x32xf32>
    %c0_19 = arith.constant 0 : index
    %c512 = arith.constant 512 : index
    %99 = vector.load %arg11[%c0_19, %c512] : memref<32x1024xbf16, #tpu.memory_space<vmem>>, vector<32x256xbf16>
    %cst_20 = arith.constant dense<0.000000e+00> : vector<8x256xf32>
    %100 = tpu.matmul %14, %99, %cst_20 {dimension_numbers = #tpu.dot_dimension_numbers<[1], [0], [0], [1], [0, 0, 1, 1], [], []>} : vector<8x32xbf16>, vector<32x256xbf16>, vector<8x256xf32> -> vector<8x256xf32>
    %101 = vector.extract_strided_slice %100 {offsets = [0, 0], sizes = [8, 32], strides = [1, 1]} : vector<8x256xf32> to vector<8x32xf32>
    %102 = vector.extract_strided_slice %9 {offsets = [0, 16], sizes = [8, 1], strides = [1, 1]} : vector<8x32xf32> to vector<8x1xf32>
    %103 = vector.broadcast %102 : vector<8x1xf32> to vector<8x32xf32>
    %104 = arith.mulf %101, %103 : vector<8x32xf32>
    %105 = arith.addf %98, %104 : vector<8x32xf32>
    %106 = vector.extract_strided_slice %100 {offsets = [0, 32], sizes = [8, 32], strides = [1, 1]} : vector<8x256xf32> to vector<8x32xf32>
    %107 = vector.extract_strided_slice %9 {offsets = [0, 17], sizes = [8, 1], strides = [1, 1]} : vector<8x32xf32> to vector<8x1xf32>
    %108 = vector.broadcast %107 : vector<8x1xf32> to vector<8x32xf32>
    %109 = arith.mulf %106, %108 : vector<8x32xf32>
    %110 = arith.addf %105, %109 : vector<8x32xf32>
    %111 = vector.extract_strided_slice %100 {offsets = [0, 64], sizes = [8, 32], strides = [1, 1]} : vector<8x256xf32> to vector<8x32xf32>
    %112 = vector.extract_strided_slice %9 {offsets = [0, 18], sizes = [8, 1], strides = [1, 1]} : vector<8x32xf32> to vector<8x1xf32>
    %113 = vector.broadcast %112 : vector<8x1xf32> to vector<8x32xf32>
    %114 = arith.mulf %111, %113 : vector<8x32xf32>
    %115 = arith.addf %110, %114 : vector<8x32xf32>
    %116 = vector.extract_strided_slice %100 {offsets = [0, 96], sizes = [8, 32], strides = [1, 1]} : vector<8x256xf32> to vector<8x32xf32>
    %117 = vector.extract_strided_slice %9 {offsets = [0, 19], sizes = [8, 1], strides = [1, 1]} : vector<8x32xf32> to vector<8x1xf32>
    %118 = vector.broadcast %117 : vector<8x1xf32> to vector<8x32xf32>
    %119 = arith.mulf %116, %118 : vector<8x32xf32>
    %120 = arith.addf %115, %119 : vector<8x32xf32>
    %121 = vector.extract_strided_slice %100 {offsets = [0, 128], sizes = [8, 32], strides = [1, 1]} : vector<8x256xf32> to vector<8x32xf32>
    %122 = vector.extract_strided_slice %9 {offsets = [0, 20], sizes = [8, 1], strides = [1, 1]} : vector<8x32xf32> to vector<8x1xf32>
    %123 = vector.broadcast %122 : vector<8x1xf32> to vector<8x32xf32>
    %124 = arith.mulf %121, %123 : vector<8x32xf32>
    %125 = arith.addf %120, %124 : vector<8x32xf32>
    %126 = vector.extract_strided_slice %100 {offsets = [0, 160], sizes = [8, 32], strides = [1, 1]} : vector<8x256xf32> to vector<8x32xf32>
    %127 = vector.extract_strided_slice %9 {offsets = [0, 21], sizes = [8, 1], strides = [1, 1]} : vector<8x32xf32> to vector<8x1xf32>
    %128 = vector.broadcast %127 : vector<8x1xf32> to vector<8x32xf32>
    %129 = arith.mulf %126, %128 : vector<8x32xf32>
    %130 = arith.addf %125, %129 : vector<8x32xf32>
    %131 = vector.extract_strided_slice %100 {offsets = [0, 192], sizes = [8, 32], strides = [1, 1]} : vector<8x256xf32> to vector<8x32xf32>
    %132 = vector.extract_strided_slice %9 {offsets = [0, 22], sizes = [8, 1], strides = [1, 1]} : vector<8x32xf32> to vector<8x1xf32>
    %133 = vector.broadcast %132 : vector<8x1xf32> to vector<8x32xf32>
    %134 = arith.mulf %131, %133 : vector<8x32xf32>
    %135 = arith.addf %130, %134 : vector<8x32xf32>
    %136 = vector.extract_strided_slice %100 {offsets = [0, 224], sizes = [8, 32], strides = [1, 1]} : vector<8x256xf32> to vector<8x32xf32>
    %137 = vector.extract_strided_slice %9 {offsets = [0, 23], sizes = [8, 1], strides = [1, 1]} : vector<8x32xf32> to vector<8x1xf32>
    %138 = vector.broadcast %137 : vector<8x1xf32> to vector<8x32xf32>
    %139 = arith.mulf %136, %138 : vector<8x32xf32>
    %140 = arith.addf %135, %139 : vector<8x32xf32>
    %c0_21 = arith.constant 0 : index
    %c768 = arith.constant 768 : index
    %141 = vector.load %arg11[%c0_21, %c768] : memref<32x1024xbf16, #tpu.memory_space<vmem>>, vector<32x256xbf16>
    %cst_22 = arith.constant dense<0.000000e+00> : vector<8x256xf32>
    %142 = tpu.matmul %14, %141, %cst_22 {dimension_numbers = #tpu.dot_dimension_numbers<[1], [0], [0], [1], [0, 0, 1, 1], [], []>} : vector<8x32xbf16>, vector<32x256xbf16>, vector<8x256xf32> -> vector<8x256xf32>
    %143 = vector.extract_strided_slice %142 {offsets = [0, 0], sizes = [8, 32], strides = [1, 1]} : vector<8x256xf32> to vector<8x32xf32>
    %144 = vector.extract_strided_slice %9 {offsets = [0, 24], sizes = [8, 1], strides = [1, 1]} : vector<8x32xf32> to vector<8x1xf32>
    %145 = vector.broadcast %144 : vector<8x1xf32> to vector<8x32xf32>
    %146 = arith.mulf %143, %145 : vector<8x32xf32>
    %147 = arith.addf %140, %146 : vector<8x32xf32>
    %148 = vector.extract_strided_slice %142 {offsets = [0, 32], sizes = [8, 32], strides = [1, 1]} : vector<8x256xf32> to vector<8x32xf32>
    %149 = vector.extract_strided_slice %9 {offsets = [0, 25], sizes = [8, 1], strides = [1, 1]} : vector<8x32xf32> to vector<8x1xf32>
    %150 = vector.broadcast %149 : vector<8x1xf32> to vector<8x32xf32>
    %151 = arith.mulf %148, %150 : vector<8x32xf32>
    %152 = arith.addf %147, %151 : vector<8x32xf32>
    %153 = vector.extract_strided_slice %142 {offsets = [0, 64], sizes = [8, 32], strides = [1, 1]} : vector<8x256xf32> to vector<8x32xf32>
    %154 = vector.extract_strided_slice %9 {offsets = [0, 26], sizes = [8, 1], strides = [1, 1]} : vector<8x32xf32> to vector<8x1xf32>
    %155 = vector.broadcast %154 : vector<8x1xf32> to vector<8x32xf32>
    %156 = arith.mulf %153, %155 : vector<8x32xf32>
    %157 = arith.addf %152, %156 : vector<8x32xf32>
    %158 = vector.extract_strided_slice %142 {offsets = [0, 96], sizes = [8, 32], strides = [1, 1]} : vector<8x256xf32> to vector<8x32xf32>
    %159 = vector.extract_strided_slice %9 {offsets = [0, 27], sizes = [8, 1], strides = [1, 1]} : vector<8x32xf32> to vector<8x1xf32>
    %160 = vector.broadcast %159 : vector<8x1xf32> to vector<8x32xf32>
    %161 = arith.mulf %158, %160 : vector<8x32xf32>
    %162 = arith.addf %157, %161 : vector<8x32xf32>
    %163 = vector.extract_strided_slice %142 {offsets = [0, 128], sizes = [8, 32], strides = [1, 1]} : vector<8x256xf32> to vector<8x32xf32>
    %164 = vector.extract_strided_slice %9 {offsets = [0, 28], sizes = [8, 1], strides = [1, 1]} : vector<8x32xf32> to vector<8x1xf32>
    %165 = vector.broadcast %164 : vector<8x1xf32> to vector<8x32xf32>
    %166 = arith.mulf %163, %165 : vector<8x32xf32>
    %167 = arith.addf %162, %166 : vector<8x32xf32>
    %168 = vector.extract_strided_slice %142 {offsets = [0, 160], sizes = [8, 32], strides = [1, 1]} : vector<8x256xf32> to vector<8x32xf32>
    %169 = vector.extract_strided_slice %9 {offsets = [0, 29], sizes = [8, 1], strides = [1, 1]} : vector<8x32xf32> to vector<8x1xf32>
    %170 = vector.broadcast %169 : vector<8x1xf32> to vector<8x32xf32>
    %171 = arith.mulf %168, %170 : vector<8x32xf32>
    %172 = arith.addf %167, %171 : vector<8x32xf32>
    %173 = vector.extract_strided_slice %142 {offsets = [0, 192], sizes = [8, 32], strides = [1, 1]} : vector<8x256xf32> to vector<8x32xf32>
    %174 = vector.extract_strided_slice %9 {offsets = [0, 30], sizes = [8, 1], strides = [1, 1]} : vector<8x32xf32> to vector<8x1xf32>
    %175 = vector.broadcast %174 : vector<8x1xf32> to vector<8x32xf32>
    %176 = arith.mulf %173, %175 : vector<8x32xf32>
    %177 = arith.addf %172, %176 : vector<8x32xf32>
    %178 = vector.extract_strided_slice %142 {offsets = [0, 224], sizes = [8, 32], strides = [1, 1]} : vector<8x256xf32> to vector<8x32xf32>
    %179 = vector.extract_strided_slice %9 {offsets = [0, 31], sizes = [8, 1], strides = [1, 1]} : vector<8x32xf32> to vector<8x1xf32>
    %180 = vector.broadcast %179 : vector<8x1xf32> to vector<8x32xf32>
    %181 = arith.mulf %178, %180 : vector<8x32xf32>
    %182 = arith.addf %177, %181 : vector<8x32xf32>
    %cst_23 = arith.constant dense<0.000000e+00> : vector<8x32xf32>
    %183 = tpu.matmul %7, %3, %cst_23 {dimension_numbers = #tpu.dot_dimension_numbers<[1], [0], [0], [1], [0, 0, 1, 1], [], []>} : vector<8x32xf32>, vector<32x32xf32>, vector<8x32xf32> -> vector<8x32xf32>
    %184 = arith.addf %183, %6 : vector<8x32xf32>
    %185 = arith.addf %184, %11 : vector<8x32xf32>
    %cst_24 = arith.constant 0.000000e+00 : f32
    %186 = vector.broadcast %cst_24 : f32 to vector<8x32xf32>
    %187 = arith.maximumf %185, %186 : vector<8x32xf32>
    %cst_25 = arith.constant 0.000000e+00 : f32
    %188 = vector.broadcast %cst_25 : f32 to vector<8x32xf32>
    %189 = arith.mulf %7, %188 : vector<8x32xf32>
    %cst_26 = arith.constant 1.000000e+00 : f32
    %190 = vector.broadcast %cst_26 : f32 to vector<8x32xf32>
    %191 = arith.mulf %187, %190 : vector<8x32xf32>
    %192 = arith.addf %189, %191 : vector<8x32xf32>
    %c0_27 = arith.constant 0 : index
    %c0_28 = arith.constant 0 : index
    %c0_29 = arith.constant 0 : index
    %193 = vector.load %arg9[%c0_27, %c0_28, %c0_29] : memref<8x8x32xf32, #tpu.memory_space<vmem>>, vector<1x8x32xf32>
    %194 = vector.shape_cast %193 : vector<1x8x32xf32> to vector<8x32xf32>
    %195 = vector.shape_cast %182 : vector<8x32xf32> to vector<1x8x32xf32>
    tpu.vector_store %arg9[%c0_27, %c0_28, %c0_29], %195 {strides = array<i32>} : memref<8x8x32xf32, #tpu.memory_space<vmem>>, vector<1x8x32xf32>,
    %c1 = arith.constant 1 : index
    %c0_30 = arith.constant 0 : index
    %c0_31 = arith.constant 0 : index
    %196 = vector.load %arg2[%c1, %c0_30, %c0_31] : memref<8x8x32xf32, #tpu.memory_space<vmem>>, vector<1x8x32xf32>
    %197 = vector.shape_cast %196 : vector<1x8x32xf32> to vector<8x32xf32>
    %c1_32 = arith.constant 1 : index
    %c0_33 = arith.constant 0 : index
    %c0_34 = arith.constant 0 : index
    %198 = vector.load %arg3[%c1_32, %c0_33, %c0_34] : memref<8x8x32xf32, #tpu.memory_space<vmem>>, vector<1x8x32xf32>
    %199 = vector.shape_cast %198 : vector<1x8x32xf32> to vector<8x32xf32>
    %c1_35 = arith.constant 1 : index
    %c0_36 = arith.constant 0 : index
    %c0_37 = arith.constant 0 : index
    %200 = vector.load %arg4[%c1_35, %c0_36, %c0_37] : memref<8x8x32xf32, #tpu.memory_space<vmem>>, vector<1x8x32xf32>
    %201 = vector.shape_cast %200 : vector<1x8x32xf32> to vector<8x32xf32>
    %202 = arith.truncf %192 : vector<8x32xf32> to vector<8x32xbf16>
    %c0_38 = arith.constant 0 : index
    %c0_39 = arith.constant 0 : index
    %203 = vector.load %arg11[%c0_38, %c0_39] : memref<32x1024xbf16, #tpu.memory_space<vmem>>, vector<32x256xbf16>
    %cst_40 = arith.constant dense<0.000000e+00> : vector<8x256xf32>
    %204 = tpu.matmul %202, %203, %cst_40 {dimension_numbers = #tpu.dot_dimension_numbers<[1], [0], [0], [1], [0, 0, 1, 1], [], []>} : vector<8x32xbf16>, vector<32x256xbf16>, vector<8x256xf32> -> vector<8x256xf32>
    %205 = vector.extract_strided_slice %204 {offsets = [0, 0], sizes = [8, 32], strides = [1, 1]} : vector<8x256xf32> to vector<8x32xf32>
    %206 = vector.extract_strided_slice %197 {offsets = [0, 0], sizes = [8, 1], strides = [1, 1]} : vector<8x32xf32> to vector<8x1xf32>
    %207 = vector.broadcast %206 : vector<8x1xf32> to vector<8x32xf32>
    %208 = arith.mulf %205, %207 : vector<8x32xf32>
    %209 = arith.addf %201, %208 : vector<8x32xf32>
    %210 = vector.extract_strided_slice %204 {offsets = [0, 32], sizes = [8, 32], strides = [1, 1]} : vector<8x256xf32> to vector<8x32xf32>
    %211 = vector.extract_strided_slice %197 {offsets = [0, 1], sizes = [8, 1], strides = [1, 1]} : vector<8x32xf32> to vector<8x1xf32>
    %212 = vector.broadcast %211 : vector<8x1xf32> to vector<8x32xf32>
    %213 = arith.mulf %210, %212 : vector<8x32xf32>
    %214 = arith.addf %209, %213 : vector<8x32xf32>
    %215 = vector.extract_strided_slice %204 {offsets = [0, 64], sizes = [8, 32], strides = [1, 1]} : vector<8x256xf32> to vector<8x32xf32>
    %216 = vector.extract_strided_slice %197 {offsets = [0, 2], sizes = [8, 1], strides = [1, 1]} : vector<8x32xf32> to vector<8x1xf32>
    %217 = vector.broadcast %216 : vector<8x1xf32> to vector<8x32xf32>
    %218 = arith.mulf %215, %217 : vector<8x32xf32>
    %219 = arith.addf %214, %218 : vector<8x32xf32>
    %220 = vector.extract_strided_slice %204 {offsets = [0, 96], sizes = [8, 32], strides = [1, 1]} : vector<8x256xf32> to vector<8x32xf32>
    %221 = vector.extract_strided_slice %197 {offsets = [0, 3], sizes = [8, 1], strides = [1, 1]} : vector<8x32xf32> to vector<8x1xf32>
    %222 = vector.broadcast %221 : vector<8x1xf32> to vector<8x32xf32>
    %223 = arith.mulf %220, %222 : vector<8x32xf32>
    %224 = arith.addf %219, %223 : vector<8x32xf32>
    %225 = vector.extract_strided_slice %204 {offsets = [0, 128], sizes = [8, 32], strides = [1, 1]} : vector<8x256xf32> to vector<8x32xf32>
    %226 = vector.extract_strided_slice %197 {offsets = [0, 4], sizes = [8, 1], strides = [1, 1]} : vector<8x32xf32> to vector<8x1xf32>
    %227 = vector.broadcast %226 : vector<8x1xf32> to vector<8x32xf32>
    %228 = arith.mulf %225, %227 : vector<8x32xf32>
    %229 = arith.addf %224, %228 : vector<8x32xf32>
    %230 = vector.extract_strided_slice %204 {offsets = [0, 160], sizes = [8, 32], strides = [1, 1]} : vector<8x256xf32> to vector<8x32xf32>
    %231 = vector.extract_strided_slice %197 {offsets = [0, 5], sizes = [8, 1], strides = [1, 1]} : vector<8x32xf32> to vector<8x1xf32>
    %232 = vector.broadcast %231 : vector<8x1xf32> to vector<8x32xf32>
    %233 = arith.mulf %230, %232 : vector<8x32xf32>
    %234 = arith.addf %229, %233 : vector<8x32xf32>
    %235 = vector.extract_strided_slice %204 {offsets = [0, 192], sizes = [8, 32], strides = [1, 1]} : vector<8x256xf32> to vector<8x32xf32>
    %236 = vector.extract_strided_slice %197 {offsets = [0, 6], sizes = [8, 1], strides = [1, 1]} : vector<8x32xf32> to vector<8x1xf32>
    %237 = vector.broadcast %236 : vector<8x1xf32> to vector<8x32xf32>
    %238 = arith.mulf %235, %237 : vector<8x32xf32>
    %239 = arith.addf %234, %238 : vector<8x32xf32>
    %240 = vector.extract_strided_slice %204 {offsets = [0, 224], sizes = [8, 32], strides = [1, 1]} : vector<8x256xf32> to vector<8x32xf32>
    %241 = vector.extract_strided_slice %197 {offsets = [0, 7], sizes = [8, 1], strides = [1, 1]} : vector<8x32xf32> to vector<8x1xf32>
    %242 = vector.broadcast %241 : vector<8x1xf32> to vector<8x32xf32>
    %243 = arith.mulf %240, %242 : vector<8x32xf32>
    %244 = arith.addf %239, %243 : vector<8x32xf32>
    %c0_41 = arith.constant 0 : index
    %c256_42 = arith.constant 256 : index
    %245 = vector.load %arg11[%c0_41, %c256_42] : memref<32x1024xbf16, #tpu.memory_space<vmem>>, vector<32x256xbf16>
    %cst_43 = arith.constant dense<0.000000e+00> : vector<8x256xf32>
    %246 = tpu.matmul %202, %245, %cst_43 {dimension_numbers = #tpu.dot_dimension_numbers<[1], [0], [0], [1], [0, 0, 1, 1], [], []>} : vector<8x32xbf16>, vector<32x256xbf16>, vector<8x256xf32> -> vector<8x256xf32>
    %247 = vector.extract_strided_slice %246 {offsets = [0, 0], sizes = [8, 32], strides = [1, 1]} : vector<8x256xf32> to vector<8x32xf32>
    %248 = vector.extract_strided_slice %197 {offsets = [0, 8], sizes = [8, 1], strides = [1, 1]} : vector<8x32xf32> to vector<8x1xf32>
    %249 = vector.broadcast %248 : vector<8x1xf32> to vector<8x32xf32>
    %250 = arith.mulf %247, %249 : vector<8x32xf32>
    %251 = arith.addf %244, %250 : vector<8x32xf32>
    %252 = vector.extract_strided_slice %246 {offsets = [0, 32], sizes = [8, 32], strides = [1, 1]} : vector<8x256xf32> to vector<8x32xf32>
    %253 = vector.extract_strided_slice %197 {offsets = [0, 9], sizes = [8, 1], strides = [1, 1]} : vector<8x32xf32> to vector<8x1xf32>
    %254 = vector.broadcast %253 : vector<8x1xf32> to vector<8x32xf32>
    %255 = arith.mulf %252, %254 : vector<8x32xf32>
    %256 = arith.addf %251, %255 : vector<8x32xf32>
    %257 = vector.extract_strided_slice %246 {offsets = [0, 64], sizes = [8, 32], strides = [1, 1]} : vector<8x256xf32> to vector<8x32xf32>
    %258 = vector.extract_strided_slice %197 {offsets = [0, 10], sizes = [8, 1], strides = [1, 1]} : vector<8x32xf32> to vector<8x1xf32>
    %259 = vector.broadcast %258 : vector<8x1xf32> to vector<8x32xf32>
    %260 = arith.mulf %257, %259 : vector<8x32xf32>
    %261 = arith.addf %256, %260 : vector<8x32xf32>
    %262 = vector.extract_strided_slice %246 {offsets = [0, 96], sizes = [8, 32], strides = [1, 1]} : vector<8x256xf32> to vector<8x32xf32>
    %263 = vector.extract_strided_slice %197 {offsets = [0, 11], sizes = [8, 1], strides = [1, 1]} : vector<8x32xf32> to vector<8x1xf32>
    %264 = vector.broadcast %263 : vector<8x1xf32> to vector<8x32xf32>
    %265 = arith.mulf %262, %264 : vector<8x32xf32>
    %266 = arith.addf %261, %265 : vector<8x32xf32>
    %267 = vector.extract_strided_slice %246 {offsets = [0, 128], sizes = [8, 32], strides = [1, 1]} : vector<8x256xf32> to vector<8x32xf32>
    %268 = vector.extract_strided_slice %197 {offsets = [0, 12], sizes = [8, 1], strides = [1, 1]} : vector<8x32xf32> to vector<8x1xf32>
    %269 = vector.broadcast %268 : vector<8x1xf32> to vector<8x32xf32>
    %270 = arith.mulf %267, %269 : vector<8x32xf32>
    %271 = arith.addf %266, %270 : vector<8x32xf32>
    %272 = vector.extract_strided_slice %246 {offsets = [0, 160], sizes = [8, 32], strides = [1, 1]} : vector<8x256xf32> to vector<8x32xf32>
    %273 = vector.extract_strided_slice %197 {offsets = [0, 13], sizes = [8, 1], strides = [1, 1]} : vector<8x32xf32> to vector<8x1xf32>
    %274 = vector.broadcast %273 : vector<8x1xf32> to vector<8x32xf32>
    %275 = arith.mulf %272, %274 : vector<8x32xf32>
    %276 = arith.addf %271, %275 : vector<8x32xf32>
    %277 = vector.extract_strided_slice %246 {offsets = [0, 192], sizes = [8, 32], strides = [1, 1]} : vector<8x256xf32> to vector<8x32xf32>
    %278 = vector.extract_strided_slice %197 {offsets = [0, 14], sizes = [8, 1], strides = [1, 1]} : vector<8x32xf32> to vector<8x1xf32>
    %279 = vector.broadcast %278 : vector<8x1xf32> to vector<8x32xf32>
    %280 = arith.mulf %277, %279 : vector<8x32xf32>
    %281 = arith.addf %276, %280 : vector<8x32xf32>
    %282 = vector.extract_strided_slice %246 {offsets = [0, 224], sizes = [8, 32], strides = [1, 1]} : vector<8x256xf32> to vector<8x32xf32>
    %283 = vector.extract_strided_slice %197 {offsets = [0, 15], sizes = [8, 1], strides = [1, 1]} : vector<8x32xf32> to vector<8x1xf32>
    %284 = vector.broadcast %283 : vector<8x1xf32> to vector<8x32xf32>
    %285 = arith.mulf %282, %284 : vector<8x32xf32>
    %286 = arith.addf %281, %285 : vector<8x32xf32>
    %c0_44 = arith.constant 0 : index
    %c512_45 = arith.constant 512 : index
    %287 = vector.load %arg11[%c0_44, %c512_45] : memref<32x1024xbf16, #tpu.memory_space<vmem>>, vector<32x256xbf16>
    %cst_46 = arith.constant dense<0.000000e+00> : vector<8x256xf32>
    %288 = tpu.matmul %202, %287, %cst_46 {dimension_numbers = #tpu.dot_dimension_numbers<[1], [0], [0], [1], [0, 0, 1, 1], [], []>} : vector<8x32xbf16>, vector<32x256xbf16>, vector<8x256xf32> -> vector<8x256xf32>
    %289 = vector.extract_strided_slice %288 {offsets = [0, 0], sizes = [8, 32], strides = [1, 1]} : vector<8x256xf32> to vector<8x32xf32>
    %290 = vector.extract_strided_slice %197 {offsets = [0, 16], sizes = [8, 1], strides = [1, 1]} : vector<8x32xf32> to vector<8x1xf32>
    %291 = vector.broadcast %290 : vector<8x1xf32> to vector<8x32xf32>
    %292 = arith.mulf %289, %291 : vector<8x32xf32>
    %293 = arith.addf %286, %292 : vector<8x32xf32>
    %294 = vector.extract_strided_slice %288 {offsets = [0, 32], sizes = [8, 32], strides = [1, 1]} : vector<8x256xf32> to vector<8x32xf32>
    %295 = vector.extract_strided_slice %197 {offsets = [0, 17], sizes = [8, 1], strides = [1, 1]} : vector<8x32xf32> to vector<8x1xf32>
    %296 = vector.broadcast %295 : vector<8x1xf32> to vector<8x32xf32>
    %297 = arith.mulf %294, %296 : vector<8x32xf32>
    %298 = arith.addf %293, %297 : vector<8x32xf32>
    %299 = vector.extract_strided_slice %288 {offsets = [0, 64], sizes = [8, 32], strides = [1, 1]} : vector<8x256xf32> to vector<8x32xf32>
    %300 = vector.extract_strided_slice %197 {offsets = [0, 18], sizes = [8, 1], strides = [1, 1]} : vector<8x32xf32> to vector<8x1xf32>
    %301 = vector.broadcast %300 : vector<8x1xf32> to vector<8x32xf32>
    %302 = arith.mulf %299, %301 : vector<8x32xf32>
    %303 = arith.addf %298, %302 : vector<8x32xf32>
    %304 = vector.extract_strided_slice %288 {offsets = [0, 96], sizes = [8, 32], strides = [1, 1]} : vector<8x256xf32> to vector<8x32xf32>
    %305 = vector.extract_strided_slice %197 {offsets = [0, 19], sizes = [8, 1], strides = [1, 1]} : vector<8x32xf32> to vector<8x1xf32>
    %306 = vector.broadcast %305 : vector<8x1xf32> to vector<8x32xf32>
    %307 = arith.mulf %304, %306 : vector<8x32xf32>
    %308 = arith.addf %303, %307 : vector<8x32xf32>
    %309 = vector.extract_strided_slice %288 {offsets = [0, 128], sizes = [8, 32], strides = [1, 1]} : vector<8x256xf32> to vector<8x32xf32>
    %310 = vector.extract_strided_slice %197 {offsets = [0, 20], sizes = [8, 1], strides = [1, 1]} : vector<8x32xf32> to vector<8x1xf32>
    %311 = vector.broadcast %310 : vector<8x1xf32> to vector<8x32xf32>
    %312 = arith.mulf %309, %311 : vector<8x32xf32>
    %313 = arith.addf %308, %312 : vector<8x32xf32>
    %314 = vector.extract_strided_slice %288 {offsets = [0, 160], sizes = [8, 32], strides = [1, 1]} : vector<8x256xf32> to vector<8x32xf32>
    %315 = vector.extract_strided_slice %197 {offsets = [0, 21], sizes = [8, 1], strides = [1, 1]} : vector<8x32xf32> to vector<8x1xf32>
    %316 = vector.broadcast %315 : vector<8x1xf32> to vector<8x32xf32>
    %317 = arith.mulf %314, %316 : vector<8x32xf32>
    %318 = arith.addf %313, %317 : vector<8x32xf32>
    %319 = vector.extract_strided_slice %288 {offsets = [0, 192], sizes = [8, 32], strides = [1, 1]} : vector<8x256xf32> to vector<8x32xf32>
    %320 = vector.extract_strided_slice %197 {offsets = [0, 22], sizes = [8, 1], strides = [1, 1]} : vector<8x32xf32> to vector<8x1xf32>
    %321 = vector.broadcast %320 : vector<8x1xf32> to vector<8x32xf32>
    %322 = arith.mulf %319, %321 : vector<8x32xf32>
    %323 = arith.addf %318, %322 : vector<8x32xf32>
    %324 = vector.extract_strided_slice %288 {offsets = [0, 224], sizes = [8, 32], strides = [1, 1]} : vector<8x256xf32> to vector<8x32xf32>
    %325 = vector.extract_strided_slice %197 {offsets = [0, 23], sizes = [8, 1], strides = [1, 1]} : vector<8x32xf32> to vector<8x1xf32>
    %326 = vector.broadcast %325 : vector<8x1xf32> to vector<8x32xf32>
    %327 = arith.mulf %324, %326 : vector<8x32xf32>
    %328 = arith.addf %323, %327 : vector<8x32xf32>
    %c0_47 = arith.constant 0 : index
    %c768_48 = arith.constant 768 : index
    %329 = vector.load %arg11[%c0_47, %c768_48] : memref<32x1024xbf16, #tpu.memory_space<vmem>>, vector<32x256xbf16>
    %cst_49 = arith.constant dense<0.000000e+00> : vector<8x256xf32>
    %330 = tpu.matmul %202, %329, %cst_49 {dimension_numbers = #tpu.dot_dimension_numbers<[1], [0], [0], [1], [0, 0, 1, 1], [], []>} : vector<8x32xbf16>, vector<32x256xbf16>, vector<8x256xf32> -> vector<8x256xf32>
    %331 = vector.extract_strided_slice %330 {offsets = [0, 0], sizes = [8, 32], strides = [1, 1]} : vector<8x256xf32> to vector<8x32xf32>
    %332 = vector.extract_strided_slice %197 {offsets = [0, 24], sizes = [8, 1], strides = [1, 1]} : vector<8x32xf32> to vector<8x1xf32>
    %333 = vector.broadcast %332 : vector<8x1xf32> to vector<8x32xf32>
    %334 = arith.mulf %331, %333 : vector<8x32xf32>
    %335 = arith.addf %328, %334 : vector<8x32xf32>
    %336 = vector.extract_strided_slice %330 {offsets = [0, 32], sizes = [8, 32], strides = [1, 1]} : vector<8x256xf32> to vector<8x32xf32>
    %337 = vector.extract_strided_slice %197 {offsets = [0, 25], sizes = [8, 1], strides = [1, 1]} : vector<8x32xf32> to vector<8x1xf32>
    %338 = vector.broadcast %337 : vector<8x1xf32> to vector<8x32xf32>
    %339 = arith.mulf %336, %338 : vector<8x32xf32>
    %340 = arith.addf %335, %339 : vector<8x32xf32>
    %341 = vector.extract_strided_slice %330 {offsets = [0, 64], sizes = [8, 32], strides = [1, 1]} : vector<8x256xf32> to vector<8x32xf32>
    %342 = vector.extract_strided_slice %197 {offsets = [0, 26], sizes = [8, 1], strides = [1, 1]} : vector<8x32xf32> to vector<8x1xf32>
    %343 = vector.broadcast %342 : vector<8x1xf32> to vector<8x32xf32>
    %344 = arith.mulf %341, %343 : vector<8x32xf32>
    %345 = arith.addf %340, %344 : vector<8x32xf32>
    %346 = vector.extract_strided_slice %330 {offsets = [0, 96], sizes = [8, 32], strides = [1, 1]} : vector<8x256xf32> to vector<8x32xf32>
    %347 = vector.extract_strided_slice %197 {offsets = [0, 27], sizes = [8, 1], strides = [1, 1]} : vector<8x32xf32> to vector<8x1xf32>
    %348 = vector.broadcast %347 : vector<8x1xf32> to vector<8x32xf32>
    %349 = arith.mulf %346, %348 : vector<8x32xf32>
    %350 = arith.addf %345, %349 : vector<8x32xf32>
    %351 = vector.extract_strided_slice %330 {offsets = [0, 128], sizes = [8, 32], strides = [1, 1]} : vector<8x256xf32> to vector<8x32xf32>
    %352 = vector.extract_strided_slice %197 {offsets = [0, 28], sizes = [8, 1], strides = [1, 1]} : vector<8x32xf32> to vector<8x1xf32>
    %353 = vector.broadcast %352 : vector<8x1xf32> to vector<8x32xf32>
    %354 = arith.mulf %351, %353 : vector<8x32xf32>
    %355 = arith.addf %350, %354 : vector<8x32xf32>
    %356 = vector.extract_strided_slice %330 {offsets = [0, 160], sizes = [8, 32], strides = [1, 1]} : vector<8x256xf32> to vector<8x32xf32>
    %357 = vector.extract_strided_slice %197 {offsets = [0, 29], sizes = [8, 1], strides = [1, 1]} : vector<8x32xf32> to vector<8x1xf32>
    %358 = vector.broadcast %357 : vector<8x1xf32> to vector<8x32xf32>
    %359 = arith.mulf %356, %358 : vector<8x32xf32>
    %360 = arith.addf %355, %359 : vector<8x32xf32>
    %361 = vector.extract_strided_slice %330 {offsets = [0, 192], sizes = [8, 32], strides = [1, 1]} : vector<8x256xf32> to vector<8x32xf32>
    %362 = vector.extract_strided_slice %197 {offsets = [0, 30], sizes = [8, 1], strides = [1, 1]} : vector<8x32xf32> to vector<8x1xf32>
    %363 = vector.broadcast %362 : vector<8x1xf32> to vector<8x32xf32>
    %364 = arith.mulf %361, %363 : vector<8x32xf32>
    %365 = arith.addf %360, %364 : vector<8x32xf32>
    %366 = vector.extract_strided_slice %330 {offsets = [0, 224], sizes = [8, 32], strides = [1, 1]} : vector<8x256xf32> to vector<8x32xf32>
    %367 = vector.extract_strided_slice %197 {offsets = [0, 31], sizes = [8, 1], strides = [1, 1]} : vector<8x32xf32> to vector<8x1xf32>
    %368 = vector.broadcast %367 : vector<8x1xf32> to vector<8x32xf32>
    %369 = arith.mulf %366, %368 : vector<8x32xf32>
    %370 = arith.addf %365, %369 : vector<8x32xf32>
    %cst_50 = arith.constant dense<0.000000e+00> : vector<8x32xf32>
    %371 = tpu.matmul %192, %3, %cst_50 {dimension_numbers = #tpu.dot_dimension_numbers<[1], [0], [0], [1], [0, 0, 1, 1], [], []>} : vector<8x32xf32>, vector<32x32xf32>, vector<8x32xf32> -> vector<8x32xf32>
    %372 = arith.addf %371, %6 : vector<8x32xf32>
    %373 = arith.addf %372, %199 : vector<8x32xf32>
    %cst_51 = arith.constant 0.000000e+00 : f32
    %374 = vector.broadcast %cst_51 : f32 to vector<8x32xf32>
    %375 = arith.maximumf %373, %374 : vector<8x32xf32>
    %cst_52 = arith.constant 0.000000e+00 : f32
    %376 = vector.broadcast %cst_52 : f32 to vector<8x32xf32>
    %377 = arith.mulf %192, %376 : vector<8x32xf32>
    %cst_53 = arith.constant 1.000000e+00 : f32
    %378 = vector.broadcast %cst_53 : f32 to vector<8x32xf32>
    %379 = arith.mulf %375, %378 : vector<8x32xf32>
    %380 = arith.addf %377, %379 : vector<8x32xf32>
    %c1_54 = arith.constant 1 : index
    %c0_55 = arith.constant 0 : index
    %c0_56 = arith.constant 0 : index
    %381 = vector.load %arg9[%c1_54, %c0_55, %c0_56] : memref<8x8x32xf32, #tpu.memory_space<vmem>>, vector<1x8x32xf32>
    %382 = vector.shape_cast %381 : vector<1x8x32xf32> to vector<8x32xf32>
    %383 = vector.shape_cast %370 : vector<8x32xf32> to vector<1x8x32xf32>
    tpu.vector_store %arg9[%c1_54, %c0_55, %c0_56], %383 {strides = array<i32>} : memref<8x8x32xf32, #tpu.memory_space<vmem>>, vector<1x8x32xf32>,
    %c2 = arith.constant 2 : index
    %c0_57 = arith.constant 0 : index
    %c0_58 = arith.constant 0 : index
    %384 = vector.load %arg2[%c2, %c0_57, %c0_58] : memref<8x8x32xf32, #tpu.memory_space<vmem>>, vector<1x8x32xf32>
    %385 = vector.shape_cast %384 : vector<1x8x32xf32> to vector<8x32xf32>
    %c2_59 = arith.constant 2 : index
    %c0_60 = arith.constant 0 : index
    %c0_61 = arith.constant 0 : index
    %386 = vector.load %arg3[%c2_59, %c0_60, %c0_61] : memref<8x8x32xf32, #tpu.memory_space<vmem>>, vector<1x8x32xf32>
    %387 = vector.shape_cast %386 : vector<1x8x32xf32> to vector<8x32xf32>
    %c2_62 = arith.constant 2 : index
    %c0_63 = arith.constant 0 : index
    %c0_64 = arith.constant 0 : index
    %388 = vector.load %arg4[%c2_62, %c0_63, %c0_64] : memref<8x8x32xf32, #tpu.memory_space<vmem>>, vector<1x8x32xf32>
    %389 = vector.shape_cast %388 : vector<1x8x32xf32> to vector<8x32xf32>
    %390 = arith.truncf %380 : vector<8x32xf32> to vector<8x32xbf16>
    %c0_65 = arith.constant 0 : index
    %c0_66 = arith.constant 0 : index
    %391 = vector.load %arg11[%c0_65, %c0_66] : memref<32x1024xbf16, #tpu.memory_space<vmem>>, vector<32x256xbf16>
    %cst_67 = arith.constant dense<0.000000e+00> : vector<8x256xf32>
    %392 = tpu.matmul %390, %391, %cst_67 {dimension_numbers = #tpu.dot_dimension_numbers<[1], [0], [0], [1], [0, 0, 1, 1], [], []>} : vector<8x32xbf16>, vector<32x256xbf16>, vector<8x256xf32> -> vector<8x256xf32>
    %393 = vector.extract_strided_slice %392 {offsets = [0, 0], sizes = [8, 32], strides = [1, 1]} : vector<8x256xf32> to vector<8x32xf32>
    %394 = vector.extract_strided_slice %385 {offsets = [0, 0], sizes = [8, 1], strides = [1, 1]} : vector<8x32xf32> to vector<8x1xf32>
    %395 = vector.broadcast %394 : vector<8x1xf32> to vector<8x32xf32>
    %396 = arith.mulf %393, %395 : vector<8x32xf32>
    %397 = arith.addf %389, %396 : vector<8x32xf32>
    %398 = vector.extract_strided_slice %392 {offsets = [0, 32], sizes = [8, 32], strides = [1, 1]} : vector<8x256xf32> to vector<8x32xf32>
    %399 = vector.extract_strided_slice %385 {offsets = [0, 1], sizes = [8, 1], strides = [1, 1]} : vector<8x32xf32> to vector<8x1xf32>
    %400 = vector.broadcast %399 : vector<8x1xf32> to vector<8x32xf32>
    %401 = arith.mulf %398, %400 : vector<8x32xf32>
    %402 = arith.addf %397, %401 : vector<8x32xf32>
    %403 = vector.extract_strided_slice %392 {offsets = [0, 64], sizes = [8, 32], strides = [1, 1]} : vector<8x256xf32> to vector<8x32xf32>
    %404 = vector.extract_strided_slice %385 {offsets = [0, 2], sizes = [8, 1], strides = [1, 1]} : vector<8x32xf32> to vector<8x1xf32>
    %405 = vector.broadcast %404 : vector<8x1xf32> to vector<8x32xf32>
    %406 = arith.mulf %403, %405 : vector<8x32xf32>
    %407 = arith.addf %402, %406 : vector<8x32xf32>
    %408 = vector.extract_strided_slice %392 {offsets = [0, 96], sizes = [8, 32], strides = [1, 1]} : vector<8x256xf32> to vector<8x32xf32>
    %409 = vector.extract_strided_slice %385 {offsets = [0, 3], sizes = [8, 1], strides = [1, 1]} : vector<8x32xf32> to vector<8x1xf32>
    %410 = vector.broadcast %409 : vector<8x1xf32> to vector<8x32xf32>
    %411 = arith.mulf %408, %410 : vector<8x32xf32>
    %412 = arith.addf %407, %411 : vector<8x32xf32>
    %413 = vector.extract_strided_slice %392 {offsets = [0, 128], sizes = [8, 32], strides = [1, 1]} : vector<8x256xf32> to vector<8x32xf32>
    %414 = vector.extract_strided_slice %385 {offsets = [0, 4], sizes = [8, 1], strides = [1, 1]} : vector<8x32xf32> to vector<8x1xf32>
    %415 = vector.broadcast %414 : vector<8x1xf32> to vector<8x32xf32>
    %416 = arith.mulf %413, %415 : vector<8x32xf32>
    %417 = arith.addf %412, %416 : vector<8x32xf32>
    %418 = vector.extract_strided_slice %392 {offsets = [0, 160], sizes = [8, 32], strides = [1, 1]} : vector<8x256xf32> to vector<8x32xf32>
    %419 = vector.extract_strided_slice %385 {offsets = [0, 5], sizes = [8, 1], strides = [1, 1]} : vector<8x32xf32> to vector<8x1xf32>
    %420 = vector.broadcast %419 : vector<8x1xf32> to vector<8x32xf32>
    %421 = arith.mulf %418, %420 : vector<8x32xf32>
    %422 = arith.addf %417, %421 : vector<8x32xf32>
    %423 = vector.extract_strided_slice %392 {offsets = [0, 192], sizes = [8, 32], strides = [1, 1]} : vector<8x256xf32> to vector<8x32xf32>
    %424 = vector.extract_strided_slice %385 {offsets = [0, 6], sizes = [8, 1], strides = [1, 1]} : vector<8x32xf32> to vector<8x1xf32>
    %425 = vector.broadcast %424 : vector<8x1xf32> to vector<8x32xf32>
    %426 = arith.mulf %423, %425 : vector<8x32xf32>
    %427 = arith.addf %422, %426 : vector<8x32xf32>
    %428 = vector.extract_strided_slice %392 {offsets = [0, 224], sizes = [8, 32], strides = [1, 1]} : vector<8x256xf32> to vector<8x32xf32>
    %429 = vector.extract_strided_slice %385 {offsets = [0, 7], sizes = [8, 1], strides = [1, 1]} : vector<8x32xf32> to vector<8x1xf32>
    %430 = vector.broadcast %429 : vector<8x1xf32> to vector<8x32xf32>
    %431 = arith.mulf %428, %430 : vector<8x32xf32>
    %432 = arith.addf %427, %431 : vector<8x32xf32>
    %c0_68 = arith.constant 0 : index
    %c256_69 = arith.constant 256 : index
    %433 = vector.load %arg11[%c0_68, %c256_69] : memref<32x1024xbf16, #tpu.memory_space<vmem>>, vector<32x256xbf16>
    %cst_70 = arith.constant dense<0.000000e+00> : vector<8x256xf32>
    %434 = tpu.matmul %390, %433, %cst_70 {dimension_numbers = #tpu.dot_dimension_numbers<[1], [0], [0], [1], [0, 0, 1, 1], [], []>} : vector<8x32xbf16>, vector<32x256xbf16>, vector<8x256xf32> -> vector<8x256xf32>
    %435 = vector.extract_strided_slice %434 {offsets = [0, 0], sizes = [8, 32], strides = [1, 1]} : vector<8x256xf32> to vector<8x32xf32>
    %436 = vector.extract_strided_slice %385 {offsets = [0, 8], sizes = [8, 1], strides = [1, 1]} : vector<8x32xf32> to vector<8x1xf32>
    %437 = vector.broadcast %436 : vector<8x1xf32> to vector<8x32xf32>
    %438 = arith.mulf %435, %437 : vector<8x32xf32>
    %439 = arith.addf %432, %438 : vector<8x32xf32>
    %440 = vector.extract_strided_slice %434 {offsets = [0, 32], sizes = [8, 32], strides = [1, 1]} : vector<8x256xf32> to vector<8x32xf32>
    %441 = vector.extract_strided_slice %385 {offsets = [0, 9], sizes = [8, 1], strides = [1, 1]} : vector<8x32xf32> to vector<8x1xf32>
    %442 = vector.broadcast %441 : vector<8x1xf32> to vector<8x32xf32>
    %443 = arith.mulf %440, %442 : vector<8x32xf32>
    %444 = arith.addf %439, %443 : vector<8x32xf32>
    %445 = vector.extract_strided_slice %434 {offsets = [0, 64], sizes = [8, 32], strides = [1, 1]} : vector<8x256xf32> to vector<8x32xf32>
    %446 = vector.extract_strided_slice %385 {offsets = [0, 10], sizes = [8, 1], strides = [1, 1]} : vector<8x32xf32> to vector<8x1xf32>
    %447 = vector.broadcast %446 : vector<8x1xf32> to vector<8x32xf32>
    %448 = arith.mulf %445, %447 : vector<8x32xf32>
    %449 = arith.addf %444, %448 : vector<8x32xf32>
    %450 = vector.extract_strided_slice %434 {offsets = [0, 96], sizes = [8, 32], strides = [1, 1]} : vector<8x256xf32> to vector<8x32xf32>
    %451 = vector.extract_strided_slice %385 {offsets = [0, 11], sizes = [8, 1], strides = [1, 1]} : vector<8x32xf32> to vector<8x1xf32>
    %452 = vector.broadcast %451 : vector<8x1xf32> to vector<8x32xf32>
    %453 = arith.mulf %450, %452 : vector<8x32xf32>
    %454 = arith.addf %449, %453 : vector<8x32xf32>
    %455 = vector.extract_strided_slice %434 {offsets = [0, 128], sizes = [8, 32], strides = [1, 1]} : vector<8x256xf32> to vector<8x32xf32>
    %456 = vector.extract_strided_slice %385 {offsets = [0, 12], sizes = [8, 1], strides = [1, 1]} : vector<8x32xf32> to vector<8x1xf32>
    %457 = vector.broadcast %456 : vector<8x1xf32> to vector<8x32xf32>
    %458 = arith.mulf %455, %457 : vector<8x32xf32>
    %459 = arith.addf %454, %458 : vector<8x32xf32>
    %460 = vector.extract_strided_slice %434 {offsets = [0, 160], sizes = [8, 32], strides = [1, 1]} : vector<8x256xf32> to vector<8x32xf32>
    %461 = vector.extract_strided_slice %385 {offsets = [0, 13], sizes = [8, 1], strides = [1, 1]} : vector<8x32xf32> to vector<8x1xf32>
    %462 = vector.broadcast %461 : vector<8x1xf32> to vector<8x32xf32>
    %463 = arith.mulf %460, %462 : vector<8x32xf32>
    %464 = arith.addf %459, %463 : vector<8x32xf32>
    %465 = vector.extract_strided_slice %434 {offsets = [0, 192], sizes = [8, 32], strides = [1, 1]} : vector<8x256xf32> to vector<8x32xf32>
    %466 = vector.extract_strided_slice %385 {offsets = [0, 14], sizes = [8, 1], strides = [1, 1]} : vector<8x32xf32> to vector<8x1xf32>
    %467 = vector.broadcast %466 : vector<8x1xf32> to vector<8x32xf32>
    %468 = arith.mulf %465, %467 : vector<8x32xf32>
    %469 = arith.addf %464, %468 : vector<8x32xf32>
    %470 = vector.extract_strided_slice %434 {offsets = [0, 224], sizes = [8, 32], strides = [1, 1]} : vector<8x256xf32> to vector<8x32xf32>
    %471 = vector.extract_strided_slice %385 {offsets = [0, 15], sizes = [8, 1], strides = [1, 1]} : vector<8x32xf32> to vector<8x1xf32>
    %472 = vector.broadcast %471 : vector<8x1xf32> to vector<8x32xf32>
    %473 = arith.mulf %470, %472 : vector<8x32xf32>
    %474 = arith.addf %469, %473 : vector<8x32xf32>
    %c0_71 = arith.constant 0 : index
    %c512_72 = arith.constant 512 : index
    %475 = vector.load %arg11[%c0_71, %c512_72] : memref<32x1024xbf16, #tpu.memory_space<vmem>>, vector<32x256xbf16>
    %cst_73 = arith.constant dense<0.000000e+00> : vector<8x256xf32>
    %476 = tpu.matmul %390, %475, %cst_73 {dimension_numbers = #tpu.dot_dimension_numbers<[1], [0], [0], [1], [0, 0, 1, 1], [], []>} : vector<8x32xbf16>, vector<32x256xbf16>, vector<8x256xf32> -> vector<8x256xf32>
    %477 = vector.extract_strided_slice %476 {offsets = [0, 0], sizes = [8, 32], strides = [1, 1]} : vector<8x256xf32> to vector<8x32xf32>
    %478 = vector.extract_strided_slice %385 {offsets = [0, 16], sizes = [8, 1], strides = [1, 1]} : vector<8x32xf32> to vector<8x1xf32>
    %479 = vector.broadcast %478 : vector<8x1xf32> to vector<8x32xf32>
    %480 = arith.mulf %477, %479 : vector<8x32xf32>
    %481 = arith.addf %474, %480 : vector<8x32xf32>
    %482 = vector.extract_strided_slice %476 {offsets = [0, 32], sizes = [8, 32], strides = [1, 1]} : vector<8x256xf32> to vector<8x32xf32>
    %483 = vector.extract_strided_slice %385 {offsets = [0, 17], sizes = [8, 1], strides = [1, 1]} : vector<8x32xf32> to vector<8x1xf32>
    %484 = vector.broadcast %483 : vector<8x1xf32> to vector<8x32xf32>
    %485 = arith.mulf %482, %484 : vector<8x32xf32>
    %486 = arith.addf %481, %485 : vector<8x32xf32>
    %487 = vector.extract_strided_slice %476 {offsets = [0, 64], sizes = [8, 32], strides = [1, 1]} : vector<8x256xf32> to vector<8x32xf32>
    %488 = vector.extract_strided_slice %385 {offsets = [0, 18], sizes = [8, 1], strides = [1, 1]} : vector<8x32xf32> to vector<8x1xf32>
    %489 = vector.broadcast %488 : vector<8x1xf32> to vector<8x32xf32>
    %490 = arith.mulf %487, %489 : vector<8x32xf32>
    %491 = arith.addf %486, %490 : vector<8x32xf32>
    %492 = vector.extract_strided_slice %476 {offsets = [0, 96], sizes = [8, 32], strides = [1, 1]} : vector<8x256xf32> to vector<8x32xf32>
    %493 = vector.extract_strided_slice %385 {offsets = [0, 19], sizes = [8, 1], strides = [1, 1]} : vector<8x32xf32> to vector<8x1xf32>
    %494 = vector.broadcast %493 : vector<8x1xf32> to vector<8x32xf32>
    %495 = arith.mulf %492, %494 : vector<8x32xf32>
    %496 = arith.addf %491, %495 : vector<8x32xf32>
    %497 = vector.extract_strided_slice %476 {offsets = [0, 128], sizes = [8, 32], strides = [1, 1]} : vector<8x256xf32> to vector<8x32xf32>
    %498 = vector.extract_strided_slice %385 {offsets = [0, 20], sizes = [8, 1], strides = [1, 1]} : vector<8x32xf32> to vector<8x1xf32>
    %499 = vector.broadcast %498 : vector<8x1xf32> to vector<8x32xf32>
    %500 = arith.mulf %497, %499 : vector<8x32xf32>
    %501 = arith.addf %496, %500 : vector<8x32xf32>
    %502 = vector.extract_strided_slice %476 {offsets = [0, 160], sizes = [8, 32], strides = [1, 1]} : vector<8x256xf32> to vector<8x32xf32>
    %503 = vector.extract_strided_slice %385 {offsets = [0, 21], sizes = [8, 1], strides = [1, 1]} : vector<8x32xf32> to vector<8x1xf32>
    %504 = vector.broadcast %503 : vector<8x1xf32> to vector<8x32xf32>
    %505 = arith.mulf %502, %504 : vector<8x32xf32>
    %506 = arith.addf %501, %505 : vector<8x32xf32>
    %507 = vector.extract_strided_slice %476 {offsets = [0, 192], sizes = [8, 32], strides = [1, 1]} : vector<8x256xf32> to vector<8x32xf32>
    %508 = vector.extract_strided_slice %385 {offsets = [0, 22], sizes = [8, 1], strides = [1, 1]} : vector<8x32xf32> to vector<8x1xf32>
    %509 = vector.broadcast %508 : vector<8x1xf32> to vector<8x32xf32>
    %510 = arith.mulf %507, %509 : vector<8x32xf32>
    %511 = arith.addf %506, %510 : vector<8x32xf32>
    %512 = vector.extract_strided_slice %476 {offsets = [0, 224], sizes = [8, 32], strides = [1, 1]} : vector<8x256xf32> to vector<8x32xf32>
    %513 = vector.extract_strided_slice %385 {offsets = [0, 23], sizes = [8, 1], strides = [1, 1]} : vector<8x32xf32> to vector<8x1xf32>
    %514 = vector.broadcast %513 : vector<8x1xf32> to vector<8x32xf32>
    %515 = arith.mulf %512, %514 : vector<8x32xf32>
    %516 = arith.addf %511, %515 : vector<8x32xf32>
    %c0_74 = arith.constant 0 : index
    %c768_75 = arith.constant 768 : index
    %517 = vector.load %arg11[%c0_74, %c768_75] : memref<32x1024xbf16, #tpu.memory_space<vmem>>, vector<32x256xbf16>
    %cst_76 = arith.constant dense<0.000000e+00> : vector<8x256xf32>
    %518 = tpu.matmul %390, %517, %cst_76 {dimension_numbers = #tpu.dot_dimension_numbers<[1], [0], [0], [1], [0, 0, 1, 1], [], []>} : vector<8x32xbf16>, vector<32x256xbf16>, vector<8x256xf32> -> vector<8x256xf32>
    %519 = vector.extract_strided_slice %518 {offsets = [0, 0], sizes = [8, 32], strides = [1, 1]} : vector<8x256xf32> to vector<8x32xf32>
    %520 = vector.extract_strided_slice %385 {offsets = [0, 24], sizes = [8, 1], strides = [1, 1]} : vector<8x32xf32> to vector<8x1xf32>
    %521 = vector.broadcast %520 : vector<8x1xf32> to vector<8x32xf32>
    %522 = arith.mulf %519, %521 : vector<8x32xf32>
    %523 = arith.addf %516, %522 : vector<8x32xf32>
    %524 = vector.extract_strided_slice %518 {offsets = [0, 32], sizes = [8, 32], strides = [1, 1]} : vector<8x256xf32> to vector<8x32xf32>
    %525 = vector.extract_strided_slice %385 {offsets = [0, 25], sizes = [8, 1], strides = [1, 1]} : vector<8x32xf32> to vector<8x1xf32>
    %526 = vector.broadcast %525 : vector<8x1xf32> to vector<8x32xf32>
    %527 = arith.mulf %524, %526 : vector<8x32xf32>
    %528 = arith.addf %523, %527 : vector<8x32xf32>
    %529 = vector.extract_strided_slice %518 {offsets = [0, 64], sizes = [8, 32], strides = [1, 1]} : vector<8x256xf32> to vector<8x32xf32>
    %530 = vector.extract_strided_slice %385 {offsets = [0, 26], sizes = [8, 1], strides = [1, 1]} : vector<8x32xf32> to vector<8x1xf32>
    %531 = vector.broadcast %530 : vector<8x1xf32> to vector<8x32xf32>
    %532 = arith.mulf %529, %531 : vector<8x32xf32>
    %533 = arith.addf %528, %532 : vector<8x32xf32>
    %534 = vector.extract_strided_slice %518 {offsets = [0, 96], sizes = [8, 32], strides = [1, 1]} : vector<8x256xf32> to vector<8x32xf32>
    %535 = vector.extract_strided_slice %385 {offsets = [0, 27], sizes = [8, 1], strides = [1, 1]} : vector<8x32xf32> to vector<8x1xf32>
    %536 = vector.broadcast %535 : vector<8x1xf32> to vector<8x32xf32>
    %537 = arith.mulf %534, %536 : vector<8x32xf32>
    %538 = arith.addf %533, %537 : vector<8x32xf32>
    %539 = vector.extract_strided_slice %518 {offsets = [0, 128], sizes = [8, 32], strides = [1, 1]} : vector<8x256xf32> to vector<8x32xf32>
    %540 = vector.extract_strided_slice %385 {offsets = [0, 28], sizes = [8, 1], strides = [1, 1]} : vector<8x32xf32> to vector<8x1xf32>
    %541 = vector.broadcast %540 : vector<8x1xf32> to vector<8x32xf32>
    %542 = arith.mulf %539, %541 : vector<8x32xf32>
    %543 = arith.addf %538, %542 : vector<8x32xf32>
    %544 = vector.extract_strided_slice %518 {offsets = [0, 160], sizes = [8, 32], strides = [1, 1]} : vector<8x256xf32> to vector<8x32xf32>
    %545 = vector.extract_strided_slice %385 {offsets = [0, 29], sizes = [8, 1], strides = [1, 1]} : vector<8x32xf32> to vector<8x1xf32>
    %546 = vector.broadcast %545 : vector<8x1xf32> to vector<8x32xf32>
    %547 = arith.mulf %544, %546 : vector<8x32xf32>
    %548 = arith.addf %543, %547 : vector<8x32xf32>
    %549 = vector.extract_strided_slice %518 {offsets = [0, 192], sizes = [8, 32], strides = [1, 1]} : vector<8x256xf32> to vector<8x32xf32>
    %550 = vector.extract_strided_slice %385 {offsets = [0, 30], sizes = [8, 1], strides = [1, 1]} : vector<8x32xf32> to vector<8x1xf32>
    %551 = vector.broadcast %550 : vector<8x1xf32> to vector<8x32xf32>
    %552 = arith.mulf %549, %551 : vector<8x32xf32>
    %553 = arith.addf %548, %552 : vector<8x32xf32>
    %554 = vector.extract_strided_slice %518 {offsets = [0, 224], sizes = [8, 32], strides = [1, 1]} : vector<8x256xf32> to vector<8x32xf32>
    %555 = vector.extract_strided_slice %385 {offsets = [0, 31], sizes = [8, 1], strides = [1, 1]} : vector<8x32xf32> to vector<8x1xf32>
    %556 = vector.broadcast %555 : vector<8x1xf32> to vector<8x32xf32>
    %557 = arith.mulf %554, %556 : vector<8x32xf32>
    %558 = arith.addf %553, %557 : vector<8x32xf32>
    %cst_77 = arith.constant dense<0.000000e+00> : vector<8x32xf32>
    %559 = tpu.matmul %380, %3, %cst_77 {dimension_numbers = #tpu.dot_dimension_numbers<[1], [0], [0], [1], [0, 0, 1, 1], [], []>} : vector<8x32xf32>, vector<32x32xf32>, vector<8x32xf32> -> vector<8x32xf32>
    %560 = arith.addf %559, %6 : vector<8x32xf32>
    %561 = arith.addf %560, %387 : vector<8x32xf32>
    %cst_78 = arith.constant 0.000000e+00 : f32
    %562 = vector.broadcast %cst_78 : f32 to vector<8x32xf32>
    %563 = arith.maximumf %561, %562 : vector<8x32xf32>
    %cst_79 = arith.constant 0.000000e+00 : f32
    %564 = vector.broadcast %cst_79 : f32 to vector<8x32xf32>
    %565 = arith.mulf %380, %564 : vector<8x32xf32>
    %cst_80 = arith.constant 1.000000e+00 : f32
    %566 = vector.broadcast %cst_80 : f32 to vector<8x32xf32>
    %567 = arith.mulf %563, %566 : vector<8x32xf32>
    %568 = arith.addf %565, %567 : vector<8x32xf32>
    %c2_81 = arith.constant 2 : index
    %c0_82 = arith.constant 0 : index
    %c0_83 = arith.constant 0 : index
    %569 = vector.load %arg9[%c2_81, %c0_82, %c0_83] : memref<8x8x32xf32, #tpu.memory_space<vmem>>, vector<1x8x32xf32>
    %570 = vector.shape_cast %569 : vector<1x8x32xf32> to vector<8x32xf32>
    %571 = vector.shape_cast %558 : vector<8x32xf32> to vector<1x8x32xf32>
    tpu.vector_store %arg9[%c2_81, %c0_82, %c0_83], %571 {strides = array<i32>} : memref<8x8x32xf32, #tpu.memory_space<vmem>>, vector<1x8x32xf32>,
    %c3 = arith.constant 3 : index
    %c0_84 = arith.constant 0 : index
    %c0_85 = arith.constant 0 : index
    %572 = vector.load %arg2[%c3, %c0_84, %c0_85] : memref<8x8x32xf32, #tpu.memory_space<vmem>>, vector<1x8x32xf32>
    %573 = vector.shape_cast %572 : vector<1x8x32xf32> to vector<8x32xf32>
    %c3_86 = arith.constant 3 : index
    %c0_87 = arith.constant 0 : index
    %c0_88 = arith.constant 0 : index
    %574 = vector.load %arg3[%c3_86, %c0_87, %c0_88] : memref<8x8x32xf32, #tpu.memory_space<vmem>>, vector<1x8x32xf32>
    %575 = vector.shape_cast %574 : vector<1x8x32xf32> to vector<8x32xf32>
    %c3_89 = arith.constant 3 : index
    %c0_90 = arith.constant 0 : index
    %c0_91 = arith.constant 0 : index
    %576 = vector.load %arg4[%c3_89, %c0_90, %c0_91] : memref<8x8x32xf32, #tpu.memory_space<vmem>>, vector<1x8x32xf32>
    %577 = vector.shape_cast %576 : vector<1x8x32xf32> to vector<8x32xf32>
    %578 = arith.truncf %568 : vector<8x32xf32> to vector<8x32xbf16>
    %c0_92 = arith.constant 0 : index
    %c0_93 = arith.constant 0 : index
    %579 = vector.load %arg11[%c0_92, %c0_93] : memref<32x1024xbf16, #tpu.memory_space<vmem>>, vector<32x256xbf16>
    %cst_94 = arith.constant dense<0.000000e+00> : vector<8x256xf32>
    %580 = tpu.matmul %578, %579, %cst_94 {dimension_numbers = #tpu.dot_dimension_numbers<[1], [0], [0], [1], [0, 0, 1, 1], [], []>} : vector<8x32xbf16>, vector<32x256xbf16>, vector<8x256xf32> -> vector<8x256xf32>
    %581 = vector.extract_strided_slice %580 {offsets = [0, 0], sizes = [8, 32], strides = [1, 1]} : vector<8x256xf32> to vector<8x32xf32>
    %582 = vector.extract_strided_slice %573 {offsets = [0, 0], sizes = [8, 1], strides = [1, 1]} : vector<8x32xf32> to vector<8x1xf32>
    %583 = vector.broadcast %582 : vector<8x1xf32> to vector<8x32xf32>
    %584 = arith.mulf %581, %583 : vector<8x32xf32>
    %585 = arith.addf %577, %584 : vector<8x32xf32>
    %586 = vector.extract_strided_slice %580 {offsets = [0, 32], sizes = [8, 32], strides = [1, 1]} : vector<8x256xf32> to vector<8x32xf32>
    %587 = vector.extract_strided_slice %573 {offsets = [0, 1], sizes = [8, 1], strides = [1, 1]} : vector<8x32xf32> to vector<8x1xf32>
    %588 = vector.broadcast %587 : vector<8x1xf32> to vector<8x32xf32>
    %589 = arith.mulf %586, %588 : vector<8x32xf32>
    %590 = arith.addf %585, %589 : vector<8x32xf32>
    %591 = vector.extract_strided_slice %580 {offsets = [0, 64], sizes = [8, 32], strides = [1, 1]} : vector<8x256xf32> to vector<8x32xf32>
    %592 = vector.extract_strided_slice %573 {offsets = [0, 2], sizes = [8, 1], strides = [1, 1]} : vector<8x32xf32> to vector<8x1xf32>
    %593 = vector.broadcast %592 : vector<8x1xf32> to vector<8x32xf32>
    %594 = arith.mulf %591, %593 : vector<8x32xf32>
    %595 = arith.addf %590, %594 : vector<8x32xf32>
    %596 = vector.extract_strided_slice %580 {offsets = [0, 96], sizes = [8, 32], strides = [1, 1]} : vector<8x256xf32> to vector<8x32xf32>
    %597 = vector.extract_strided_slice %573 {offsets = [0, 3], sizes = [8, 1], strides = [1, 1]} : vector<8x32xf32> to vector<8x1xf32>
    %598 = vector.broadcast %597 : vector<8x1xf32> to vector<8x32xf32>
    %599 = arith.mulf %596, %598 : vector<8x32xf32>
    %600 = arith.addf %595, %599 : vector<8x32xf32>
    %601 = vector.extract_strided_slice %580 {offsets = [0, 128], sizes = [8, 32], strides = [1, 1]} : vector<8x256xf32> to vector<8x32xf32>
    %602 = vector.extract_strided_slice %573 {offsets = [0, 4], sizes = [8, 1], strides = [1, 1]} : vector<8x32xf32> to vector<8x1xf32>
    %603 = vector.broadcast %602 : vector<8x1xf32> to vector<8x32xf32>
    %604 = arith.mulf %601, %603 : vector<8x32xf32>
    %605 = arith.addf %600, %604 : vector<8x32xf32>
    %606 = vector.extract_strided_slice %580 {offsets = [0, 160], sizes = [8, 32], strides = [1, 1]} : vector<8x256xf32> to vector<8x32xf32>
    %607 = vector.extract_strided_slice %573 {offsets = [0, 5], sizes = [8, 1], strides = [1, 1]} : vector<8x32xf32> to vector<8x1xf32>
    %608 = vector.broadcast %607 : vector<8x1xf32> to vector<8x32xf32>
    %609 = arith.mulf %606, %608 : vector<8x32xf32>
    %610 = arith.addf %605, %609 : vector<8x32xf32>
    %611 = vector.extract_strided_slice %580 {offsets = [0, 192], sizes = [8, 32], strides = [1, 1]} : vector<8x256xf32> to vector<8x32xf32>
    %612 = vector.extract_strided_slice %573 {offsets = [0, 6], sizes = [8, 1], strides = [1, 1]} : vector<8x32xf32> to vector<8x1xf32>
    %613 = vector.broadcast %612 : vector<8x1xf32> to vector<8x32xf32>
    %614 = arith.mulf %611, %613 : vector<8x32xf32>
    %615 = arith.addf %610, %614 : vector<8x32xf32>
    %616 = vector.extract_strided_slice %580 {offsets = [0, 224], sizes = [8, 32], strides = [1, 1]} : vector<8x256xf32> to vector<8x32xf32>
    %617 = vector.extract_strided_slice %573 {offsets = [0, 7], sizes = [8, 1], strides = [1, 1]} : vector<8x32xf32> to vector<8x1xf32>
    %618 = vector.broadcast %617 : vector<8x1xf32> to vector<8x32xf32>
    %619 = arith.mulf %616, %618 : vector<8x32xf32>
    %620 = arith.addf %615, %619 : vector<8x32xf32>
    %c0_95 = arith.constant 0 : index
    %c256_96 = arith.constant 256 : index
    %621 = vector.load %arg11[%c0_95, %c256_96] : memref<32x1024xbf16, #tpu.memory_space<vmem>>, vector<32x256xbf16>
    %cst_97 = arith.constant dense<0.000000e+00> : vector<8x256xf32>
    %622 = tpu.matmul %578, %621, %cst_97 {dimension_numbers = #tpu.dot_dimension_numbers<[1], [0], [0], [1], [0, 0, 1, 1], [], []>} : vector<8x32xbf16>, vector<32x256xbf16>, vector<8x256xf32> -> vector<8x256xf32>
    %623 = vector.extract_strided_slice %622 {offsets = [0, 0], sizes = [8, 32], strides = [1, 1]} : vector<8x256xf32> to vector<8x32xf32>
    %624 = vector.extract_strided_slice %573 {offsets = [0, 8], sizes = [8, 1], strides = [1, 1]} : vector<8x32xf32> to vector<8x1xf32>
    %625 = vector.broadcast %624 : vector<8x1xf32> to vector<8x32xf32>
    %626 = arith.mulf %623, %625 : vector<8x32xf32>
    %627 = arith.addf %620, %626 : vector<8x32xf32>
    %628 = vector.extract_strided_slice %622 {offsets = [0, 32], sizes = [8, 32], strides = [1, 1]} : vector<8x256xf32> to vector<8x32xf32>
    %629 = vector.extract_strided_slice %573 {offsets = [0, 9], sizes = [8, 1], strides = [1, 1]} : vector<8x32xf32> to vector<8x1xf32>
    %630 = vector.broadcast %629 : vector<8x1xf32> to vector<8x32xf32>
    %631 = arith.mulf %628, %630 : vector<8x32xf32>
    %632 = arith.addf %627, %631 : vector<8x32xf32>
    %633 = vector.extract_strided_slice %622 {offsets = [0, 64], sizes = [8, 32], strides = [1, 1]} : vector<8x256xf32> to vector<8x32xf32>
    %634 = vector.extract_strided_slice %573 {offsets = [0, 10], sizes = [8, 1], strides = [1, 1]} : vector<8x32xf32> to vector<8x1xf32>
    %635 = vector.broadcast %634 : vector<8x1xf32> to vector<8x32xf32>
    %636 = arith.mulf %633, %635 : vector<8x32xf32>
    %637 = arith.addf %632, %636 : vector<8x32xf32>
    %638 = vector.extract_strided_slice %622 {offsets = [0, 96], sizes = [8, 32], strides = [1, 1]} : vector<8x256xf32> to vector<8x32xf32>
    %639 = vector.extract_strided_slice %573 {offsets = [0, 11], sizes = [8, 1], strides = [1, 1]} : vector<8x32xf32> to vector<8x1xf32>
    %640 = vector.broadcast %639 : vector<8x1xf32> to vector<8x32xf32>
    %641 = arith.mulf %638, %640 : vector<8x32xf32>
    %642 = arith.addf %637, %641 : vector<8x32xf32>
    %643 = vector.extract_strided_slice %622 {offsets = [0, 128], sizes = [8, 32], strides = [1, 1]} : vector<8x256xf32> to vector<8x32xf32>
    %644 = vector.extract_strided_slice %573 {offsets = [0, 12], sizes = [8, 1], strides = [1, 1]} : vector<8x32xf32> to vector<8x1xf32>
    %645 = vector.broadcast %644 : vector<8x1xf32> to vector<8x32xf32>
    %646 = arith.mulf %643, %645 : vector<8x32xf32>
    %647 = arith.addf %642, %646 : vector<8x32xf32>
    %648 = vector.extract_strided_slice %622 {offsets = [0, 160], sizes = [8, 32], strides = [1, 1]} : vector<8x256xf32> to vector<8x32xf32>
    %649 = vector.extract_strided_slice %573 {offsets = [0, 13], sizes = [8, 1], strides = [1, 1]} : vector<8x32xf32> to vector<8x1xf32>
    %650 = vector.broadcast %649 : vector<8x1xf32> to vector<8x32xf32>
    %651 = arith.mulf %648, %650 : vector<8x32xf32>
    %652 = arith.addf %647, %651 : vector<8x32xf32>
    %653 = vector.extract_strided_slice %622 {offsets = [0, 192], sizes = [8, 32], strides = [1, 1]} : vector<8x256xf32> to vector<8x32xf32>
    %654 = vector.extract_strided_slice %573 {offsets = [0, 14], sizes = [8, 1], strides = [1, 1]} : vector<8x32xf32> to vector<8x1xf32>
    %655 = vector.broadcast %654 : vector<8x1xf32> to vector<8x32xf32>
    %656 = arith.mulf %653, %655 : vector<8x32xf32>
    %657 = arith.addf %652, %656 : vector<8x32xf32>
    %658 = vector.extract_strided_slice %622 {offsets = [0, 224], sizes = [8, 32], strides = [1, 1]} : vector<8x256xf32> to vector<8x32xf32>
    %659 = vector.extract_strided_slice %573 {offsets = [0, 15], sizes = [8, 1], strides = [1, 1]} : vector<8x32xf32> to vector<8x1xf32>
    %660 = vector.broadcast %659 : vector<8x1xf32> to vector<8x32xf32>
    %661 = arith.mulf %658, %660 : vector<8x32xf32>
    %662 = arith.addf %657, %661 : vector<8x32xf32>
    %c0_98 = arith.constant 0 : index
    %c512_99 = arith.constant 512 : index
    %663 = vector.load %arg11[%c0_98, %c512_99] : memref<32x1024xbf16, #tpu.memory_space<vmem>>, vector<32x256xbf16>
    %cst_100 = arith.constant dense<0.000000e+00> : vector<8x256xf32>
    %664 = tpu.matmul %578, %663, %cst_100 {dimension_numbers = #tpu.dot_dimension_numbers<[1], [0], [0], [1], [0, 0, 1, 1], [], []>} : vector<8x32xbf16>, vector<32x256xbf16>, vector<8x256xf32> -> vector<8x256xf32>
    %665 = vector.extract_strided_slice %664 {offsets = [0, 0], sizes = [8, 32], strides = [1, 1]} : vector<8x256xf32> to vector<8x32xf32>
    %666 = vector.extract_strided_slice %573 {offsets = [0, 16], sizes = [8, 1], strides = [1, 1]} : vector<8x32xf32> to vector<8x1xf32>
    %667 = vector.broadcast %666 : vector<8x1xf32> to vector<8x32xf32>
    %668 = arith.mulf %665, %667 : vector<8x32xf32>
    %669 = arith.addf %662, %668 : vector<8x32xf32>
    %670 = vector.extract_strided_slice %664 {offsets = [0, 32], sizes = [8, 32], strides = [1, 1]} : vector<8x256xf32> to vector<8x32xf32>
    %671 = vector.extract_strided_slice %573 {offsets = [0, 17], sizes = [8, 1], strides = [1, 1]} : vector<8x32xf32> to vector<8x1xf32>
    %672 = vector.broadcast %671 : vector<8x1xf32> to vector<8x32xf32>
    %673 = arith.mulf %670, %672 : vector<8x32xf32>
    %674 = arith.addf %669, %673 : vector<8x32xf32>
    %675 = vector.extract_strided_slice %664 {offsets = [0, 64], sizes = [8, 32], strides = [1, 1]} : vector<8x256xf32> to vector<8x32xf32>
    %676 = vector.extract_strided_slice %573 {offsets = [0, 18], sizes = [8, 1], strides = [1, 1]} : vector<8x32xf32> to vector<8x1xf32>
    %677 = vector.broadcast %676 : vector<8x1xf32> to vector<8x32xf32>
    %678 = arith.mulf %675, %677 : vector<8x32xf32>
    %679 = arith.addf %674, %678 : vector<8x32xf32>
    %680 = vector.extract_strided_slice %664 {offsets = [0, 96], sizes = [8, 32], strides = [1, 1]} : vector<8x256xf32> to vector<8x32xf32>
    %681 = vector.extract_strided_slice %573 {offsets = [0, 19], sizes = [8, 1], strides = [1, 1]} : vector<8x32xf32> to vector<8x1xf32>
    %682 = vector.broadcast %681 : vector<8x1xf32> to vector<8x32xf32>
    %683 = arith.mulf %680, %682 : vector<8x32xf32>
    %684 = arith.addf %679, %683 : vector<8x32xf32>
    %685 = vector.extract_strided_slice %664 {offsets = [0, 128], sizes = [8, 32], strides = [1, 1]} : vector<8x256xf32> to vector<8x32xf32>
    %686 = vector.extract_strided_slice %573 {offsets = [0, 20], sizes = [8, 1], strides = [1, 1]} : vector<8x32xf32> to vector<8x1xf32>
    %687 = vector.broadcast %686 : vector<8x1xf32> to vector<8x32xf32>
    %688 = arith.mulf %685, %687 : vector<8x32xf32>
    %689 = arith.addf %684, %688 : vector<8x32xf32>
    %690 = vector.extract_strided_slice %664 {offsets = [0, 160], sizes = [8, 32], strides = [1, 1]} : vector<8x256xf32> to vector<8x32xf32>
    %691 = vector.extract_strided_slice %573 {offsets = [0, 21], sizes = [8, 1], strides = [1, 1]} : vector<8x32xf32> to vector<8x1xf32>
    %692 = vector.broadcast %691 : vector<8x1xf32> to vector<8x32xf32>
    %693 = arith.mulf %690, %692 : vector<8x32xf32>
    %694 = arith.addf %689, %693 : vector<8x32xf32>
    %695 = vector.extract_strided_slice %664 {offsets = [0, 192], sizes = [8, 32], strides = [1, 1]} : vector<8x256xf32> to vector<8x32xf32>
    %696 = vector.extract_strided_slice %573 {offsets = [0, 22], sizes = [8, 1], strides = [1, 1]} : vector<8x32xf32> to vector<8x1xf32>
    %697 = vector.broadcast %696 : vector<8x1xf32> to vector<8x32xf32>
    %698 = arith.mulf %695, %697 : vector<8x32xf32>
    %699 = arith.addf %694, %698 : vector<8x32xf32>
    %700 = vector.extract_strided_slice %664 {offsets = [0, 224], sizes = [8, 32], strides = [1, 1]} : vector<8x256xf32> to vector<8x32xf32>
    %701 = vector.extract_strided_slice %573 {offsets = [0, 23], sizes = [8, 1], strides = [1, 1]} : vector<8x32xf32> to vector<8x1xf32>
    %702 = vector.broadcast %701 : vector<8x1xf32> to vector<8x32xf32>
    %703 = arith.mulf %700, %702 : vector<8x32xf32>
    %704 = arith.addf %699, %703 : vector<8x32xf32>
    %c0_101 = arith.constant 0 : index
    %c768_102 = arith.constant 768 : index
    %705 = vector.load %arg11[%c0_101, %c768_102] : memref<32x1024xbf16, #tpu.memory_space<vmem>>, vector<32x256xbf16>
    %cst_103 = arith.constant dense<0.000000e+00> : vector<8x256xf32>
    %706 = tpu.matmul %578, %705, %cst_103 {dimension_numbers = #tpu.dot_dimension_numbers<[1], [0], [0], [1], [0, 0, 1, 1], [], []>} : vector<8x32xbf16>, vector<32x256xbf16>, vector<8x256xf32> -> vector<8x256xf32>
    %707 = vector.extract_strided_slice %706 {offsets = [0, 0], sizes = [8, 32], strides = [1, 1]} : vector<8x256xf32> to vector<8x32xf32>
    %708 = vector.extract_strided_slice %573 {offsets = [0, 24], sizes = [8, 1], strides = [1, 1]} : vector<8x32xf32> to vector<8x1xf32>
    %709 = vector.broadcast %708 : vector<8x1xf32> to vector<8x32xf32>
    %710 = arith.mulf %707, %709 : vector<8x32xf32>
    %711 = arith.addf %704, %710 : vector<8x32xf32>
    %712 = vector.extract_strided_slice %706 {offsets = [0, 32], sizes = [8, 32], strides = [1, 1]} : vector<8x256xf32> to vector<8x32xf32>
    %713 = vector.extract_strided_slice %573 {offsets = [0, 25], sizes = [8, 1], strides = [1, 1]} : vector<8x32xf32> to vector<8x1xf32>
    %714 = vector.broadcast %713 : vector<8x1xf32> to vector<8x32xf32>
    %715 = arith.mulf %712, %714 : vector<8x32xf32>
    %716 = arith.addf %711, %715 : vector<8x32xf32>
    %717 = vector.extract_strided_slice %706 {offsets = [0, 64], sizes = [8, 32], strides = [1, 1]} : vector<8x256xf32> to vector<8x32xf32>
    %718 = vector.extract_strided_slice %573 {offsets = [0, 26], sizes = [8, 1], strides = [1, 1]} : vector<8x32xf32> to vector<8x1xf32>
    %719 = vector.broadcast %718 : vector<8x1xf32> to vector<8x32xf32>
    %720 = arith.mulf %717, %719 : vector<8x32xf32>
    %721 = arith.addf %716, %720 : vector<8x32xf32>
    %722 = vector.extract_strided_slice %706 {offsets = [0, 96], sizes = [8, 32], strides = [1, 1]} : vector<8x256xf32> to vector<8x32xf32>
    %723 = vector.extract_strided_slice %573 {offsets = [0, 27], sizes = [8, 1], strides = [1, 1]} : vector<8x32xf32> to vector<8x1xf32>
    %724 = vector.broadcast %723 : vector<8x1xf32> to vector<8x32xf32>
    %725 = arith.mulf %722, %724 : vector<8x32xf32>
    %726 = arith.addf %721, %725 : vector<8x32xf32>
    %727 = vector.extract_strided_slice %706 {offsets = [0, 128], sizes = [8, 32], strides = [1, 1]} : vector<8x256xf32> to vector<8x32xf32>
    %728 = vector.extract_strided_slice %573 {offsets = [0, 28], sizes = [8, 1], strides = [1, 1]} : vector<8x32xf32> to vector<8x1xf32>
    %729 = vector.broadcast %728 : vector<8x1xf32> to vector<8x32xf32>
    %730 = arith.mulf %727, %729 : vector<8x32xf32>
    %731 = arith.addf %726, %730 : vector<8x32xf32>
    %732 = vector.extract_strided_slice %706 {offsets = [0, 160], sizes = [8, 32], strides = [1, 1]} : vector<8x256xf32> to vector<8x32xf32>
    %733 = vector.extract_strided_slice %573 {offsets = [0, 29], sizes = [8, 1], strides = [1, 1]} : vector<8x32xf32> to vector<8x1xf32>
    %734 = vector.broadcast %733 : vector<8x1xf32> to vector<8x32xf32>
    %735 = arith.mulf %732, %734 : vector<8x32xf32>
    %736 = arith.addf %731, %735 : vector<8x32xf32>
    %737 = vector.extract_strided_slice %706 {offsets = [0, 192], sizes = [8, 32], strides = [1, 1]} : vector<8x256xf32> to vector<8x32xf32>
    %738 = vector.extract_strided_slice %573 {offsets = [0, 30], sizes = [8, 1], strides = [1, 1]} : vector<8x32xf32> to vector<8x1xf32>
    %739 = vector.broadcast %738 : vector<8x1xf32> to vector<8x32xf32>
    %740 = arith.mulf %737, %739 : vector<8x32xf32>
    %741 = arith.addf %736, %740 : vector<8x32xf32>
    %742 = vector.extract_strided_slice %706 {offsets = [0, 224], sizes = [8, 32], strides = [1, 1]} : vector<8x256xf32> to vector<8x32xf32>
    %743 = vector.extract_strided_slice %573 {offsets = [0, 31], sizes = [8, 1], strides = [1, 1]} : vector<8x32xf32> to vector<8x1xf32>
    %744 = vector.broadcast %743 : vector<8x1xf32> to vector<8x32xf32>
    %745 = arith.mulf %742, %744 : vector<8x32xf32>
    %746 = arith.addf %741, %745 : vector<8x32xf32>
    %cst_104 = arith.constant dense<0.000000e+00> : vector<8x32xf32>
    %747 = tpu.matmul %568, %3, %cst_104 {dimension_numbers = #tpu.dot_dimension_numbers<[1], [0], [0], [1], [0, 0, 1, 1], [], []>} : vector<8x32xf32>, vector<32x32xf32>, vector<8x32xf32> -> vector<8x32xf32>
    %748 = arith.addf %747, %6 : vector<8x32xf32>
    %749 = arith.addf %748, %575 : vector<8x32xf32>
    %cst_105 = arith.constant 0.000000e+00 : f32
    %750 = vector.broadcast %cst_105 : f32 to vector<8x32xf32>
    %751 = arith.maximumf %749, %750 : vector<8x32xf32>
    %cst_106 = arith.constant 0.000000e+00 : f32
    %752 = vector.broadcast %cst_106 : f32 to vector<8x32xf32>
    %753 = arith.mulf %568, %752 : vector<8x32xf32>
    %cst_107 = arith.constant 1.000000e+00 : f32
    %754 = vector.broadcast %cst_107 : f32 to vector<8x32xf32>
    %755 = arith.mulf %751, %754 : vector<8x32xf32>
    %756 = arith.addf %753, %755 : vector<8x32xf32>
    %c3_108 = arith.constant 3 : index
    %c0_109 = arith.constant 0 : index
    %c0_110 = arith.constant 0 : index
    %757 = vector.load %arg9[%c3_108, %c0_109, %c0_110] : memref<8x8x32xf32, #tpu.memory_space<vmem>>, vector<1x8x32xf32>
    %758 = vector.shape_cast %757 : vector<1x8x32xf32> to vector<8x32xf32>
    %759 = vector.shape_cast %746 : vector<8x32xf32> to vector<1x8x32xf32>
    tpu.vector_store %arg9[%c3_108, %c0_109, %c0_110], %759 {strides = array<i32>} : memref<8x8x32xf32, #tpu.memory_space<vmem>>, vector<1x8x32xf32>,
    %c4 = arith.constant 4 : index
    %c0_111 = arith.constant 0 : index
    %c0_112 = arith.constant 0 : index
    %760 = vector.load %arg2[%c4, %c0_111, %c0_112] : memref<8x8x32xf32, #tpu.memory_space<vmem>>, vector<1x8x32xf32>
    %761 = vector.shape_cast %760 : vector<1x8x32xf32> to vector<8x32xf32>
    %c4_113 = arith.constant 4 : index
    %c0_114 = arith.constant 0 : index
    %c0_115 = arith.constant 0 : index
    %762 = vector.load %arg3[%c4_113, %c0_114, %c0_115] : memref<8x8x32xf32, #tpu.memory_space<vmem>>, vector<1x8x32xf32>
    %763 = vector.shape_cast %762 : vector<1x8x32xf32> to vector<8x32xf32>
    %c4_116 = arith.constant 4 : index
    %c0_117 = arith.constant 0 : index
    %c0_118 = arith.constant 0 : index
    %764 = vector.load %arg4[%c4_116, %c0_117, %c0_118] : memref<8x8x32xf32, #tpu.memory_space<vmem>>, vector<1x8x32xf32>
    %765 = vector.shape_cast %764 : vector<1x8x32xf32> to vector<8x32xf32>
    %766 = arith.truncf %756 : vector<8x32xf32> to vector<8x32xbf16>
    %c0_119 = arith.constant 0 : index
    %c0_120 = arith.constant 0 : index
    %767 = vector.load %arg11[%c0_119, %c0_120] : memref<32x1024xbf16, #tpu.memory_space<vmem>>, vector<32x256xbf16>
    %cst_121 = arith.constant dense<0.000000e+00> : vector<8x256xf32>
    %768 = tpu.matmul %766, %767, %cst_121 {dimension_numbers = #tpu.dot_dimension_numbers<[1], [0], [0], [1], [0, 0, 1, 1], [], []>} : vector<8x32xbf16>, vector<32x256xbf16>, vector<8x256xf32> -> vector<8x256xf32>
    %769 = vector.extract_strided_slice %768 {offsets = [0, 0], sizes = [8, 32], strides = [1, 1]} : vector<8x256xf32> to vector<8x32xf32>
    %770 = vector.extract_strided_slice %761 {offsets = [0, 0], sizes = [8, 1], strides = [1, 1]} : vector<8x32xf32> to vector<8x1xf32>
    %771 = vector.broadcast %770 : vector<8x1xf32> to vector<8x32xf32>
    %772 = arith.mulf %769, %771 : vector<8x32xf32>
    %773 = arith.addf %765, %772 : vector<8x32xf32>
    %774 = vector.extract_strided_slice %768 {offsets = [0, 32], sizes = [8, 32], strides = [1, 1]} : vector<8x256xf32> to vector<8x32xf32>
    %775 = vector.extract_strided_slice %761 {offsets = [0, 1], sizes = [8, 1], strides = [1, 1]} : vector<8x32xf32> to vector<8x1xf32>
    %776 = vector.broadcast %775 : vector<8x1xf32> to vector<8x32xf32>
    %777 = arith.mulf %774, %776 : vector<8x32xf32>
    %778 = arith.addf %773, %777 : vector<8x32xf32>
    %779 = vector.extract_strided_slice %768 {offsets = [0, 64], sizes = [8, 32], strides = [1, 1]} : vector<8x256xf32> to vector<8x32xf32>
    %780 = vector.extract_strided_slice %761 {offsets = [0, 2], sizes = [8, 1], strides = [1, 1]} : vector<8x32xf32> to vector<8x1xf32>
    %781 = vector.broadcast %780 : vector<8x1xf32> to vector<8x32xf32>
    %782 = arith.mulf %779, %781 : vector<8x32xf32>
    %783 = arith.addf %778, %782 : vector<8x32xf32>
    %784 = vector.extract_strided_slice %768 {offsets = [0, 96], sizes = [8, 32], strides = [1, 1]} : vector<8x256xf32> to vector<8x32xf32>
    %785 = vector.extract_strided_slice %761 {offsets = [0, 3], sizes = [8, 1], strides = [1, 1]} : vector<8x32xf32> to vector<8x1xf32>
    %786 = vector.broadcast %785 : vector<8x1xf32> to vector<8x32xf32>
    %787 = arith.mulf %784, %786 : vector<8x32xf32>
    %788 = arith.addf %783, %787 : vector<8x32xf32>
    %789 = vector.extract_strided_slice %768 {offsets = [0, 128], sizes = [8, 32], strides = [1, 1]} : vector<8x256xf32> to vector<8x32xf32>
    %790 = vector.extract_strided_slice %761 {offsets = [0, 4], sizes = [8, 1], strides = [1, 1]} : vector<8x32xf32> to vector<8x1xf32>
    %791 = vector.broadcast %790 : vector<8x1xf32> to vector<8x32xf32>
    %792 = arith.mulf %789, %791 : vector<8x32xf32>
    %793 = arith.addf %788, %792 : vector<8x32xf32>
    %794 = vector.extract_strided_slice %768 {offsets = [0, 160], sizes = [8, 32], strides = [1, 1]} : vector<8x256xf32> to vector<8x32xf32>
    %795 = vector.extract_strided_slice %761 {offsets = [0, 5], sizes = [8, 1], strides = [1, 1]} : vector<8x32xf32> to vector<8x1xf32>
    %796 = vector.broadcast %795 : vector<8x1xf32> to vector<8x32xf32>
    %797 = arith.mulf %794, %796 : vector<8x32xf32>
    %798 = arith.addf %793, %797 : vector<8x32xf32>
    %799 = vector.extract_strided_slice %768 {offsets = [0, 192], sizes = [8, 32], strides = [1, 1]} : vector<8x256xf32> to vector<8x32xf32>
    %800 = vector.extract_strided_slice %761 {offsets = [0, 6], sizes = [8, 1], strides = [1, 1]} : vector<8x32xf32> to vector<8x1xf32>
    %801 = vector.broadcast %800 : vector<8x1xf32> to vector<8x32xf32>
    %802 = arith.mulf %799, %801 : vector<8x32xf32>
    %803 = arith.addf %798, %802 : vector<8x32xf32>
    %804 = vector.extract_strided_slice %768 {offsets = [0, 224], sizes = [8, 32], strides = [1, 1]} : vector<8x256xf32> to vector<8x32xf32>
    %805 = vector.extract_strided_slice %761 {offsets = [0, 7], sizes = [8, 1], strides = [1, 1]} : vector<8x32xf32> to vector<8x1xf32>
    %806 = vector.broadcast %805 : vector<8x1xf32> to vector<8x32xf32>
    %807 = arith.mulf %804, %806 : vector<8x32xf32>
    %808 = arith.addf %803, %807 : vector<8x32xf32>
    %c0_122 = arith.constant 0 : index
    %c256_123 = arith.constant 256 : index
    %809 = vector.load %arg11[%c0_122, %c256_123] : memref<32x1024xbf16, #tpu.memory_space<vmem>>, vector<32x256xbf16>
    %cst_124 = arith.constant dense<0.000000e+00> : vector<8x256xf32>
    %810 = tpu.matmul %766, %809, %cst_124 {dimension_numbers = #tpu.dot_dimension_numbers<[1], [0], [0], [1], [0, 0, 1, 1], [], []>} : vector<8x32xbf16>, vector<32x256xbf16>, vector<8x256xf32> -> vector<8x256xf32>
    %811 = vector.extract_strided_slice %810 {offsets = [0, 0], sizes = [8, 32], strides = [1, 1]} : vector<8x256xf32> to vector<8x32xf32>
    %812 = vector.extract_strided_slice %761 {offsets = [0, 8], sizes = [8, 1], strides = [1, 1]} : vector<8x32xf32> to vector<8x1xf32>
    %813 = vector.broadcast %812 : vector<8x1xf32> to vector<8x32xf32>
    %814 = arith.mulf %811, %813 : vector<8x32xf32>
    %815 = arith.addf %808, %814 : vector<8x32xf32>
    %816 = vector.extract_strided_slice %810 {offsets = [0, 32], sizes = [8, 32], strides = [1, 1]} : vector<8x256xf32> to vector<8x32xf32>
    %817 = vector.extract_strided_slice %761 {offsets = [0, 9], sizes = [8, 1], strides = [1, 1]} : vector<8x32xf32> to vector<8x1xf32>
    %818 = vector.broadcast %817 : vector<8x1xf32> to vector<8x32xf32>
    %819 = arith.mulf %816, %818 : vector<8x32xf32>
    %820 = arith.addf %815, %819 : vector<8x32xf32>
    %821 = vector.extract_strided_slice %810 {offsets = [0, 64], sizes = [8, 32], strides = [1, 1]} : vector<8x256xf32> to vector<8x32xf32>
    %822 = vector.extract_strided_slice %761 {offsets = [0, 10], sizes = [8, 1], strides = [1, 1]} : vector<8x32xf32> to vector<8x1xf32>
    %823 = vector.broadcast %822 : vector<8x1xf32> to vector<8x32xf32>
    %824 = arith.mulf %821, %823 : vector<8x32xf32>
    %825 = arith.addf %820, %824 : vector<8x32xf32>
    %826 = vector.extract_strided_slice %810 {offsets = [0, 96], sizes = [8, 32], strides = [1, 1]} : vector<8x256xf32> to vector<8x32xf32>
    %827 = vector.extract_strided_slice %761 {offsets = [0, 11], sizes = [8, 1], strides = [1, 1]} : vector<8x32xf32> to vector<8x1xf32>
    %828 = vector.broadcast %827 : vector<8x1xf32> to vector<8x32xf32>
    %829 = arith.mulf %826, %828 : vector<8x32xf32>
    %830 = arith.addf %825, %829 : vector<8x32xf32>
    %831 = vector.extract_strided_slice %810 {offsets = [0, 128], sizes = [8, 32], strides = [1, 1]} : vector<8x256xf32> to vector<8x32xf32>
    %832 = vector.extract_strided_slice %761 {offsets = [0, 12], sizes = [8, 1], strides = [1, 1]} : vector<8x32xf32> to vector<8x1xf32>
    %833 = vector.broadcast %832 : vector<8x1xf32> to vector<8x32xf32>
    %834 = arith.mulf %831, %833 : vector<8x32xf32>
    %835 = arith.addf %830, %834 : vector<8x32xf32>
    %836 = vector.extract_strided_slice %810 {offsets = [0, 160], sizes = [8, 32], strides = [1, 1]} : vector<8x256xf32> to vector<8x32xf32>
    %837 = vector.extract_strided_slice %761 {offsets = [0, 13], sizes = [8, 1], strides = [1, 1]} : vector<8x32xf32> to vector<8x1xf32>
    %838 = vector.broadcast %837 : vector<8x1xf32> to vector<8x32xf32>
    %839 = arith.mulf %836, %838 : vector<8x32xf32>
    %840 = arith.addf %835, %839 : vector<8x32xf32>
    %841 = vector.extract_strided_slice %810 {offsets = [0, 192], sizes = [8, 32], strides = [1, 1]} : vector<8x256xf32> to vector<8x32xf32>
    %842 = vector.extract_strided_slice %761 {offsets = [0, 14], sizes = [8, 1], strides = [1, 1]} : vector<8x32xf32> to vector<8x1xf32>
    %843 = vector.broadcast %842 : vector<8x1xf32> to vector<8x32xf32>
    %844 = arith.mulf %841, %843 : vector<8x32xf32>
    %845 = arith.addf %840, %844 : vector<8x32xf32>
    %846 = vector.extract_strided_slice %810 {offsets = [0, 224], sizes = [8, 32], strides = [1, 1]} : vector<8x256xf32> to vector<8x32xf32>
    %847 = vector.extract_strided_slice %761 {offsets = [0, 15], sizes = [8, 1], strides = [1, 1]} : vector<8x32xf32> to vector<8x1xf32>
    %848 = vector.broadcast %847 : vector<8x1xf32> to vector<8x32xf32>
    %849 = arith.mulf %846, %848 : vector<8x32xf32>
    %850 = arith.addf %845, %849 : vector<8x32xf32>
    %c0_125 = arith.constant 0 : index
    %c512_126 = arith.constant 512 : index
    %851 = vector.load %arg11[%c0_125, %c512_126] : memref<32x1024xbf16, #tpu.memory_space<vmem>>, vector<32x256xbf16>
    %cst_127 = arith.constant dense<0.000000e+00> : vector<8x256xf32>
    %852 = tpu.matmul %766, %851, %cst_127 {dimension_numbers = #tpu.dot_dimension_numbers<[1], [0], [0], [1], [0, 0, 1, 1], [], []>} : vector<8x32xbf16>, vector<32x256xbf16>, vector<8x256xf32> -> vector<8x256xf32>
    %853 = vector.extract_strided_slice %852 {offsets = [0, 0], sizes = [8, 32], strides = [1, 1]} : vector<8x256xf32> to vector<8x32xf32>
    %854 = vector.extract_strided_slice %761 {offsets = [0, 16], sizes = [8, 1], strides = [1, 1]} : vector<8x32xf32> to vector<8x1xf32>
    %855 = vector.broadcast %854 : vector<8x1xf32> to vector<8x32xf32>
    %856 = arith.mulf %853, %855 : vector<8x32xf32>
    %857 = arith.addf %850, %856 : vector<8x32xf32>
    %858 = vector.extract_strided_slice %852 {offsets = [0, 32], sizes = [8, 32], strides = [1, 1]} : vector<8x256xf32> to vector<8x32xf32>
    %859 = vector.extract_strided_slice %761 {offsets = [0, 17], sizes = [8, 1], strides = [1, 1]} : vector<8x32xf32> to vector<8x1xf32>
    %860 = vector.broadcast %859 : vector<8x1xf32> to vector<8x32xf32>
    %861 = arith.mulf %858, %860 : vector<8x32xf32>
    %862 = arith.addf %857, %861 : vector<8x32xf32>
    %863 = vector.extract_strided_slice %852 {offsets = [0, 64], sizes = [8, 32], strides = [1, 1]} : vector<8x256xf32> to vector<8x32xf32>
    %864 = vector.extract_strided_slice %761 {offsets = [0, 18], sizes = [8, 1], strides = [1, 1]} : vector<8x32xf32> to vector<8x1xf32>
    %865 = vector.broadcast %864 : vector<8x1xf32> to vector<8x32xf32>
    %866 = arith.mulf %863, %865 : vector<8x32xf32>
    %867 = arith.addf %862, %866 : vector<8x32xf32>
    %868 = vector.extract_strided_slice %852 {offsets = [0, 96], sizes = [8, 32], strides = [1, 1]} : vector<8x256xf32> to vector<8x32xf32>
    %869 = vector.extract_strided_slice %761 {offsets = [0, 19], sizes = [8, 1], strides = [1, 1]} : vector<8x32xf32> to vector<8x1xf32>
    %870 = vector.broadcast %869 : vector<8x1xf32> to vector<8x32xf32>
    %871 = arith.mulf %868, %870 : vector<8x32xf32>
    %872 = arith.addf %867, %871 : vector<8x32xf32>
    %873 = vector.extract_strided_slice %852 {offsets = [0, 128], sizes = [8, 32], strides = [1, 1]} : vector<8x256xf32> to vector<8x32xf32>
    %874 = vector.extract_strided_slice %761 {offsets = [0, 20], sizes = [8, 1], strides = [1, 1]} : vector<8x32xf32> to vector<8x1xf32>
    %875 = vector.broadcast %874 : vector<8x1xf32> to vector<8x32xf32>
    %876 = arith.mulf %873, %875 : vector<8x32xf32>
    %877 = arith.addf %872, %876 : vector<8x32xf32>
    %878 = vector.extract_strided_slice %852 {offsets = [0, 160], sizes = [8, 32], strides = [1, 1]} : vector<8x256xf32> to vector<8x32xf32>
    %879 = vector.extract_strided_slice %761 {offsets = [0, 21], sizes = [8, 1], strides = [1, 1]} : vector<8x32xf32> to vector<8x1xf32>
    %880 = vector.broadcast %879 : vector<8x1xf32> to vector<8x32xf32>
    %881 = arith.mulf %878, %880 : vector<8x32xf32>
    %882 = arith.addf %877, %881 : vector<8x32xf32>
    %883 = vector.extract_strided_slice %852 {offsets = [0, 192], sizes = [8, 32], strides = [1, 1]} : vector<8x256xf32> to vector<8x32xf32>
    %884 = vector.extract_strided_slice %761 {offsets = [0, 22], sizes = [8, 1], strides = [1, 1]} : vector<8x32xf32> to vector<8x1xf32>
    %885 = vector.broadcast %884 : vector<8x1xf32> to vector<8x32xf32>
    %886 = arith.mulf %883, %885 : vector<8x32xf32>
    %887 = arith.addf %882, %886 : vector<8x32xf32>
    %888 = vector.extract_strided_slice %852 {offsets = [0, 224], sizes = [8, 32], strides = [1, 1]} : vector<8x256xf32> to vector<8x32xf32>
    %889 = vector.extract_strided_slice %761 {offsets = [0, 23], sizes = [8, 1], strides = [1, 1]} : vector<8x32xf32> to vector<8x1xf32>
    %890 = vector.broadcast %889 : vector<8x1xf32> to vector<8x32xf32>
    %891 = arith.mulf %888, %890 : vector<8x32xf32>
    %892 = arith.addf %887, %891 : vector<8x32xf32>
    %c0_128 = arith.constant 0 : index
    %c768_129 = arith.constant 768 : index
    %893 = vector.load %arg11[%c0_128, %c768_129] : memref<32x1024xbf16, #tpu.memory_space<vmem>>, vector<32x256xbf16>
    %cst_130 = arith.constant dense<0.000000e+00> : vector<8x256xf32>
    %894 = tpu.matmul %766, %893, %cst_130 {dimension_numbers = #tpu.dot_dimension_numbers<[1], [0], [0], [1], [0, 0, 1, 1], [], []>} : vector<8x32xbf16>, vector<32x256xbf16>, vector<8x256xf32> -> vector<8x256xf32>
    %895 = vector.extract_strided_slice %894 {offsets = [0, 0], sizes = [8, 32], strides = [1, 1]} : vector<8x256xf32> to vector<8x32xf32>
    %896 = vector.extract_strided_slice %761 {offsets = [0, 24], sizes = [8, 1], strides = [1, 1]} : vector<8x32xf32> to vector<8x1xf32>
    %897 = vector.broadcast %896 : vector<8x1xf32> to vector<8x32xf32>
    %898 = arith.mulf %895, %897 : vector<8x32xf32>
    %899 = arith.addf %892, %898 : vector<8x32xf32>
    %900 = vector.extract_strided_slice %894 {offsets = [0, 32], sizes = [8, 32], strides = [1, 1]} : vector<8x256xf32> to vector<8x32xf32>
    %901 = vector.extract_strided_slice %761 {offsets = [0, 25], sizes = [8, 1], strides = [1, 1]} : vector<8x32xf32> to vector<8x1xf32>
    %902 = vector.broadcast %901 : vector<8x1xf32> to vector<8x32xf32>
    %903 = arith.mulf %900, %902 : vector<8x32xf32>
    %904 = arith.addf %899, %903 : vector<8x32xf32>
    %905 = vector.extract_strided_slice %894 {offsets = [0, 64], sizes = [8, 32], strides = [1, 1]} : vector<8x256xf32> to vector<8x32xf32>
    %906 = vector.extract_strided_slice %761 {offsets = [0, 26], sizes = [8, 1], strides = [1, 1]} : vector<8x32xf32> to vector<8x1xf32>
    %907 = vector.broadcast %906 : vector<8x1xf32> to vector<8x32xf32>
    %908 = arith.mulf %905, %907 : vector<8x32xf32>
    %909 = arith.addf %904, %908 : vector<8x32xf32>
    %910 = vector.extract_strided_slice %894 {offsets = [0, 96], sizes = [8, 32], strides = [1, 1]} : vector<8x256xf32> to vector<8x32xf32>
    %911 = vector.extract_strided_slice %761 {offsets = [0, 27], sizes = [8, 1], strides = [1, 1]} : vector<8x32xf32> to vector<8x1xf32>
    %912 = vector.broadcast %911 : vector<8x1xf32> to vector<8x32xf32>
    %913 = arith.mulf %910, %912 : vector<8x32xf32>
    %914 = arith.addf %909, %913 : vector<8x32xf32>
    %915 = vector.extract_strided_slice %894 {offsets = [0, 128], sizes = [8, 32], strides = [1, 1]} : vector<8x256xf32> to vector<8x32xf32>
    %916 = vector.extract_strided_slice %761 {offsets = [0, 28], sizes = [8, 1], strides = [1, 1]} : vector<8x32xf32> to vector<8x1xf32>
    %917 = vector.broadcast %916 : vector<8x1xf32> to vector<8x32xf32>
    %918 = arith.mulf %915, %917 : vector<8x32xf32>
    %919 = arith.addf %914, %918 : vector<8x32xf32>
    %920 = vector.extract_strided_slice %894 {offsets = [0, 160], sizes = [8, 32], strides = [1, 1]} : vector<8x256xf32> to vector<8x32xf32>
    %921 = vector.extract_strided_slice %761 {offsets = [0, 29], sizes = [8, 1], strides = [1, 1]} : vector<8x32xf32> to vector<8x1xf32>
    %922 = vector.broadcast %921 : vector<8x1xf32> to vector<8x32xf32>
    %923 = arith.mulf %920, %922 : vector<8x32xf32>
    %924 = arith.addf %919, %923 : vector<8x32xf32>
    %925 = vector.extract_strided_slice %894 {offsets = [0, 192], sizes = [8, 32], strides = [1, 1]} : vector<8x256xf32> to vector<8x32xf32>
    %926 = vector.extract_strided_slice %761 {offsets = [0, 30], sizes = [8, 1], strides = [1, 1]} : vector<8x32xf32> to vector<8x1xf32>
    %927 = vector.broadcast %926 : vector<8x1xf32> to vector<8x32xf32>
    %928 = arith.mulf %925, %927 : vector<8x32xf32>
    %929 = arith.addf %924, %928 : vector<8x32xf32>
    %930 = vector.extract_strided_slice %894 {offsets = [0, 224], sizes = [8, 32], strides = [1, 1]} : vector<8x256xf32> to vector<8x32xf32>
    %931 = vector.extract_strided_slice %761 {offsets = [0, 31], sizes = [8, 1], strides = [1, 1]} : vector<8x32xf32> to vector<8x1xf32>
    %932 = vector.broadcast %931 : vector<8x1xf32> to vector<8x32xf32>
    %933 = arith.mulf %930, %932 : vector<8x32xf32>
    %934 = arith.addf %929, %933 : vector<8x32xf32>
    %cst_131 = arith.constant dense<0.000000e+00> : vector<8x32xf32>
    %935 = tpu.matmul %756, %3, %cst_131 {dimension_numbers = #tpu.dot_dimension_numbers<[1], [0], [0], [1], [0, 0, 1, 1], [], []>} : vector<8x32xf32>, vector<32x32xf32>, vector<8x32xf32> -> vector<8x32xf32>
    %936 = arith.addf %935, %6 : vector<8x32xf32>
    %937 = arith.addf %936, %763 : vector<8x32xf32>
    %cst_132 = arith.constant 0.000000e+00 : f32
    %938 = vector.broadcast %cst_132 : f32 to vector<8x32xf32>
    %939 = arith.maximumf %937, %938 : vector<8x32xf32>
    %cst_133 = arith.constant 0.000000e+00 : f32
    %940 = vector.broadcast %cst_133 : f32 to vector<8x32xf32>
    %941 = arith.mulf %756, %940 : vector<8x32xf32>
    %cst_134 = arith.constant 1.000000e+00 : f32
    %942 = vector.broadcast %cst_134 : f32 to vector<8x32xf32>
    %943 = arith.mulf %939, %942 : vector<8x32xf32>
    %944 = arith.addf %941, %943 : vector<8x32xf32>
    %c4_135 = arith.constant 4 : index
    %c0_136 = arith.constant 0 : index
    %c0_137 = arith.constant 0 : index
    %945 = vector.load %arg9[%c4_135, %c0_136, %c0_137] : memref<8x8x32xf32, #tpu.memory_space<vmem>>, vector<1x8x32xf32>
    %946 = vector.shape_cast %945 : vector<1x8x32xf32> to vector<8x32xf32>
    %947 = vector.shape_cast %934 : vector<8x32xf32> to vector<1x8x32xf32>
    tpu.vector_store %arg9[%c4_135, %c0_136, %c0_137], %947 {strides = array<i32>} : memref<8x8x32xf32, #tpu.memory_space<vmem>>, vector<1x8x32xf32>,
    %c5 = arith.constant 5 : index
    %c0_138 = arith.constant 0 : index
    %c0_139 = arith.constant 0 : index
    %948 = vector.load %arg2[%c5, %c0_138, %c0_139] : memref<8x8x32xf32, #tpu.memory_space<vmem>>, vector<1x8x32xf32>
    %949 = vector.shape_cast %948 : vector<1x8x32xf32> to vector<8x32xf32>
    %c5_140 = arith.constant 5 : index
    %c0_141 = arith.constant 0 : index
    %c0_142 = arith.constant 0 : index
    %950 = vector.load %arg3[%c5_140, %c0_141, %c0_142] : memref<8x8x32xf32, #tpu.memory_space<vmem>>, vector<1x8x32xf32>
    %951 = vector.shape_cast %950 : vector<1x8x32xf32> to vector<8x32xf32>
    %c5_143 = arith.constant 5 : index
    %c0_144 = arith.constant 0 : index
    %c0_145 = arith.constant 0 : index
    %952 = vector.load %arg4[%c5_143, %c0_144, %c0_145] : memref<8x8x32xf32, #tpu.memory_space<vmem>>, vector<1x8x32xf32>
    %953 = vector.shape_cast %952 : vector<1x8x32xf32> to vector<8x32xf32>
    %954 = arith.truncf %944 : vector<8x32xf32> to vector<8x32xbf16>
    %c0_146 = arith.constant 0 : index
    %c0_147 = arith.constant 0 : index
    %955 = vector.load %arg11[%c0_146, %c0_147] : memref<32x1024xbf16, #tpu.memory_space<vmem>>, vector<32x256xbf16>
    %cst_148 = arith.constant dense<0.000000e+00> : vector<8x256xf32>
    %956 = tpu.matmul %954, %955, %cst_148 {dimension_numbers = #tpu.dot_dimension_numbers<[1], [0], [0], [1], [0, 0, 1, 1], [], []>} : vector<8x32xbf16>, vector<32x256xbf16>, vector<8x256xf32> -> vector<8x256xf32>
    %957 = vector.extract_strided_slice %956 {offsets = [0, 0], sizes = [8, 32], strides = [1, 1]} : vector<8x256xf32> to vector<8x32xf32>
    %958 = vector.extract_strided_slice %949 {offsets = [0, 0], sizes = [8, 1], strides = [1, 1]} : vector<8x32xf32> to vector<8x1xf32>
    %959 = vector.broadcast %958 : vector<8x1xf32> to vector<8x32xf32>
    %960 = arith.mulf %957, %959 : vector<8x32xf32>
    %961 = arith.addf %953, %960 : vector<8x32xf32>
    %962 = vector.extract_strided_slice %956 {offsets = [0, 32], sizes = [8, 32], strides = [1, 1]} : vector<8x256xf32> to vector<8x32xf32>
    %963 = vector.extract_strided_slice %949 {offsets = [0, 1], sizes = [8, 1], strides = [1, 1]} : vector<8x32xf32> to vector<8x1xf32>
    %964 = vector.broadcast %963 : vector<8x1xf32> to vector<8x32xf32>
    %965 = arith.mulf %962, %964 : vector<8x32xf32>
    %966 = arith.addf %961, %965 : vector<8x32xf32>
    %967 = vector.extract_strided_slice %956 {offsets = [0, 64], sizes = [8, 32], strides = [1, 1]} : vector<8x256xf32> to vector<8x32xf32>
    %968 = vector.extract_strided_slice %949 {offsets = [0, 2], sizes = [8, 1], strides = [1, 1]} : vector<8x32xf32> to vector<8x1xf32>
    %969 = vector.broadcast %968 : vector<8x1xf32> to vector<8x32xf32>
    %970 = arith.mulf %967, %969 : vector<8x32xf32>
    %971 = arith.addf %966, %970 : vector<8x32xf32>
    %972 = vector.extract_strided_slice %956 {offsets = [0, 96], sizes = [8, 32], strides = [1, 1]} : vector<8x256xf32> to vector<8x32xf32>
    %973 = vector.extract_strided_slice %949 {offsets = [0, 3], sizes = [8, 1], strides = [1, 1]} : vector<8x32xf32> to vector<8x1xf32>
    %974 = vector.broadcast %973 : vector<8x1xf32> to vector<8x32xf32>
    %975 = arith.mulf %972, %974 : vector<8x32xf32>
    %976 = arith.addf %971, %975 : vector<8x32xf32>
    %977 = vector.extract_strided_slice %956 {offsets = [0, 128], sizes = [8, 32], strides = [1, 1]} : vector<8x256xf32> to vector<8x32xf32>
    %978 = vector.extract_strided_slice %949 {offsets = [0, 4], sizes = [8, 1], strides = [1, 1]} : vector<8x32xf32> to vector<8x1xf32>
    %979 = vector.broadcast %978 : vector<8x1xf32> to vector<8x32xf32>
    %980 = arith.mulf %977, %979 : vector<8x32xf32>
    %981 = arith.addf %976, %980 : vector<8x32xf32>
    %982 = vector.extract_strided_slice %956 {offsets = [0, 160], sizes = [8, 32], strides = [1, 1]} : vector<8x256xf32> to vector<8x32xf32>
    %983 = vector.extract_strided_slice %949 {offsets = [0, 5], sizes = [8, 1], strides = [1, 1]} : vector<8x32xf32> to vector<8x1xf32>
    %984 = vector.broadcast %983 : vector<8x1xf32> to vector<8x32xf32>
    %985 = arith.mulf %982, %984 : vector<8x32xf32>
    %986 = arith.addf %981, %985 : vector<8x32xf32>
    %987 = vector.extract_strided_slice %956 {offsets = [0, 192], sizes = [8, 32], strides = [1, 1]} : vector<8x256xf32> to vector<8x32xf32>
    %988 = vector.extract_strided_slice %949 {offsets = [0, 6], sizes = [8, 1], strides = [1, 1]} : vector<8x32xf32> to vector<8x1xf32>
    %989 = vector.broadcast %988 : vector<8x1xf32> to vector<8x32xf32>
    %990 = arith.mulf %987, %989 : vector<8x32xf32>
    %991 = arith.addf %986, %990 : vector<8x32xf32>
    %992 = vector.extract_strided_slice %956 {offsets = [0, 224], sizes = [8, 32], strides = [1, 1]} : vector<8x256xf32> to vector<8x32xf32>
    %993 = vector.extract_strided_slice %949 {offsets = [0, 7], sizes = [8, 1], strides = [1, 1]} : vector<8x32xf32> to vector<8x1xf32>
    %994 = vector.broadcast %993 : vector<8x1xf32> to vector<8x32xf32>
    %995 = arith.mulf %992, %994 : vector<8x32xf32>
    %996 = arith.addf %991, %995 : vector<8x32xf32>
    %c0_149 = arith.constant 0 : index
    %c256_150 = arith.constant 256 : index
    %997 = vector.load %arg11[%c0_149, %c256_150] : memref<32x1024xbf16, #tpu.memory_space<vmem>>, vector<32x256xbf16>
    %cst_151 = arith.constant dense<0.000000e+00> : vector<8x256xf32>
    %998 = tpu.matmul %954, %997, %cst_151 {dimension_numbers = #tpu.dot_dimension_numbers<[1], [0], [0], [1], [0, 0, 1, 1], [], []>} : vector<8x32xbf16>, vector<32x256xbf16>, vector<8x256xf32> -> vector<8x256xf32>
    %999 = vector.extract_strided_slice %998 {offsets = [0, 0], sizes = [8, 32], strides = [1, 1]} : vector<8x256xf32> to vector<8x32xf32>
    %1000 = vector.extract_strided_slice %949 {offsets = [0, 8], sizes = [8, 1], strides = [1, 1]} : vector<8x32xf32> to vector<8x1xf32>
    %1001 = vector.broadcast %1000 : vector<8x1xf32> to vector<8x32xf32>
    %1002 = arith.mulf %999, %1001 : vector<8x32xf32>
    %1003 = arith.addf %996, %1002 : vector<8x32xf32>
    %1004 = vector.extract_strided_slice %998 {offsets = [0, 32], sizes = [8, 32], strides = [1, 1]} : vector<8x256xf32> to vector<8x32xf32>
    %1005 = vector.extract_strided_slice %949 {offsets = [0, 9], sizes = [8, 1], strides = [1, 1]} : vector<8x32xf32> to vector<8x1xf32>
    %1006 = vector.broadcast %1005 : vector<8x1xf32> to vector<8x32xf32>
    %1007 = arith.mulf %1004, %1006 : vector<8x32xf32>
    %1008 = arith.addf %1003, %1007 : vector<8x32xf32>
    %1009 = vector.extract_strided_slice %998 {offsets = [0, 64], sizes = [8, 32], strides = [1, 1]} : vector<8x256xf32> to vector<8x32xf32>
    %1010 = vector.extract_strided_slice %949 {offsets = [0, 10], sizes = [8, 1], strides = [1, 1]} : vector<8x32xf32> to vector<8x1xf32>
    %1011 = vector.broadcast %1010 : vector<8x1xf32> to vector<8x32xf32>
    %1012 = arith.mulf %1009, %1011 : vector<8x32xf32>
    %1013 = arith.addf %1008, %1012 : vector<8x32xf32>
    %1014 = vector.extract_strided_slice %998 {offsets = [0, 96], sizes = [8, 32], strides = [1, 1]} : vector<8x256xf32> to vector<8x32xf32>
    %1015 = vector.extract_strided_slice %949 {offsets = [0, 11], sizes = [8, 1], strides = [1, 1]} : vector<8x32xf32> to vector<8x1xf32>
    %1016 = vector.broadcast %1015 : vector<8x1xf32> to vector<8x32xf32>
    %1017 = arith.mulf %1014, %1016 : vector<8x32xf32>
    %1018 = arith.addf %1013, %1017 : vector<8x32xf32>
    %1019 = vector.extract_strided_slice %998 {offsets = [0, 128], sizes = [8, 32], strides = [1, 1]} : vector<8x256xf32> to vector<8x32xf32>
    %1020 = vector.extract_strided_slice %949 {offsets = [0, 12], sizes = [8, 1], strides = [1, 1]} : vector<8x32xf32> to vector<8x1xf32>
    %1021 = vector.broadcast %1020 : vector<8x1xf32> to vector<8x32xf32>
    %1022 = arith.mulf %1019, %1021 : vector<8x32xf32>
    %1023 = arith.addf %1018, %1022 : vector<8x32xf32>
    %1024 = vector.extract_strided_slice %998 {offsets = [0, 160], sizes = [8, 32], strides = [1, 1]} : vector<8x256xf32> to vector<8x32xf32>
    %1025 = vector.extract_strided_slice %949 {offsets = [0, 13], sizes = [8, 1], strides = [1, 1]} : vector<8x32xf32> to vector<8x1xf32>
    %1026 = vector.broadcast %1025 : vector<8x1xf32> to vector<8x32xf32>
    %1027 = arith.mulf %1024, %1026 : vector<8x32xf32>
    %1028 = arith.addf %1023, %1027 : vector<8x32xf32>
    %1029 = vector.extract_strided_slice %998 {offsets = [0, 192], sizes = [8, 32], strides = [1, 1]} : vector<8x256xf32> to vector<8x32xf32>
    %1030 = vector.extract_strided_slice %949 {offsets = [0, 14], sizes = [8, 1], strides = [1, 1]} : vector<8x32xf32> to vector<8x1xf32>
    %1031 = vector.broadcast %1030 : vector<8x1xf32> to vector<8x32xf32>
    %1032 = arith.mulf %1029, %1031 : vector<8x32xf32>
    %1033 = arith.addf %1028, %1032 : vector<8x32xf32>
    %1034 = vector.extract_strided_slice %998 {offsets = [0, 224], sizes = [8, 32], strides = [1, 1]} : vector<8x256xf32> to vector<8x32xf32>
    %1035 = vector.extract_strided_slice %949 {offsets = [0, 15], sizes = [8, 1], strides = [1, 1]} : vector<8x32xf32> to vector<8x1xf32>
    %1036 = vector.broadcast %1035 : vector<8x1xf32> to vector<8x32xf32>
    %1037 = arith.mulf %1034, %1036 : vector<8x32xf32>
    %1038 = arith.addf %1033, %1037 : vector<8x32xf32>
    %c0_152 = arith.constant 0 : index
    %c512_153 = arith.constant 512 : index
    %1039 = vector.load %arg11[%c0_152, %c512_153] : memref<32x1024xbf16, #tpu.memory_space<vmem>>, vector<32x256xbf16>
    %cst_154 = arith.constant dense<0.000000e+00> : vector<8x256xf32>
    %1040 = tpu.matmul %954, %1039, %cst_154 {dimension_numbers = #tpu.dot_dimension_numbers<[1], [0], [0], [1], [0, 0, 1, 1], [], []>} : vector<8x32xbf16>, vector<32x256xbf16>, vector<8x256xf32> -> vector<8x256xf32>
    %1041 = vector.extract_strided_slice %1040 {offsets = [0, 0], sizes = [8, 32], strides = [1, 1]} : vector<8x256xf32> to vector<8x32xf32>
    %1042 = vector.extract_strided_slice %949 {offsets = [0, 16], sizes = [8, 1], strides = [1, 1]} : vector<8x32xf32> to vector<8x1xf32>
    %1043 = vector.broadcast %1042 : vector<8x1xf32> to vector<8x32xf32>
    %1044 = arith.mulf %1041, %1043 : vector<8x32xf32>
    %1045 = arith.addf %1038, %1044 : vector<8x32xf32>
    %1046 = vector.extract_strided_slice %1040 {offsets = [0, 32], sizes = [8, 32], strides = [1, 1]} : vector<8x256xf32> to vector<8x32xf32>
    %1047 = vector.extract_strided_slice %949 {offsets = [0, 17], sizes = [8, 1], strides = [1, 1]} : vector<8x32xf32> to vector<8x1xf32>
    %1048 = vector.broadcast %1047 : vector<8x1xf32> to vector<8x32xf32>
    %1049 = arith.mulf %1046, %1048 : vector<8x32xf32>
    %1050 = arith.addf %1045, %1049 : vector<8x32xf32>
    %1051 = vector.extract_strided_slice %1040 {offsets = [0, 64], sizes = [8, 32], strides = [1, 1]} : vector<8x256xf32> to vector<8x32xf32>
    %1052 = vector.extract_strided_slice %949 {offsets = [0, 18], sizes = [8, 1], strides = [1, 1]} : vector<8x32xf32> to vector<8x1xf32>
    %1053 = vector.broadcast %1052 : vector<8x1xf32> to vector<8x32xf32>
    %1054 = arith.mulf %1051, %1053 : vector<8x32xf32>
    %1055 = arith.addf %1050, %1054 : vector<8x32xf32>
    %1056 = vector.extract_strided_slice %1040 {offsets = [0, 96], sizes = [8, 32], strides = [1, 1]} : vector<8x256xf32> to vector<8x32xf32>
    %1057 = vector.extract_strided_slice %949 {offsets = [0, 19], sizes = [8, 1], strides = [1, 1]} : vector<8x32xf32> to vector<8x1xf32>
    %1058 = vector.broadcast %1057 : vector<8x1xf32> to vector<8x32xf32>
    %1059 = arith.mulf %1056, %1058 : vector<8x32xf32>
    %1060 = arith.addf %1055, %1059 : vector<8x32xf32>
    %1061 = vector.extract_strided_slice %1040 {offsets = [0, 128], sizes = [8, 32], strides = [1, 1]} : vector<8x256xf32> to vector<8x32xf32>
    %1062 = vector.extract_strided_slice %949 {offsets = [0, 20], sizes = [8, 1], strides = [1, 1]} : vector<8x32xf32> to vector<8x1xf32>
    %1063 = vector.broadcast %1062 : vector<8x1xf32> to vector<8x32xf32>
    %1064 = arith.mulf %1061, %1063 : vector<8x32xf32>
    %1065 = arith.addf %1060, %1064 : vector<8x32xf32>
    %1066 = vector.extract_strided_slice %1040 {offsets = [0, 160], sizes = [8, 32], strides = [1, 1]} : vector<8x256xf32> to vector<8x32xf32>
    %1067 = vector.extract_strided_slice %949 {offsets = [0, 21], sizes = [8, 1], strides = [1, 1]} : vector<8x32xf32> to vector<8x1xf32>
    %1068 = vector.broadcast %1067 : vector<8x1xf32> to vector<8x32xf32>
    %1069 = arith.mulf %1066, %1068 : vector<8x32xf32>
    %1070 = arith.addf %1065, %1069 : vector<8x32xf32>
    %1071 = vector.extract_strided_slice %1040 {offsets = [0, 192], sizes = [8, 32], strides = [1, 1]} : vector<8x256xf32> to vector<8x32xf32>
    %1072 = vector.extract_strided_slice %949 {offsets = [0, 22], sizes = [8, 1], strides = [1, 1]} : vector<8x32xf32> to vector<8x1xf32>
    %1073 = vector.broadcast %1072 : vector<8x1xf32> to vector<8x32xf32>
    %1074 = arith.mulf %1071, %1073 : vector<8x32xf32>
    %1075 = arith.addf %1070, %1074 : vector<8x32xf32>
    %1076 = vector.extract_strided_slice %1040 {offsets = [0, 224], sizes = [8, 32], strides = [1, 1]} : vector<8x256xf32> to vector<8x32xf32>
    %1077 = vector.extract_strided_slice %949 {offsets = [0, 23], sizes = [8, 1], strides = [1, 1]} : vector<8x32xf32> to vector<8x1xf32>
    %1078 = vector.broadcast %1077 : vector<8x1xf32> to vector<8x32xf32>
    %1079 = arith.mulf %1076, %1078 : vector<8x32xf32>
    %1080 = arith.addf %1075, %1079 : vector<8x32xf32>
    %c0_155 = arith.constant 0 : index
    %c768_156 = arith.constant 768 : index
    %1081 = vector.load %arg11[%c0_155, %c768_156] : memref<32x1024xbf16, #tpu.memory_space<vmem>>, vector<32x256xbf16>
    %cst_157 = arith.constant dense<0.000000e+00> : vector<8x256xf32>
    %1082 = tpu.matmul %954, %1081, %cst_157 {dimension_numbers = #tpu.dot_dimension_numbers<[1], [0], [0], [1], [0, 0, 1, 1], [], []>} : vector<8x32xbf16>, vector<32x256xbf16>, vector<8x256xf32> -> vector<8x256xf32>
    %1083 = vector.extract_strided_slice %1082 {offsets = [0, 0], sizes = [8, 32], strides = [1, 1]} : vector<8x256xf32> to vector<8x32xf32>
    %1084 = vector.extract_strided_slice %949 {offsets = [0, 24], sizes = [8, 1], strides = [1, 1]} : vector<8x32xf32> to vector<8x1xf32>
    %1085 = vector.broadcast %1084 : vector<8x1xf32> to vector<8x32xf32>
    %1086 = arith.mulf %1083, %1085 : vector<8x32xf32>
    %1087 = arith.addf %1080, %1086 : vector<8x32xf32>
    %1088 = vector.extract_strided_slice %1082 {offsets = [0, 32], sizes = [8, 32], strides = [1, 1]} : vector<8x256xf32> to vector<8x32xf32>
    %1089 = vector.extract_strided_slice %949 {offsets = [0, 25], sizes = [8, 1], strides = [1, 1]} : vector<8x32xf32> to vector<8x1xf32>
    %1090 = vector.broadcast %1089 : vector<8x1xf32> to vector<8x32xf32>
    %1091 = arith.mulf %1088, %1090 : vector<8x32xf32>
    %1092 = arith.addf %1087, %1091 : vector<8x32xf32>
    %1093 = vector.extract_strided_slice %1082 {offsets = [0, 64], sizes = [8, 32], strides = [1, 1]} : vector<8x256xf32> to vector<8x32xf32>
    %1094 = vector.extract_strided_slice %949 {offsets = [0, 26], sizes = [8, 1], strides = [1, 1]} : vector<8x32xf32> to vector<8x1xf32>
    %1095 = vector.broadcast %1094 : vector<8x1xf32> to vector<8x32xf32>
    %1096 = arith.mulf %1093, %1095 : vector<8x32xf32>
    %1097 = arith.addf %1092, %1096 : vector<8x32xf32>
    %1098 = vector.extract_strided_slice %1082 {offsets = [0, 96], sizes = [8, 32], strides = [1, 1]} : vector<8x256xf32> to vector<8x32xf32>
    %1099 = vector.extract_strided_slice %949 {offsets = [0, 27], sizes = [8, 1], strides = [1, 1]} : vector<8x32xf32> to vector<8x1xf32>
    %1100 = vector.broadcast %1099 : vector<8x1xf32> to vector<8x32xf32>
    %1101 = arith.mulf %1098, %1100 : vector<8x32xf32>
    %1102 = arith.addf %1097, %1101 : vector<8x32xf32>
    %1103 = vector.extract_strided_slice %1082 {offsets = [0, 128], sizes = [8, 32], strides = [1, 1]} : vector<8x256xf32> to vector<8x32xf32>
    %1104 = vector.extract_strided_slice %949 {offsets = [0, 28], sizes = [8, 1], strides = [1, 1]} : vector<8x32xf32> to vector<8x1xf32>
    %1105 = vector.broadcast %1104 : vector<8x1xf32> to vector<8x32xf32>
    %1106 = arith.mulf %1103, %1105 : vector<8x32xf32>
    %1107 = arith.addf %1102, %1106 : vector<8x32xf32>
    %1108 = vector.extract_strided_slice %1082 {offsets = [0, 160], sizes = [8, 32], strides = [1, 1]} : vector<8x256xf32> to vector<8x32xf32>
    %1109 = vector.extract_strided_slice %949 {offsets = [0, 29], sizes = [8, 1], strides = [1, 1]} : vector<8x32xf32> to vector<8x1xf32>
    %1110 = vector.broadcast %1109 : vector<8x1xf32> to vector<8x32xf32>
    %1111 = arith.mulf %1108, %1110 : vector<8x32xf32>
    %1112 = arith.addf %1107, %1111 : vector<8x32xf32>
    %1113 = vector.extract_strided_slice %1082 {offsets = [0, 192], sizes = [8, 32], strides = [1, 1]} : vector<8x256xf32> to vector<8x32xf32>
    %1114 = vector.extract_strided_slice %949 {offsets = [0, 30], sizes = [8, 1], strides = [1, 1]} : vector<8x32xf32> to vector<8x1xf32>
    %1115 = vector.broadcast %1114 : vector<8x1xf32> to vector<8x32xf32>
    %1116 = arith.mulf %1113, %1115 : vector<8x32xf32>
    %1117 = arith.addf %1112, %1116 : vector<8x32xf32>
    %1118 = vector.extract_strided_slice %1082 {offsets = [0, 224], sizes = [8, 32], strides = [1, 1]} : vector<8x256xf32> to vector<8x32xf32>
    %1119 = vector.extract_strided_slice %949 {offsets = [0, 31], sizes = [8, 1], strides = [1, 1]} : vector<8x32xf32> to vector<8x1xf32>
    %1120 = vector.broadcast %1119 : vector<8x1xf32> to vector<8x32xf32>
    %1121 = arith.mulf %1118, %1120 : vector<8x32xf32>
    %1122 = arith.addf %1117, %1121 : vector<8x32xf32>
    %cst_158 = arith.constant dense<0.000000e+00> : vector<8x32xf32>
    %1123 = tpu.matmul %944, %3, %cst_158 {dimension_numbers = #tpu.dot_dimension_numbers<[1], [0], [0], [1], [0, 0, 1, 1], [], []>} : vector<8x32xf32>, vector<32x32xf32>, vector<8x32xf32> -> vector<8x32xf32>
    %1124 = arith.addf %1123, %6 : vector<8x32xf32>
    %1125 = arith.addf %1124, %951 : vector<8x32xf32>
    %cst_159 = arith.constant 0.000000e+00 : f32
    %1126 = vector.broadcast %cst_159 : f32 to vector<8x32xf32>
    %1127 = arith.maximumf %1125, %1126 : vector<8x32xf32>
    %cst_160 = arith.constant 0.000000e+00 : f32
    %1128 = vector.broadcast %cst_160 : f32 to vector<8x32xf32>
    %1129 = arith.mulf %944, %1128 : vector<8x32xf32>
    %cst_161 = arith.constant 1.000000e+00 : f32
    %1130 = vector.broadcast %cst_161 : f32 to vector<8x32xf32>
    %1131 = arith.mulf %1127, %1130 : vector<8x32xf32>
    %1132 = arith.addf %1129, %1131 : vector<8x32xf32>
    %c5_162 = arith.constant 5 : index
    %c0_163 = arith.constant 0 : index
    %c0_164 = arith.constant 0 : index
    %1133 = vector.load %arg9[%c5_162, %c0_163, %c0_164] : memref<8x8x32xf32, #tpu.memory_space<vmem>>, vector<1x8x32xf32>
    %1134 = vector.shape_cast %1133 : vector<1x8x32xf32> to vector<8x32xf32>
    %1135 = vector.shape_cast %1122 : vector<8x32xf32> to vector<1x8x32xf32>
    tpu.vector_store %arg9[%c5_162, %c0_163, %c0_164], %1135 {strides = array<i32>} : memref<8x8x32xf32, #tpu.memory_space<vmem>>, vector<1x8x32xf32>,
    %c6 = arith.constant 6 : index
    %c0_165 = arith.constant 0 : index
    %c0_166 = arith.constant 0 : index
    %1136 = vector.load %arg2[%c6, %c0_165, %c0_166] : memref<8x8x32xf32, #tpu.memory_space<vmem>>, vector<1x8x32xf32>
    %1137 = vector.shape_cast %1136 : vector<1x8x32xf32> to vector<8x32xf32>
    %c6_167 = arith.constant 6 : index
    %c0_168 = arith.constant 0 : index
    %c0_169 = arith.constant 0 : index
    %1138 = vector.load %arg3[%c6_167, %c0_168, %c0_169] : memref<8x8x32xf32, #tpu.memory_space<vmem>>, vector<1x8x32xf32>
    %1139 = vector.shape_cast %1138 : vector<1x8x32xf32> to vector<8x32xf32>
    %c6_170 = arith.constant 6 : index
    %c0_171 = arith.constant 0 : index
    %c0_172 = arith.constant 0 : index
    %1140 = vector.load %arg4[%c6_170, %c0_171, %c0_172] : memref<8x8x32xf32, #tpu.memory_space<vmem>>, vector<1x8x32xf32>
    %1141 = vector.shape_cast %1140 : vector<1x8x32xf32> to vector<8x32xf32>
    %1142 = arith.truncf %1132 : vector<8x32xf32> to vector<8x32xbf16>
    %c0_173 = arith.constant 0 : index
    %c0_174 = arith.constant 0 : index
    %1143 = vector.load %arg11[%c0_173, %c0_174] : memref<32x1024xbf16, #tpu.memory_space<vmem>>, vector<32x256xbf16>
    %cst_175 = arith.constant dense<0.000000e+00> : vector<8x256xf32>
    %1144 = tpu.matmul %1142, %1143, %cst_175 {dimension_numbers = #tpu.dot_dimension_numbers<[1], [0], [0], [1], [0, 0, 1, 1], [], []>} : vector<8x32xbf16>, vector<32x256xbf16>, vector<8x256xf32> -> vector<8x256xf32>
    %1145 = vector.extract_strided_slice %1144 {offsets = [0, 0], sizes = [8, 32], strides = [1, 1]} : vector<8x256xf32> to vector<8x32xf32>
    %1146 = vector.extract_strided_slice %1137 {offsets = [0, 0], sizes = [8, 1], strides = [1, 1]} : vector<8x32xf32> to vector<8x1xf32>
    %1147 = vector.broadcast %1146 : vector<8x1xf32> to vector<8x32xf32>
    %1148 = arith.mulf %1145, %1147 : vector<8x32xf32>
    %1149 = arith.addf %1141, %1148 : vector<8x32xf32>
    %1150 = vector.extract_strided_slice %1144 {offsets = [0, 32], sizes = [8, 32], strides = [1, 1]} : vector<8x256xf32> to vector<8x32xf32>
    %1151 = vector.extract_strided_slice %1137 {offsets = [0, 1], sizes = [8, 1], strides = [1, 1]} : vector<8x32xf32> to vector<8x1xf32>
    %1152 = vector.broadcast %1151 : vector<8x1xf32> to vector<8x32xf32>
    %1153 = arith.mulf %1150, %1152 : vector<8x32xf32>
    %1154 = arith.addf %1149, %1153 : vector<8x32xf32>
    %1155 = vector.extract_strided_slice %1144 {offsets = [0, 64], sizes = [8, 32], strides = [1, 1]} : vector<8x256xf32> to vector<8x32xf32>
    %1156 = vector.extract_strided_slice %1137 {offsets = [0, 2], sizes = [8, 1], strides = [1, 1]} : vector<8x32xf32> to vector<8x1xf32>
    %1157 = vector.broadcast %1156 : vector<8x1xf32> to vector<8x32xf32>
    %1158 = arith.mulf %1155, %1157 : vector<8x32xf32>
    %1159 = arith.addf %1154, %1158 : vector<8x32xf32>
    %1160 = vector.extract_strided_slice %1144 {offsets = [0, 96], sizes = [8, 32], strides = [1, 1]} : vector<8x256xf32> to vector<8x32xf32>
    %1161 = vector.extract_strided_slice %1137 {offsets = [0, 3], sizes = [8, 1], strides = [1, 1]} : vector<8x32xf32> to vector<8x1xf32>
    %1162 = vector.broadcast %1161 : vector<8x1xf32> to vector<8x32xf32>
    %1163 = arith.mulf %1160, %1162 : vector<8x32xf32>
    %1164 = arith.addf %1159, %1163 : vector<8x32xf32>
    %1165 = vector.extract_strided_slice %1144 {offsets = [0, 128], sizes = [8, 32], strides = [1, 1]} : vector<8x256xf32> to vector<8x32xf32>
    %1166 = vector.extract_strided_slice %1137 {offsets = [0, 4], sizes = [8, 1], strides = [1, 1]} : vector<8x32xf32> to vector<8x1xf32>
    %1167 = vector.broadcast %1166 : vector<8x1xf32> to vector<8x32xf32>
    %1168 = arith.mulf %1165, %1167 : vector<8x32xf32>
    %1169 = arith.addf %1164, %1168 : vector<8x32xf32>
    %1170 = vector.extract_strided_slice %1144 {offsets = [0, 160], sizes = [8, 32], strides = [1, 1]} : vector<8x256xf32> to vector<8x32xf32>
    %1171 = vector.extract_strided_slice %1137 {offsets = [0, 5], sizes = [8, 1], strides = [1, 1]} : vector<8x32xf32> to vector<8x1xf32>
    %1172 = vector.broadcast %1171 : vector<8x1xf32> to vector<8x32xf32>
    %1173 = arith.mulf %1170, %1172 : vector<8x32xf32>
    %1174 = arith.addf %1169, %1173 : vector<8x32xf32>
    %1175 = vector.extract_strided_slice %1144 {offsets = [0, 192], sizes = [8, 32], strides = [1, 1]} : vector<8x256xf32> to vector<8x32xf32>
    %1176 = vector.extract_strided_slice %1137 {offsets = [0, 6], sizes = [8, 1], strides = [1, 1]} : vector<8x32xf32> to vector<8x1xf32>
    %1177 = vector.broadcast %1176 : vector<8x1xf32> to vector<8x32xf32>
    %1178 = arith.mulf %1175, %1177 : vector<8x32xf32>
    %1179 = arith.addf %1174, %1178 : vector<8x32xf32>
    %1180 = vector.extract_strided_slice %1144 {offsets = [0, 224], sizes = [8, 32], strides = [1, 1]} : vector<8x256xf32> to vector<8x32xf32>
    %1181 = vector.extract_strided_slice %1137 {offsets = [0, 7], sizes = [8, 1], strides = [1, 1]} : vector<8x32xf32> to vector<8x1xf32>
    %1182 = vector.broadcast %1181 : vector<8x1xf32> to vector<8x32xf32>
    %1183 = arith.mulf %1180, %1182 : vector<8x32xf32>
    %1184 = arith.addf %1179, %1183 : vector<8x32xf32>
    %c0_176 = arith.constant 0 : index
    %c256_177 = arith.constant 256 : index
    %1185 = vector.load %arg11[%c0_176, %c256_177] : memref<32x1024xbf16, #tpu.memory_space<vmem>>, vector<32x256xbf16>
    %cst_178 = arith.constant dense<0.000000e+00> : vector<8x256xf32>
    %1186 = tpu.matmul %1142, %1185, %cst_178 {dimension_numbers = #tpu.dot_dimension_numbers<[1], [0], [0], [1], [0, 0, 1, 1], [], []>} : vector<8x32xbf16>, vector<32x256xbf16>, vector<8x256xf32> -> vector<8x256xf32>
    %1187 = vector.extract_strided_slice %1186 {offsets = [0, 0], sizes = [8, 32], strides = [1, 1]} : vector<8x256xf32> to vector<8x32xf32>
    %1188 = vector.extract_strided_slice %1137 {offsets = [0, 8], sizes = [8, 1], strides = [1, 1]} : vector<8x32xf32> to vector<8x1xf32>
    %1189 = vector.broadcast %1188 : vector<8x1xf32> to vector<8x32xf32>
    %1190 = arith.mulf %1187, %1189 : vector<8x32xf32>
    %1191 = arith.addf %1184, %1190 : vector<8x32xf32>
    %1192 = vector.extract_strided_slice %1186 {offsets = [0, 32], sizes = [8, 32], strides = [1, 1]} : vector<8x256xf32> to vector<8x32xf32>
    %1193 = vector.extract_strided_slice %1137 {offsets = [0, 9], sizes = [8, 1], strides = [1, 1]} : vector<8x32xf32> to vector<8x1xf32>
    %1194 = vector.broadcast %1193 : vector<8x1xf32> to vector<8x32xf32>
    %1195 = arith.mulf %1192, %1194 : vector<8x32xf32>
    %1196 = arith.addf %1191, %1195 : vector<8x32xf32>
    %1197 = vector.extract_strided_slice %1186 {offsets = [0, 64], sizes = [8, 32], strides = [1, 1]} : vector<8x256xf32> to vector<8x32xf32>
    %1198 = vector.extract_strided_slice %1137 {offsets = [0, 10], sizes = [8, 1], strides = [1, 1]} : vector<8x32xf32> to vector<8x1xf32>
    %1199 = vector.broadcast %1198 : vector<8x1xf32> to vector<8x32xf32>
    %1200 = arith.mulf %1197, %1199 : vector<8x32xf32>
    %1201 = arith.addf %1196, %1200 : vector<8x32xf32>
    %1202 = vector.extract_strided_slice %1186 {offsets = [0, 96], sizes = [8, 32], strides = [1, 1]} : vector<8x256xf32> to vector<8x32xf32>
    %1203 = vector.extract_strided_slice %1137 {offsets = [0, 11], sizes = [8, 1], strides = [1, 1]} : vector<8x32xf32> to vector<8x1xf32>
    %1204 = vector.broadcast %1203 : vector<8x1xf32> to vector<8x32xf32>
    %1205 = arith.mulf %1202, %1204 : vector<8x32xf32>
    %1206 = arith.addf %1201, %1205 : vector<8x32xf32>
    %1207 = vector.extract_strided_slice %1186 {offsets = [0, 128], sizes = [8, 32], strides = [1, 1]} : vector<8x256xf32> to vector<8x32xf32>
    %1208 = vector.extract_strided_slice %1137 {offsets = [0, 12], sizes = [8, 1], strides = [1, 1]} : vector<8x32xf32> to vector<8x1xf32>
    %1209 = vector.broadcast %1208 : vector<8x1xf32> to vector<8x32xf32>
    %1210 = arith.mulf %1207, %1209 : vector<8x32xf32>
    %1211 = arith.addf %1206, %1210 : vector<8x32xf32>
    %1212 = vector.extract_strided_slice %1186 {offsets = [0, 160], sizes = [8, 32], strides = [1, 1]} : vector<8x256xf32> to vector<8x32xf32>
    %1213 = vector.extract_strided_slice %1137 {offsets = [0, 13], sizes = [8, 1], strides = [1, 1]} : vector<8x32xf32> to vector<8x1xf32>
    %1214 = vector.broadcast %1213 : vector<8x1xf32> to vector<8x32xf32>
    %1215 = arith.mulf %1212, %1214 : vector<8x32xf32>
    %1216 = arith.addf %1211, %1215 : vector<8x32xf32>
    %1217 = vector.extract_strided_slice %1186 {offsets = [0, 192], sizes = [8, 32], strides = [1, 1]} : vector<8x256xf32> to vector<8x32xf32>
    %1218 = vector.extract_strided_slice %1137 {offsets = [0, 14], sizes = [8, 1], strides = [1, 1]} : vector<8x32xf32> to vector<8x1xf32>
    %1219 = vector.broadcast %1218 : vector<8x1xf32> to vector<8x32xf32>
    %1220 = arith.mulf %1217, %1219 : vector<8x32xf32>
    %1221 = arith.addf %1216, %1220 : vector<8x32xf32>
    %1222 = vector.extract_strided_slice %1186 {offsets = [0, 224], sizes = [8, 32], strides = [1, 1]} : vector<8x256xf32> to vector<8x32xf32>
    %1223 = vector.extract_strided_slice %1137 {offsets = [0, 15], sizes = [8, 1], strides = [1, 1]} : vector<8x32xf32> to vector<8x1xf32>
    %1224 = vector.broadcast %1223 : vector<8x1xf32> to vector<8x32xf32>
    %1225 = arith.mulf %1222, %1224 : vector<8x32xf32>
    %1226 = arith.addf %1221, %1225 : vector<8x32xf32>
    %c0_179 = arith.constant 0 : index
    %c512_180 = arith.constant 512 : index
    %1227 = vector.load %arg11[%c0_179, %c512_180] : memref<32x1024xbf16, #tpu.memory_space<vmem>>, vector<32x256xbf16>
    %cst_181 = arith.constant dense<0.000000e+00> : vector<8x256xf32>
    %1228 = tpu.matmul %1142, %1227, %cst_181 {dimension_numbers = #tpu.dot_dimension_numbers<[1], [0], [0], [1], [0, 0, 1, 1], [], []>} : vector<8x32xbf16>, vector<32x256xbf16>, vector<8x256xf32> -> vector<8x256xf32>
    %1229 = vector.extract_strided_slice %1228 {offsets = [0, 0], sizes = [8, 32], strides = [1, 1]} : vector<8x256xf32> to vector<8x32xf32>
    %1230 = vector.extract_strided_slice %1137 {offsets = [0, 16], sizes = [8, 1], strides = [1, 1]} : vector<8x32xf32> to vector<8x1xf32>
    %1231 = vector.broadcast %1230 : vector<8x1xf32> to vector<8x32xf32>
    %1232 = arith.mulf %1229, %1231 : vector<8x32xf32>
    %1233 = arith.addf %1226, %1232 : vector<8x32xf32>
    %1234 = vector.extract_strided_slice %1228 {offsets = [0, 32], sizes = [8, 32], strides = [1, 1]} : vector<8x256xf32> to vector<8x32xf32>
    %1235 = vector.extract_strided_slice %1137 {offsets = [0, 17], sizes = [8, 1], strides = [1, 1]} : vector<8x32xf32> to vector<8x1xf32>
    %1236 = vector.broadcast %1235 : vector<8x1xf32> to vector<8x32xf32>
    %1237 = arith.mulf %1234, %1236 : vector<8x32xf32>
    %1238 = arith.addf %1233, %1237 : vector<8x32xf32>
    %1239 = vector.extract_strided_slice %1228 {offsets = [0, 64], sizes = [8, 32], strides = [1, 1]} : vector<8x256xf32> to vector<8x32xf32>
    %1240 = vector.extract_strided_slice %1137 {offsets = [0, 18], sizes = [8, 1], strides = [1, 1]} : vector<8x32xf32> to vector<8x1xf32>
    %1241 = vector.broadcast %1240 : vector<8x1xf32> to vector<8x32xf32>
    %1242 = arith.mulf %1239, %1241 : vector<8x32xf32>
    %1243 = arith.addf %1238, %1242 : vector<8x32xf32>
    %1244 = vector.extract_strided_slice %1228 {offsets = [0, 96], sizes = [8, 32], strides = [1, 1]} : vector<8x256xf32> to vector<8x32xf32>
    %1245 = vector.extract_strided_slice %1137 {offsets = [0, 19], sizes = [8, 1], strides = [1, 1]} : vector<8x32xf32> to vector<8x1xf32>
    %1246 = vector.broadcast %1245 : vector<8x1xf32> to vector<8x32xf32>
    %1247 = arith.mulf %1244, %1246 : vector<8x32xf32>
    %1248 = arith.addf %1243, %1247 : vector<8x32xf32>
    %1249 = vector.extract_strided_slice %1228 {offsets = [0, 128], sizes = [8, 32], strides = [1, 1]} : vector<8x256xf32> to vector<8x32xf32>
    %1250 = vector.extract_strided_slice %1137 {offsets = [0, 20], sizes = [8, 1], strides = [1, 1]} : vector<8x32xf32> to vector<8x1xf32>
    %1251 = vector.broadcast %1250 : vector<8x1xf32> to vector<8x32xf32>
    %1252 = arith.mulf %1249, %1251 : vector<8x32xf32>
    %1253 = arith.addf %1248, %1252 : vector<8x32xf32>
    %1254 = vector.extract_strided_slice %1228 {offsets = [0, 160], sizes = [8, 32], strides = [1, 1]} : vector<8x256xf32> to vector<8x32xf32>
    %1255 = vector.extract_strided_slice %1137 {offsets = [0, 21], sizes = [8, 1], strides = [1, 1]} : vector<8x32xf32> to vector<8x1xf32>
    %1256 = vector.broadcast %1255 : vector<8x1xf32> to vector<8x32xf32>
    %1257 = arith.mulf %1254, %1256 : vector<8x32xf32>
    %1258 = arith.addf %1253, %1257 : vector<8x32xf32>
    %1259 = vector.extract_strided_slice %1228 {offsets = [0, 192], sizes = [8, 32], strides = [1, 1]} : vector<8x256xf32> to vector<8x32xf32>
    %1260 = vector.extract_strided_slice %1137 {offsets = [0, 22], sizes = [8, 1], strides = [1, 1]} : vector<8x32xf32> to vector<8x1xf32>
    %1261 = vector.broadcast %1260 : vector<8x1xf32> to vector<8x32xf32>
    %1262 = arith.mulf %1259, %1261 : vector<8x32xf32>
    %1263 = arith.addf %1258, %1262 : vector<8x32xf32>
    %1264 = vector.extract_strided_slice %1228 {offsets = [0, 224], sizes = [8, 32], strides = [1, 1]} : vector<8x256xf32> to vector<8x32xf32>
    %1265 = vector.extract_strided_slice %1137 {offsets = [0, 23], sizes = [8, 1], strides = [1, 1]} : vector<8x32xf32> to vector<8x1xf32>
    %1266 = vector.broadcast %1265 : vector<8x1xf32> to vector<8x32xf32>
    %1267 = arith.mulf %1264, %1266 : vector<8x32xf32>
    %1268 = arith.addf %1263, %1267 : vector<8x32xf32>
    %c0_182 = arith.constant 0 : index
    %c768_183 = arith.constant 768 : index
    %1269 = vector.load %arg11[%c0_182, %c768_183] : memref<32x1024xbf16, #tpu.memory_space<vmem>>, vector<32x256xbf16>
    %cst_184 = arith.constant dense<0.000000e+00> : vector<8x256xf32>
    %1270 = tpu.matmul %1142, %1269, %cst_184 {dimension_numbers = #tpu.dot_dimension_numbers<[1], [0], [0], [1], [0, 0, 1, 1], [], []>} : vector<8x32xbf16>, vector<32x256xbf16>, vector<8x256xf32> -> vector<8x256xf32>
    %1271 = vector.extract_strided_slice %1270 {offsets = [0, 0], sizes = [8, 32], strides = [1, 1]} : vector<8x256xf32> to vector<8x32xf32>
    %1272 = vector.extract_strided_slice %1137 {offsets = [0, 24], sizes = [8, 1], strides = [1, 1]} : vector<8x32xf32> to vector<8x1xf32>
    %1273 = vector.broadcast %1272 : vector<8x1xf32> to vector<8x32xf32>
    %1274 = arith.mulf %1271, %1273 : vector<8x32xf32>
    %1275 = arith.addf %1268, %1274 : vector<8x32xf32>
    %1276 = vector.extract_strided_slice %1270 {offsets = [0, 32], sizes = [8, 32], strides = [1, 1]} : vector<8x256xf32> to vector<8x32xf32>
    %1277 = vector.extract_strided_slice %1137 {offsets = [0, 25], sizes = [8, 1], strides = [1, 1]} : vector<8x32xf32> to vector<8x1xf32>
    %1278 = vector.broadcast %1277 : vector<8x1xf32> to vector<8x32xf32>
    %1279 = arith.mulf %1276, %1278 : vector<8x32xf32>
    %1280 = arith.addf %1275, %1279 : vector<8x32xf32>
    %1281 = vector.extract_strided_slice %1270 {offsets = [0, 64], sizes = [8, 32], strides = [1, 1]} : vector<8x256xf32> to vector<8x32xf32>
    %1282 = vector.extract_strided_slice %1137 {offsets = [0, 26], sizes = [8, 1], strides = [1, 1]} : vector<8x32xf32> to vector<8x1xf32>
    %1283 = vector.broadcast %1282 : vector<8x1xf32> to vector<8x32xf32>
    %1284 = arith.mulf %1281, %1283 : vector<8x32xf32>
    %1285 = arith.addf %1280, %1284 : vector<8x32xf32>
    %1286 = vector.extract_strided_slice %1270 {offsets = [0, 96], sizes = [8, 32], strides = [1, 1]} : vector<8x256xf32> to vector<8x32xf32>
    %1287 = vector.extract_strided_slice %1137 {offsets = [0, 27], sizes = [8, 1], strides = [1, 1]} : vector<8x32xf32> to vector<8x1xf32>
    %1288 = vector.broadcast %1287 : vector<8x1xf32> to vector<8x32xf32>
    %1289 = arith.mulf %1286, %1288 : vector<8x32xf32>
    %1290 = arith.addf %1285, %1289 : vector<8x32xf32>
    %1291 = vector.extract_strided_slice %1270 {offsets = [0, 128], sizes = [8, 32], strides = [1, 1]} : vector<8x256xf32> to vector<8x32xf32>
    %1292 = vector.extract_strided_slice %1137 {offsets = [0, 28], sizes = [8, 1], strides = [1, 1]} : vector<8x32xf32> to vector<8x1xf32>
    %1293 = vector.broadcast %1292 : vector<8x1xf32> to vector<8x32xf32>
    %1294 = arith.mulf %1291, %1293 : vector<8x32xf32>
    %1295 = arith.addf %1290, %1294 : vector<8x32xf32>
    %1296 = vector.extract_strided_slice %1270 {offsets = [0, 160], sizes = [8, 32], strides = [1, 1]} : vector<8x256xf32> to vector<8x32xf32>
    %1297 = vector.extract_strided_slice %1137 {offsets = [0, 29], sizes = [8, 1], strides = [1, 1]} : vector<8x32xf32> to vector<8x1xf32>
    %1298 = vector.broadcast %1297 : vector<8x1xf32> to vector<8x32xf32>
    %1299 = arith.mulf %1296, %1298 : vector<8x32xf32>
    %1300 = arith.addf %1295, %1299 : vector<8x32xf32>
    %1301 = vector.extract_strided_slice %1270 {offsets = [0, 192], sizes = [8, 32], strides = [1, 1]} : vector<8x256xf32> to vector<8x32xf32>
    %1302 = vector.extract_strided_slice %1137 {offsets = [0, 30], sizes = [8, 1], strides = [1, 1]} : vector<8x32xf32> to vector<8x1xf32>
    %1303 = vector.broadcast %1302 : vector<8x1xf32> to vector<8x32xf32>
    %1304 = arith.mulf %1301, %1303 : vector<8x32xf32>
    %1305 = arith.addf %1300, %1304 : vector<8x32xf32>
    %1306 = vector.extract_strided_slice %1270 {offsets = [0, 224], sizes = [8, 32], strides = [1, 1]} : vector<8x256xf32> to vector<8x32xf32>
    %1307 = vector.extract_strided_slice %1137 {offsets = [0, 31], sizes = [8, 1], strides = [1, 1]} : vector<8x32xf32> to vector<8x1xf32>
    %1308 = vector.broadcast %1307 : vector<8x1xf32> to vector<8x32xf32>
    %1309 = arith.mulf %1306, %1308 : vector<8x32xf32>
    %1310 = arith.addf %1305, %1309 : vector<8x32xf32>
    %cst_185 = arith.constant dense<0.000000e+00> : vector<8x32xf32>
    %1311 = tpu.matmul %1132, %3, %cst_185 {dimension_numbers = #tpu.dot_dimension_numbers<[1], [0], [0], [1], [0, 0, 1, 1], [], []>} : vector<8x32xf32>, vector<32x32xf32>, vector<8x32xf32> -> vector<8x32xf32>
    %1312 = arith.addf %1311, %6 : vector<8x32xf32>
    %1313 = arith.addf %1312, %1139 : vector<8x32xf32>
    %cst_186 = arith.constant 0.000000e+00 : f32
    %1314 = vector.broadcast %cst_186 : f32 to vector<8x32xf32>
    %1315 = arith.maximumf %1313, %1314 : vector<8x32xf32>
    %cst_187 = arith.constant 0.000000e+00 : f32
    %1316 = vector.broadcast %cst_187 : f32 to vector<8x32xf32>
    %1317 = arith.mulf %1132, %1316 : vector<8x32xf32>
    %cst_188 = arith.constant 1.000000e+00 : f32
    %1318 = vector.broadcast %cst_188 : f32 to vector<8x32xf32>
    %1319 = arith.mulf %1315, %1318 : vector<8x32xf32>
    %1320 = arith.addf %1317, %1319 : vector<8x32xf32>
    %c6_189 = arith.constant 6 : index
    %c0_190 = arith.constant 0 : index
    %c0_191 = arith.constant 0 : index
    %1321 = vector.load %arg9[%c6_189, %c0_190, %c0_191] : memref<8x8x32xf32, #tpu.memory_space<vmem>>, vector<1x8x32xf32>
    %1322 = vector.shape_cast %1321 : vector<1x8x32xf32> to vector<8x32xf32>
    %1323 = vector.shape_cast %1310 : vector<8x32xf32> to vector<1x8x32xf32>
    tpu.vector_store %arg9[%c6_189, %c0_190, %c0_191], %1323 {strides = array<i32>} : memref<8x8x32xf32, #tpu.memory_space<vmem>>, vector<1x8x32xf32>,
    %c7 = arith.constant 7 : index
    %c0_192 = arith.constant 0 : index
    %c0_193 = arith.constant 0 : index
    %1324 = vector.load %arg2[%c7, %c0_192, %c0_193] : memref<8x8x32xf32, #tpu.memory_space<vmem>>, vector<1x8x32xf32>
    %1325 = vector.shape_cast %1324 : vector<1x8x32xf32> to vector<8x32xf32>
    %c7_194 = arith.constant 7 : index
    %c0_195 = arith.constant 0 : index
    %c0_196 = arith.constant 0 : index
    %1326 = vector.load %arg3[%c7_194, %c0_195, %c0_196] : memref<8x8x32xf32, #tpu.memory_space<vmem>>, vector<1x8x32xf32>
    %1327 = vector.shape_cast %1326 : vector<1x8x32xf32> to vector<8x32xf32>
    %c7_197 = arith.constant 7 : index
    %c0_198 = arith.constant 0 : index
    %c0_199 = arith.constant 0 : index
    %1328 = vector.load %arg4[%c7_197, %c0_198, %c0_199] : memref<8x8x32xf32, #tpu.memory_space<vmem>>, vector<1x8x32xf32>
    %1329 = vector.shape_cast %1328 : vector<1x8x32xf32> to vector<8x32xf32>
    %1330 = arith.truncf %1320 : vector<8x32xf32> to vector<8x32xbf16>
    %c0_200 = arith.constant 0 : index
    %c0_201 = arith.constant 0 : index
    %1331 = vector.load %arg11[%c0_200, %c0_201] : memref<32x1024xbf16, #tpu.memory_space<vmem>>, vector<32x256xbf16>
    %cst_202 = arith.constant dense<0.000000e+00> : vector<8x256xf32>
    %1332 = tpu.matmul %1330, %1331, %cst_202 {dimension_numbers = #tpu.dot_dimension_numbers<[1], [0], [0], [1], [0, 0, 1, 1], [], []>} : vector<8x32xbf16>, vector<32x256xbf16>, vector<8x256xf32> -> vector<8x256xf32>
    %1333 = vector.extract_strided_slice %1332 {offsets = [0, 0], sizes = [8, 32], strides = [1, 1]} : vector<8x256xf32> to vector<8x32xf32>
    %1334 = vector.extract_strided_slice %1325 {offsets = [0, 0], sizes = [8, 1], strides = [1, 1]} : vector<8x32xf32> to vector<8x1xf32>
    %1335 = vector.broadcast %1334 : vector<8x1xf32> to vector<8x32xf32>
    %1336 = arith.mulf %1333, %1335 : vector<8x32xf32>
    %1337 = arith.addf %1329, %1336 : vector<8x32xf32>
    %1338 = vector.extract_strided_slice %1332 {offsets = [0, 32], sizes = [8, 32], strides = [1, 1]} : vector<8x256xf32> to vector<8x32xf32>
    %1339 = vector.extract_strided_slice %1325 {offsets = [0, 1], sizes = [8, 1], strides = [1, 1]} : vector<8x32xf32> to vector<8x1xf32>
    %1340 = vector.broadcast %1339 : vector<8x1xf32> to vector<8x32xf32>
    %1341 = arith.mulf %1338, %1340 : vector<8x32xf32>
    %1342 = arith.addf %1337, %1341 : vector<8x32xf32>
    %1343 = vector.extract_strided_slice %1332 {offsets = [0, 64], sizes = [8, 32], strides = [1, 1]} : vector<8x256xf32> to vector<8x32xf32>
    %1344 = vector.extract_strided_slice %1325 {offsets = [0, 2], sizes = [8, 1], strides = [1, 1]} : vector<8x32xf32> to vector<8x1xf32>
    %1345 = vector.broadcast %1344 : vector<8x1xf32> to vector<8x32xf32>
    %1346 = arith.mulf %1343, %1345 : vector<8x32xf32>
    %1347 = arith.addf %1342, %1346 : vector<8x32xf32>
    %1348 = vector.extract_strided_slice %1332 {offsets = [0, 96], sizes = [8, 32], strides = [1, 1]} : vector<8x256xf32> to vector<8x32xf32>
    %1349 = vector.extract_strided_slice %1325 {offsets = [0, 3], sizes = [8, 1], strides = [1, 1]} : vector<8x32xf32> to vector<8x1xf32>
    %1350 = vector.broadcast %1349 : vector<8x1xf32> to vector<8x32xf32>
    %1351 = arith.mulf %1348, %1350 : vector<8x32xf32>
    %1352 = arith.addf %1347, %1351 : vector<8x32xf32>
    %1353 = vector.extract_strided_slice %1332 {offsets = [0, 128], sizes = [8, 32], strides = [1, 1]} : vector<8x256xf32> to vector<8x32xf32>
    %1354 = vector.extract_strided_slice %1325 {offsets = [0, 4], sizes = [8, 1], strides = [1, 1]} : vector<8x32xf32> to vector<8x1xf32>
    %1355 = vector.broadcast %1354 : vector<8x1xf32> to vector<8x32xf32>
    %1356 = arith.mulf %1353, %1355 : vector<8x32xf32>
    %1357 = arith.addf %1352, %1356 : vector<8x32xf32>
    %1358 = vector.extract_strided_slice %1332 {offsets = [0, 160], sizes = [8, 32], strides = [1, 1]} : vector<8x256xf32> to vector<8x32xf32>
    %1359 = vector.extract_strided_slice %1325 {offsets = [0, 5], sizes = [8, 1], strides = [1, 1]} : vector<8x32xf32> to vector<8x1xf32>
    %1360 = vector.broadcast %1359 : vector<8x1xf32> to vector<8x32xf32>
    %1361 = arith.mulf %1358, %1360 : vector<8x32xf32>
    %1362 = arith.addf %1357, %1361 : vector<8x32xf32>
    %1363 = vector.extract_strided_slice %1332 {offsets = [0, 192], sizes = [8, 32], strides = [1, 1]} : vector<8x256xf32> to vector<8x32xf32>
    %1364 = vector.extract_strided_slice %1325 {offsets = [0, 6], sizes = [8, 1], strides = [1, 1]} : vector<8x32xf32> to vector<8x1xf32>
    %1365 = vector.broadcast %1364 : vector<8x1xf32> to vector<8x32xf32>
    %1366 = arith.mulf %1363, %1365 : vector<8x32xf32>
    %1367 = arith.addf %1362, %1366 : vector<8x32xf32>
    %1368 = vector.extract_strided_slice %1332 {offsets = [0, 224], sizes = [8, 32], strides = [1, 1]} : vector<8x256xf32> to vector<8x32xf32>
    %1369 = vector.extract_strided_slice %1325 {offsets = [0, 7], sizes = [8, 1], strides = [1, 1]} : vector<8x32xf32> to vector<8x1xf32>
    %1370 = vector.broadcast %1369 : vector<8x1xf32> to vector<8x32xf32>
    %1371 = arith.mulf %1368, %1370 : vector<8x32xf32>
    %1372 = arith.addf %1367, %1371 : vector<8x32xf32>
    %c0_203 = arith.constant 0 : index
    %c256_204 = arith.constant 256 : index
    %1373 = vector.load %arg11[%c0_203, %c256_204] : memref<32x1024xbf16, #tpu.memory_space<vmem>>, vector<32x256xbf16>
    %cst_205 = arith.constant dense<0.000000e+00> : vector<8x256xf32>
    %1374 = tpu.matmul %1330, %1373, %cst_205 {dimension_numbers = #tpu.dot_dimension_numbers<[1], [0], [0], [1], [0, 0, 1, 1], [], []>} : vector<8x32xbf16>, vector<32x256xbf16>, vector<8x256xf32> -> vector<8x256xf32>
    %1375 = vector.extract_strided_slice %1374 {offsets = [0, 0], sizes = [8, 32], strides = [1, 1]} : vector<8x256xf32> to vector<8x32xf32>
    %1376 = vector.extract_strided_slice %1325 {offsets = [0, 8], sizes = [8, 1], strides = [1, 1]} : vector<8x32xf32> to vector<8x1xf32>
    %1377 = vector.broadcast %1376 : vector<8x1xf32> to vector<8x32xf32>
    %1378 = arith.mulf %1375, %1377 : vector<8x32xf32>
    %1379 = arith.addf %1372, %1378 : vector<8x32xf32>
    %1380 = vector.extract_strided_slice %1374 {offsets = [0, 32], sizes = [8, 32], strides = [1, 1]} : vector<8x256xf32> to vector<8x32xf32>
    %1381 = vector.extract_strided_slice %1325 {offsets = [0, 9], sizes = [8, 1], strides = [1, 1]} : vector<8x32xf32> to vector<8x1xf32>
    %1382 = vector.broadcast %1381 : vector<8x1xf32> to vector<8x32xf32>
    %1383 = arith.mulf %1380, %1382 : vector<8x32xf32>
    %1384 = arith.addf %1379, %1383 : vector<8x32xf32>
    %1385 = vector.extract_strided_slice %1374 {offsets = [0, 64], sizes = [8, 32], strides = [1, 1]} : vector<8x256xf32> to vector<8x32xf32>
    %1386 = vector.extract_strided_slice %1325 {offsets = [0, 10], sizes = [8, 1], strides = [1, 1]} : vector<8x32xf32> to vector<8x1xf32>
    %1387 = vector.broadcast %1386 : vector<8x1xf32> to vector<8x32xf32>
    %1388 = arith.mulf %1385, %1387 : vector<8x32xf32>
    %1389 = arith.addf %1384, %1388 : vector<8x32xf32>
    %1390 = vector.extract_strided_slice %1374 {offsets = [0, 96], sizes = [8, 32], strides = [1, 1]} : vector<8x256xf32> to vector<8x32xf32>
    %1391 = vector.extract_strided_slice %1325 {offsets = [0, 11], sizes = [8, 1], strides = [1, 1]} : vector<8x32xf32> to vector<8x1xf32>
    %1392 = vector.broadcast %1391 : vector<8x1xf32> to vector<8x32xf32>
    %1393 = arith.mulf %1390, %1392 : vector<8x32xf32>
    %1394 = arith.addf %1389, %1393 : vector<8x32xf32>
    %1395 = vector.extract_strided_slice %1374 {offsets = [0, 128], sizes = [8, 32], strides = [1, 1]} : vector<8x256xf32> to vector<8x32xf32>
    %1396 = vector.extract_strided_slice %1325 {offsets = [0, 12], sizes = [8, 1], strides = [1, 1]} : vector<8x32xf32> to vector<8x1xf32>
    %1397 = vector.broadcast %1396 : vector<8x1xf32> to vector<8x32xf32>
    %1398 = arith.mulf %1395, %1397 : vector<8x32xf32>
    %1399 = arith.addf %1394, %1398 : vector<8x32xf32>
    %1400 = vector.extract_strided_slice %1374 {offsets = [0, 160], sizes = [8, 32], strides = [1, 1]} : vector<8x256xf32> to vector<8x32xf32>
    %1401 = vector.extract_strided_slice %1325 {offsets = [0, 13], sizes = [8, 1], strides = [1, 1]} : vector<8x32xf32> to vector<8x1xf32>
    %1402 = vector.broadcast %1401 : vector<8x1xf32> to vector<8x32xf32>
    %1403 = arith.mulf %1400, %1402 : vector<8x32xf32>
    %1404 = arith.addf %1399, %1403 : vector<8x32xf32>
    %1405 = vector.extract_strided_slice %1374 {offsets = [0, 192], sizes = [8, 32], strides = [1, 1]} : vector<8x256xf32> to vector<8x32xf32>
    %1406 = vector.extract_strided_slice %1325 {offsets = [0, 14], sizes = [8, 1], strides = [1, 1]} : vector<8x32xf32> to vector<8x1xf32>
    %1407 = vector.broadcast %1406 : vector<8x1xf32> to vector<8x32xf32>
    %1408 = arith.mulf %1405, %1407 : vector<8x32xf32>
    %1409 = arith.addf %1404, %1408 : vector<8x32xf32>
    %1410 = vector.extract_strided_slice %1374 {offsets = [0, 224], sizes = [8, 32], strides = [1, 1]} : vector<8x256xf32> to vector<8x32xf32>
    %1411 = vector.extract_strided_slice %1325 {offsets = [0, 15], sizes = [8, 1], strides = [1, 1]} : vector<8x32xf32> to vector<8x1xf32>
    %1412 = vector.broadcast %1411 : vector<8x1xf32> to vector<8x32xf32>
    %1413 = arith.mulf %1410, %1412 : vector<8x32xf32>
    %1414 = arith.addf %1409, %1413 : vector<8x32xf32>
    %c0_206 = arith.constant 0 : index
    %c512_207 = arith.constant 512 : index
    %1415 = vector.load %arg11[%c0_206, %c512_207] : memref<32x1024xbf16, #tpu.memory_space<vmem>>, vector<32x256xbf16>
    %cst_208 = arith.constant dense<0.000000e+00> : vector<8x256xf32>
    %1416 = tpu.matmul %1330, %1415, %cst_208 {dimension_numbers = #tpu.dot_dimension_numbers<[1], [0], [0], [1], [0, 0, 1, 1], [], []>} : vector<8x32xbf16>, vector<32x256xbf16>, vector<8x256xf32> -> vector<8x256xf32>
    %1417 = vector.extract_strided_slice %1416 {offsets = [0, 0], sizes = [8, 32], strides = [1, 1]} : vector<8x256xf32> to vector<8x32xf32>
    %1418 = vector.extract_strided_slice %1325 {offsets = [0, 16], sizes = [8, 1], strides = [1, 1]} : vector<8x32xf32> to vector<8x1xf32>
    %1419 = vector.broadcast %1418 : vector<8x1xf32> to vector<8x32xf32>
    %1420 = arith.mulf %1417, %1419 : vector<8x32xf32>
    %1421 = arith.addf %1414, %1420 : vector<8x32xf32>
    %1422 = vector.extract_strided_slice %1416 {offsets = [0, 32], sizes = [8, 32], strides = [1, 1]} : vector<8x256xf32> to vector<8x32xf32>
    %1423 = vector.extract_strided_slice %1325 {offsets = [0, 17], sizes = [8, 1], strides = [1, 1]} : vector<8x32xf32> to vector<8x1xf32>
    %1424 = vector.broadcast %1423 : vector<8x1xf32> to vector<8x32xf32>
    %1425 = arith.mulf %1422, %1424 : vector<8x32xf32>
    %1426 = arith.addf %1421, %1425 : vector<8x32xf32>
    %1427 = vector.extract_strided_slice %1416 {offsets = [0, 64], sizes = [8, 32], strides = [1, 1]} : vector<8x256xf32> to vector<8x32xf32>
    %1428 = vector.extract_strided_slice %1325 {offsets = [0, 18], sizes = [8, 1], strides = [1, 1]} : vector<8x32xf32> to vector<8x1xf32>
    %1429 = vector.broadcast %1428 : vector<8x1xf32> to vector<8x32xf32>
    %1430 = arith.mulf %1427, %1429 : vector<8x32xf32>
    %1431 = arith.addf %1426, %1430 : vector<8x32xf32>
    %1432 = vector.extract_strided_slice %1416 {offsets = [0, 96], sizes = [8, 32], strides = [1, 1]} : vector<8x256xf32> to vector<8x32xf32>
    %1433 = vector.extract_strided_slice %1325 {offsets = [0, 19], sizes = [8, 1], strides = [1, 1]} : vector<8x32xf32> to vector<8x1xf32>
    %1434 = vector.broadcast %1433 : vector<8x1xf32> to vector<8x32xf32>
    %1435 = arith.mulf %1432, %1434 : vector<8x32xf32>
    %1436 = arith.addf %1431, %1435 : vector<8x32xf32>
    %1437 = vector.extract_strided_slice %1416 {offsets = [0, 128], sizes = [8, 32], strides = [1, 1]} : vector<8x256xf32> to vector<8x32xf32>
    %1438 = vector.extract_strided_slice %1325 {offsets = [0, 20], sizes = [8, 1], strides = [1, 1]} : vector<8x32xf32> to vector<8x1xf32>
    %1439 = vector.broadcast %1438 : vector<8x1xf32> to vector<8x32xf32>
    %1440 = arith.mulf %1437, %1439 : vector<8x32xf32>
    %1441 = arith.addf %1436, %1440 : vector<8x32xf32>
    %1442 = vector.extract_strided_slice %1416 {offsets = [0, 160], sizes = [8, 32], strides = [1, 1]} : vector<8x256xf32> to vector<8x32xf32>
    %1443 = vector.extract_strided_slice %1325 {offsets = [0, 21], sizes = [8, 1], strides = [1, 1]} : vector<8x32xf32> to vector<8x1xf32>
    %1444 = vector.broadcast %1443 : vector<8x1xf32> to vector<8x32xf32>
    %1445 = arith.mulf %1442, %1444 : vector<8x32xf32>
    %1446 = arith.addf %1441, %1445 : vector<8x32xf32>
    %1447 = vector.extract_strided_slice %1416 {offsets = [0, 192], sizes = [8, 32], strides = [1, 1]} : vector<8x256xf32> to vector<8x32xf32>
    %1448 = vector.extract_strided_slice %1325 {offsets = [0, 22], sizes = [8, 1], strides = [1, 1]} : vector<8x32xf32> to vector<8x1xf32>
    %1449 = vector.broadcast %1448 : vector<8x1xf32> to vector<8x32xf32>
    %1450 = arith.mulf %1447, %1449 : vector<8x32xf32>
    %1451 = arith.addf %1446, %1450 : vector<8x32xf32>
    %1452 = vector.extract_strided_slice %1416 {offsets = [0, 224], sizes = [8, 32], strides = [1, 1]} : vector<8x256xf32> to vector<8x32xf32>
    %1453 = vector.extract_strided_slice %1325 {offsets = [0, 23], sizes = [8, 1], strides = [1, 1]} : vector<8x32xf32> to vector<8x1xf32>
    %1454 = vector.broadcast %1453 : vector<8x1xf32> to vector<8x32xf32>
    %1455 = arith.mulf %1452, %1454 : vector<8x32xf32>
    %1456 = arith.addf %1451, %1455 : vector<8x32xf32>
    %c0_209 = arith.constant 0 : index
    %c768_210 = arith.constant 768 : index
    %1457 = vector.load %arg11[%c0_209, %c768_210] : memref<32x1024xbf16, #tpu.memory_space<vmem>>, vector<32x256xbf16>
    %cst_211 = arith.constant dense<0.000000e+00> : vector<8x256xf32>
    %1458 = tpu.matmul %1330, %1457, %cst_211 {dimension_numbers = #tpu.dot_dimension_numbers<[1], [0], [0], [1], [0, 0, 1, 1], [], []>} : vector<8x32xbf16>, vector<32x256xbf16>, vector<8x256xf32> -> vector<8x256xf32>
    %1459 = vector.extract_strided_slice %1458 {offsets = [0, 0], sizes = [8, 32], strides = [1, 1]} : vector<8x256xf32> to vector<8x32xf32>
    %1460 = vector.extract_strided_slice %1325 {offsets = [0, 24], sizes = [8, 1], strides = [1, 1]} : vector<8x32xf32> to vector<8x1xf32>
    %1461 = vector.broadcast %1460 : vector<8x1xf32> to vector<8x32xf32>
    %1462 = arith.mulf %1459, %1461 : vector<8x32xf32>
    %1463 = arith.addf %1456, %1462 : vector<8x32xf32>
    %1464 = vector.extract_strided_slice %1458 {offsets = [0, 32], sizes = [8, 32], strides = [1, 1]} : vector<8x256xf32> to vector<8x32xf32>
    %1465 = vector.extract_strided_slice %1325 {offsets = [0, 25], sizes = [8, 1], strides = [1, 1]} : vector<8x32xf32> to vector<8x1xf32>
    %1466 = vector.broadcast %1465 : vector<8x1xf32> to vector<8x32xf32>
    %1467 = arith.mulf %1464, %1466 : vector<8x32xf32>
    %1468 = arith.addf %1463, %1467 : vector<8x32xf32>
    %1469 = vector.extract_strided_slice %1458 {offsets = [0, 64], sizes = [8, 32], strides = [1, 1]} : vector<8x256xf32> to vector<8x32xf32>
    %1470 = vector.extract_strided_slice %1325 {offsets = [0, 26], sizes = [8, 1], strides = [1, 1]} : vector<8x32xf32> to vector<8x1xf32>
    %1471 = vector.broadcast %1470 : vector<8x1xf32> to vector<8x32xf32>
    %1472 = arith.mulf %1469, %1471 : vector<8x32xf32>
    %1473 = arith.addf %1468, %1472 : vector<8x32xf32>
    %1474 = vector.extract_strided_slice %1458 {offsets = [0, 96], sizes = [8, 32], strides = [1, 1]} : vector<8x256xf32> to vector<8x32xf32>
    %1475 = vector.extract_strided_slice %1325 {offsets = [0, 27], sizes = [8, 1], strides = [1, 1]} : vector<8x32xf32> to vector<8x1xf32>
    %1476 = vector.broadcast %1475 : vector<8x1xf32> to vector<8x32xf32>
    %1477 = arith.mulf %1474, %1476 : vector<8x32xf32>
    %1478 = arith.addf %1473, %1477 : vector<8x32xf32>
    %1479 = vector.extract_strided_slice %1458 {offsets = [0, 128], sizes = [8, 32], strides = [1, 1]} : vector<8x256xf32> to vector<8x32xf32>
    %1480 = vector.extract_strided_slice %1325 {offsets = [0, 28], sizes = [8, 1], strides = [1, 1]} : vector<8x32xf32> to vector<8x1xf32>
    %1481 = vector.broadcast %1480 : vector<8x1xf32> to vector<8x32xf32>
    %1482 = arith.mulf %1479, %1481 : vector<8x32xf32>
    %1483 = arith.addf %1478, %1482 : vector<8x32xf32>
    %1484 = vector.extract_strided_slice %1458 {offsets = [0, 160], sizes = [8, 32], strides = [1, 1]} : vector<8x256xf32> to vector<8x32xf32>
    %1485 = vector.extract_strided_slice %1325 {offsets = [0, 29], sizes = [8, 1], strides = [1, 1]} : vector<8x32xf32> to vector<8x1xf32>
    %1486 = vector.broadcast %1485 : vector<8x1xf32> to vector<8x32xf32>
    %1487 = arith.mulf %1484, %1486 : vector<8x32xf32>
    %1488 = arith.addf %1483, %1487 : vector<8x32xf32>
    %1489 = vector.extract_strided_slice %1458 {offsets = [0, 192], sizes = [8, 32], strides = [1, 1]} : vector<8x256xf32> to vector<8x32xf32>
    %1490 = vector.extract_strided_slice %1325 {offsets = [0, 30], sizes = [8, 1], strides = [1, 1]} : vector<8x32xf32> to vector<8x1xf32>
    %1491 = vector.broadcast %1490 : vector<8x1xf32> to vector<8x32xf32>
    %1492 = arith.mulf %1489, %1491 : vector<8x32xf32>
    %1493 = arith.addf %1488, %1492 : vector<8x32xf32>
    %1494 = vector.extract_strided_slice %1458 {offsets = [0, 224], sizes = [8, 32], strides = [1, 1]} : vector<8x256xf32> to vector<8x32xf32>
    %1495 = vector.extract_strided_slice %1325 {offsets = [0, 31], sizes = [8, 1], strides = [1, 1]} : vector<8x32xf32> to vector<8x1xf32>
    %1496 = vector.broadcast %1495 : vector<8x1xf32> to vector<8x32xf32>
    %1497 = arith.mulf %1494, %1496 : vector<8x32xf32>
    %1498 = arith.addf %1493, %1497 : vector<8x32xf32>
    %cst_212 = arith.constant dense<0.000000e+00> : vector<8x32xf32>
    %1499 = tpu.matmul %1320, %3, %cst_212 {dimension_numbers = #tpu.dot_dimension_numbers<[1], [0], [0], [1], [0, 0, 1, 1], [], []>} : vector<8x32xf32>, vector<32x32xf32>, vector<8x32xf32> -> vector<8x32xf32>
    %1500 = arith.addf %1499, %6 : vector<8x32xf32>
    %1501 = arith.addf %1500, %1327 : vector<8x32xf32>
    %cst_213 = arith.constant 0.000000e+00 : f32
    %1502 = vector.broadcast %cst_213 : f32 to vector<8x32xf32>
    %1503 = arith.maximumf %1501, %1502 : vector<8x32xf32>
    %cst_214 = arith.constant 0.000000e+00 : f32
    %1504 = vector.broadcast %cst_214 : f32 to vector<8x32xf32>
    %1505 = arith.mulf %1320, %1504 : vector<8x32xf32>
    %cst_215 = arith.constant 1.000000e+00 : f32
    %1506 = vector.broadcast %cst_215 : f32 to vector<8x32xf32>
    %1507 = arith.mulf %1503, %1506 : vector<8x32xf32>
    %1508 = arith.addf %1505, %1507 : vector<8x32xf32>
    %c7_216 = arith.constant 7 : index
    %c0_217 = arith.constant 0 : index
    %c0_218 = arith.constant 0 : index
    %1509 = vector.load %arg9[%c7_216, %c0_217, %c0_218] : memref<8x8x32xf32, #tpu.memory_space<vmem>>, vector<1x8x32xf32>
    %1510 = vector.shape_cast %1509 : vector<1x8x32xf32> to vector<8x32xf32>
    %1511 = vector.shape_cast %1498 : vector<8x32xf32> to vector<1x8x32xf32>
    tpu.vector_store %arg9[%c7_216, %c0_217, %c0_218], %1511 {strides = array<i32>} : memref<8x8x32xf32, #tpu.memory_space<vmem>>, vector<1x8x32xf32>,
    %c0_219 = arith.constant 0 : index
    %c0_220 = arith.constant 0 : index
    %1512 = vector.load %arg10[%c0_219, %c0_220] : memref<8x32xf32, #tpu.memory_space<vmem>>, vector<8x32xf32>
    tpu.vector_store %arg10[%c0_219, %c0_220], %1508 {strides = array<i32>} : memref<8x32xf32, #tpu.memory_space<vmem>>, vector<8x32xf32>,
    return
  }
  func.func @transform_0(%arg0: i32, %arg1: i32) -> (i32, i32, i32) {
    %c0_i32 = arith.constant 0 : i32
    %c0_i32_0 = arith.constant 0 : i32
    return %arg1, %arg0, %c0_i32 : i32, i32, i32
  }
  func.func @transform_1(%arg0: i32, %arg1: i32) -> (i32, i32, i32) {
    %c0_i32 = arith.constant 0 : i32
    %c0_i32_0 = arith.constant 0 : i32
    return %arg1, %arg0, %c0_i32 : i32, i32, i32
  }
  func.func @transform_2(%arg0: i32, %arg1: i32) -> (i32, i32, i32) {
    %c0_i32 = arith.constant 0 : i32
    %c0_i32_0 = arith.constant 0 : i32
    return %arg1, %arg0, %c0_i32 : i32, i32, i32
  }
  func.func @transform_3(%arg0: i32, %arg1: i32) -> (i32, i32) {
    %c0_i32 = arith.constant 0 : i32
    %c0_i32_0 = arith.constant 0 : i32
    return %arg0, %c0_i32 : i32, i32
  }
  func.func @transform_4(%arg0: i32, %arg1: i32) -> (i32, i32) {
    %c0_i32 = arith.constant 0 : i32
    %c0_i32_0 = arith.constant 0 : i32
    %c0_i32_1 = arith.constant 0 : i32
    return %c0_i32, %c0_i32_0 : i32, i32
  }
  func.func @transform_5(%arg0: i32, %arg1: i32) -> (i32, i32) {
    %c0_i32 = arith.constant 0 : i32
    %c0_i32_0 = arith.constant 0 : i32
    %c0_i32_1 = arith.constant 0 : i32
    return %c0_i32, %c0_i32_0 : i32, i32
  }
  func.func @transform_7(%arg0: i32, %arg1: i32) -> (i32, i32, i32) {
    %c0_i32 = arith.constant 0 : i32
    %c0_i32_0 = arith.constant 0 : i32
    return %arg1, %arg0, %c0_i32 : i32, i32, i32
  }
  func.func @transform_8(%arg0: i32, %arg1: i32) -> (i32, i32) {
    %c0_i32 = arith.constant 0 : i32
    %c0_i32_0 = arith.constant 0 : i32
    return %arg0, %c0_i32 : i32, i32
  }
}

</mosaic_0001>

<llo_original>
// kernel: context_transform_rnn_forward.1
$region0: #{context_transform_rnn_forward.1}
  #allocation0 [shape = 'u32[]', space=smem, size = 0x4, offset = 0x4, fixed_abs, tag = 'smem constant byte address 0x4 - core index']
  #allocation1 [shape = 'u32[144,128]{1,0:T(1,128)}', space=vmem, size = 0x12000, scoped, tag = 'internal scratch']
  #allocation2 [shape = 'bf16[32,1024]{1,0:T(8,128)(2,1)}', space=vmem, size = 0x10000, scoped, tag = 'scratch operand']
  #allocation3 [shape = 's32[1]{0}', space=sflag, size = 0x4, scoped, tag = 'scratch operand']
  #allocation6 [shape = 's32[]', space=sflag, size = 0x4, offset = 0, fixed_abs, tag = 'sflag constant byte address 0x0 - dummy sync flag']
  %s0 = inlined_call_operand.vmem [shape: f32[8,8,32], index: 0, kind: input, shape index: {}]
  %s1 = inlined_call_operand.vmem [shape: f32[8,8,32], index: 1, kind: input, shape index: {}]
  %s2 = inlined_call_operand.vmem [shape: f32[8,8,32], index: 2, kind: input, shape index: {}]
  %s3 = inlined_call_operand.vmem [shape: f32[8,32], index: 3, kind: input, shape index: {}]
  %s4 = inlined_call_operand.vmem [shape: f32[32,32], index: 4, kind: input, shape index: {}]
  %s5 = inlined_call_operand.vmem [shape: f32[1,32], index: 5, kind: input, shape index: {}]
  %s6 = inlined_call_operand.vmem [shape: bf16[32,1024], index: 6, kind: input, shape index: {}]
  %s7 = inlined_call_operand.vmem [shape: f32[8,8,32], index: 7, kind: output, shape index: {0}]
  %s8 = inlined_call_operand.hbm [shape: f32[8,32], index: 8, kind: output, shape index: {1}]
  %9 = xla_tuple %s7, %s8
  %s10 = sld [smem:[#allocation0]]
  $region80: #{context_transform_rnn_forward.1} parent=0
    _
  %s12 = ssub.s32 1, %s10
  %s13 = scalar_select 0, %s12, %s10
  $region1: #{context_transform_rnn_forward.1} parent=0
    #allocation4 [shape = 'u8[4096]{0}', space=vmem, size = 0x1000, scoped, tag = 'output window, operand 1, single buffered']
    #allocation5 [shape = 's32[1]{0}', space=sflag, size = 0x4, scoped, tag = 'scoped memory for context_transform_rnn_forward.1']
    %14 = vsyncpa [#allocation5], 0
    // Predicated region
    $region2: #{context_transform_rnn_forward.1} parent=1 // pred_check
      _
    $region3: #{context_transform_rnn_forward.1} parent=1 // pred_check_branch
      %16 = sbr.rel (0) target = $region5
    $region4: #{context_transform_rnn_forward.1} parent=1 // pred_region
      _
    $region5: #{context_transform_rnn_forward.1} parent=1 // pred_fallthru
      _
    // Predicated region
    $region6: #{context_transform_rnn_forward.1} parent=1 // pred_check
      _
    $region7: #{context_transform_rnn_forward.1} parent=1 // pred_check_branch
      %18 = sbr.rel (0) target = $region9
    $region8: #{context_transform_rnn_forward.1} parent=1 // pred_region
      _
    $region9: #{context_transform_rnn_forward.1} parent=1 // pred_fallthru
      _
    // Predicated region
    $region10: #{context_transform_rnn_forward.1} parent=1 // pred_check
      _
    $region11: #{context_transform_rnn_forward.1} parent=1 // pred_check_branch
      %20 = sbr.rel (0) target = $region13
    $region12: #{context_transform_rnn_forward.1} parent=1 // pred_region
      _
    $region13: #{context_transform_rnn_forward.1} parent=1 // pred_fallthru
      _
    // Predicated region
    $region14: #{context_transform_rnn_forward.1} parent=1 // pred_check
      _
    $region15: #{context_transform_rnn_forward.1} parent=1 // pred_check_branch
      %22 = sbr.rel (0) target = $region17
    $region16: #{context_transform_rnn_forward.1} parent=1 // pred_region
      _
    $region17: #{context_transform_rnn_forward.1} parent=1 // pred_fallthru
      _
    // Predicated region
    $region18: #{context_transform_rnn_forward.1} parent=1 // pred_check
      _
    $region19: #{context_transform_rnn_forward.1} parent=1 // pred_check_branch
      %24 = sbr.rel (0) target = $region21
    $region20: #{context_transform_rnn_forward.1} parent=1 // pred_region
      _
    $region21: #{context_transform_rnn_forward.1} parent=1 // pred_fallthru
      _
    // Predicated region
    $region22: #{context_transform_rnn_forward.1} parent=1 // pred_check
      _
    $region23: #{context_transform_rnn_forward.1} parent=1 // pred_check_branch
      %26 = sbr.rel (0) target = $region25
    $region24: #{context_transform_rnn_forward.1} parent=1 // pred_region
      _
    $region25: #{context_transform_rnn_forward.1} parent=1 // pred_fallthru
      _
    %p28 = scmp.eq.s32.totalorder 0, 0
    // Predicated region
    $region26: #{context_transform_rnn_forward.1} parent=1 // pred_check
      %p29 = pneg %p28
    $region27: #{context_transform_rnn_forward.1} parent=1 // pred_check_branch
      %31 = sbr.rel (%p29) target = $region29
    $region28: #{context_transform_rnn_forward.1} parent=1 // pred_region
      %p33 = scmp.lt.u32.totalorder 128, 8
      %p34 = pneg %p33
      // Predicated region
      $region30: #{context_transform_rnn_forward.1} parent=28 // pred_check
        _
      $region31: #{context_transform_rnn_forward.1} parent=28 // pred_check_branch
        %36 = sbr.rel (%p33) target = $region33
      $region32: #{context_transform_rnn_forward.1} parent=28 // pred_region
        %s52 = sand.u32 128, 7
        %p53 = scmp.eq.s32.totalorder %s52, 0
        // Predicated region
        $region45: #{context_transform_rnn_forward.1} parent=32 // pred_check
          %p54 = pneg %p53
        $region46: #{context_transform_rnn_forward.1} parent=32 // pred_check_branch
          %56 = sbr.rel (%p54) target = $region48
        $region47: #{context_transform_rnn_forward.1} parent=32 // pred_region
          loop: start=0, step=1, limit=1
          $region49: #{context_transform_rnn_forward.1} parent=47 // loop_pre_header
            _
          $region50: #{context_transform_rnn_forward.1} parent=47 // loop_header
            %s58 = sphi 0, %s62
            %p59 = scmp.ge.s32.totalorder %s58, 1
            %s63 = sphi %s6, %s6
            %s64 = sphi [#allocation2], [#allocation2]
          $region51: #{context_transform_rnn_forward.1} parent=47 // loop_header_branch
            %61 = sbr.rel (%p59) target = $region55
          $region52: #{context_transform_rnn_forward.1} parent=47 // loop_body
            %v65 = vld [vmem:[%s63] sm:$0xff]
            %66 = vst [vmem:[%s64] sm:$0xff] %v65
            %v67 = vld [vmem:[%s63 + $0x8] sm:$0xff]
            %68 = vst [vmem:[%s64 + $0x8] sm:$0xff] %v67
            %v69 = vld [vmem:[%s63 + $0x10] sm:$0xff]
            %70 = vst [vmem:[%s64 + $0x10] sm:$0xff] %v69
            %v71 = vld [vmem:[%s63 + $0x18] sm:$0xff]
            %72 = vst [vmem:[%s64 + $0x18] sm:$0xff] %v71
            %v73 = vld [vmem:[%s63 + $0x20] sm:$0xff]
            %74 = vst [vmem:[%s64 + $0x20] sm:$0xff] %v73
            %v75 = vld [vmem:[%s63 + $0x28] sm:$0xff]
            %76 = vst [vmem:[%s64 + $0x28] sm:$0xff] %v75
            %v77 = vld [vmem:[%s63 + $0x30] sm:$0xff]
            %78 = vst [vmem:[%s64 + $0x30] sm:$0xff] %v77
            %v79 = vld [vmem:[%s63 + $0x38] sm:$0xff]
            %80 = vst [vmem:[%s64 + $0x38] sm:$0xff] %v79
            %v81 = vld [vmem:[%s63 + $0x40] sm:$0xff]
            %82 = vst [vmem:[%s64 + $0x40] sm:$0xff] %v81
            %v83 = vld [vmem:[%s63 + $0x48] sm:$0xff]
            %84 = vst [vmem:[%s64 + $0x48] sm:$0xff] %v83
            %v85 = vld [vmem:[%s63 + $0x50] sm:$0xff]
            %86 = vst [vmem:[%s64 + $0x50] sm:$0xff] %v85
            %v87 = vld [vmem:[%s63 + $0x58] sm:$0xff]
            %88 = vst [vmem:[%s64 + $0x58] sm:$0xff] %v87
            %v89 = vld [vmem:[%s63 + $0x60] sm:$0xff]
            %90 = vst [vmem:[%s64 + $0x60] sm:$0xff] %v89
            %v91 = vld [vmem:[%s63 + $0x68] sm:$0xff]
            %92 = vst [vmem:[%s64 + $0x68] sm:$0xff] %v91
            %v93 = vld [vmem:[%s63 + $0x70] sm:$0xff]
            %94 = vst [vmem:[%s64 + $0x70] sm:$0xff] %v93
            %v95 = vld [vmem:[%s63 + $0x78] sm:$0xff]
            %96 = vst [vmem:[%s64 + $0x78] sm:$0xff] %v95
          $region53: #{context_transform_rnn_forward.1} parent=47 // loop_footer
            %s62 = sadd.s32 1, %s58
          $region54: #{context_transform_rnn_forward.1} parent=47 // loop_footer_branch
            %57 = sbr.rel target = $region50
          $region55: #{context_transform_rnn_forward.1} parent=47 // loop_exit
            _
        $region48: #{context_transform_rnn_forward.1} parent=32 // pred_fallthru
          _
        %p97 = pneg %p53
        // Predicated region
        $region56: #{context_transform_rnn_forward.1} parent=32 // pred_check
          _
        $region57: #{context_transform_rnn_forward.1} parent=32 // pred_check_branch
          %99 = sbr.rel (%p53) target = $region59
        $region58: #{context_transform_rnn_forward.1} parent=32 // pred_region
          %s100 = sand.u32 128, 7
        $region59: #{context_transform_rnn_forward.1} parent=32 // pred_fallthru
          _
      $region33: #{context_transform_rnn_forward.1} parent=28 // pred_fallthru
        _
      // Predicated region
      $region34: #{context_transform_rnn_forward.1} parent=28 // pred_check
        %p37 = pneg %p33
      $region35: #{context_transform_rnn_forward.1} parent=28 // pred_check_branch
        %39 = sbr.rel (%p37) target = $region37
      $region36: #{context_transform_rnn_forward.1} parent=28 // pred_region
        %s40 = sshll.u32 1, 128
        %s41 = ssub.s32 %s40, 1
        loop: start=0, step=1, limit=1
        $region38: #{context_transform_rnn_forward.1} parent=36 // loop_pre_header
          _
        $region39: #{context_transform_rnn_forward.1} parent=36 // loop_header
          %s43 = sphi 0, %s47
          %p44 = scmp.ge.s32.totalorder %s43, 1
          %s48 = sphi %s6, %s6
          %s49 = sphi [#allocation2], [#allocation2]
        $region40: #{context_transform_rnn_forward.1} parent=36 // loop_header_branch
          %46 = sbr.rel (%p44) target = $region44
        $region41: #{context_transform_rnn_forward.1} parent=36 // loop_body
          %v50 = vld [vmem:[%s48] sm:%s41]
          %51 = vst [vmem:[%s49] sm:%s41] %v50
        $region42: #{context_transform_rnn_forward.1} parent=36 // loop_footer
          %s47 = sadd.s32 1, %s43
        $region43: #{context_transform_rnn_forward.1} parent=36 // loop_footer_branch
          %42 = sbr.rel target = $region39
        $region44: #{context_transform_rnn_forward.1} parent=36 // loop_exit
          _
      $region37: #{context_transform_rnn_forward.1} parent=28 // pred_fallthru
        _
      // Predicated region
      $region60: #{context_transform_rnn_forward.1} parent=28 // pred_check
        _
      $region61: #{context_transform_rnn_forward.1} parent=28 // pred_check_branch
        %103 = sbr.rel (0) target = $region63
      $region62: #{context_transform_rnn_forward.1} parent=28 // pred_region
        %104 = vsyncadd [#allocation3], 2048
      $region63: #{context_transform_rnn_forward.1} parent=28 // pred_fallthru
        _
      %s105 = smul.u32 4, 4
      %s106 = smul.u32 %s105, 8
      %s107 = sshll.u32 %s106, 4
      %108 = dma.done [#allocation3], %s107
      %v109 = vld [vmem:[%s3] sm:$0xff]
      %vm110 = vcmask 261120
      %111 = vst.msk [vmem:[#allocation4] sm:$0xff] %vm110, %v109
    $region29: #{context_transform_rnn_forward.1} parent=1 // pred_fallthru
      _
    %v112 = vld [vmem:[%s4] sm:$0xff]
    %v113 = vld [vmem:[%s4 + $0x8] sm:$0xff]
    %v114 = vld [vmem:[%s4 + $0x10] sm:$0xff]
    %v115 = vld [vmem:[%s4 + $0x18] sm:$0xff]
    %v116 = vld [vmem:[%s5] sm:$0x1]
    %v118 = vlaneseq
    %v119 = vshrl.u32 %v118, 7
    %v120 = vsub.s32 0, %v119
    %v121 = vrot.slane %v116, %v120
    %v123 = vld [vmem:[#allocation4] sm:$0xff]
    %v124 = vld [vmem:[%s0] sm:$0xff]
    %v125 = vld [vmem:[%s1] sm:$0xff]
    %v126 = vld [vmem:[%s2] sm:$0xff]
    %v127 = vpack.c.bf16 %v123, %v123
    %v128 = vld [vmem:[#allocation2] sm:$0xff]
    %v129 = vld [vmem:[#allocation2 + $0x20] sm:$0xff]
    %v130 = vld [vmem:[#allocation2 + $0x40] sm:$0xff]
    %v131 = vld [vmem:[#allocation2 + $0x60] sm:$0xff]
    %v136 = vunpack.c.l.b16 %v128
    %v137 = vunpack.c.h.b16 %v128
    %v138 = vunpack.c.l.b16 %v129
    %v139 = vunpack.c.h.b16 %v129
    %v140 = vunpack.c.l.b16 %v130
    %v141 = vunpack.c.h.b16 %v130
    %v142 = vunpack.c.l.b16 %v131
    %v143 = vunpack.c.h.b16 %v131
    %v144 = vpack.c.b16 %v138, %v136
    %v145 = vpack.c.b16 %v139, %v137
    %v146 = vpack.c.b16 %v142, %v140
    %v147 = vpack.c.b16 %v143, %v141
    %vm152 = vcmask 261120
    %v154 = vsel %vm152, %v127, 0
    %156 = vmatprep.subr.bf16.mxu0 0
    %157 = vmatpush1.bf16.msra.mxu0 0
    %158 = vmatprep.subr.bf16.mxu0 0
    %159 = vmatpush1.bf16.msra.mxu0 0
    %160 = vmatprep.subr.bf16.mxu0 0
    %161 = vmatpush1.bf16.msra.mxu0 0
    %162 = vmatprep.subr.bf16.mxu0 0
    %163 = vmatpush1.bf16.msra.mxu0 0
    %164 = vmatprep.subr.bf16.mxu0 0
    %165 = vmatpush1.bf16.msra.mxu0 0
    %166 = vmatprep.subr.bf16.mxu0 0
    %167 = vmatpush1.bf16.msra.mxu0 0
    %168 = vmatprep.subr.bf16.mxu0 %v147
    %169 = vmatpush1.bf16.msra.mxu0 %v146
    %170 = vmatprep.subr.bf16.mxu0 %v145
    %171 = vmatpush1.bf16.msra.mxu0 %v144
    %172 = vmatprep.subr.bf16.mxu0 0
    %173 = vmatpush2.bf16.msra.mxu0 0
    %174 = vmatprep.subr.bf16.mxu0 0
    %175 = vmatpush2.bf16.msra.mxu0 0
    %176 = vmatprep.subr.bf16.mxu0 0
    %177 = vmatpush2.bf16.msra.mxu0 0
    %178 = vmatprep.subr.bf16.mxu0 0
    %179 = vmatpush2.bf16.msra.mxu0 0
    %180 = vmatprep.subr.bf16.mxu0 0
    %181 = vmatpush2.bf16.msra.mxu0 0
    %182 = vmatprep.subr.bf16.mxu0 0
    %183 = vmatpush2.bf16.msra.mxu0 0
    %184 = vmatprep.subr.bf16.mxu0 0
    %185 = vmatpush2.bf16.msra.mxu0 0
    %186 = vmatprep.subr.bf16.mxu0 0
    %187 = vmatpush2.bf16.msra.mxu0 0
    %188 = vmatprep.mubr.bf16.mxu0 0
    %189 = vmatmul.mubr.bf16.gmra.mxu0 %v154
    %v190 = vpop.f32.mrf.mxu0
    %v191 = vadd.f32 0.0, %v190
    %v192 = vpop.f32.mrf.mxu0
    %v193 = vadd.f32 0.0, %v192
    %v194 = vpop.f32.mrf.mxu0
    %v195 = vpop.f32.mrf.mxu0
    %196 = vdwg.mxu0
    %198 = vset.pattern.permute.xlu0 0
    %199 = vperm.xlu0 %198, %v124
    %v200 = vpop.permute.xlu0 %199
    %v202 = vmul.f32 %v191, %v200
    %v203 = vadd.f32 %v126, %v202
    %204 = vset.pattern.permute.xlu0 1
    %205 = vperm.xlu0 %204, %v124
    %v206 = vpop.permute.xlu0 %205
    %v208 = vmul.f32 %v191, %v206
    %210 = vrot.lane.b32.xlu0 %v208, 96
    %v211 = vpop.permute.xlu0 %210
    %v213 = vadd.f32 %v203, %v211
    %214 = vset.pattern.permute.xlu0 2
    %215 = vperm.xlu0 %214, %v124
    %v216 = vpop.permute.xlu0 %215
    %v218 = vmul.f32 %v191, %v216
    %220 = vrot.lane.b32.xlu0 %v218, 64
    %v221 = vpop.permute.xlu0 %220
    %v223 = vadd.f32 %v213, %v221
    %224 = vset.pattern.permute.xlu0 3
    %225 = vperm.xlu0 %224, %v124
    %v226 = vpop.permute.xlu0 %225
    %v228 = vmul.f32 %v191, %v226
    %230 = vrot.lane.b32.xlu0 %v228, 32
    %v231 = vpop.permute.xlu0 %230
    %v233 = vadd.f32 %v223, %v231
    %234 = vset.pattern.permute.xlu0 4
    %235 = vperm.xlu0 %234, %v124
    %v236 = vpop.permute.xlu0 %235
    %v238 = vmul.f32 %v193, %v236
    %v239 = vadd.f32 %v233, %v238
    %240 = vset.pattern.permute.xlu0 5
    %241 = vperm.xlu0 %240, %v124
    %v242 = vpop.permute.xlu0 %241
    %v244 = vmul.f32 %v193, %v242
    %246 = vrot.lane.b32.xlu0 %v244, 96
    %v247 = vpop.permute.xlu0 %246
    %v249 = vadd.f32 %v239, %v247
    %250 = vset.pattern.permute.xlu0 6
    %251 = vperm.xlu0 %250, %v124
    %v252 = vpop.permute.xlu0 %251
    %v254 = vmul.f32 %v193, %v252
    %256 = vrot.lane.b32.xlu0 %v254, 64
    %v257 = vpop.permute.xlu0 %256
    %v259 = vadd.f32 %v249, %v257
    %260 = vset.pattern.permute.xlu0 7
    %261 = vperm.xlu0 %260, %v124
    %v262 = vpop.permute.xlu0 %261
    %v264 = vmul.f32 %v193, %v262
    %266 = vrot.lane.b32.xlu0 %v264, 32
    %v267 = vpop.permute.xlu0 %266
    %v269 = vadd.f32 %v259, %v267
    %v270 = vld [vmem:[#allocation2 + $0x8] sm:$0xff]
    %v271 = vld [vmem:[#allocation2 + $0x28] sm:$0xff]
    %v272 = vld [vmem:[#allocation2 + $0x48] sm:$0xff]
    %v273 = vld [vmem:[#allocation2 + $0x68] sm:$0xff]
    %v278 = vunpack.c.l.b16 %v270
    %v279 = vunpack.c.h.b16 %v270
    %v280 = vunpack.c.l.b16 %v271
    %v281 = vunpack.c.h.b16 %v271
    %v282 = vunpack.c.l.b16 %v272
    %v283 = vunpack.c.h.b16 %v272
    %v284 = vunpack.c.l.b16 %v273
    %v285 = vunpack.c.h.b16 %v273
    %v286 = vpack.c.b16 %v280, %v278
    %v287 = vpack.c.b16 %v281, %v279
    %v288 = vpack.c.b16 %v284, %v282
    %v289 = vpack.c.b16 %v285, %v283
    %294 = vmatprep.subr.bf16.mxu0 0
    %295 = vmatpush1.bf16.msra.mxu0 0
    %296 = vmatprep.subr.bf16.mxu0 0
    %297 = vmatpush1.bf16.msra.mxu0 0
    %298 = vmatprep.subr.bf16.mxu0 0
    %299 = vmatpush1.bf16.msra.mxu0 0
    %300 = vmatprep.subr.bf16.mxu0 0
    %301 = vmatpush1.bf16.msra.mxu0 0
    %302 = vmatprep.subr.bf16.mxu0 0
    %303 = vmatpush1.bf16.msra.mxu0 0
    %304 = vmatprep.subr.bf16.mxu0 0
    %305 = vmatpush1.bf16.msra.mxu0 0
    %306 = vmatprep.subr.bf16.mxu0 %v289
    %307 = vmatpush1.bf16.msra.mxu0 %v288
    %308 = vmatprep.subr.bf16.mxu0 %v287
    %309 = vmatpush1.bf16.msra.mxu0 %v286
    %310 = vmatprep.subr.bf16.mxu0 0
    %311 = vmatpush2.bf16.msra.mxu0 0
    %312 = vmatprep.subr.bf16.mxu0 0
    %313 = vmatpush2.bf16.msra.mxu0 0
    %314 = vmatprep.subr.bf16.mxu0 0
    %315 = vmatpush2.bf16.msra.mxu0 0
    %316 = vmatprep.subr.bf16.mxu0 0
    %317 = vmatpush2.bf16.msra.mxu0 0
    %318 = vmatprep.subr.bf16.mxu0 0
    %319 = vmatpush2.bf16.msra.mxu0 0
    %320 = vmatprep.subr.bf16.mxu0 0
    %321 = vmatpush2.bf16.msra.mxu0 0
    %322 = vmatprep.subr.bf16.mxu0 0
    %323 = vmatpush2.bf16.msra.mxu0 0
    %324 = vmatprep.subr.bf16.mxu0 0
    %325 = vmatpush2.bf16.msra.mxu0 0
    %326 = vmatprep.mubr.bf16.mxu0 0
    %327 = vmatmul.mubr.bf16.gmra.mxu0 %v154
    %v328 = vpop.f32.mrf.mxu0
    %v329 = vadd.f32 0.0, %v328
    %v330 = vpop.f32.mrf.mxu0
    %v331 = vadd.f32 0.0, %v330
    %v332 = vpop.f32.mrf.mxu0
    %v333 = vpop.f32.mrf.mxu0
    %334 = vdwg.mxu0
    %335 = vset.pattern.permute.xlu0 8
    %336 = vperm.xlu0 %335, %v124
    %v337 = vpop.permute.xlu0 %336
    %v339 = vmul.f32 %v329, %v337
    %v340 = vadd.f32 %v269, %v339
    %341 = vset.pattern.permute.xlu0 9
    %342 = vperm.xlu0 %341, %v124
    %v343 = vpop.permute.xlu0 %342
    %v345 = vmul.f32 %v329, %v343
    %347 = vrot.lane.b32.xlu0 %v345, 96
    %v348 = vpop.permute.xlu0 %347
    %v350 = vadd.f32 %v340, %v348
    %351 = vset.pattern.permute.xlu0 10
    %352 = vperm.xlu0 %351, %v124
    %v353 = vpop.permute.xlu0 %352
    %v355 = vmul.f32 %v329, %v353
    %357 = vrot.lane.b32.xlu0 %v355, 64
    %v358 = vpop.permute.xlu0 %357
    %v360 = vadd.f32 %v350, %v358
    %361 = vset.pattern.permute.xlu0 11
    %362 = vperm.xlu0 %361, %v124
    %v363 = vpop.permute.xlu0 %362
    %v365 = vmul.f32 %v329, %v363
    %367 = vrot.lane.b32.xlu0 %v365, 32
    %v368 = vpop.permute.xlu0 %367
    %v370 = vadd.f32 %v360, %v368
    %371 = vset.pattern.permute.xlu0 12
    %372 = vperm.xlu0 %371, %v124
    %v373 = vpop.permute.xlu0 %372
    %v375 = vmul.f32 %v331, %v373
    %v376 = vadd.f32 %v370, %v375
    %377 = vset.pattern.permute.xlu0 13
    %378 = vperm.xlu0 %377, %v124
    %v379 = vpop.permute.xlu0 %378
    %v381 = vmul.f32 %v331, %v379
    %383 = vrot.lane.b32.xlu0 %v381, 96
    %v384 = vpop.permute.xlu0 %383
    %v386 = vadd.f32 %v376, %v384
    %387 = vset.pattern.permute.xlu0 14
    %388 = vperm.xlu0 %387, %v124
    %v389 = vpop.permute.xlu0 %388
    %v391 = vmul.f32 %v331, %v389
    %393 = vrot.lane.b32.xlu0 %v391, 64
    %v394 = vpop.permute.xlu0 %393
    %v396 = vadd.f32 %v386, %v394
    %397 = vset.pattern.permute.xlu0 15
    %398 = vperm.xlu0 %397, %v124
    %v399 = vpop.permute.xlu0 %398
    %v401 = vmul.f32 %v331, %v399
    %403 = vrot.lane.b32.xlu0 %v401, 32
    %v404 = vpop.permute.xlu0 %403
    %v406 = vadd.f32 %v396, %v404
    %v407 = vld [vmem:[#allocation2 + $0x10] sm:$0xff]
    %v408 = vld [vmem:[#allocation2 + $0x30] sm:$0xff]
    %v409 = vld [vmem:[#allocation2 + $0x50] sm:$0xff]
    %v410 = vld [vmem:[#allocation2 + $0x70] sm:$0xff]
    %v415 = vunpack.c.l.b16 %v407
    %v416 = vunpack.c.h.b16 %v407
    %v417 = vunpack.c.l.b16 %v408
    %v418 = vunpack.c.h.b16 %v408
    %v419 = vunpack.c.l.b16 %v409
    %v420 = vunpack.c.h.b16 %v409
    %v421 = vunpack.c.l.b16 %v410
    %v422 = vunpack.c.h.b16 %v410
    %v423 = vpack.c.b16 %v417, %v415
    %v424 = vpack.c.b16 %v418, %v416
    %v425 = vpack.c.b16 %v421, %v419
    %v426 = vpack.c.b16 %v422, %v420
    %431 = vmatprep.subr.bf16.mxu0 0
    %432 = vmatpush1.bf16.msra.mxu0 0
    %433 = vmatprep.subr.bf16.mxu0 0
    %434 = vmatpush1.bf16.msra.mxu0 0
    %435 = vmatprep.subr.bf16.mxu0 0
    %436 = vmatpush1.bf16.msra.mxu0 0
    %437 = vmatprep.subr.bf16.mxu0 0
    %438 = vmatpush1.bf16.msra.mxu0 0
    %439 = vmatprep.subr.bf16.mxu0 0
    %440 = vmatpush1.bf16.msra.mxu0 0
    %441 = vmatprep.subr.bf16.mxu0 0
    %442 = vmatpush1.bf16.msra.mxu0 0
    %443 = vmatprep.subr.bf16.mxu0 %v426
    %444 = vmatpush1.bf16.msra.mxu0 %v425
    %445 = vmatprep.subr.bf16.mxu0 %v424
    %446 = vmatpush1.bf16.msra.mxu0 %v423
    %447 = vmatprep.subr.bf16.mxu0 0
    %448 = vmatpush2.bf16.msra.mxu0 0
    %449 = vmatprep.subr.bf16.mxu0 0
    %450 = vmatpush2.bf16.msra.mxu0 0
    %451 = vmatprep.subr.bf16.mxu0 0
    %452 = vmatpush2.bf16.msra.mxu0 0
    %453 = vmatprep.subr.bf16.mxu0 0
    %454 = vmatpush2.bf16.msra.mxu0 0
    %455 = vmatprep.subr.bf16.mxu0 0
    %456 = vmatpush2.bf16.msra.mxu0 0
    %457 = vmatprep.subr.bf16.mxu0 0
    %458 = vmatpush2.bf16.msra.mxu0 0
    %459 = vmatprep.subr.bf16.mxu0 0
    %460 = vmatpush2.bf16.msra.mxu0 0
    %461 = vmatprep.subr.bf16.mxu0 0
    %462 = vmatpush2.bf16.msra.mxu0 0
    %463 = vmatprep.mubr.bf16.mxu0 0
    %464 = vmatmul.mubr.bf16.gmra.mxu0 %v154
    %v465 = vpop.f32.mrf.mxu0
    %v466 = vadd.f32 0.0, %v465
    %v467 = vpop.f32.mrf.mxu0
    %v468 = vadd.f32 0.0, %v467
    %v469 = vpop.f32.mrf.mxu0
    %v470 = vpop.f32.mrf.mxu0
    %471 = vdwg.mxu0
    %472 = vset.pattern.permute.xlu0 16
    %473 = vperm.xlu0 %472, %v124
    %v474 = vpop.permute.xlu0 %473
    %v476 = vmul.f32 %v466, %v474
    %v477 = vadd.f32 %v406, %v476
    %478 = vset.pattern.permute.xlu0 17
    %479 = vperm.xlu0 %478, %v124
    %v480 = vpop.permute.xlu0 %479
    %v482 = vmul.f32 %v466, %v480
    %484 = vrot.lane.b32.xlu0 %v482, 96
    %v485 = vpop.permute.xlu0 %484
    %v487 = vadd.f32 %v477, %v485
    %488 = vset.pattern.permute.xlu0 18
    %489 = vperm.xlu0 %488, %v124
    %v490 = vpop.permute.xlu0 %489
    %v492 = vmul.f32 %v466, %v490
    %494 = vrot.lane.b32.xlu0 %v492, 64
    %v495 = vpop.permute.xlu0 %494
    %v497 = vadd.f32 %v487, %v495
    %498 = vset.pattern.permute.xlu0 19
    %499 = vperm.xlu0 %498, %v124
    %v500 = vpop.permute.xlu0 %499
    %v502 = vmul.f32 %v466, %v500
    %504 = vrot.lane.b32.xlu0 %v502, 32
    %v505 = vpop.permute.xlu0 %504
    %v507 = vadd.f32 %v497, %v505
    %508 = vset.pattern.permute.xlu0 20
    %509 = vperm.xlu0 %508, %v124
    %v510 = vpop.permute.xlu0 %509
    %v512 = vmul.f32 %v468, %v510
    %v513 = vadd.f32 %v507, %v512
    %514 = vset.pattern.permute.xlu0 21
    %515 = vperm.xlu0 %514, %v124
    %v516 = vpop.permute.xlu0 %515
    %v518 = vmul.f32 %v468, %v516
    %520 = vrot.lane.b32.xlu0 %v518, 96
    %v521 = vpop.permute.xlu0 %520
    %v523 = vadd.f32 %v513, %v521
    %524 = vset.pattern.permute.xlu0 22
    %525 = vperm.xlu0 %524, %v124
    %v526 = vpop.permute.xlu0 %525
    %v528 = vmul.f32 %v468, %v526
    %530 = vrot.lane.b32.xlu0 %v528, 64
    %v531 = vpop.permute.xlu0 %530
    %v533 = vadd.f32 %v523, %v531
    %534 = vset.pattern.permute.xlu0 23
    %535 = vperm.xlu0 %534, %v124
    %v536 = vpop.permute.xlu0 %535
    %v538 = vmul.f32 %v468, %v536
    %540 = vrot.lane.b32.xlu0 %v538, 32
    %v541 = vpop.permute.xlu0 %540
    %v543 = vadd.f32 %v533, %v541
    %v544 = vld [vmem:[#allocation2 + $0x18] sm:$0xff]
    %v545 = vld [vmem:[#allocation2 + $0x38] sm:$0xff]
    %v546 = vld [vmem:[#allocation2 + $0x58] sm:$0xff]
    %v547 = vld [vmem:[#allocation2 + $0x78] sm:$0xff]
    %v552 = vunpack.c.l.b16 %v544
    %v553 = vunpack.c.h.b16 %v544
    %v554 = vunpack.c.l.b16 %v545
    %v555 = vunpack.c.h.b16 %v545
    %v556 = vunpack.c.l.b16 %v546
    %v557 = vunpack.c.h.b16 %v546
    %v558 = vunpack.c.l.b16 %v547
    %v559 = vunpack.c.h.b16 %v547
    %v560 = vpack.c.b16 %v554, %v552
    %v561 = vpack.c.b16 %v555, %v553
    %v562 = vpack.c.b16 %v558, %v556
    %v563 = vpack.c.b16 %v559, %v557
    %568 = vmatprep.subr.bf16.mxu0 0
    %569 = vmatpush1.bf16.msra.mxu0 0
    %570 = vmatprep.subr.bf16.mxu0 0
    %571 = vmatpush1.bf16.msra.mxu0 0
    %572 = vmatprep.subr.bf16.mxu0 0
    %573 = vmatpush1.bf16.msra.mxu0 0
    %574 = vmatprep.subr.bf16.mxu0 0
    %575 = vmatpush1.bf16.msra.mxu0 0
    %576 = vmatprep.subr.bf16.mxu0 0
    %577 = vmatpush1.bf16.msra.mxu0 0
    %578 = vmatprep.subr.bf16.mxu0 0
    %579 = vmatpush1.bf16.msra.mxu0 0
    %580 = vmatprep.subr.bf16.mxu0 %v563
    %581 = vmatpush1.bf16.msra.mxu0 %v562
    %582 = vmatprep.subr.bf16.mxu0 %v561
    %583 = vmatpush1.bf16.msra.mxu0 %v560
    %584 = vmatprep.subr.bf16.mxu0 0
    %585 = vmatpush2.bf16.msra.mxu0 0
    %586 = vmatprep.subr.bf16.mxu0 0
    %587 = vmatpush2.bf16.msra.mxu0 0
    %588 = vmatprep.subr.bf16.mxu0 0
    %589 = vmatpush2.bf16.msra.mxu0 0
    %590 = vmatprep.subr.bf16.mxu0 0
    %591 = vmatpush2.bf16.msra.mxu0 0
    %592 = vmatprep.subr.bf16.mxu0 0
    %593 = vmatpush2.bf16.msra.mxu0 0
    %594 = vmatprep.subr.bf16.mxu0 0
    %595 = vmatpush2.bf16.msra.mxu0 0
    %596 = vmatprep.subr.bf16.mxu0 0
    %597 = vmatpush2.bf16.msra.mxu0 0
    %598 = vmatprep.subr.bf16.mxu0 0
    %599 = vmatpush2.bf16.msra.mxu0 0
    %600 = vmatprep.mubr.bf16.mxu0 0
    %601 = vmatmul.mubr.bf16.gmra.mxu0 %v154
    %v602 = vpop.f32.mrf.mxu0
    %v603 = vadd.f32 0.0, %v602
    %v604 = vpop.f32.mrf.mxu0
    %v605 = vadd.f32 0.0, %v604
    %v606 = vpop.f32.mrf.mxu0
    %v607 = vpop.f32.mrf.mxu0
    %608 = vdwg.mxu0
    %609 = vset.pattern.permute.xlu0 24
    %610 = vperm.xlu0 %609, %v124
    %v611 = vpop.permute.xlu0 %610
    %v613 = vmul.f32 %v603, %v611
    %v614 = vadd.f32 %v543, %v613
    %615 = vset.pattern.permute.xlu0 25
    %616 = vperm.xlu0 %615, %v124
    %v617 = vpop.permute.xlu0 %616
    %v619 = vmul.f32 %v603, %v617
    %621 = vrot.lane.b32.xlu0 %v619, 96
    %v622 = vpop.permute.xlu0 %621
    %v624 = vadd.f32 %v614, %v622
    %625 = vset.pattern.permute.xlu0 26
    %626 = vperm.xlu0 %625, %v124
    %v627 = vpop.permute.xlu0 %626
    %v629 = vmul.f32 %v603, %v627
    %631 = vrot.lane.b32.xlu0 %v629, 64
    %v632 = vpop.permute.xlu0 %631
    %v634 = vadd.f32 %v624, %v632
    %635 = vset.pattern.permute.xlu0 27
    %636 = vperm.xlu0 %635, %v124
    %v637 = vpop.permute.xlu0 %636
    %v639 = vmul.f32 %v603, %v637
    %641 = vrot.lane.b32.xlu0 %v639, 32
    %v642 = vpop.permute.xlu0 %641
    %v644 = vadd.f32 %v634, %v642
    %645 = vset.pattern.permute.xlu0 28
    %646 = vperm.xlu0 %645, %v124
    %v647 = vpop.permute.xlu0 %646
    %v649 = vmul.f32 %v605, %v647
    %v650 = vadd.f32 %v644, %v649
    %651 = vset.pattern.permute.xlu0 29
    %652 = vperm.xlu0 %651, %v124
    %v653 = vpop.permute.xlu0 %652
    %v655 = vmul.f32 %v605, %v653
    %657 = vrot.lane.b32.xlu0 %v655, 96
    %v658 = vpop.permute.xlu0 %657
    %v660 = vadd.f32 %v650, %v658
    %661 = vset.pattern.permute.xlu0 30
    %662 = vperm.xlu0 %661, %v124
    %v663 = vpop.permute.xlu0 %662
    %v665 = vmul.f32 %v605, %v663
    %667 = vrot.lane.b32.xlu0 %v665, 64
    %v668 = vpop.permute.xlu0 %667
    %v670 = vadd.f32 %v660, %v668
    %671 = vset.pattern.permute.xlu0 31
    %672 = vperm.xlu0 %671, %v124
    %v673 = vpop.permute.xlu0 %672
    %v675 = vmul.f32 %v605, %v673
    %677 = vrot.lane.b32.xlu0 %v675, 32
    %v678 = vpop.permute.xlu0 %677
    %v680 = vadd.f32 %v670, %v678
    %v682 = vsel %vm152, %v123, 0
    %684 = vmatprep.subr.mxu0 0.0
    %685 = vmatpush1.msra.mxu0 0.0
    %686 = vmatprep.subr.mxu0 0.0
    %687 = vmatpush1.msra.mxu0 0.0
    %688 = vmatprep.subr.mxu0 0.0
    %689 = vmatpush1.msra.mxu0 0.0
    %690 = vmatprep.subr.mxu0 0.0
    %691 = vmatpush1.msra.mxu0 0.0
    %692 = vmatprep.subr.mxu0 0.0
    %693 = vmatpush1.msra.mxu0 0.0
    %694 = vmatprep.subr.mxu0 0.0
    %695 = vmatpush1.msra.mxu0 0.0
    %696 = vmatprep.subr.mxu0 0.0
    %697 = vmatpush1.msra.mxu0 0.0
    %698 = vmatprep.subr.mxu0 0.0
    %699 = vmatpush1.msra.mxu0 0.0
    %700 = vmatprep.subr.mxu0 0.0
    %701 = vmatpush1.msra.mxu0 0.0
    %702 = vmatprep.subr.mxu0 0.0
    %703 = vmatpush1.msra.mxu0 0.0
    %704 = vmatprep.subr.mxu0 0.0
    %705 = vmatpush1.msra.mxu0 0.0
    %706 = vmatprep.subr.mxu0 0.0
    %707 = vmatpush1.msra.mxu0 0.0
    %708 = vmatprep.subr.mxu0 0.0
    %709 = vmatpush1.msra.mxu0 %v115
    %710 = vmatprep.subr.mxu0 0.0
    %711 = vmatpush1.msra.mxu0 %v114
    %712 = vmatprep.subr.mxu0 0.0
    %713 = vmatpush1.msra.mxu0 %v113
    %714 = vmatprep.subr.mxu0 0.0
    %715 = vmatpush1.msra.mxu0 %v112
    %716 = vmatprep.subr.mxu0 0.0
    %717 = vmatpush2.msra.mxu0 0.0
    %718 = vmatprep.subr.mxu0 0.0
    %719 = vmatpush2.msra.mxu0 0.0
    %720 = vmatprep.subr.mxu0 0.0
    %721 = vmatpush2.msra.mxu0 0.0
    %722 = vmatprep.subr.mxu0 0.0
    %723 = vmatpush2.msra.mxu0 0.0
    %724 = vmatprep.subr.mxu0 0.0
    %725 = vmatpush2.msra.mxu0 0.0
    %726 = vmatprep.subr.mxu0 0.0
    %727 = vmatpush2.msra.mxu0 0.0
    %728 = vmatprep.subr.mxu0 0.0
    %729 = vmatpush2.msra.mxu0 0.0
    %730 = vmatprep.subr.mxu0 0.0
    %731 = vmatpush2.msra.mxu0 0.0
    %732 = vmatprep.subr.mxu0 0.0
    %733 = vmatpush2.msra.mxu0 0.0
    %734 = vmatprep.subr.mxu0 0.0
    %735 = vmatpush2.msra.mxu0 0.0
    %736 = vmatprep.subr.mxu0 0.0
    %737 = vmatpush2.msra.mxu0 0.0
    %738 = vmatprep.subr.mxu0 0.0
    %739 = vmatpush2.msra.mxu0 0.0
    %740 = vmatprep.subr.mxu0 0.0
    %741 = vmatpush2.msra.mxu0 0.0
    %742 = vmatprep.subr.mxu0 0.0
    %743 = vmatpush2.msra.mxu0 0.0
    %744 = vmatprep.subr.mxu0 0.0
    %745 = vmatpush2.msra.mxu0 0.0
    %746 = vmatprep.subr.mxu0 0.0
    %747 = vmatpush2.msra.mxu0 0.0
    %748 = vmatprep.mubr.f32.mxu0 0.0
    %749 = vmatmul.mubr.f32.gmra.mxu0 %v682
    %v750 = vpop.f32.mrf.mxu0
    %v751 = vadd.f32 %v121, %v750
    %v752 = vpop.f32.mrf.mxu0
    %753 = vdwg.mxu0
    %v754 = vadd.f32 %v751, %v125
    %v755 = vmax.f32 %v754, 0.0
    %v756 = vmul.f32 %v123, 0.0
    %v757 = vadd.f32 %v756, %v755
    %758 = vst.msk [vmem:[%s7] sm:$0xff] %vm152, %v680
    %s759 = scalar_lea.vmem %s0, 8
    %v760 = vld [vmem:[%s759] sm:$0xff]
    %s761 = scalar_lea.vmem %s1, 8
    %v762 = vld [vmem:[%s761] sm:$0xff]
    %s763 = scalar_lea.vmem %s2, 8
    %v764 = vld [vmem:[%s763] sm:$0xff]
    %v765 = vpack.c.bf16 %v757, %v757
    %v766 = vld [vmem:[#allocation2] sm:$0xff]
    %v767 = vld [vmem:[#allocation2 + $0x20] sm:$0xff]
    %v768 = vld [vmem:[#allocation2 + $0x40] sm:$0xff]
    %v769 = vld [vmem:[#allocation2 + $0x60] sm:$0xff]
    %v774 = vunpack.c.l.b16 %v766
    %v775 = vunpack.c.h.b16 %v766
    %v776 = vunpack.c.l.b16 %v767
    %v777 = vunpack.c.h.b16 %v767
    %v778 = vunpack.c.l.b16 %v768
    %v779 = vunpack.c.h.b16 %v768
    %v780 = vunpack.c.l.b16 %v769
    %v781 = vunpack.c.h.b16 %v769
    %v782 = vpack.c.b16 %v776, %v774
    %v783 = vpack.c.b16 %v777, %v775
    %v784 = vpack.c.b16 %v780, %v778
    %v785 = vpack.c.b16 %v781, %v779
    %v791 = vsel %vm152, %v765, 0
    %793 = vmatprep.subr.bf16.mxu0 0
    %794 = vmatpush1.bf16.msra.mxu0 0
    %795 = vmatprep.subr.bf16.mxu0 0
    %796 = vmatpush1.bf16.msra.mxu0 0
    %797 = vmatprep.subr.bf16.mxu0 0
    %798 = vmatpush1.bf16.msra.mxu0 0
    %799 = vmatprep.subr.bf16.mxu0 0
    %800 = vmatpush1.bf16.msra.mxu0 0
    %801 = vmatprep.subr.bf16.mxu0 0
    %802 = vmatpush1.bf16.msra.mxu0 0
    %803 = vmatprep.subr.bf16.mxu0 0
    %804 = vmatpush1.bf16.msra.mxu0 0
    %805 = vmatprep.subr.bf16.mxu0 %v785
    %806 = vmatpush1.bf16.msra.mxu0 %v784
    %807 = vmatprep.subr.bf16.mxu0 %v783
    %808 = vmatpush1.bf16.msra.mxu0 %v782
    %809 = vmatprep.subr.bf16.mxu0 0
    %810 = vmatpush2.bf16.msra.mxu0 0
    %811 = vmatprep.subr.bf16.mxu0 0
    %812 = vmatpush2.bf16.msra.mxu0 0
    %813 = vmatprep.subr.bf16.mxu0 0
    %814 = vmatpush2.bf16.msra.mxu0 0
    %815 = vmatprep.subr.bf16.mxu0 0
    %816 = vmatpush2.bf16.msra.mxu0 0
    %817 = vmatprep.subr.bf16.mxu0 0
    %818 = vmatpush2.bf16.msra.mxu0 0
    %819 = vmatprep.subr.bf16.mxu0 0
    %820 = vmatpush2.bf16.msra.mxu0 0
    %821 = vmatprep.subr.bf16.mxu0 0
    %822 = vmatpush2.bf16.msra.mxu0 0
    %823 = vmatprep.subr.bf16.mxu0 0
    %824 = vmatpush2.bf16.msra.mxu0 0
    %825 = vmatprep.mubr.bf16.mxu0 0
    %826 = vmatmul.mubr.bf16.gmra.mxu0 %v791
    %v827 = vpop.f32.mrf.mxu0
    %v828 = vadd.f32 0.0, %v827
    %v829 = vpop.f32.mrf.mxu0
    %v830 = vadd.f32 0.0, %v829
    %v831 = vpop.f32.mrf.mxu0
    %v832 = vpop.f32.mrf.mxu0
    %833 = vdwg.mxu0
    %835 = vset.pattern.permute.xlu0 0
    %836 = vperm.xlu0 %835, %v760
    %v837 = vpop.permute.xlu0 %836
    %v839 = vmul.f32 %v828, %v837
    %v840 = vadd.f32 %v764, %v839
    %841 = vset.pattern.permute.xlu0 1
    %842 = vperm.xlu0 %841, %v760
    %v843 = vpop.permute.xlu0 %842
    %v845 = vmul.f32 %v828, %v843
    %847 = vrot.lane.b32.xlu0 %v845, 96
    %v848 = vpop.permute.xlu0 %847
    %v850 = vadd.f32 %v840, %v848
    %851 = vset.pattern.permute.xlu0 2
    %852 = vperm.xlu0 %851, %v760
    %v853 = vpop.permute.xlu0 %852
    %v855 = vmul.f32 %v828, %v853
    %857 = vrot.lane.b32.xlu0 %v855, 64
    %v858 = vpop.permute.xlu0 %857
    %v860 = vadd.f32 %v850, %v858
    %861 = vset.pattern.permute.xlu0 3
    %862 = vperm.xlu0 %861, %v760
    %v863 = vpop.permute.xlu0 %862
    %v865 = vmul.f32 %v828, %v863
    %867 = vrot.lane.b32.xlu0 %v865, 32
    %v868 = vpop.permute.xlu0 %867
    %v870 = vadd.f32 %v860, %v868
    %871 = vset.pattern.permute.xlu0 4
    %872 = vperm.xlu0 %871, %v760
    %v873 = vpop.permute.xlu0 %872
    %v875 = vmul.f32 %v830, %v873
    %v876 = vadd.f32 %v870, %v875
    %877 = vset.pattern.permute.xlu0 5
    %878 = vperm.xlu0 %877, %v760
    %v879 = vpop.permute.xlu0 %878
    %v881 = vmul.f32 %v830, %v879
    %883 = vrot.lane.b32.xlu0 %v881, 96
    %v884 = vpop.permute.xlu0 %883
    %v886 = vadd.f32 %v876, %v884
    %887 = vset.pattern.permute.xlu0 6
    %888 = vperm.xlu0 %887, %v760
    %v889 = vpop.permute.xlu0 %888
    %v891 = vmul.f32 %v830, %v889
    %893 = vrot.lane.b32.xlu0 %v891, 64
    %v894 = vpop.permute.xlu0 %893
    %v896 = vadd.f32 %v886, %v894
    %897 = vset.pattern.permute.xlu0 7
    %898 = vperm.xlu0 %897, %v760
    %v899 = vpop.permute.xlu0 %898
    %v901 = vmul.f32 %v830, %v899
    %903 = vrot.lane.b32.xlu0 %v901, 32
    %v904 = vpop.permute.xlu0 %903
    %v906 = vadd.f32 %v896, %v904
    %v907 = vld [vmem:[#allocation2 + $0x8] sm:$0xff]
    %v908 = vld [vmem:[#allocation2 + $0x28] sm:$0xff]
    %v909 = vld [vmem:[#allocation2 + $0x48] sm:$0xff]
    %v910 = vld [vmem:[#allocation2 + $0x68] sm:$0xff]
    %v915 = vunpack.c.l.b16 %v907
    %v916 = vunpack.c.h.b16 %v907
    %v917 = vunpack.c.l.b16 %v908
    %v918 = vunpack.c.h.b16 %v908
    %v919 = vunpack.c.l.b16 %v909
    %v920 = vunpack.c.h.b16 %v909
    %v921 = vunpack.c.l.b16 %v910
    %v922 = vunpack.c.h.b16 %v910
    %v923 = vpack.c.b16 %v917, %v915
    %v924 = vpack.c.b16 %v918, %v916
    %v925 = vpack.c.b16 %v921, %v919
    %v926 = vpack.c.b16 %v922, %v920
    %931 = vmatprep.subr.bf16.mxu0 0
    %932 = vmatpush1.bf16.msra.mxu0 0
    %933 = vmatprep.subr.bf16.mxu0 0
    %934 = vmatpush1.bf16.msra.mxu0 0
    %935 = vmatprep.subr.bf16.mxu0 0
    %936 = vmatpush1.bf16.msra.mxu0 0
    %937 = vmatprep.subr.bf16.mxu0 0
    %938 = vmatpush1.bf16.msra.mxu0 0
    %939 = vmatprep.subr.bf16.mxu0 0
    %940 = vmatpush1.bf16.msra.mxu0 0
    %941 = vmatprep.subr.bf16.mxu0 0
    %942 = vmatpush1.bf16.msra.mxu0 0
    %943 = vmatprep.subr.bf16.mxu0 %v926
    %944 = vmatpush1.bf16.msra.mxu0 %v925
    %945 = vmatprep.subr.bf16.mxu0 %v924
    %946 = vmatpush1.bf16.msra.mxu0 %v923
    %947 = vmatprep.subr.bf16.mxu0 0
    %948 = vmatpush2.bf16.msra.mxu0 0
    %949 = vmatprep.subr.bf16.mxu0 0
    %950 = vmatpush2.bf16.msra.mxu0 0
    %951 = vmatprep.subr.bf16.mxu0 0
    %952 = vmatpush2.bf16.msra.mxu0 0
    %953 = vmatprep.subr.bf16.mxu0 0
    %954 = vmatpush2.bf16.msra.mxu0 0
    %955 = vmatprep.subr.bf16.mxu0 0
    %956 = vmatpush2.bf16.msra.mxu0 0
    %957 = vmatprep.subr.bf16.mxu0 0
    %958 = vmatpush2.bf16.msra.mxu0 0
    %959 = vmatprep.subr.bf16.mxu0 0
    %960 = vmatpush2.bf16.msra.mxu0 0
    %961 = vmatprep.subr.bf16.mxu0 0
    %962 = vmatpush2.bf16.msra.mxu0 0
    %963 = vmatprep.mubr.bf16.mxu0 0
    %964 = vmatmul.mubr.bf16.gmra.mxu0 %v791
    %v965 = vpop.f32.mrf.mxu0
    %v966 = vadd.f32 0.0, %v965
    %v967 = vpop.f32.mrf.mxu0
    %v968 = vadd.f32 0.0, %v967
    %v969 = vpop.f32.mrf.mxu0
    %v970 = vpop.f32.mrf.mxu0
    %971 = vdwg.mxu0
    %972 = vset.pattern.permute.xlu0 8
    %973 = vperm.xlu0 %972, %v760
    %v974 = vpop.permute.xlu0 %973
    %v976 = vmul.f32 %v966, %v974
    %v977 = vadd.f32 %v906, %v976
    %978 = vset.pattern.permute.xlu0 9
    %979 = vperm.xlu0 %978, %v760
    %v980 = vpop.permute.xlu0 %979
    %v982 = vmul.f32 %v966, %v980
    %984 = vrot.lane.b32.xlu0 %v982, 96
    %v985 = vpop.permute.xlu0 %984
    %v987 = vadd.f32 %v977, %v985
    %988 = vset.pattern.permute.xlu0 10
    %989 = vperm.xlu0 %988, %v760
    %v990 = vpop.permute.xlu0 %989
    %v992 = vmul.f32 %v966, %v990
    %994 = vrot.lane.b32.xlu0 %v992, 64
    %v995 = vpop.permute.xlu0 %994
    %v997 = vadd.f32 %v987, %v995
    %998 = vset.pattern.permute.xlu0 11
    %999 = vperm.xlu0 %998, %v760
    %v1000 = vpop.permute.xlu0 %999
    %v1002 = vmul.f32 %v966, %v1000
    %1004 = vrot.lane.b32.xlu0 %v1002, 32
    %v1005 = vpop.permute.xlu0 %1004
    %v1007 = vadd.f32 %v997, %v1005
    %1008 = vset.pattern.permute.xlu0 12
    %1009 = vperm.xlu0 %1008, %v760
    %v1010 = vpop.permute.xlu0 %1009
    %v1012 = vmul.f32 %v968, %v1010
    %v1013 = vadd.f32 %v1007, %v1012
    %1014 = vset.pattern.permute.xlu0 13
    %1015 = vperm.xlu0 %1014, %v760
    %v1016 = vpop.permute.xlu0 %1015
    %v1018 = vmul.f32 %v968, %v1016
    %1020 = vrot.lane.b32.xlu0 %v1018, 96
    %v1021 = vpop.permute.xlu0 %1020
    %v1023 = vadd.f32 %v1013, %v1021
    %1024 = vset.pattern.permute.xlu0 14
    %1025 = vperm.xlu0 %1024, %v760
    %v1026 = vpop.permute.xlu0 %1025
    %v1028 = vmul.f32 %v968, %v1026
    %1030 = vrot.lane.b32.xlu0 %v1028, 64
    %v1031 = vpop.permute.xlu0 %1030
    %v1033 = vadd.f32 %v1023, %v1031
    %1034 = vset.pattern.permute.xlu0 15
    %1035 = vperm.xlu0 %1034, %v760
    %v1036 = vpop.permute.xlu0 %1035
    %v1038 = vmul.f32 %v968, %v1036
    %1040 = vrot.lane.b32.xlu0 %v1038, 32
    %v1041 = vpop.permute.xlu0 %1040
    %v1043 = vadd.f32 %v1033, %v1041
    %v1044 = vld [vmem:[#allocation2 + $0x10] sm:$0xff]
    %v1045 = vld [vmem:[#allocation2 + $0x30] sm:$0xff]
    %v1046 = vld [vmem:[#allocation2 + $0x50] sm:$0xff]
    %v1047 = vld [vmem:[#allocation2 + $0x70] sm:$0xff]
    %v1052 = vunpack.c.l.b16 %v1044
    %v1053 = vunpack.c.h.b16 %v1044
    %v1054 = vunpack.c.l.b16 %v1045
    %v1055 = vunpack.c.h.b16 %v1045
    %v1056 = vunpack.c.l.b16 %v1046
    %v1057 = vunpack.c.h.b16 %v1046
    %v1058 = vunpack.c.l.b16 %v1047
    %v1059 = vunpack.c.h.b16 %v1047
    %v1060 = vpack.c.b16 %v1054, %v1052
    %v1061 = vpack.c.b16 %v1055, %v1053
    %v1062 = vpack.c.b16 %v1058, %v1056
    %v1063 = vpack.c.b16 %v1059, %v1057
    %1068 = vmatprep.subr.bf16.mxu0 0
    %1069 = vmatpush1.bf16.msra.mxu0 0
    %1070 = vmatprep.subr.bf16.mxu0 0
    %1071 = vmatpush1.bf16.msra.mxu0 0
    %1072 = vmatprep.subr.bf16.mxu0 0
    %1073 = vmatpush1.bf16.msra.mxu0 0
    %1074 = vmatprep.subr.bf16.mxu0 0
    %1075 = vmatpush1.bf16.msra.mxu0 0
    %1076 = vmatprep.subr.bf16.mxu0 0
    %1077 = vmatpush1.bf16.msra.mxu0 0
    %1078 = vmatprep.subr.bf16.mxu0 0
    %1079 = vmatpush1.bf16.msra.mxu0 0
    %1080 = vmatprep.subr.bf16.mxu0 %v1063
    %1081 = vmatpush1.bf16.msra.mxu0 %v1062
    %1082 = vmatprep.subr.bf16.mxu0 %v1061
    %1083 = vmatpush1.bf16.msra.mxu0 %v1060
    %1084 = vmatprep.subr.bf16.mxu0 0
    %1085 = vmatpush2.bf16.msra.mxu0 0
    %1086 = vmatprep.subr.bf16.mxu0 0
    %1087 = vmatpush2.bf16.msra.mxu0 0
    %1088 = vmatprep.subr.bf16.mxu0 0
    %1089 = vmatpush2.bf16.msra.mxu0 0
    %1090 = vmatprep.subr.bf16.mxu0 0
    %1091 = vmatpush2.bf16.msra.mxu0 0
    %1092 = vmatprep.subr.bf16.mxu0 0
    %1093 = vmatpush2.bf16.msra.mxu0 0
    %1094 = vmatprep.subr.bf16.mxu0 0
    %1095 = vmatpush2.bf16.msra.mxu0 0
    %1096 = vmatprep.subr.bf16.mxu0 0
    %1097 = vmatpush2.bf16.msra.mxu0 0
    %1098 = vmatprep.subr.bf16.mxu0 0
    %1099 = vmatpush2.bf16.msra.mxu0 0
    %1100 = vmatprep.mubr.bf16.mxu0 0
    %1101 = vmatmul.mubr.bf16.gmra.mxu0 %v791
    %v1102 = vpop.f32.mrf.mxu0
    %v1103 = vadd.f32 0.0, %v1102
    %v1104 = vpop.f32.mrf.mxu0
    %v1105 = vadd.f32 0.0, %v1104
    %v1106 = vpop.f32.mrf.mxu0
    %v1107 = vpop.f32.mrf.mxu0
    %1108 = vdwg.mxu0
    %1109 = vset.pattern.permute.xlu0 16
    %1110 = vperm.xlu0 %1109, %v760
    %v1111 = vpop.permute.xlu0 %1110
    %v1113 = vmul.f32 %v1103, %v1111
    %v1114 = vadd.f32 %v1043, %v1113
    %1115 = vset.pattern.permute.xlu0 17
    %1116 = vperm.xlu0 %1115, %v760
    %v1117 = vpop.permute.xlu0 %1116
    %v1119 = vmul.f32 %v1103, %v1117
    %1121 = vrot.lane.b32.xlu0 %v1119, 96
    %v1122 = vpop.permute.xlu0 %1121
    %v1124 = vadd.f32 %v1114, %v1122
    %1125 = vset.pattern.permute.xlu0 18
    %1126 = vperm.xlu0 %1125, %v760
    %v1127 = vpop.permute.xlu0 %1126
    %v1129 = vmul.f32 %v1103, %v1127
    %1131 = vrot.lane.b32.xlu0 %v1129, 64
    %v1132 = vpop.permute.xlu0 %1131
    %v1134 = vadd.f32 %v1124, %v1132
    %1135 = vset.pattern.permute.xlu0 19
    %1136 = vperm.xlu0 %1135, %v760
    %v1137 = vpop.permute.xlu0 %1136
    %v1139 = vmul.f32 %v1103, %v1137
    %1141 = vrot.lane.b32.xlu0 %v1139, 32
    %v1142 = vpop.permute.xlu0 %1141
    %v1144 = vadd.f32 %v1134, %v1142
    %1145 = vset.pattern.permute.xlu0 20
    %1146 = vperm.xlu0 %1145, %v760
    %v1147 = vpop.permute.xlu0 %1146
    %v1149 = vmul.f32 %v1105, %v1147
    %v1150 = vadd.f32 %v1144, %v1149
    %1151 = vset.pattern.permute.xlu0 21
    %1152 = vperm.xlu0 %1151, %v760
    %v1153 = vpop.permute.xlu0 %1152
    %v1155 = vmul.f32 %v1105, %v1153
    %1157 = vrot.lane.b32.xlu0 %v1155, 96
    %v1158 = vpop.permute.xlu0 %1157
    %v1160 = vadd.f32 %v1150, %v1158
    %1161 = vset.pattern.permute.xlu0 22
    %1162 = vperm.xlu0 %1161, %v760
    %v1163 = vpop.permute.xlu0 %1162
    %v1165 = vmul.f32 %v1105, %v1163
    %1167 = vrot.lane.b32.xlu0 %v1165, 64
    %v1168 = vpop.permute.xlu0 %1167
    %v1170 = vadd.f32 %v1160, %v1168
    %1171 = vset.pattern.permute.xlu0 23
    %1172 = vperm.xlu0 %1171, %v760
    %v1173 = vpop.permute.xlu0 %1172
    %v1175 = vmul.f32 %v1105, %v1173
    %1177 = vrot.lane.b32.xlu0 %v1175, 32
    %v1178 = vpop.permute.xlu0 %1177
    %v1180 = vadd.f32 %v1170, %v1178
    %v1181 = vld [vmem:[#allocation2 + $0x18] sm:$0xff]
    %v1182 = vld [vmem:[#allocation2 + $0x38] sm:$0xff]
    %v1183 = vld [vmem:[#allocation2 + $0x58] sm:$0xff]
    %v1184 = vld [vmem:[#allocation2 + $0x78] sm:$0xff]
    %v1189 = vunpack.c.l.b16 %v1181
    %v1190 = vunpack.c.h.b16 %v1181
    %v1191 = vunpack.c.l.b16 %v1182
    %v1192 = vunpack.c.h.b16 %v1182
    %v1193 = vunpack.c.l.b16 %v1183
    %v1194 = vunpack.c.h.b16 %v1183
    %v1195 = vunpack.c.l.b16 %v1184
    %v1196 = vunpack.c.h.b16 %v1184
    %v1197 = vpack.c.b16 %v1191, %v1189
    %v1198 = vpack.c.b16 %v1192, %v1190
    %v1199 = vpack.c.b16 %v1195, %v1193
    %v1200 = vpack.c.b16 %v1196, %v1194
    %1205 = vmatprep.subr.bf16.mxu0 0
    %1206 = vmatpush1.bf16.msra.mxu0 0
    %1207 = vmatprep.subr.bf16.mxu0 0
    %1208 = vmatpush1.bf16.msra.mxu0 0
    %1209 = vmatprep.subr.bf16.mxu0 0
    %1210 = vmatpush1.bf16.msra.mxu0 0
    %1211 = vmatprep.subr.bf16.mxu0 0
    %1212 = vmatpush1.bf16.msra.mxu0 0
    %1213 = vmatprep.subr.bf16.mxu0 0
    %1214 = vmatpush1.bf16.msra.mxu0 0
    %1215 = vmatprep.subr.bf16.mxu0 0
    %1216 = vmatpush1.bf16.msra.mxu0 0
    %1217 = vmatprep.subr.bf16.mxu0 %v1200
    %1218 = vmatpush1.bf16.msra.mxu0 %v1199
    %1219 = vmatprep.subr.bf16.mxu0 %v1198
    %1220 = vmatpush1.bf16.msra.mxu0 %v1197
    %1221 = vmatprep.subr.bf16.mxu0 0
    %1222 = vmatpush2.bf16.msra.mxu0 0
    %1223 = vmatprep.subr.bf16.mxu0 0
    %1224 = vmatpush2.bf16.msra.mxu0 0
    %1225 = vmatprep.subr.bf16.mxu0 0
    %1226 = vmatpush2.bf16.msra.mxu0 0
    %1227 = vmatprep.subr.bf16.mxu0 0
    %1228 = vmatpush2.bf16.msra.mxu0 0
    %1229 = vmatprep.subr.bf16.mxu0 0
    %1230 = vmatpush2.bf16.msra.mxu0 0
    %1231 = vmatprep.subr.bf16.mxu0 0
    %1232 = vmatpush2.bf16.msra.mxu0 0
    %1233 = vmatprep.subr.bf16.mxu0 0
    %1234 = vmatpush2.bf16.msra.mxu0 0
    %1235 = vmatprep.subr.bf16.mxu0 0
    %1236 = vmatpush2.bf16.msra.mxu0 0
    %1237 = vmatprep.mubr.bf16.mxu0 0
    %1238 = vmatmul.mubr.bf16.gmra.mxu0 %v791
    %v1239 = vpop.f32.mrf.mxu0
    %v1240 = vadd.f32 0.0, %v1239
    %v1241 = vpop.f32.mrf.mxu0
    %v1242 = vadd.f32 0.0, %v1241
    %v1243 = vpop.f32.mrf.mxu0
    %v1244 = vpop.f32.mrf.mxu0
    %1245 = vdwg.mxu0
    %1246 = vset.pattern.permute.xlu0 24
    %1247 = vperm.xlu0 %1246, %v760
    %v1248 = vpop.permute.xlu0 %1247
    %v1250 = vmul.f32 %v1240, %v1248
    %v1251 = vadd.f32 %v1180, %v1250
    %1252 = vset.pattern.permute.xlu0 25
    %1253 = vperm.xlu0 %1252, %v760
    %v1254 = vpop.permute.xlu0 %1253
    %v1256 = vmul.f32 %v1240, %v1254
    %1258 = vrot.lane.b32.xlu0 %v1256, 96
    %v1259 = vpop.permute.xlu0 %1258
    %v1261 = vadd.f32 %v1251, %v1259
    %1262 = vset.pattern.permute.xlu0 26
    %1263 = vperm.xlu0 %1262, %v760
    %v1264 = vpop.permute.xlu0 %1263
    %v1266 = vmul.f32 %v1240, %v1264
    %1268 = vrot.lane.b32.xlu0 %v1266, 64
    %v1269 = vpop.permute.xlu0 %1268
    %v1271 = vadd.f32 %v1261, %v1269
    %1272 = vset.pattern.permute.xlu0 27
    %1273 = vperm.xlu0 %1272, %v760
    %v1274 = vpop.permute.xlu0 %1273
    %v1276 = vmul.f32 %v1240, %v1274
    %1278 = vrot.lane.b32.xlu0 %v1276, 32
    %v1279 = vpop.permute.xlu0 %1278
    %v1281 = vadd.f32 %v1271, %v1279
    %1282 = vset.pattern.permute.xlu0 28
    %1283 = vperm.xlu0 %1282, %v760
    %v1284 = vpop.permute.xlu0 %1283
    %v1286 = vmul.f32 %v1242, %v1284
    %v1287 = vadd.f32 %v1281, %v1286
    %1288 = vset.pattern.permute.xlu0 29
    %1289 = vperm.xlu0 %1288, %v760
    %v1290 = vpop.permute.xlu0 %1289
    %v1292 = vmul.f32 %v1242, %v1290
    %1294 = vrot.lane.b32.xlu0 %v1292, 96
    %v1295 = vpop.permute.xlu0 %1294
    %v1297 = vadd.f32 %v1287, %v1295
    %1298 = vset.pattern.permute.xlu0 30
    %1299 = vperm.xlu0 %1298, %v760
    %v1300 = vpop.permute.xlu0 %1299
    %v1302 = vmul.f32 %v1242, %v1300
    %1304 = vrot.lane.b32.xlu0 %v1302, 64
    %v1305 = vpop.permute.xlu0 %1304
    %v1307 = vadd.f32 %v1297, %v1305
    %1308 = vset.pattern.permute.xlu0 31
    %1309 = vperm.xlu0 %1308, %v760
    %v1310 = vpop.permute.xlu0 %1309
    %v1312 = vmul.f32 %v1242, %v1310
    %1314 = vrot.lane.b32.xlu0 %v1312, 32
    %v1315 = vpop.permute.xlu0 %1314
    %v1317 = vadd.f32 %v1307, %v1315
    %v1319 = vsel %vm152, %v757, 0
    %1321 = vmatprep.subr.mxu0 0.0
    %1322 = vmatpush1.msra.mxu0 0.0
    %1323 = vmatprep.subr.mxu0 0.0
    %1324 = vmatpush1.msra.mxu0 0.0
    %1325 = vmatprep.subr.mxu0 0.0
    %1326 = vmatpush1.msra.mxu0 0.0
    %1327 = vmatprep.subr.mxu0 0.0
    %1328 = vmatpush1.msra.mxu0 0.0
    %1329 = vmatprep.subr.mxu0 0.0
    %1330 = vmatpush1.msra.mxu0 0.0
    %1331 = vmatprep.subr.mxu0 0.0
    %1332 = vmatpush1.msra.mxu0 0.0
    %1333 = vmatprep.subr.mxu0 0.0
    %1334 = vmatpush1.msra.mxu0 0.0
    %1335 = vmatprep.subr.mxu0 0.0
    %1336 = vmatpush1.msra.mxu0 0.0
    %1337 = vmatprep.subr.mxu0 0.0
    %1338 = vmatpush1.msra.mxu0 0.0
    %1339 = vmatprep.subr.mxu0 0.0
    %1340 = vmatpush1.msra.mxu0 0.0
    %1341 = vmatprep.subr.mxu0 0.0
    %1342 = vmatpush1.msra.mxu0 0.0
    %1343 = vmatprep.subr.mxu0 0.0
    %1344 = vmatpush1.msra.mxu0 0.0
    %1345 = vmatprep.subr.mxu0 0.0
    %1346 = vmatpush1.msra.mxu0 %v115
    %1347 = vmatprep.subr.mxu0 0.0
    %1348 = vmatpush1.msra.mxu0 %v114
    %1349 = vmatprep.subr.mxu0 0.0
    %1350 = vmatpush1.msra.mxu0 %v113
    %1351 = vmatprep.subr.mxu0 0.0
    %1352 = vmatpush1.msra.mxu0 %v112
    %1353 = vmatprep.subr.mxu0 0.0
    %1354 = vmatpush2.msra.mxu0 0.0
    %1355 = vmatprep.subr.mxu0 0.0
    %1356 = vmatpush2.msra.mxu0 0.0
    %1357 = vmatprep.subr.mxu0 0.0
    %1358 = vmatpush2.msra.mxu0 0.0
    %1359 = vmatprep.subr.mxu0 0.0
    %1360 = vmatpush2.msra.mxu0 0.0
    %1361 = vmatprep.subr.mxu0 0.0
    %1362 = vmatpush2.msra.mxu0 0.0
    %1363 = vmatprep.subr.mxu0 0.0
    %1364 = vmatpush2.msra.mxu0 0.0
    %1365 = vmatprep.subr.mxu0 0.0
    %1366 = vmatpush2.msra.mxu0 0.0
    %1367 = vmatprep.subr.mxu0 0.0
    %1368 = vmatpush2.msra.mxu0 0.0
    %1369 = vmatprep.subr.mxu0 0.0
    %1370 = vmatpush2.msra.mxu0 0.0
    %1371 = vmatprep.subr.mxu0 0.0
    %1372 = vmatpush2.msra.mxu0 0.0
    %1373 = vmatprep.subr.mxu0 0.0
    %1374 = vmatpush2.msra.mxu0 0.0
    %1375 = vmatprep.subr.mxu0 0.0
    %1376 = vmatpush2.msra.mxu0 0.0
    %1377 = vmatprep.subr.mxu0 0.0
    %1378 = vmatpush2.msra.mxu0 0.0
    %1379 = vmatprep.subr.mxu0 0.0
    %1380 = vmatpush2.msra.mxu0 0.0
    %1381 = vmatprep.subr.mxu0 0.0
    %1382 = vmatpush2.msra.mxu0 0.0
    %1383 = vmatprep.subr.mxu0 0.0
    %1384 = vmatpush2.msra.mxu0 0.0
    %1385 = vmatprep.mubr.f32.mxu0 0.0
    %1386 = vmatmul.mubr.f32.gmra.mxu0 %v1319
    %v1387 = vpop.f32.mrf.mxu0
    %v1388 = vadd.f32 %v121, %v1387
    %v1389 = vpop.f32.mrf.mxu0
    %1390 = vdwg.mxu0
    %v1391 = vadd.f32 %v1388, %v762
    %v1392 = vmax.f32 %v1391, 0.0
    %v1393 = vmul.f32 %v757, 0.0
    %v1394 = vadd.f32 %v1393, %v1392
    %s1395 = scalar_lea.vmem %s7, 8
    %1396 = vst.msk [vmem:[%s1395] sm:$0xff] %vm152, %v1317
    %s1397 = scalar_lea.vmem %s0, 16
    %v1398 = vld [vmem:[%s1397] sm:$0xff]
    %s1399 = scalar_lea.vmem %s1, 16
    %v1400 = vld [vmem:[%s1399] sm:$0xff]
    %s1401 = scalar_lea.vmem %s2, 16
    %v1402 = vld [vmem:[%s1401] sm:$0xff]
    %v1403 = vpack.c.bf16 %v1394, %v1394
    %v1404 = vld [vmem:[#allocation2] sm:$0xff]
    %v1405 = vld [vmem:[#allocation2 + $0x20] sm:$0xff]
    %v1406 = vld [vmem:[#allocation2 + $0x40] sm:$0xff]
    %v1407 = vld [vmem:[#allocation2 + $0x60] sm:$0xff]
    %v1412 = vunpack.c.l.b16 %v1404
    %v1413 = vunpack.c.h.b16 %v1404
    %v1414 = vunpack.c.l.b16 %v1405
    %v1415 = vunpack.c.h.b16 %v1405
    %v1416 = vunpack.c.l.b16 %v1406
    %v1417 = vunpack.c.h.b16 %v1406
    %v1418 = vunpack.c.l.b16 %v1407
    %v1419 = vunpack.c.h.b16 %v1407
    %v1420 = vpack.c.b16 %v1414, %v1412
    %v1421 = vpack.c.b16 %v1415, %v1413
    %v1422 = vpack.c.b16 %v1418, %v1416
    %v1423 = vpack.c.b16 %v1419, %v1417
    %v1429 = vsel %vm152, %v1403, 0
    %1431 = vmatprep.subr.bf16.mxu0 0
    %1432 = vmatpush1.bf16.msra.mxu0 0
    %1433 = vmatprep.subr.bf16.mxu0 0
    %1434 = vmatpush1.bf16.msra.mxu0 0
    %1435 = vmatprep.subr.bf16.mxu0 0
    %1436 = vmatpush1.bf16.msra.mxu0 0
    %1437 = vmatprep.subr.bf16.mxu0 0
    %1438 = vmatpush1.bf16.msra.mxu0 0
    %1439 = vmatprep.subr.bf16.mxu0 0
    %1440 = vmatpush1.bf16.msra.mxu0 0
    %1441 = vmatprep.subr.bf16.mxu0 0
    %1442 = vmatpush1.bf16.msra.mxu0 0
    %1443 = vmatprep.subr.bf16.mxu0 %v1423
    %1444 = vmatpush1.bf16.msra.mxu0 %v1422
    %1445 = vmatprep.subr.bf16.mxu0 %v1421
    %1446 = vmatpush1.bf16.msra.mxu0 %v1420
    %1447 = vmatprep.subr.bf16.mxu0 0
    %1448 = vmatpush2.bf16.msra.mxu0 0
    %1449 = vmatprep.subr.bf16.mxu0 0
    %1450 = vmatpush2.bf16.msra.mxu0 0
    %1451 = vmatprep.subr.bf16.mxu0 0
    %1452 = vmatpush2.bf16.msra.mxu0 0
    %1453 = vmatprep.subr.bf16.mxu0 0
    %1454 = vmatpush2.bf16.msra.mxu0 0
    %1455 = vmatprep.subr.bf16.mxu0 0
    %1456 = vmatpush2.bf16.msra.mxu0 0
    %1457 = vmatprep.subr.bf16.mxu0 0
    %1458 = vmatpush2.bf16.msra.mxu0 0
    %1459 = vmatprep.subr.bf16.mxu0 0
    %1460 = vmatpush2.bf16.msra.mxu0 0
    %1461 = vmatprep.subr.bf16.mxu0 0
    %1462 = vmatpush2.bf16.msra.mxu0 0
    %1463 = vmatprep.mubr.bf16.mxu0 0
    %1464 = vmatmul.mubr.bf16.gmra.mxu0 %v1429
    %v1465 = vpop.f32.mrf.mxu0
    %v1466 = vadd.f32 0.0, %v1465
    %v1467 = vpop.f32.mrf.mxu0
    %v1468 = vadd.f32 0.0, %v1467
    %v1469 = vpop.f32.mrf.mxu0
    %v1470 = vpop.f32.mrf.mxu0
    %1471 = vdwg.mxu0
    %1473 = vset.pattern.permute.xlu0 0
    %1474 = vperm.xlu0 %1473, %v1398
    %v1475 = vpop.permute.xlu0 %1474
    %v1477 = vmul.f32 %v1466, %v1475
    %v1478 = vadd.f32 %v1402, %v1477
    %1479 = vset.pattern.permute.xlu0 1
    %1480 = vperm.xlu0 %1479, %v1398
    %v1481 = vpop.permute.xlu0 %1480
    %v1483 = vmul.f32 %v1466, %v1481
    %1485 = vrot.lane.b32.xlu0 %v1483, 96
    %v1486 = vpop.permute.xlu0 %1485
    %v1488 = vadd.f32 %v1478, %v1486
    %1489 = vset.pattern.permute.xlu0 2
    %1490 = vperm.xlu0 %1489, %v1398
    %v1491 = vpop.permute.xlu0 %1490
    %v1493 = vmul.f32 %v1466, %v1491
    %1495 = vrot.lane.b32.xlu0 %v1493, 64
    %v1496 = vpop.permute.xlu0 %1495
    %v1498 = vadd.f32 %v1488, %v1496
    %1499 = vset.pattern.permute.xlu0 3
    %1500 = vperm.xlu0 %1499, %v1398
    %v1501 = vpop.permute.xlu0 %1500
    %v1503 = vmul.f32 %v1466, %v1501
    %1505 = vrot.lane.b32.xlu0 %v1503, 32
    %v1506 = vpop.permute.xlu0 %1505
    %v1508 = vadd.f32 %v1498, %v1506
    %1509 = vset.pattern.permute.xlu0 4
    %1510 = vperm.xlu0 %1509, %v1398
    %v1511 = vpop.permute.xlu0 %1510
    %v1513 = vmul.f32 %v1468, %v1511
    %v1514 = vadd.f32 %v1508, %v1513
    %1515 = vset.pattern.permute.xlu0 5
    %1516 = vperm.xlu0 %1515, %v1398
    %v1517 = vpop.permute.xlu0 %1516
    %v1519 = vmul.f32 %v1468, %v1517
    %1521 = vrot.lane.b32.xlu0 %v1519, 96
    %v1522 = vpop.permute.xlu0 %1521
    %v1524 = vadd.f32 %v1514, %v1522
    %1525 = vset.pattern.permute.xlu0 6
    %1526 = vperm.xlu0 %1525, %v1398
    %v1527 = vpop.permute.xlu0 %1526
    %v1529 = vmul.f32 %v1468, %v1527
    %1531 = vrot.lane.b32.xlu0 %v1529, 64
    %v1532 = vpop.permute.xlu0 %1531
    %v1534 = vadd.f32 %v1524, %v1532
    %1535 = vset.pattern.permute.xlu0 7
    %1536 = vperm.xlu0 %1535, %v1398
    %v1537 = vpop.permute.xlu0 %1536
    %v1539 = vmul.f32 %v1468, %v1537
    %1541 = vrot.lane.b32.xlu0 %v1539, 32
    %v1542 = vpop.permute.xlu0 %1541
    %v1544 = vadd.f32 %v1534, %v1542
    %v1545 = vld [vmem:[#allocation2 + $0x8] sm:$0xff]
    %v1546 = vld [vmem:[#allocation2 + $0x28] sm:$0xff]
    %v1547 = vld [vmem:[#allocation2 + $0x48] sm:$0xff]
    %v1548 = vld [vmem:[#allocation2 + $0x68] sm:$0xff]
    %v1553 = vunpack.c.l.b16 %v1545
    %v1554 = vunpack.c.h.b16 %v1545
    %v1555 = vunpack.c.l.b16 %v1546
    %v1556 = vunpack.c.h.b16 %v1546
    %v1557 = vunpack.c.l.b16 %v1547
    %v1558 = vunpack.c.h.b16 %v1547
    %v1559 = vunpack.c.l.b16 %v1548
    %v1560 = vunpack.c.h.b16 %v1548
    %v1561 = vpack.c.b16 %v1555, %v1553
    %v1562 = vpack.c.b16 %v1556, %v1554
    %v1563 = vpack.c.b16 %v1559, %v1557
    %v1564 = vpack.c.b16 %v1560, %v1558
    %1569 = vmatprep.subr.bf16.mxu0 0
    %1570 = vmatpush1.bf16.msra.mxu0 0
    %1571 = vmatprep.subr.bf16.mxu0 0
    %1572 = vmatpush1.bf16.msra.mxu0 0
    %1573 = vmatprep.subr.bf16.mxu0 0
    %1574 = vmatpush1.bf16.msra.mxu0 0
    %1575 = vmatprep.subr.bf16.mxu0 0
    %1576 = vmatpush1.bf16.msra.mxu0 0
    %1577 = vmatprep.subr.bf16.mxu0 0
    %1578 = vmatpush1.bf16.msra.mxu0 0
    %1579 = vmatprep.subr.bf16.mxu0 0
    %1580 = vmatpush1.bf16.msra.mxu0 0
    %1581 = vmatprep.subr.bf16.mxu0 %v1564
    %1582 = vmatpush1.bf16.msra.mxu0 %v1563
    %1583 = vmatprep.subr.bf16.mxu0 %v1562
    %1584 = vmatpush1.bf16.msra.mxu0 %v1561
    %1585 = vmatprep.subr.bf16.mxu0 0
    %1586 = vmatpush2.bf16.msra.mxu0 0
    %1587 = vmatprep.subr.bf16.mxu0 0
    %1588 = vmatpush2.bf16.msra.mxu0 0
    %1589 = vmatprep.subr.bf16.mxu0 0
    %1590 = vmatpush2.bf16.msra.mxu0 0
    %1591 = vmatprep.subr.bf16.mxu0 0
    %1592 = vmatpush2.bf16.msra.mxu0 0
    %1593 = vmatprep.subr.bf16.mxu0 0
    %1594 = vmatpush2.bf16.msra.mxu0 0
    %1595 = vmatprep.subr.bf16.mxu0 0
    %1596 = vmatpush2.bf16.msra.mxu0 0
    %1597 = vmatprep.subr.bf16.mxu0 0
    %1598 = vmatpush2.bf16.msra.mxu0 0
    %1599 = vmatprep.subr.bf16.mxu0 0
    %1600 = vmatpush2.bf16.msra.mxu0 0
    %1601 = vmatprep.mubr.bf16.mxu0 0
    %1602 = vmatmul.mubr.bf16.gmra.mxu0 %v1429
    %v1603 = vpop.f32.mrf.mxu0
    %v1604 = vadd.f32 0.0, %v1603
    %v1605 = vpop.f32.mrf.mxu0
    %v1606 = vadd.f32 0.0, %v1605
    %v1607 = vpop.f32.mrf.mxu0
    %v1608 = vpop.f32.mrf.mxu0
    %1609 = vdwg.mxu0
    %1610 = vset.pattern.permute.xlu0 8
    %1611 = vperm.xlu0 %1610, %v1398
    %v1612 = vpop.permute.xlu0 %1611
    %v1614 = vmul.f32 %v1604, %v1612
    %v1615 = vadd.f32 %v1544, %v1614
    %1616 = vset.pattern.permute.xlu0 9
    %1617 = vperm.xlu0 %1616, %v1398
    %v1618 = vpop.permute.xlu0 %1617
    %v1620 = vmul.f32 %v1604, %v1618
    %1622 = vrot.lane.b32.xlu0 %v1620, 96
    %v1623 = vpop.permute.xlu0 %1622
    %v1625 = vadd.f32 %v1615, %v1623
    %1626 = vset.pattern.permute.xlu0 10
    %1627 = vperm.xlu0 %1626, %v1398
    %v1628 = vpop.permute.xlu0 %1627
    %v1630 = vmul.f32 %v1604, %v1628
    %1632 = vrot.lane.b32.xlu0 %v1630, 64
    %v1633 = vpop.permute.xlu0 %1632
    %v1635 = vadd.f32 %v1625, %v1633
    %1636 = vset.pattern.permute.xlu0 11
    %1637 = vperm.xlu0 %1636, %v1398
    %v1638 = vpop.permute.xlu0 %1637
    %v1640 = vmul.f32 %v1604, %v1638
    %1642 = vrot.lane.b32.xlu0 %v1640, 32
    %v1643 = vpop.permute.xlu0 %1642
    %v1645 = vadd.f32 %v1635, %v1643
    %1646 = vset.pattern.permute.xlu0 12
    %1647 = vperm.xlu0 %1646, %v1398
    %v1648 = vpop.permute.xlu0 %1647
    %v1650 = vmul.f32 %v1606, %v1648
    %v1651 = vadd.f32 %v1645, %v1650
    %1652 = vset.pattern.permute.xlu0 13
    %1653 = vperm.xlu0 %1652, %v1398
    %v1654 = vpop.permute.xlu0 %1653
    %v1656 = vmul.f32 %v1606, %v1654
    %1658 = vrot.lane.b32.xlu0 %v1656, 96
    %v1659 = vpop.permute.xlu0 %1658
    %v1661 = vadd.f32 %v1651, %v1659
    %1662 = vset.pattern.permute.xlu0 14
    %1663 = vperm.xlu0 %1662, %v1398
    %v1664 = vpop.permute.xlu0 %1663
    %v1666 = vmul.f32 %v1606, %v1664
    %1668 = vrot.lane.b32.xlu0 %v1666, 64
    %v1669 = vpop.permute.xlu0 %1668
    %v1671 = vadd.f32 %v1661, %v1669
    %1672 = vset.pattern.permute.xlu0 15
    %1673 = vperm.xlu0 %1672, %v1398
    %v1674 = vpop.permute.xlu0 %1673
    %v1676 = vmul.f32 %v1606, %v1674
    %1678 = vrot.lane.b32.xlu0 %v1676, 32
    %v1679 = vpop.permute.xlu0 %1678
    %v1681 = vadd.f32 %v1671, %v1679
    %v1682 = vld [vmem:[#allocation2 + $0x10] sm:$0xff]
    %v1683 = vld [vmem:[#allocation2 + $0x30] sm:$0xff]
    %v1684 = vld [vmem:[#allocation2 + $0x50] sm:$0xff]
    %v1685 = vld [vmem:[#allocation2 + $0x70] sm:$0xff]
    %v1690 = vunpack.c.l.b16 %v1682
    %v1691 = vunpack.c.h.b16 %v1682
    %v1692 = vunpack.c.l.b16 %v1683
    %v1693 = vunpack.c.h.b16 %v1683
    %v1694 = vunpack.c.l.b16 %v1684
    %v1695 = vunpack.c.h.b16 %v1684
    %v1696 = vunpack.c.l.b16 %v1685
    %v1697 = vunpack.c.h.b16 %v1685
    %v1698 = vpack.c.b16 %v1692, %v1690
    %v1699 = vpack.c.b16 %v1693, %v1691
    %v1700 = vpack.c.b16 %v1696, %v1694
    %v1701 = vpack.c.b16 %v1697, %v1695
    %1706 = vmatprep.subr.bf16.mxu0 0
    %1707 = vmatpush1.bf16.msra.mxu0 0
    %1708 = vmatprep.subr.bf16.mxu0 0
    %1709 = vmatpush1.bf16.msra.mxu0 0
    %1710 = vmatprep.subr.bf16.mxu0 0
    %1711 = vmatpush1.bf16.msra.mxu0 0
    %1712 = vmatprep.subr.bf16.mxu0 0
    %1713 = vmatpush1.bf16.msra.mxu0 0
    %1714 = vmatprep.subr.bf16.mxu0 0
    %1715 = vmatpush1.bf16.msra.mxu0 0
    %1716 = vmatprep.subr.bf16.mxu0 0
    %1717 = vmatpush1.bf16.msra.mxu0 0
    %1718 = vmatprep.subr.bf16.mxu0 %v1701
    %1719 = vmatpush1.bf16.msra.mxu0 %v1700
    %1720 = vmatprep.subr.bf16.mxu0 %v1699
    %1721 = vmatpush1.bf16.msra.mxu0 %v1698
    %1722 = vmatprep.subr.bf16.mxu0 0
    %1723 = vmatpush2.bf16.msra.mxu0 0
    %1724 = vmatprep.subr.bf16.mxu0 0
    %1725 = vmatpush2.bf16.msra.mxu0 0
    %1726 = vmatprep.subr.bf16.mxu0 0
    %1727 = vmatpush2.bf16.msra.mxu0 0
    %1728 = vmatprep.subr.bf16.mxu0 0
    %1729 = vmatpush2.bf16.msra.mxu0 0
    %1730 = vmatprep.subr.bf16.mxu0 0
    %1731 = vmatpush2.bf16.msra.mxu0 0
    %1732 = vmatprep.subr.bf16.mxu0 0
    %1733 = vmatpush2.bf16.msra.mxu0 0
    %1734 = vmatprep.subr.bf16.mxu0 0
    %1735 = vmatpush2.bf16.msra.mxu0 0
    %1736 = vmatprep.subr.bf16.mxu0 0
    %1737 = vmatpush2.bf16.msra.mxu0 0
    %1738 = vmatprep.mubr.bf16.mxu0 0
    %1739 = vmatmul.mubr.bf16.gmra.mxu0 %v1429
    %v1740 = vpop.f32.mrf.mxu0
    %v1741 = vadd.f32 0.0, %v1740
    %v1742 = vpop.f32.mrf.mxu0
    %v1743 = vadd.f32 0.0, %v1742
    %v1744 = vpop.f32.mrf.mxu0
    %v1745 = vpop.f32.mrf.mxu0
    %1746 = vdwg.mxu0
    %1747 = vset.pattern.permute.xlu0 16
    %1748 = vperm.xlu0 %1747, %v1398
    %v1749 = vpop.permute.xlu0 %1748
    %v1751 = vmul.f32 %v1741, %v1749
    %v1752 = vadd.f32 %v1681, %v1751
    %1753 = vset.pattern.permute.xlu0 17
    %1754 = vperm.xlu0 %1753, %v1398
    %v1755 = vpop.permute.xlu0 %1754
    %v1757 = vmul.f32 %v1741, %v1755
    %1759 = vrot.lane.b32.xlu0 %v1757, 96
    %v1760 = vpop.permute.xlu0 %1759
    %v1762 = vadd.f32 %v1752, %v1760
    %1763 = vset.pattern.permute.xlu0 18
    %1764 = vperm.xlu0 %1763, %v1398
    %v1765 = vpop.permute.xlu0 %1764
    %v1767 = vmul.f32 %v1741, %v1765
    %1769 = vrot.lane.b32.xlu0 %v1767, 64
    %v1770 = vpop.permute.xlu0 %1769
    %v1772 = vadd.f32 %v1762, %v1770
    %1773 = vset.pattern.permute.xlu0 19
    %1774 = vperm.xlu0 %1773, %v1398
    %v1775 = vpop.permute.xlu0 %1774
    %v1777 = vmul.f32 %v1741, %v1775
    %1779 = vrot.lane.b32.xlu0 %v1777, 32
    %v1780 = vpop.permute.xlu0 %1779
    %v1782 = vadd.f32 %v1772, %v1780
    %1783 = vset.pattern.permute.xlu0 20
    %1784 = vperm.xlu0 %1783, %v1398
    %v1785 = vpop.permute.xlu0 %1784
    %v1787 = vmul.f32 %v1743, %v1785
    %v1788 = vadd.f32 %v1782, %v1787
    %1789 = vset.pattern.permute.xlu0 21
    %1790 = vperm.xlu0 %1789, %v1398
    %v1791 = vpop.permute.xlu0 %1790
    %v1793 = vmul.f32 %v1743, %v1791
    %1795 = vrot.lane.b32.xlu0 %v1793, 96
    %v1796 = vpop.permute.xlu0 %1795
    %v1798 = vadd.f32 %v1788, %v1796
    %1799 = vset.pattern.permute.xlu0 22
    %1800 = vperm.xlu0 %1799, %v1398
    %v1801 = vpop.permute.xlu0 %1800
    %v1803 = vmul.f32 %v1743, %v1801
    %1805 = vrot.lane.b32.xlu0 %v1803, 64
    %v1806 = vpop.permute.xlu0 %1805
    %v1808 = vadd.f32 %v1798, %v1806
    %1809 = vset.pattern.permute.xlu0 23
    %1810 = vperm.xlu0 %1809, %v1398
    %v1811 = vpop.permute.xlu0 %1810
    %v1813 = vmul.f32 %v1743, %v1811
    %1815 = vrot.lane.b32.xlu0 %v1813, 32
    %v1816 = vpop.permute.xlu0 %1815
    %v1818 = vadd.f32 %v1808, %v1816
    %v1819 = vld [vmem:[#allocation2 + $0x18] sm:$0xff]
    %v1820 = vld [vmem:[#allocation2 + $0x38] sm:$0xff]
    %v1821 = vld [vmem:[#allocation2 + $0x58] sm:$0xff]
    %v1822 = vld [vmem:[#allocation2 + $0x78] sm:$0xff]
    %v1827 = vunpack.c.l.b16 %v1819
    %v1828 = vunpack.c.h.b16 %v1819
    %v1829 = vunpack.c.l.b16 %v1820
    %v1830 = vunpack.c.h.b16 %v1820
    %v1831 = vunpack.c.l.b16 %v1821
    %v1832 = vunpack.c.h.b16 %v1821
    %v1833 = vunpack.c.l.b16 %v1822
    %v1834 = vunpack.c.h.b16 %v1822
    %v1835 = vpack.c.b16 %v1829, %v1827
    %v1836 = vpack.c.b16 %v1830, %v1828
    %v1837 = vpack.c.b16 %v1833, %v1831
    %v1838 = vpack.c.b16 %v1834, %v1832
    %1843 = vmatprep.subr.bf16.mxu0 0
    %1844 = vmatpush1.bf16.msra.mxu0 0
    %1845 = vmatprep.subr.bf16.mxu0 0
    %1846 = vmatpush1.bf16.msra.mxu0 0
    %1847 = vmatprep.subr.bf16.mxu0 0
    %1848 = vmatpush1.bf16.msra.mxu0 0
    %1849 = vmatprep.subr.bf16.mxu0 0
    %1850 = vmatpush1.bf16.msra.mxu0 0
    %1851 = vmatprep.subr.bf16.mxu0 0
    %1852 = vmatpush1.bf16.msra.mxu0 0
    %1853 = vmatprep.subr.bf16.mxu0 0
    %1854 = vmatpush1.bf16.msra.mxu0 0
    %1855 = vmatprep.subr.bf16.mxu0 %v1838
    %1856 = vmatpush1.bf16.msra.mxu0 %v1837
    %1857 = vmatprep.subr.bf16.mxu0 %v1836
    %1858 = vmatpush1.bf16.msra.mxu0 %v1835
    %1859 = vmatprep.subr.bf16.mxu0 0
    %1860 = vmatpush2.bf16.msra.mxu0 0
    %1861 = vmatprep.subr.bf16.mxu0 0
    %1862 = vmatpush2.bf16.msra.mxu0 0
    %1863 = vmatprep.subr.bf16.mxu0 0
    %1864 = vmatpush2.bf16.msra.mxu0 0
    %1865 = vmatprep.subr.bf16.mxu0 0
    %1866 = vmatpush2.bf16.msra.mxu0 0
    %1867 = vmatprep.subr.bf16.mxu0 0
    %1868 = vmatpush2.bf16.msra.mxu0 0
    %1869 = vmatprep.subr.bf16.mxu0 0
    %1870 = vmatpush2.bf16.msra.mxu0 0
    %1871 = vmatprep.subr.bf16.mxu0 0
    %1872 = vmatpush2.bf16.msra.mxu0 0
    %1873 = vmatprep.subr.bf16.mxu0 0
    %1874 = vmatpush2.bf16.msra.mxu0 0
    %1875 = vmatprep.mubr.bf16.mxu0 0
    %1876 = vmatmul.mubr.bf16.gmra.mxu0 %v1429
    %v1877 = vpop.f32.mrf.mxu0
    %v1878 = vadd.f32 0.0, %v1877
    %v1879 = vpop.f32.mrf.mxu0
    %v1880 = vadd.f32 0.0, %v1879
    %v1881 = vpop.f32.mrf.mxu0
    %v1882 = vpop.f32.mrf.mxu0
    %1883 = vdwg.mxu0
    %1884 = vset.pattern.permute.xlu0 24
    %1885 = vperm.xlu0 %1884, %v1398
    %v1886 = vpop.permute.xlu0 %1885
    %v1888 = vmul.f32 %v1878, %v1886
    %v1889 = vadd.f32 %v1818, %v1888
    %1890 = vset.pattern.permute.xlu0 25
    %1891 = vperm.xlu0 %1890, %v1398
    %v1892 = vpop.permute.xlu0 %1891
    %v1894 = vmul.f32 %v1878, %v1892
    %1896 = vrot.lane.b32.xlu0 %v1894, 96
    %v1897 = vpop.permute.xlu0 %1896
    %v1899 = vadd.f32 %v1889, %v1897
    %1900 = vset.pattern.permute.xlu0 26
    %1901 = vperm.xlu0 %1900, %v1398
    %v1902 = vpop.permute.xlu0 %1901
    %v1904 = vmul.f32 %v1878, %v1902
    %1906 = vrot.lane.b32.xlu0 %v1904, 64
    %v1907 = vpop.permute.xlu0 %1906
    %v1909 = vadd.f32 %v1899, %v1907
    %1910 = vset.pattern.permute.xlu0 27
    %1911 = vperm.xlu0 %1910, %v1398
    %v1912 = vpop.permute.xlu0 %1911
    %v1914 = vmul.f32 %v1878, %v1912
    %1916 = vrot.lane.b32.xlu0 %v1914, 32
    %v1917 = vpop.permute.xlu0 %1916
    %v1919 = vadd.f32 %v1909, %v1917
    %1920 = vset.pattern.permute.xlu0 28
    %1921 = vperm.xlu0 %1920, %v1398
    %v1922 = vpop.permute.xlu0 %1921
    %v1924 = vmul.f32 %v1880, %v1922
    %v1925 = vadd.f32 %v1919, %v1924
    %1926 = vset.pattern.permute.xlu0 29
    %1927 = vperm.xlu0 %1926, %v1398
    %v1928 = vpop.permute.xlu0 %1927
    %v1930 = vmul.f32 %v1880, %v1928
    %1932 = vrot.lane.b32.xlu0 %v1930, 96
    %v1933 = vpop.permute.xlu0 %1932
    %v1935 = vadd.f32 %v1925, %v1933
    %1936 = vset.pattern.permute.xlu0 30
    %1937 = vperm.xlu0 %1936, %v1398
    %v1938 = vpop.permute.xlu0 %1937
    %v1940 = vmul.f32 %v1880, %v1938
    %1942 = vrot.lane.b32.xlu0 %v1940, 64
    %v1943 = vpop.permute.xlu0 %1942
    %v1945 = vadd.f32 %v1935, %v1943
    %1946 = vset.pattern.permute.xlu0 31
    %1947 = vperm.xlu0 %1946, %v1398
    %v1948 = vpop.permute.xlu0 %1947
    %v1950 = vmul.f32 %v1880, %v1948
    %1952 = vrot.lane.b32.xlu0 %v1950, 32
    %v1953 = vpop.permute.xlu0 %1952
    %v1955 = vadd.f32 %v1945, %v1953
    %v1957 = vsel %vm152, %v1394, 0
    %1959 = vmatprep.subr.mxu0 0.0
    %1960 = vmatpush1.msra.mxu0 0.0
    %1961 = vmatprep.subr.mxu0 0.0
    %1962 = vmatpush1.msra.mxu0 0.0
    %1963 = vmatprep.subr.mxu0 0.0
    %1964 = vmatpush1.msra.mxu0 0.0
    %1965 = vmatprep.subr.mxu0 0.0
    %1966 = vmatpush1.msra.mxu0 0.0
    %1967 = vmatprep.subr.mxu0 0.0
    %1968 = vmatpush1.msra.mxu0 0.0
    %1969 = vmatprep.subr.mxu0 0.0
    %1970 = vmatpush1.msra.mxu0 0.0
    %1971 = vmatprep.subr.mxu0 0.0
    %1972 = vmatpush1.msra.mxu0 0.0
    %1973 = vmatprep.subr.mxu0 0.0
    %1974 = vmatpush1.msra.mxu0 0.0
    %1975 = vmatprep.subr.mxu0 0.0
    %1976 = vmatpush1.msra.mxu0 0.0
    %1977 = vmatprep.subr.mxu0 0.0
    %1978 = vmatpush1.msra.mxu0 0.0
    %1979 = vmatprep.subr.mxu0 0.0
    %1980 = vmatpush1.msra.mxu0 0.0
    %1981 = vmatprep.subr.mxu0 0.0
    %1982 = vmatpush1.msra.mxu0 0.0
    %1983 = vmatprep.subr.mxu0 0.0
    %1984 = vmatpush1.msra.mxu0 %v115
    %1985 = vmatprep.subr.mxu0 0.0
    %1986 = vmatpush1.msra.mxu0 %v114
    %1987 = vmatprep.subr.mxu0 0.0
    %1988 = vmatpush1.msra.mxu0 %v113
    %1989 = vmatprep.subr.mxu0 0.0
    %1990 = vmatpush1.msra.mxu0 %v112
    %1991 = vmatprep.subr.mxu0 0.0
    %1992 = vmatpush2.msra.mxu0 0.0
    %1993 = vmatprep.subr.mxu0 0.0
    %1994 = vmatpush2.msra.mxu0 0.0
    %1995 = vmatprep.subr.mxu0 0.0
    %1996 = vmatpush2.msra.mxu0 0.0
    %1997 = vmatprep.subr.mxu0 0.0
    %1998 = vmatpush2.msra.mxu0 0.0
    %1999 = vmatprep.subr.mxu0 0.0
    %2000 = vmatpush2.msra.mxu0 0.0
    %2001 = vmatprep.subr.mxu0 0.0
    %2002 = vmatpush2.msra.mxu0 0.0
    %2003 = vmatprep.subr.mxu0 0.0
    %2004 = vmatpush2.msra.mxu0 0.0
    %2005 = vmatprep.subr.mxu0 0.0
    %2006 = vmatpush2.msra.mxu0 0.0
    %2007 = vmatprep.subr.mxu0 0.0
    %2008 = vmatpush2.msra.mxu0 0.0
    %2009 = vmatprep.subr.mxu0 0.0
    %2010 = vmatpush2.msra.mxu0 0.0
    %2011 = vmatprep.subr.mxu0 0.0
    %2012 = vmatpush2.msra.mxu0 0.0
    %2013 = vmatprep.subr.mxu0 0.0
    %2014 = vmatpush2.msra.mxu0 0.0
    %2015 = vmatprep.subr.mxu0 0.0
    %2016 = vmatpush2.msra.mxu0 0.0
    %2017 = vmatprep.subr.mxu0 0.0
    %2018 = vmatpush2.msra.mxu0 0.0
    %2019 = vmatprep.subr.mxu0 0.0
    %2020 = vmatpush2.msra.mxu0 0.0
    %2021 = vmatprep.subr.mxu0 0.0
    %2022 = vmatpush2.msra.mxu0 0.0
    %2023 = vmatprep.mubr.f32.mxu0 0.0
    %2024 = vmatmul.mubr.f32.gmra.mxu0 %v1957
    %v2025 = vpop.f32.mrf.mxu0
    %v2026 = vadd.f32 %v121, %v2025
    %v2027 = vpop.f32.mrf.mxu0
    %2028 = vdwg.mxu0
    %v2029 = vadd.f32 %v2026, %v1400
    %v2030 = vmax.f32 %v2029, 0.0
    %v2031 = vmul.f32 %v1394, 0.0
    %v2032 = vadd.f32 %v2031, %v2030
    %s2033 = scalar_lea.vmem %s7, 16
    %2034 = vst.msk [vmem:[%s2033] sm:$0xff] %vm152, %v1955
    %s2035 = scalar_lea.vmem %s0, 24
    %v2036 = vld [vmem:[%s2035] sm:$0xff]
    %s2037 = scalar_lea.vmem %s1, 24
    %v2038 = vld [vmem:[%s2037] sm:$0xff]
    %s2039 = scalar_lea.vmem %s2, 24
    %v2040 = vld [vmem:[%s2039] sm:$0xff]
    %v2041 = vpack.c.bf16 %v2032, %v2032
    %v2042 = vld [vmem:[#allocation2] sm:$0xff]
    %v2043 = vld [vmem:[#allocation2 + $0x20] sm:$0xff]
    %v2044 = vld [vmem:[#allocation2 + $0x40] sm:$0xff]
    %v2045 = vld [vmem:[#allocation2 + $0x60] sm:$0xff]
    %v2050 = vunpack.c.l.b16 %v2042
    %v2051 = vunpack.c.h.b16 %v2042
    %v2052 = vunpack.c.l.b16 %v2043
    %v2053 = vunpack.c.h.b16 %v2043
    %v2054 = vunpack.c.l.b16 %v2044
    %v2055 = vunpack.c.h.b16 %v2044
    %v2056 = vunpack.c.l.b16 %v2045
    %v2057 = vunpack.c.h.b16 %v2045
    %v2058 = vpack.c.b16 %v2052, %v2050
    %v2059 = vpack.c.b16 %v2053, %v2051
    %v2060 = vpack.c.b16 %v2056, %v2054
    %v2061 = vpack.c.b16 %v2057, %v2055
    %v2067 = vsel %vm152, %v2041, 0
    %2069 = vmatprep.subr.bf16.mxu0 0
    %2070 = vmatpush1.bf16.msra.mxu0 0
    %2071 = vmatprep.subr.bf16.mxu0 0
    %2072 = vmatpush1.bf16.msra.mxu0 0
    %2073 = vmatprep.subr.bf16.mxu0 0
    %2074 = vmatpush1.bf16.msra.mxu0 0
    %2075 = vmatprep.subr.bf16.mxu0 0
    %2076 = vmatpush1.bf16.msra.mxu0 0
    %2077 = vmatprep.subr.bf16.mxu0 0
    %2078 = vmatpush1.bf16.msra.mxu0 0
    %2079 = vmatprep.subr.bf16.mxu0 0
    %2080 = vmatpush1.bf16.msra.mxu0 0
    %2081 = vmatprep.subr.bf16.mxu0 %v2061
    %2082 = vmatpush1.bf16.msra.mxu0 %v2060
    %2083 = vmatprep.subr.bf16.mxu0 %v2059
    %2084 = vmatpush1.bf16.msra.mxu0 %v2058
    %2085 = vmatprep.subr.bf16.mxu0 0
    %2086 = vmatpush2.bf16.msra.mxu0 0
    %2087 = vmatprep.subr.bf16.mxu0 0
    %2088 = vmatpush2.bf16.msra.mxu0 0
    %2089 = vmatprep.subr.bf16.mxu0 0
    %2090 = vmatpush2.bf16.msra.mxu0 0
    %2091 = vmatprep.subr.bf16.mxu0 0
    %2092 = vmatpush2.bf16.msra.mxu0 0
    %2093 = vmatprep.subr.bf16.mxu0 0
    %2094 = vmatpush2.bf16.msra.mxu0 0
    %2095 = vmatprep.subr.bf16.mxu0 0
    %2096 = vmatpush2.bf16.msra.mxu0 0
    %2097 = vmatprep.subr.bf16.mxu0 0
    %2098 = vmatpush2.bf16.msra.mxu0 0
    %2099 = vmatprep.subr.bf16.mxu0 0
    %2100 = vmatpush2.bf16.msra.mxu0 0
    %2101 = vmatprep.mubr.bf16.mxu0 0
    %2102 = vmatmul.mubr.bf16.gmra.mxu0 %v2067
    %v2103 = vpop.f32.mrf.mxu0
    %v2104 = vadd.f32 0.0, %v2103
    %v2105 = vpop.f32.mrf.mxu0
    %v2106 = vadd.f32 0.0, %v2105
    %v2107 = vpop.f32.mrf.mxu0
    %v2108 = vpop.f32.mrf.mxu0
    %2109 = vdwg.mxu0
    %2111 = vset.pattern.permute.xlu0 0
    %2112 = vperm.xlu0 %2111, %v2036
    %v2113 = vpop.permute.xlu0 %2112
    %v2115 = vmul.f32 %v2104, %v2113
    %v2116 = vadd.f32 %v2040, %v2115
    %2117 = vset.pattern.permute.xlu0 1
    %2118 = vperm.xlu0 %2117, %v2036
    %v2119 = vpop.permute.xlu0 %2118
    %v2121 = vmul.f32 %v2104, %v2119
    %2123 = vrot.lane.b32.xlu0 %v2121, 96
    %v2124 = vpop.permute.xlu0 %2123
    %v2126 = vadd.f32 %v2116, %v2124
    %2127 = vset.pattern.permute.xlu0 2
    %2128 = vperm.xlu0 %2127, %v2036
    %v2129 = vpop.permute.xlu0 %2128
    %v2131 = vmul.f32 %v2104, %v2129
    %2133 = vrot.lane.b32.xlu0 %v2131, 64
    %v2134 = vpop.permute.xlu0 %2133
    %v2136 = vadd.f32 %v2126, %v2134
    %2137 = vset.pattern.permute.xlu0 3
    %2138 = vperm.xlu0 %2137, %v2036
    %v2139 = vpop.permute.xlu0 %2138
    %v2141 = vmul.f32 %v2104, %v2139
    %2143 = vrot.lane.b32.xlu0 %v2141, 32
    %v2144 = vpop.permute.xlu0 %2143
    %v2146 = vadd.f32 %v2136, %v2144
    %2147 = vset.pattern.permute.xlu0 4
    %2148 = vperm.xlu0 %2147, %v2036
    %v2149 = vpop.permute.xlu0 %2148
    %v2151 = vmul.f32 %v2106, %v2149
    %v2152 = vadd.f32 %v2146, %v2151
    %2153 = vset.pattern.permute.xlu0 5
    %2154 = vperm.xlu0 %2153, %v2036
    %v2155 = vpop.permute.xlu0 %2154
    %v2157 = vmul.f32 %v2106, %v2155
    %2159 = vrot.lane.b32.xlu0 %v2157, 96
    %v2160 = vpop.permute.xlu0 %2159
    %v2162 = vadd.f32 %v2152, %v2160
    %2163 = vset.pattern.permute.xlu0 6
    %2164 = vperm.xlu0 %2163, %v2036
    %v2165 = vpop.permute.xlu0 %2164
    %v2167 = vmul.f32 %v2106, %v2165
    %2169 = vrot.lane.b32.xlu0 %v2167, 64
    %v2170 = vpop.permute.xlu0 %2169
    %v2172 = vadd.f32 %v2162, %v2170
    %2173 = vset.pattern.permute.xlu0 7
    %2174 = vperm.xlu0 %2173, %v2036
    %v2175 = vpop.permute.xlu0 %2174
    %v2177 = vmul.f32 %v2106, %v2175
    %2179 = vrot.lane.b32.xlu0 %v2177, 32
    %v2180 = vpop.permute.xlu0 %2179
    %v2182 = vadd.f32 %v2172, %v2180
    %v2183 = vld [vmem:[#allocation2 + $0x8] sm:$0xff]
    %v2184 = vld [vmem:[#allocation2 + $0x28] sm:$0xff]
    %v2185 = vld [vmem:[#allocation2 + $0x48] sm:$0xff]
    %v2186 = vld [vmem:[#allocation2 + $0x68] sm:$0xff]
    %v2191 = vunpack.c.l.b16 %v2183
    %v2192 = vunpack.c.h.b16 %v2183
    %v2193 = vunpack.c.l.b16 %v2184
    %v2194 = vunpack.c.h.b16 %v2184
    %v2195 = vunpack.c.l.b16 %v2185
    %v2196 = vunpack.c.h.b16 %v2185
    %v2197 = vunpack.c.l.b16 %v2186
    %v2198 = vunpack.c.h.b16 %v2186
    %v2199 = vpack.c.b16 %v2193, %v2191
    %v2200 = vpack.c.b16 %v2194, %v2192
    %v2201 = vpack.c.b16 %v2197, %v2195
    %v2202 = vpack.c.b16 %v2198, %v2196
    %2207 = vmatprep.subr.bf16.mxu0 0
    %2208 = vmatpush1.bf16.msra.mxu0 0
    %2209 = vmatprep.subr.bf16.mxu0 0
    %2210 = vmatpush1.bf16.msra.mxu0 0
    %2211 = vmatprep.subr.bf16.mxu0 0
    %2212 = vmatpush1.bf16.msra.mxu0 0
    %2213 = vmatprep.subr.bf16.mxu0 0
    %2214 = vmatpush1.bf16.msra.mxu0 0
    %2215 = vmatprep.subr.bf16.mxu0 0
    %2216 = vmatpush1.bf16.msra.mxu0 0
    %2217 = vmatprep.subr.bf16.mxu0 0
    %2218 = vmatpush1.bf16.msra.mxu0 0
    %2219 = vmatprep.subr.bf16.mxu0 %v2202
    %2220 = vmatpush1.bf16.msra.mxu0 %v2201
    %2221 = vmatprep.subr.bf16.mxu0 %v2200
    %2222 = vmatpush1.bf16.msra.mxu0 %v2199
    %2223 = vmatprep.subr.bf16.mxu0 0
    %2224 = vmatpush2.bf16.msra.mxu0 0
    %2225 = vmatprep.subr.bf16.mxu0 0
    %2226 = vmatpush2.bf16.msra.mxu0 0
    %2227 = vmatprep.subr.bf16.mxu0 0
    %2228 = vmatpush2.bf16.msra.mxu0 0
    %2229 = vmatprep.subr.bf16.mxu0 0
    %2230 = vmatpush2.bf16.msra.mxu0 0
    %2231 = vmatprep.subr.bf16.mxu0 0
    %2232 = vmatpush2.bf16.msra.mxu0 0
    %2233 = vmatprep.subr.bf16.mxu0 0
    %2234 = vmatpush2.bf16.msra.mxu0 0
    %2235 = vmatprep.subr.bf16.mxu0 0
    %2236 = vmatpush2.bf16.msra.mxu0 0
    %2237 = vmatprep.subr.bf16.mxu0 0
    %2238 = vmatpush2.bf16.msra.mxu0 0
    %2239 = vmatprep.mubr.bf16.mxu0 0
    %2240 = vmatmul.mubr.bf16.gmra.mxu0 %v2067
    %v2241 = vpop.f32.mrf.mxu0
    %v2242 = vadd.f32 0.0, %v2241
    %v2243 = vpop.f32.mrf.mxu0
    %v2244 = vadd.f32 0.0, %v2243
    %v2245 = vpop.f32.mrf.mxu0
    %v2246 = vpop.f32.mrf.mxu0
    %2247 = vdwg.mxu0
    %2248 = vset.pattern.permute.xlu0 8
    %2249 = vperm.xlu0 %2248, %v2036
    %v2250 = vpop.permute.xlu0 %2249
    %v2252 = vmul.f32 %v2242, %v2250
    %v2253 = vadd.f32 %v2182, %v2252
    %2254 = vset.pattern.permute.xlu0 9
    %2255 = vperm.xlu0 %2254, %v2036
    %v2256 = vpop.permute.xlu0 %2255
    %v2258 = vmul.f32 %v2242, %v2256
    %2260 = vrot.lane.b32.xlu0 %v2258, 96
    %v2261 = vpop.permute.xlu0 %2260
    %v2263 = vadd.f32 %v2253, %v2261
    %2264 = vset.pattern.permute.xlu0 10
    %2265 = vperm.xlu0 %2264, %v2036
    %v2266 = vpop.permute.xlu0 %2265
    %v2268 = vmul.f32 %v2242, %v2266
    %2270 = vrot.lane.b32.xlu0 %v2268, 64
    %v2271 = vpop.permute.xlu0 %2270
    %v2273 = vadd.f32 %v2263, %v2271
    %2274 = vset.pattern.permute.xlu0 11
    %2275 = vperm.xlu0 %2274, %v2036
    %v2276 = vpop.permute.xlu0 %2275
    %v2278 = vmul.f32 %v2242, %v2276
    %2280 = vrot.lane.b32.xlu0 %v2278, 32
    %v2281 = vpop.permute.xlu0 %2280
    %v2283 = vadd.f32 %v2273, %v2281
    %2284 = vset.pattern.permute.xlu0 12
    %2285 = vperm.xlu0 %2284, %v2036
    %v2286 = vpop.permute.xlu0 %2285
    %v2288 = vmul.f32 %v2244, %v2286
    %v2289 = vadd.f32 %v2283, %v2288
    %2290 = vset.pattern.permute.xlu0 13
    %2291 = vperm.xlu0 %2290, %v2036
    %v2292 = vpop.permute.xlu0 %2291
    %v2294 = vmul.f32 %v2244, %v2292
    %2296 = vrot.lane.b32.xlu0 %v2294, 96
    %v2297 = vpop.permute.xlu0 %2296
    %v2299 = vadd.f32 %v2289, %v2297
    %2300 = vset.pattern.permute.xlu0 14
    %2301 = vperm.xlu0 %2300, %v2036
    %v2302 = vpop.permute.xlu0 %2301
    %v2304 = vmul.f32 %v2244, %v2302
    %2306 = vrot.lane.b32.xlu0 %v2304, 64
    %v2307 = vpop.permute.xlu0 %2306
    %v2309 = vadd.f32 %v2299, %v2307
    %2310 = vset.pattern.permute.xlu0 15
    %2311 = vperm.xlu0 %2310, %v2036
    %v2312 = vpop.permute.xlu0 %2311
    %v2314 = vmul.f32 %v2244, %v2312
    %2316 = vrot.lane.b32.xlu0 %v2314, 32
    %v2317 = vpop.permute.xlu0 %2316
    %v2319 = vadd.f32 %v2309, %v2317
    %v2320 = vld [vmem:[#allocation2 + $0x10] sm:$0xff]
    %v2321 = vld [vmem:[#allocation2 + $0x30] sm:$0xff]
    %v2322 = vld [vmem:[#allocation2 + $0x50] sm:$0xff]
    %v2323 = vld [vmem:[#allocation2 + $0x70] sm:$0xff]
    %v2328 = vunpack.c.l.b16 %v2320
    %v2329 = vunpack.c.h.b16 %v2320
    %v2330 = vunpack.c.l.b16 %v2321
    %v2331 = vunpack.c.h.b16 %v2321
    %v2332 = vunpack.c.l.b16 %v2322
    %v2333 = vunpack.c.h.b16 %v2322
    %v2334 = vunpack.c.l.b16 %v2323
    %v2335 = vunpack.c.h.b16 %v2323
    %v2336 = vpack.c.b16 %v2330, %v2328
    %v2337 = vpack.c.b16 %v2331, %v2329
    %v2338 = vpack.c.b16 %v2334, %v2332
    %v2339 = vpack.c.b16 %v2335, %v2333
    %2344 = vmatprep.subr.bf16.mxu0 0
    %2345 = vmatpush1.bf16.msra.mxu0 0
    %2346 = vmatprep.subr.bf16.mxu0 0
    %2347 = vmatpush1.bf16.msra.mxu0 0
    %2348 = vmatprep.subr.bf16.mxu0 0
    %2349 = vmatpush1.bf16.msra.mxu0 0
    %2350 = vmatprep.subr.bf16.mxu0 0
    %2351 = vmatpush1.bf16.msra.mxu0 0
    %2352 = vmatprep.subr.bf16.mxu0 0
    %2353 = vmatpush1.bf16.msra.mxu0 0
    %2354 = vmatprep.subr.bf16.mxu0 0
    %2355 = vmatpush1.bf16.msra.mxu0 0
    %2356 = vmatprep.subr.bf16.mxu0 %v2339
    %2357 = vmatpush1.bf16.msra.mxu0 %v2338
    %2358 = vmatprep.subr.bf16.mxu0 %v2337
    %2359 = vmatpush1.bf16.msra.mxu0 %v2336
    %2360 = vmatprep.subr.bf16.mxu0 0
    %2361 = vmatpush2.bf16.msra.mxu0 0
    %2362 = vmatprep.subr.bf16.mxu0 0
    %2363 = vmatpush2.bf16.msra.mxu0 0
    %2364 = vmatprep.subr.bf16.mxu0 0
    %2365 = vmatpush2.bf16.msra.mxu0 0
    %2366 = vmatprep.subr.bf16.mxu0 0
    %2367 = vmatpush2.bf16.msra.mxu0 0
    %2368 = vmatprep.subr.bf16.mxu0 0
    %2369 = vmatpush2.bf16.msra.mxu0 0
    %2370 = vmatprep.subr.bf16.mxu0 0
    %2371 = vmatpush2.bf16.msra.mxu0 0
    %2372 = vmatprep.subr.bf16.mxu0 0
    %2373 = vmatpush2.bf16.msra.mxu0 0
    %2374 = vmatprep.subr.bf16.mxu0 0
    %2375 = vmatpush2.bf16.msra.mxu0 0
    %2376 = vmatprep.mubr.bf16.mxu0 0
    %2377 = vmatmul.mubr.bf16.gmra.mxu0 %v2067
    %v2378 = vpop.f32.mrf.mxu0
    %v2379 = vadd.f32 0.0, %v2378
    %v2380 = vpop.f32.mrf.mxu0
    %v2381 = vadd.f32 0.0, %v2380
    %v2382 = vpop.f32.mrf.mxu0
    %v2383 = vpop.f32.mrf.mxu0
    %2384 = vdwg.mxu0
    %2385 = vset.pattern.permute.xlu0 16
    %2386 = vperm.xlu0 %2385, %v2036
    %v2387 = vpop.permute.xlu0 %2386
    %v2389 = vmul.f32 %v2379, %v2387
    %v2390 = vadd.f32 %v2319, %v2389
    %2391 = vset.pattern.permute.xlu0 17
    %2392 = vperm.xlu0 %2391, %v2036
    %v2393 = vpop.permute.xlu0 %2392
    %v2395 = vmul.f32 %v2379, %v2393
    %2397 = vrot.lane.b32.xlu0 %v2395, 96
    %v2398 = vpop.permute.xlu0 %2397
    %v2400 = vadd.f32 %v2390, %v2398
    %2401 = vset.pattern.permute.xlu0 18
    %2402 = vperm.xlu0 %2401, %v2036
    %v2403 = vpop.permute.xlu0 %2402
    %v2405 = vmul.f32 %v2379, %v2403
    %2407 = vrot.lane.b32.xlu0 %v2405, 64
    %v2408 = vpop.permute.xlu0 %2407
    %v2410 = vadd.f32 %v2400, %v2408
    %2411 = vset.pattern.permute.xlu0 19
    %2412 = vperm.xlu0 %2411, %v2036
    %v2413 = vpop.permute.xlu0 %2412
    %v2415 = vmul.f32 %v2379, %v2413
    %2417 = vrot.lane.b32.xlu0 %v2415, 32
    %v2418 = vpop.permute.xlu0 %2417
    %v2420 = vadd.f32 %v2410, %v2418
    %2421 = vset.pattern.permute.xlu0 20
    %2422 = vperm.xlu0 %2421, %v2036
    %v2423 = vpop.permute.xlu0 %2422
    %v2425 = vmul.f32 %v2381, %v2423
    %v2426 = vadd.f32 %v2420, %v2425
    %2427 = vset.pattern.permute.xlu0 21
    %2428 = vperm.xlu0 %2427, %v2036
    %v2429 = vpop.permute.xlu0 %2428
    %v2431 = vmul.f32 %v2381, %v2429
    %2433 = vrot.lane.b32.xlu0 %v2431, 96
    %v2434 = vpop.permute.xlu0 %2433
    %v2436 = vadd.f32 %v2426, %v2434
    %2437 = vset.pattern.permute.xlu0 22
    %2438 = vperm.xlu0 %2437, %v2036
    %v2439 = vpop.permute.xlu0 %2438
    %v2441 = vmul.f32 %v2381, %v2439
    %2443 = vrot.lane.b32.xlu0 %v2441, 64
    %v2444 = vpop.permute.xlu0 %2443
    %v2446 = vadd.f32 %v2436, %v2444
    %2447 = vset.pattern.permute.xlu0 23
    %2448 = vperm.xlu0 %2447, %v2036
    %v2449 = vpop.permute.xlu0 %2448
    %v2451 = vmul.f32 %v2381, %v2449
    %2453 = vrot.lane.b32.xlu0 %v2451, 32
    %v2454 = vpop.permute.xlu0 %2453
    %v2456 = vadd.f32 %v2446, %v2454
    %v2457 = vld [vmem:[#allocation2 + $0x18] sm:$0xff]
    %v2458 = vld [vmem:[#allocation2 + $0x38] sm:$0xff]
    %v2459 = vld [vmem:[#allocation2 + $0x58] sm:$0xff]
    %v2460 = vld [vmem:[#allocation2 + $0x78] sm:$0xff]
    %v2465 = vunpack.c.l.b16 %v2457
    %v2466 = vunpack.c.h.b16 %v2457
    %v2467 = vunpack.c.l.b16 %v2458
    %v2468 = vunpack.c.h.b16 %v2458
    %v2469 = vunpack.c.l.b16 %v2459
    %v2470 = vunpack.c.h.b16 %v2459
    %v2471 = vunpack.c.l.b16 %v2460
    %v2472 = vunpack.c.h.b16 %v2460
    %v2473 = vpack.c.b16 %v2467, %v2465
    %v2474 = vpack.c.b16 %v2468, %v2466
    %v2475 = vpack.c.b16 %v2471, %v2469
    %v2476 = vpack.c.b16 %v2472, %v2470
    %2481 = vmatprep.subr.bf16.mxu0 0
    %2482 = vmatpush1.bf16.msra.mxu0 0
    %2483 = vmatprep.subr.bf16.mxu0 0
    %2484 = vmatpush1.bf16.msra.mxu0 0
    %2485 = vmatprep.subr.bf16.mxu0 0
    %2486 = vmatpush1.bf16.msra.mxu0 0
    %2487 = vmatprep.subr.bf16.mxu0 0
    %2488 = vmatpush1.bf16.msra.mxu0 0
    %2489 = vmatprep.subr.bf16.mxu0 0
    %2490 = vmatpush1.bf16.msra.mxu0 0
    %2491 = vmatprep.subr.bf16.mxu0 0
    %2492 = vmatpush1.bf16.msra.mxu0 0
    %2493 = vmatprep.subr.bf16.mxu0 %v2476
    %2494 = vmatpush1.bf16.msra.mxu0 %v2475
    %2495 = vmatprep.subr.bf16.mxu0 %v2474
    %2496 = vmatpush1.bf16.msra.mxu0 %v2473
    %2497 = vmatprep.subr.bf16.mxu0 0
    %2498 = vmatpush2.bf16.msra.mxu0 0
    %2499 = vmatprep.subr.bf16.mxu0 0
    %2500 = vmatpush2.bf16.msra.mxu0 0
    %2501 = vmatprep.subr.bf16.mxu0 0
    %2502 = vmatpush2.bf16.msra.mxu0 0
    %2503 = vmatprep.subr.bf16.mxu0 0
    %2504 = vmatpush2.bf16.msra.mxu0 0
    %2505 = vmatprep.subr.bf16.mxu0 0
    %2506 = vmatpush2.bf16.msra.mxu0 0
    %2507 = vmatprep.subr.bf16.mxu0 0
    %2508 = vmatpush2.bf16.msra.mxu0 0
    %2509 = vmatprep.subr.bf16.mxu0 0
    %2510 = vmatpush2.bf16.msra.mxu0 0
    %2511 = vmatprep.subr.bf16.mxu0 0
    %2512 = vmatpush2.bf16.msra.mxu0 0
    %2513 = vmatprep.mubr.bf16.mxu0 0
    %2514 = vmatmul.mubr.bf16.gmra.mxu0 %v2067
    %v2515 = vpop.f32.mrf.mxu0
    %v2516 = vadd.f32 0.0, %v2515
    %v2517 = vpop.f32.mrf.mxu0
    %v2518 = vadd.f32 0.0, %v2517
    %v2519 = vpop.f32.mrf.mxu0
    %v2520 = vpop.f32.mrf.mxu0
    %2521 = vdwg.mxu0
    %2522 = vset.pattern.permute.xlu0 24
    %2523 = vperm.xlu0 %2522, %v2036
    %v2524 = vpop.permute.xlu0 %2523
    %v2526 = vmul.f32 %v2516, %v2524
    %v2527 = vadd.f32 %v2456, %v2526
    %2528 = vset.pattern.permute.xlu0 25
    %2529 = vperm.xlu0 %2528, %v2036
    %v2530 = vpop.permute.xlu0 %2529
    %v2532 = vmul.f32 %v2516, %v2530
    %2534 = vrot.lane.b32.xlu0 %v2532, 96
    %v2535 = vpop.permute.xlu0 %2534
    %v2537 = vadd.f32 %v2527, %v2535
    %2538 = vset.pattern.permute.xlu0 26
    %2539 = vperm.xlu0 %2538, %v2036
    %v2540 = vpop.permute.xlu0 %2539
    %v2542 = vmul.f32 %v2516, %v2540
    %2544 = vrot.lane.b32.xlu0 %v2542, 64
    %v2545 = vpop.permute.xlu0 %2544
    %v2547 = vadd.f32 %v2537, %v2545
    %2548 = vset.pattern.permute.xlu0 27
    %2549 = vperm.xlu0 %2548, %v2036
    %v2550 = vpop.permute.xlu0 %2549
    %v2552 = vmul.f32 %v2516, %v2550
    %2554 = vrot.lane.b32.xlu0 %v2552, 32
    %v2555 = vpop.permute.xlu0 %2554
    %v2557 = vadd.f32 %v2547, %v2555
    %2558 = vset.pattern.permute.xlu0 28
    %2559 = vperm.xlu0 %2558, %v2036
    %v2560 = vpop.permute.xlu0 %2559
    %v2562 = vmul.f32 %v2518, %v2560
    %v2563 = vadd.f32 %v2557, %v2562
    %2564 = vset.pattern.permute.xlu0 29
    %2565 = vperm.xlu0 %2564, %v2036
    %v2566 = vpop.permute.xlu0 %2565
    %v2568 = vmul.f32 %v2518, %v2566
    %2570 = vrot.lane.b32.xlu0 %v2568, 96
    %v2571 = vpop.permute.xlu0 %2570
    %v2573 = vadd.f32 %v2563, %v2571
    %2574 = vset.pattern.permute.xlu0 30
    %2575 = vperm.xlu0 %2574, %v2036
    %v2576 = vpop.permute.xlu0 %2575
    %v2578 = vmul.f32 %v2518, %v2576
    %2580 = vrot.lane.b32.xlu0 %v2578, 64
    %v2581 = vpop.permute.xlu0 %2580
    %v2583 = vadd.f32 %v2573, %v2581
    %2584 = vset.pattern.permute.xlu0 31
    %2585 = vperm.xlu0 %2584, %v2036
    %v2586 = vpop.permute.xlu0 %2585
    %v2588 = vmul.f32 %v2518, %v2586
    %2590 = vrot.lane.b32.xlu0 %v2588, 32
    %v2591 = vpop.permute.xlu0 %2590
    %v2593 = vadd.f32 %v2583, %v2591
    %v2595 = vsel %vm152, %v2032, 0
    %2597 = vmatprep.subr.mxu0 0.0
    %2598 = vmatpush1.msra.mxu0 0.0
    %2599 = vmatprep.subr.mxu0 0.0
    %2600 = vmatpush1.msra.mxu0 0.0
    %2601 = vmatprep.subr.mxu0 0.0
    %2602 = vmatpush1.msra.mxu0 0.0
    %2603 = vmatprep.subr.mxu0 0.0
    %2604 = vmatpush1.msra.mxu0 0.0
    %2605 = vmatprep.subr.mxu0 0.0
    %2606 = vmatpush1.msra.mxu0 0.0
    %2607 = vmatprep.subr.mxu0 0.0
    %2608 = vmatpush1.msra.mxu0 0.0
    %2609 = vmatprep.subr.mxu0 0.0
    %2610 = vmatpush1.msra.mxu0 0.0
    %2611 = vmatprep.subr.mxu0 0.0
    %2612 = vmatpush1.msra.mxu0 0.0
    %2613 = vmatprep.subr.mxu0 0.0
    %2614 = vmatpush1.msra.mxu0 0.0
    %2615 = vmatprep.subr.mxu0 0.0
    %2616 = vmatpush1.msra.mxu0 0.0
    %2617 = vmatprep.subr.mxu0 0.0
    %2618 = vmatpush1.msra.mxu0 0.0
    %2619 = vmatprep.subr.mxu0 0.0
    %2620 = vmatpush1.msra.mxu0 0.0
    %2621 = vmatprep.subr.mxu0 0.0
    %2622 = vmatpush1.msra.mxu0 %v115
    %2623 = vmatprep.subr.mxu0 0.0
    %2624 = vmatpush1.msra.mxu0 %v114
    %2625 = vmatprep.subr.mxu0 0.0
    %2626 = vmatpush1.msra.mxu0 %v113
    %2627 = vmatprep.subr.mxu0 0.0
    %2628 = vmatpush1.msra.mxu0 %v112
    %2629 = vmatprep.subr.mxu0 0.0
    %2630 = vmatpush2.msra.mxu0 0.0
    %2631 = vmatprep.subr.mxu0 0.0
    %2632 = vmatpush2.msra.mxu0 0.0
    %2633 = vmatprep.subr.mxu0 0.0
    %2634 = vmatpush2.msra.mxu0 0.0
    %2635 = vmatprep.subr.mxu0 0.0
    %2636 = vmatpush2.msra.mxu0 0.0
    %2637 = vmatprep.subr.mxu0 0.0
    %2638 = vmatpush2.msra.mxu0 0.0
    %2639 = vmatprep.subr.mxu0 0.0
    %2640 = vmatpush2.msra.mxu0 0.0
    %2641 = vmatprep.subr.mxu0 0.0
    %2642 = vmatpush2.msra.mxu0 0.0
    %2643 = vmatprep.subr.mxu0 0.0
    %2644 = vmatpush2.msra.mxu0 0.0
    %2645 = vmatprep.subr.mxu0 0.0
    %2646 = vmatpush2.msra.mxu0 0.0
    %2647 = vmatprep.subr.mxu0 0.0
    %2648 = vmatpush2.msra.mxu0 0.0
    %2649 = vmatprep.subr.mxu0 0.0
    %2650 = vmatpush2.msra.mxu0 0.0
    %2651 = vmatprep.subr.mxu0 0.0
    %2652 = vmatpush2.msra.mxu0 0.0
    %2653 = vmatprep.subr.mxu0 0.0
    %2654 = vmatpush2.msra.mxu0 0.0
    %2655 = vmatprep.subr.mxu0 0.0
    %2656 = vmatpush2.msra.mxu0 0.0
    %2657 = vmatprep.subr.mxu0 0.0
    %2658 = vmatpush2.msra.mxu0 0.0
    %2659 = vmatprep.subr.mxu0 0.0
    %2660 = vmatpush2.msra.mxu0 0.0
    %2661 = vmatprep.mubr.f32.mxu0 0.0
    %2662 = vmatmul.mubr.f32.gmra.mxu0 %v2595
    %v2663 = vpop.f32.mrf.mxu0
    %v2664 = vadd.f32 %v121, %v2663
    %v2665 = vpop.f32.mrf.mxu0
    %2666 = vdwg.mxu0
    %v2667 = vadd.f32 %v2664, %v2038
    %v2668 = vmax.f32 %v2667, 0.0
    %v2669 = vmul.f32 %v2032, 0.0
    %v2670 = vadd.f32 %v2669, %v2668
    %s2671 = scalar_lea.vmem %s7, 24
    %2672 = vst.msk [vmem:[%s2671] sm:$0xff] %vm152, %v2593
    %s2673 = scalar_lea.vmem %s0, 32
    %v2674 = vld [vmem:[%s2673] sm:$0xff]
    %s2675 = scalar_lea.vmem %s1, 32
    %v2676 = vld [vmem:[%s2675] sm:$0xff]
    %s2677 = scalar_lea.vmem %s2, 32
    %v2678 = vld [vmem:[%s2677] sm:$0xff]
    %v2679 = vpack.c.bf16 %v2670, %v2670
    %v2680 = vld [vmem:[#allocation2] sm:$0xff]
    %v2681 = vld [vmem:[#allocation2 + $0x20] sm:$0xff]
    %v2682 = vld [vmem:[#allocation2 + $0x40] sm:$0xff]
    %v2683 = vld [vmem:[#allocation2 + $0x60] sm:$0xff]
    %v2688 = vunpack.c.l.b16 %v2680
    %v2689 = vunpack.c.h.b16 %v2680
    %v2690 = vunpack.c.l.b16 %v2681
    %v2691 = vunpack.c.h.b16 %v2681
    %v2692 = vunpack.c.l.b16 %v2682
    %v2693 = vunpack.c.h.b16 %v2682
    %v2694 = vunpack.c.l.b16 %v2683
    %v2695 = vunpack.c.h.b16 %v2683
    %v2696 = vpack.c.b16 %v2690, %v2688
    %v2697 = vpack.c.b16 %v2691, %v2689
    %v2698 = vpack.c.b16 %v2694, %v2692
    %v2699 = vpack.c.b16 %v2695, %v2693
    %v2705 = vsel %vm152, %v2679, 0
    %2707 = vmatprep.subr.bf16.mxu0 0
    %2708 = vmatpush1.bf16.msra.mxu0 0
    %2709 = vmatprep.subr.bf16.mxu0 0
    %2710 = vmatpush1.bf16.msra.mxu0 0
    %2711 = vmatprep.subr.bf16.mxu0 0
    %2712 = vmatpush1.bf16.msra.mxu0 0
    %2713 = vmatprep.subr.bf16.mxu0 0
    %2714 = vmatpush1.bf16.msra.mxu0 0
    %2715 = vmatprep.subr.bf16.mxu0 0
    %2716 = vmatpush1.bf16.msra.mxu0 0
    %2717 = vmatprep.subr.bf16.mxu0 0
    %2718 = vmatpush1.bf16.msra.mxu0 0
    %2719 = vmatprep.subr.bf16.mxu0 %v2699
    %2720 = vmatpush1.bf16.msra.mxu0 %v2698
    %2721 = vmatprep.subr.bf16.mxu0 %v2697
    %2722 = vmatpush1.bf16.msra.mxu0 %v2696
    %2723 = vmatprep.subr.bf16.mxu0 0
    %2724 = vmatpush2.bf16.msra.mxu0 0
    %2725 = vmatprep.subr.bf16.mxu0 0
    %2726 = vmatpush2.bf16.msra.mxu0 0
    %2727 = vmatprep.subr.bf16.mxu0 0
    %2728 = vmatpush2.bf16.msra.mxu0 0
    %2729 = vmatprep.subr.bf16.mxu0 0
    %2730 = vmatpush2.bf16.msra.mxu0 0
    %2731 = vmatprep.subr.bf16.mxu0 0
    %2732 = vmatpush2.bf16.msra.mxu0 0
    %2733 = vmatprep.subr.bf16.mxu0 0
    %2734 = vmatpush2.bf16.msra.mxu0 0
    %2735 = vmatprep.subr.bf16.mxu0 0
    %2736 = vmatpush2.bf16.msra.mxu0 0
    %2737 = vmatprep.subr.bf16.mxu0 0
    %2738 = vmatpush2.bf16.msra.mxu0 0
    %2739 = vmatprep.mubr.bf16.mxu0 0
    %2740 = vmatmul.mubr.bf16.gmra.mxu0 %v2705
    %v2741 = vpop.f32.mrf.mxu0
    %v2742 = vadd.f32 0.0, %v2741
    %v2743 = vpop.f32.mrf.mxu0
    %v2744 = vadd.f32 0.0, %v2743
    %v2745 = vpop.f32.mrf.mxu0
    %v2746 = vpop.f32.mrf.mxu0
    %2747 = vdwg.mxu0
    %2749 = vset.pattern.permute.xlu0 0
    %2750 = vperm.xlu0 %2749, %v2674
    %v2751 = vpop.permute.xlu0 %2750
    %v2753 = vmul.f32 %v2742, %v2751
    %v2754 = vadd.f32 %v2678, %v2753
    %2755 = vset.pattern.permute.xlu0 1
    %2756 = vperm.xlu0 %2755, %v2674
    %v2757 = vpop.permute.xlu0 %2756
    %v2759 = vmul.f32 %v2742, %v2757
    %2761 = vrot.lane.b32.xlu0 %v2759, 96
    %v2762 = vpop.permute.xlu0 %2761
    %v2764 = vadd.f32 %v2754, %v2762
    %2765 = vset.pattern.permute.xlu0 2
    %2766 = vperm.xlu0 %2765, %v2674
    %v2767 = vpop.permute.xlu0 %2766
    %v2769 = vmul.f32 %v2742, %v2767
    %2771 = vrot.lane.b32.xlu0 %v2769, 64
    %v2772 = vpop.permute.xlu0 %2771
    %v2774 = vadd.f32 %v2764, %v2772
    %2775 = vset.pattern.permute.xlu0 3
    %2776 = vperm.xlu0 %2775, %v2674
    %v2777 = vpop.permute.xlu0 %2776
    %v2779 = vmul.f32 %v2742, %v2777
    %2781 = vrot.lane.b32.xlu0 %v2779, 32
    %v2782 = vpop.permute.xlu0 %2781
    %v2784 = vadd.f32 %v2774, %v2782
    %2785 = vset.pattern.permute.xlu0 4
    %2786 = vperm.xlu0 %2785, %v2674
    %v2787 = vpop.permute.xlu0 %2786
    %v2789 = vmul.f32 %v2744, %v2787
    %v2790 = vadd.f32 %v2784, %v2789
    %2791 = vset.pattern.permute.xlu0 5
    %2792 = vperm.xlu0 %2791, %v2674
    %v2793 = vpop.permute.xlu0 %2792
    %v2795 = vmul.f32 %v2744, %v2793
    %2797 = vrot.lane.b32.xlu0 %v2795, 96
    %v2798 = vpop.permute.xlu0 %2797
    %v2800 = vadd.f32 %v2790, %v2798
    %2801 = vset.pattern.permute.xlu0 6
    %2802 = vperm.xlu0 %2801, %v2674
    %v2803 = vpop.permute.xlu0 %2802
    %v2805 = vmul.f32 %v2744, %v2803
    %2807 = vrot.lane.b32.xlu0 %v2805, 64
    %v2808 = vpop.permute.xlu0 %2807
    %v2810 = vadd.f32 %v2800, %v2808
    %2811 = vset.pattern.permute.xlu0 7
    %2812 = vperm.xlu0 %2811, %v2674
    %v2813 = vpop.permute.xlu0 %2812
    %v2815 = vmul.f32 %v2744, %v2813
    %2817 = vrot.lane.b32.xlu0 %v2815, 32
    %v2818 = vpop.permute.xlu0 %2817
    %v2820 = vadd.f32 %v2810, %v2818
    %v2821 = vld [vmem:[#allocation2 + $0x8] sm:$0xff]
    %v2822 = vld [vmem:[#allocation2 + $0x28] sm:$0xff]
    %v2823 = vld [vmem:[#allocation2 + $0x48] sm:$0xff]
    %v2824 = vld [vmem:[#allocation2 + $0x68] sm:$0xff]
    %v2829 = vunpack.c.l.b16 %v2821
    %v2830 = vunpack.c.h.b16 %v2821
    %v2831 = vunpack.c.l.b16 %v2822
    %v2832 = vunpack.c.h.b16 %v2822
    %v2833 = vunpack.c.l.b16 %v2823
    %v2834 = vunpack.c.h.b16 %v2823
    %v2835 = vunpack.c.l.b16 %v2824
    %v2836 = vunpack.c.h.b16 %v2824
    %v2837 = vpack.c.b16 %v2831, %v2829
    %v2838 = vpack.c.b16 %v2832, %v2830
    %v2839 = vpack.c.b16 %v2835, %v2833
    %v2840 = vpack.c.b16 %v2836, %v2834
    %2845 = vmatprep.subr.bf16.mxu0 0
    %2846 = vmatpush1.bf16.msra.mxu0 0
    %2847 = vmatprep.subr.bf16.mxu0 0
    %2848 = vmatpush1.bf16.msra.mxu0 0
    %2849 = vmatprep.subr.bf16.mxu0 0
    %2850 = vmatpush1.bf16.msra.mxu0 0
    %2851 = vmatprep.subr.bf16.mxu0 0
    %2852 = vmatpush1.bf16.msra.mxu0 0
    %2853 = vmatprep.subr.bf16.mxu0 0
    %2854 = vmatpush1.bf16.msra.mxu0 0
    %2855 = vmatprep.subr.bf16.mxu0 0
    %2856 = vmatpush1.bf16.msra.mxu0 0
    %2857 = vmatprep.subr.bf16.mxu0 %v2840
    %2858 = vmatpush1.bf16.msra.mxu0 %v2839
    %2859 = vmatprep.subr.bf16.mxu0 %v2838
    %2860 = vmatpush1.bf16.msra.mxu0 %v2837
    %2861 = vmatprep.subr.bf16.mxu0 0
    %2862 = vmatpush2.bf16.msra.mxu0 0
    %2863 = vmatprep.subr.bf16.mxu0 0
    %2864 = vmatpush2.bf16.msra.mxu0 0
    %2865 = vmatprep.subr.bf16.mxu0 0
    %2866 = vmatpush2.bf16.msra.mxu0 0
    %2867 = vmatprep.subr.bf16.mxu0 0
    %2868 = vmatpush2.bf16.msra.mxu0 0
    %2869 = vmatprep.subr.bf16.mxu0 0
    %2870 = vmatpush2.bf16.msra.mxu0 0
    %2871 = vmatprep.subr.bf16.mxu0 0
    %2872 = vmatpush2.bf16.msra.mxu0 0
    %2873 = vmatprep.subr.bf16.mxu0 0
    %2874 = vmatpush2.bf16.msra.mxu0 0
    %2875 = vmatprep.subr.bf16.mxu0 0
    %2876 = vmatpush2.bf16.msra.mxu0 0
    %2877 = vmatprep.mubr.bf16.mxu0 0
    %2878 = vmatmul.mubr.bf16.gmra.mxu0 %v2705
    %v2879 = vpop.f32.mrf.mxu0
    %v2880 = vadd.f32 0.0, %v2879
    %v2881 = vpop.f32.mrf.mxu0
    %v2882 = vadd.f32 0.0, %v2881
    %v2883 = vpop.f32.mrf.mxu0
    %v2884 = vpop.f32.mrf.mxu0
    %2885 = vdwg.mxu0
    %2886 = vset.pattern.permute.xlu0 8
    %2887 = vperm.xlu0 %2886, %v2674
    %v2888 = vpop.permute.xlu0 %2887
    %v2890 = vmul.f32 %v2880, %v2888
    %v2891 = vadd.f32 %v2820, %v2890
    %2892 = vset.pattern.permute.xlu0 9
    %2893 = vperm.xlu0 %2892, %v2674
    %v2894 = vpop.permute.xlu0 %2893
    %v2896 = vmul.f32 %v2880, %v2894
    %2898 = vrot.lane.b32.xlu0 %v2896, 96
    %v2899 = vpop.permute.xlu0 %2898
    %v2901 = vadd.f32 %v2891, %v2899
    %2902 = vset.pattern.permute.xlu0 10
    %2903 = vperm.xlu0 %2902, %v2674
    %v2904 = vpop.permute.xlu0 %2903
    %v2906 = vmul.f32 %v2880, %v2904
    %2908 = vrot.lane.b32.xlu0 %v2906, 64
    %v2909 = vpop.permute.xlu0 %2908
    %v2911 = vadd.f32 %v2901, %v2909
    %2912 = vset.pattern.permute.xlu0 11
    %2913 = vperm.xlu0 %2912, %v2674
    %v2914 = vpop.permute.xlu0 %2913
    %v2916 = vmul.f32 %v2880, %v2914
    %2918 = vrot.lane.b32.xlu0 %v2916, 32
    %v2919 = vpop.permute.xlu0 %2918
    %v2921 = vadd.f32 %v2911, %v2919
    %2922 = vset.pattern.permute.xlu0 12
    %2923 = vperm.xlu0 %2922, %v2674
    %v2924 = vpop.permute.xlu0 %2923
    %v2926 = vmul.f32 %v2882, %v2924
    %v2927 = vadd.f32 %v2921, %v2926
    %2928 = vset.pattern.permute.xlu0 13
    %2929 = vperm.xlu0 %2928, %v2674
    %v2930 = vpop.permute.xlu0 %2929
    %v2932 = vmul.f32 %v2882, %v2930
    %2934 = vrot.lane.b32.xlu0 %v2932, 96
    %v2935 = vpop.permute.xlu0 %2934
    %v2937 = vadd.f32 %v2927, %v2935
    %2938 = vset.pattern.permute.xlu0 14
    %2939 = vperm.xlu0 %2938, %v2674
    %v2940 = vpop.permute.xlu0 %2939
    %v2942 = vmul.f32 %v2882, %v2940
    %2944 = vrot.lane.b32.xlu0 %v2942, 64
    %v2945 = vpop.permute.xlu0 %2944
    %v2947 = vadd.f32 %v2937, %v2945
    %2948 = vset.pattern.permute.xlu0 15
    %2949 = vperm.xlu0 %2948, %v2674
    %v2950 = vpop.permute.xlu0 %2949
    %v2952 = vmul.f32 %v2882, %v2950
    %2954 = vrot.lane.b32.xlu0 %v2952, 32
    %v2955 = vpop.permute.xlu0 %2954
    %v2957 = vadd.f32 %v2947, %v2955
    %v2958 = vld [vmem:[#allocation2 + $0x10] sm:$0xff]
    %v2959 = vld [vmem:[#allocation2 + $0x30] sm:$0xff]
    %v2960 = vld [vmem:[#allocation2 + $0x50] sm:$0xff]
    %v2961 = vld [vmem:[#allocation2 + $0x70] sm:$0xff]
    %v2966 = vunpack.c.l.b16 %v2958
    %v2967 = vunpack.c.h.b16 %v2958
    %v2968 = vunpack.c.l.b16 %v2959
    %v2969 = vunpack.c.h.b16 %v2959
    %v2970 = vunpack.c.l.b16 %v2960
    %v2971 = vunpack.c.h.b16 %v2960
    %v2972 = vunpack.c.l.b16 %v2961
    %v2973 = vunpack.c.h.b16 %v2961
    %v2974 = vpack.c.b16 %v2968, %v2966
    %v2975 = vpack.c.b16 %v2969, %v2967
    %v2976 = vpack.c.b16 %v2972, %v2970
    %v2977 = vpack.c.b16 %v2973, %v2971
    %2982 = vmatprep.subr.bf16.mxu0 0
    %2983 = vmatpush1.bf16.msra.mxu0 0
    %2984 = vmatprep.subr.bf16.mxu0 0
    %2985 = vmatpush1.bf16.msra.mxu0 0
    %2986 = vmatprep.subr.bf16.mxu0 0
    %2987 = vmatpush1.bf16.msra.mxu0 0
    %2988 = vmatprep.subr.bf16.mxu0 0
    %2989 = vmatpush1.bf16.msra.mxu0 0
    %2990 = vmatprep.subr.bf16.mxu0 0
    %2991 = vmatpush1.bf16.msra.mxu0 0
    %2992 = vmatprep.subr.bf16.mxu0 0
    %2993 = vmatpush1.bf16.msra.mxu0 0
    %2994 = vmatprep.subr.bf16.mxu0 %v2977
    %2995 = vmatpush1.bf16.msra.mxu0 %v2976
    %2996 = vmatprep.subr.bf16.mxu0 %v2975
    %2997 = vmatpush1.bf16.msra.mxu0 %v2974
    %2998 = vmatprep.subr.bf16.mxu0 0
    %2999 = vmatpush2.bf16.msra.mxu0 0
    %3000 = vmatprep.subr.bf16.mxu0 0
    %3001 = vmatpush2.bf16.msra.mxu0 0
    %3002 = vmatprep.subr.bf16.mxu0 0
    %3003 = vmatpush2.bf16.msra.mxu0 0
    %3004 = vmatprep.subr.bf16.mxu0 0
    %3005 = vmatpush2.bf16.msra.mxu0 0
    %3006 = vmatprep.subr.bf16.mxu0 0
    %3007 = vmatpush2.bf16.msra.mxu0 0
    %3008 = vmatprep.subr.bf16.mxu0 0
    %3009 = vmatpush2.bf16.msra.mxu0 0
    %3010 = vmatprep.subr.bf16.mxu0 0
    %3011 = vmatpush2.bf16.msra.mxu0 0
    %3012 = vmatprep.subr.bf16.mxu0 0
    %3013 = vmatpush2.bf16.msra.mxu0 0
    %3014 = vmatprep.mubr.bf16.mxu0 0
    %3015 = vmatmul.mubr.bf16.gmra.mxu0 %v2705
    %v3016 = vpop.f32.mrf.mxu0
    %v3017 = vadd.f32 0.0, %v3016
    %v3018 = vpop.f32.mrf.mxu0
    %v3019 = vadd.f32 0.0, %v3018
    %v3020 = vpop.f32.mrf.mxu0
    %v3021 = vpop.f32.mrf.mxu0
    %3022 = vdwg.mxu0
    %3023 = vset.pattern.permute.xlu0 16
    %3024 = vperm.xlu0 %3023, %v2674
    %v3025 = vpop.permute.xlu0 %3024
    %v3027 = vmul.f32 %v3017, %v3025
    %v3028 = vadd.f32 %v2957, %v3027
    %3029 = vset.pattern.permute.xlu0 17
    %3030 = vperm.xlu0 %3029, %v2674
    %v3031 = vpop.permute.xlu0 %3030
    %v3033 = vmul.f32 %v3017, %v3031
    %3035 = vrot.lane.b32.xlu0 %v3033, 96
    %v3036 = vpop.permute.xlu0 %3035
    %v3038 = vadd.f32 %v3028, %v3036
    %3039 = vset.pattern.permute.xlu0 18
    %3040 = vperm.xlu0 %3039, %v2674
    %v3041 = vpop.permute.xlu0 %3040
    %v3043 = vmul.f32 %v3017, %v3041
    %3045 = vrot.lane.b32.xlu0 %v3043, 64
    %v3046 = vpop.permute.xlu0 %3045
    %v3048 = vadd.f32 %v3038, %v3046
    %3049 = vset.pattern.permute.xlu0 19
    %3050 = vperm.xlu0 %3049, %v2674
    %v3051 = vpop.permute.xlu0 %3050
    %v3053 = vmul.f32 %v3017, %v3051
    %3055 = vrot.lane.b32.xlu0 %v3053, 32
    %v3056 = vpop.permute.xlu0 %3055
    %v3058 = vadd.f32 %v3048, %v3056
    %3059 = vset.pattern.permute.xlu0 20
    %3060 = vperm.xlu0 %3059, %v2674
    %v3061 = vpop.permute.xlu0 %3060
    %v3063 = vmul.f32 %v3019, %v3061
    %v3064 = vadd.f32 %v3058, %v3063
    %3065 = vset.pattern.permute.xlu0 21
    %3066 = vperm.xlu0 %3065, %v2674
    %v3067 = vpop.permute.xlu0 %3066
    %v3069 = vmul.f32 %v3019, %v3067
    %3071 = vrot.lane.b32.xlu0 %v3069, 96
    %v3072 = vpop.permute.xlu0 %3071
    %v3074 = vadd.f32 %v3064, %v3072
    %3075 = vset.pattern.permute.xlu0 22
    %3076 = vperm.xlu0 %3075, %v2674
    %v3077 = vpop.permute.xlu0 %3076
    %v3079 = vmul.f32 %v3019, %v3077
    %3081 = vrot.lane.b32.xlu0 %v3079, 64
    %v3082 = vpop.permute.xlu0 %3081
    %v3084 = vadd.f32 %v3074, %v3082
    %3085 = vset.pattern.permute.xlu0 23
    %3086 = vperm.xlu0 %3085, %v2674
    %v3087 = vpop.permute.xlu0 %3086
    %v3089 = vmul.f32 %v3019, %v3087
    %3091 = vrot.lane.b32.xlu0 %v3089, 32
    %v3092 = vpop.permute.xlu0 %3091
    %v3094 = vadd.f32 %v3084, %v3092
    %v3095 = vld [vmem:[#allocation2 + $0x18] sm:$0xff]
    %v3096 = vld [vmem:[#allocation2 + $0x38] sm:$0xff]
    %v3097 = vld [vmem:[#allocation2 + $0x58] sm:$0xff]
    %v3098 = vld [vmem:[#allocation2 + $0x78] sm:$0xff]
    %v3103 = vunpack.c.l.b16 %v3095
    %v3104 = vunpack.c.h.b16 %v3095
    %v3105 = vunpack.c.l.b16 %v3096
    %v3106 = vunpack.c.h.b16 %v3096
    %v3107 = vunpack.c.l.b16 %v3097
    %v3108 = vunpack.c.h.b16 %v3097
    %v3109 = vunpack.c.l.b16 %v3098
    %v3110 = vunpack.c.h.b16 %v3098
    %v3111 = vpack.c.b16 %v3105, %v3103
    %v3112 = vpack.c.b16 %v3106, %v3104
    %v3113 = vpack.c.b16 %v3109, %v3107
    %v3114 = vpack.c.b16 %v3110, %v3108
    %3119 = vmatprep.subr.bf16.mxu0 0
    %3120 = vmatpush1.bf16.msra.mxu0 0
    %3121 = vmatprep.subr.bf16.mxu0 0
    %3122 = vmatpush1.bf16.msra.mxu0 0
    %3123 = vmatprep.subr.bf16.mxu0 0
    %3124 = vmatpush1.bf16.msra.mxu0 0
    %3125 = vmatprep.subr.bf16.mxu0 0
    %3126 = vmatpush1.bf16.msra.mxu0 0
    %3127 = vmatprep.subr.bf16.mxu0 0
    %3128 = vmatpush1.bf16.msra.mxu0 0
    %3129 = vmatprep.subr.bf16.mxu0 0
    %3130 = vmatpush1.bf16.msra.mxu0 0
    %3131 = vmatprep.subr.bf16.mxu0 %v3114
    %3132 = vmatpush1.bf16.msra.mxu0 %v3113
    %3133 = vmatprep.subr.bf16.mxu0 %v3112
    %3134 = vmatpush1.bf16.msra.mxu0 %v3111
    %3135 = vmatprep.subr.bf16.mxu0 0
    %3136 = vmatpush2.bf16.msra.mxu0 0
    %3137 = vmatprep.subr.bf16.mxu0 0
    %3138 = vmatpush2.bf16.msra.mxu0 0
    %3139 = vmatprep.subr.bf16.mxu0 0
    %3140 = vmatpush2.bf16.msra.mxu0 0
    %3141 = vmatprep.subr.bf16.mxu0 0
    %3142 = vmatpush2.bf16.msra.mxu0 0
    %3143 = vmatprep.subr.bf16.mxu0 0
    %3144 = vmatpush2.bf16.msra.mxu0 0
    %3145 = vmatprep.subr.bf16.mxu0 0
    %3146 = vmatpush2.bf16.msra.mxu0 0
    %3147 = vmatprep.subr.bf16.mxu0 0
    %3148 = vmatpush2.bf16.msra.mxu0 0
    %3149 = vmatprep.subr.bf16.mxu0 0
    %3150 = vmatpush2.bf16.msra.mxu0 0
    %3151 = vmatprep.mubr.bf16.mxu0 0
    %3152 = vmatmul.mubr.bf16.gmra.mxu0 %v2705
    %v3153 = vpop.f32.mrf.mxu0
    %v3154 = vadd.f32 0.0, %v3153
    %v3155 = vpop.f32.mrf.mxu0
    %v3156 = vadd.f32 0.0, %v3155
    %v3157 = vpop.f32.mrf.mxu0
    %v3158 = vpop.f32.mrf.mxu0
    %3159 = vdwg.mxu0
    %3160 = vset.pattern.permute.xlu0 24
    %3161 = vperm.xlu0 %3160, %v2674
    %v3162 = vpop.permute.xlu0 %3161
    %v3164 = vmul.f32 %v3154, %v3162
    %v3165 = vadd.f32 %v3094, %v3164
    %3166 = vset.pattern.permute.xlu0 25
    %3167 = vperm.xlu0 %3166, %v2674
    %v3168 = vpop.permute.xlu0 %3167
    %v3170 = vmul.f32 %v3154, %v3168
    %3172 = vrot.lane.b32.xlu0 %v3170, 96
    %v3173 = vpop.permute.xlu0 %3172
    %v3175 = vadd.f32 %v3165, %v3173
    %3176 = vset.pattern.permute.xlu0 26
    %3177 = vperm.xlu0 %3176, %v2674
    %v3178 = vpop.permute.xlu0 %3177
    %v3180 = vmul.f32 %v3154, %v3178
    %3182 = vrot.lane.b32.xlu0 %v3180, 64
    %v3183 = vpop.permute.xlu0 %3182
    %v3185 = vadd.f32 %v3175, %v3183
    %3186 = vset.pattern.permute.xlu0 27
    %3187 = vperm.xlu0 %3186, %v2674
    %v3188 = vpop.permute.xlu0 %3187
    %v3190 = vmul.f32 %v3154, %v3188
    %3192 = vrot.lane.b32.xlu0 %v3190, 32
    %v3193 = vpop.permute.xlu0 %3192
    %v3195 = vadd.f32 %v3185, %v3193
    %3196 = vset.pattern.permute.xlu0 28
    %3197 = vperm.xlu0 %3196, %v2674
    %v3198 = vpop.permute.xlu0 %3197
    %v3200 = vmul.f32 %v3156, %v3198
    %v3201 = vadd.f32 %v3195, %v3200
    %3202 = vset.pattern.permute.xlu0 29
    %3203 = vperm.xlu0 %3202, %v2674
    %v3204 = vpop.permute.xlu0 %3203
    %v3206 = vmul.f32 %v3156, %v3204
    %3208 = vrot.lane.b32.xlu0 %v3206, 96
    %v3209 = vpop.permute.xlu0 %3208
    %v3211 = vadd.f32 %v3201, %v3209
    %3212 = vset.pattern.permute.xlu0 30
    %3213 = vperm.xlu0 %3212, %v2674
    %v3214 = vpop.permute.xlu0 %3213
    %v3216 = vmul.f32 %v3156, %v3214
    %3218 = vrot.lane.b32.xlu0 %v3216, 64
    %v3219 = vpop.permute.xlu0 %3218
    %v3221 = vadd.f32 %v3211, %v3219
    %3222 = vset.pattern.permute.xlu0 31
    %3223 = vperm.xlu0 %3222, %v2674
    %v3224 = vpop.permute.xlu0 %3223
    %v3226 = vmul.f32 %v3156, %v3224
    %3228 = vrot.lane.b32.xlu0 %v3226, 32
    %v3229 = vpop.permute.xlu0 %3228
    %v3231 = vadd.f32 %v3221, %v3229
    %v3233 = vsel %vm152, %v2670, 0
    %3235 = vmatprep.subr.mxu0 0.0
    %3236 = vmatpush1.msra.mxu0 0.0
    %3237 = vmatprep.subr.mxu0 0.0
    %3238 = vmatpush1.msra.mxu0 0.0
    %3239 = vmatprep.subr.mxu0 0.0
    %3240 = vmatpush1.msra.mxu0 0.0
    %3241 = vmatprep.subr.mxu0 0.0
    %3242 = vmatpush1.msra.mxu0 0.0
    %3243 = vmatprep.subr.mxu0 0.0
    %3244 = vmatpush1.msra.mxu0 0.0
    %3245 = vmatprep.subr.mxu0 0.0
    %3246 = vmatpush1.msra.mxu0 0.0
    %3247 = vmatprep.subr.mxu0 0.0
    %3248 = vmatpush1.msra.mxu0 0.0
    %3249 = vmatprep.subr.mxu0 0.0
    %3250 = vmatpush1.msra.mxu0 0.0
    %3251 = vmatprep.subr.mxu0 0.0
    %3252 = vmatpush1.msra.mxu0 0.0
    %3253 = vmatprep.subr.mxu0 0.0
    %3254 = vmatpush1.msra.mxu0 0.0
    %3255 = vmatprep.subr.mxu0 0.0
    %3256 = vmatpush1.msra.mxu0 0.0
    %3257 = vmatprep.subr.mxu0 0.0
    %3258 = vmatpush1.msra.mxu0 0.0
    %3259 = vmatprep.subr.mxu0 0.0
    %3260 = vmatpush1.msra.mxu0 %v115
    %3261 = vmatprep.subr.mxu0 0.0
    %3262 = vmatpush1.msra.mxu0 %v114
    %3263 = vmatprep.subr.mxu0 0.0
    %3264 = vmatpush1.msra.mxu0 %v113
    %3265 = vmatprep.subr.mxu0 0.0
    %3266 = vmatpush1.msra.mxu0 %v112
    %3267 = vmatprep.subr.mxu0 0.0
    %3268 = vmatpush2.msra.mxu0 0.0
    %3269 = vmatprep.subr.mxu0 0.0
    %3270 = vmatpush2.msra.mxu0 0.0
    %3271 = vmatprep.subr.mxu0 0.0
    %3272 = vmatpush2.msra.mxu0 0.0
    %3273 = vmatprep.subr.mxu0 0.0
    %3274 = vmatpush2.msra.mxu0 0.0
    %3275 = vmatprep.subr.mxu0 0.0
    %3276 = vmatpush2.msra.mxu0 0.0
    %3277 = vmatprep.subr.mxu0 0.0
    %3278 = vmatpush2.msra.mxu0 0.0
    %3279 = vmatprep.subr.mxu0 0.0
    %3280 = vmatpush2.msra.mxu0 0.0
    %3281 = vmatprep.subr.mxu0 0.0
    %3282 = vmatpush2.msra.mxu0 0.0
    %3283 = vmatprep.subr.mxu0 0.0
    %3284 = vmatpush2.msra.mxu0 0.0
    %3285 = vmatprep.subr.mxu0 0.0
    %3286 = vmatpush2.msra.mxu0 0.0
    %3287 = vmatprep.subr.mxu0 0.0
    %3288 = vmatpush2.msra.mxu0 0.0
    %3289 = vmatprep.subr.mxu0 0.0
    %3290 = vmatpush2.msra.mxu0 0.0
    %3291 = vmatprep.subr.mxu0 0.0
    %3292 = vmatpush2.msra.mxu0 0.0
    %3293 = vmatprep.subr.mxu0 0.0
    %3294 = vmatpush2.msra.mxu0 0.0
    %3295 = vmatprep.subr.mxu0 0.0
    %3296 = vmatpush2.msra.mxu0 0.0
    %3297 = vmatprep.subr.mxu0 0.0
    %3298 = vmatpush2.msra.mxu0 0.0
    %3299 = vmatprep.mubr.f32.mxu0 0.0
    %3300 = vmatmul.mubr.f32.gmra.mxu0 %v3233
    %v3301 = vpop.f32.mrf.mxu0
    %v3302 = vadd.f32 %v121, %v3301
    %v3303 = vpop.f32.mrf.mxu0
    %3304 = vdwg.mxu0
    %v3305 = vadd.f32 %v3302, %v2676
    %v3306 = vmax.f32 %v3305, 0.0
    %v3307 = vmul.f32 %v2670, 0.0
    %v3308 = vadd.f32 %v3307, %v3306
    %s3309 = scalar_lea.vmem %s7, 32
    %3310 = vst.msk [vmem:[%s3309] sm:$0xff] %vm152, %v3231
    %s3311 = scalar_lea.vmem %s0, 40
    %v3312 = vld [vmem:[%s3311] sm:$0xff]
    %s3313 = scalar_lea.vmem %s1, 40
    %v3314 = vld [vmem:[%s3313] sm:$0xff]
    %s3315 = scalar_lea.vmem %s2, 40
    %v3316 = vld [vmem:[%s3315] sm:$0xff]
    %v3317 = vpack.c.bf16 %v3308, %v3308
    %v3318 = vld [vmem:[#allocation2] sm:$0xff]
    %v3319 = vld [vmem:[#allocation2 + $0x20] sm:$0xff]
    %v3320 = vld [vmem:[#allocation2 + $0x40] sm:$0xff]
    %v3321 = vld [vmem:[#allocation2 + $0x60] sm:$0xff]
    %v3326 = vunpack.c.l.b16 %v3318
    %v3327 = vunpack.c.h.b16 %v3318
    %v3328 = vunpack.c.l.b16 %v3319
    %v3329 = vunpack.c.h.b16 %v3319
    %v3330 = vunpack.c.l.b16 %v3320
    %v3331 = vunpack.c.h.b16 %v3320
    %v3332 = vunpack.c.l.b16 %v3321
    %v3333 = vunpack.c.h.b16 %v3321
    %v3334 = vpack.c.b16 %v3328, %v3326
    %v3335 = vpack.c.b16 %v3329, %v3327
    %v3336 = vpack.c.b16 %v3332, %v3330
    %v3337 = vpack.c.b16 %v3333, %v3331
    %v3343 = vsel %vm152, %v3317, 0
    %3345 = vmatprep.subr.bf16.mxu0 0
    %3346 = vmatpush1.bf16.msra.mxu0 0
    %3347 = vmatprep.subr.bf16.mxu0 0
    %3348 = vmatpush1.bf16.msra.mxu0 0
    %3349 = vmatprep.subr.bf16.mxu0 0
    %3350 = vmatpush1.bf16.msra.mxu0 0
    %3351 = vmatprep.subr.bf16.mxu0 0
    %3352 = vmatpush1.bf16.msra.mxu0 0
    %3353 = vmatprep.subr.bf16.mxu0 0
    %3354 = vmatpush1.bf16.msra.mxu0 0
    %3355 = vmatprep.subr.bf16.mxu0 0
    %3356 = vmatpush1.bf16.msra.mxu0 0
    %3357 = vmatprep.subr.bf16.mxu0 %v3337
    %3358 = vmatpush1.bf16.msra.mxu0 %v3336
    %3359 = vmatprep.subr.bf16.mxu0 %v3335
    %3360 = vmatpush1.bf16.msra.mxu0 %v3334
    %3361 = vmatprep.subr.bf16.mxu0 0
    %3362 = vmatpush2.bf16.msra.mxu0 0
    %3363 = vmatprep.subr.bf16.mxu0 0
    %3364 = vmatpush2.bf16.msra.mxu0 0
    %3365 = vmatprep.subr.bf16.mxu0 0
    %3366 = vmatpush2.bf16.msra.mxu0 0
    %3367 = vmatprep.subr.bf16.mxu0 0
    %3368 = vmatpush2.bf16.msra.mxu0 0
    %3369 = vmatprep.subr.bf16.mxu0 0
    %3370 = vmatpush2.bf16.msra.mxu0 0
    %3371 = vmatprep.subr.bf16.mxu0 0
    %3372 = vmatpush2.bf16.msra.mxu0 0
    %3373 = vmatprep.subr.bf16.mxu0 0
    %3374 = vmatpush2.bf16.msra.mxu0 0
    %3375 = vmatprep.subr.bf16.mxu0 0
    %3376 = vmatpush2.bf16.msra.mxu0 0
    %3377 = vmatprep.mubr.bf16.mxu0 0
    %3378 = vmatmul.mubr.bf16.gmra.mxu0 %v3343
    %v3379 = vpop.f32.mrf.mxu0
    %v3380 = vadd.f32 0.0, %v3379
    %v3381 = vpop.f32.mrf.mxu0
    %v3382 = vadd.f32 0.0, %v3381
    %v3383 = vpop.f32.mrf.mxu0
    %v3384 = vpop.f32.mrf.mxu0
    %3385 = vdwg.mxu0
    %3387 = vset.pattern.permute.xlu0 0
    %3388 = vperm.xlu0 %3387, %v3312
    %v3389 = vpop.permute.xlu0 %3388
    %v3391 = vmul.f32 %v3380, %v3389
    %v3392 = vadd.f32 %v3316, %v3391
    %3393 = vset.pattern.permute.xlu0 1
    %3394 = vperm.xlu0 %3393, %v3312
    %v3395 = vpop.permute.xlu0 %3394
    %v3397 = vmul.f32 %v3380, %v3395
    %3399 = vrot.lane.b32.xlu0 %v3397, 96
    %v3400 = vpop.permute.xlu0 %3399
    %v3402 = vadd.f32 %v3392, %v3400
    %3403 = vset.pattern.permute.xlu0 2
    %3404 = vperm.xlu0 %3403, %v3312
    %v3405 = vpop.permute.xlu0 %3404
    %v3407 = vmul.f32 %v3380, %v3405
    %3409 = vrot.lane.b32.xlu0 %v3407, 64
    %v3410 = vpop.permute.xlu0 %3409
    %v3412 = vadd.f32 %v3402, %v3410
    %3413 = vset.pattern.permute.xlu0 3
    %3414 = vperm.xlu0 %3413, %v3312
    %v3415 = vpop.permute.xlu0 %3414
    %v3417 = vmul.f32 %v3380, %v3415
    %3419 = vrot.lane.b32.xlu0 %v3417, 32
    %v3420 = vpop.permute.xlu0 %3419
    %v3422 = vadd.f32 %v3412, %v3420
    %3423 = vset.pattern.permute.xlu0 4
    %3424 = vperm.xlu0 %3423, %v3312
    %v3425 = vpop.permute.xlu0 %3424
    %v3427 = vmul.f32 %v3382, %v3425
    %v3428 = vadd.f32 %v3422, %v3427
    %3429 = vset.pattern.permute.xlu0 5
    %3430 = vperm.xlu0 %3429, %v3312
    %v3431 = vpop.permute.xlu0 %3430
    %v3433 = vmul.f32 %v3382, %v3431
    %3435 = vrot.lane.b32.xlu0 %v3433, 96
    %v3436 = vpop.permute.xlu0 %3435
    %v3438 = vadd.f32 %v3428, %v3436
    %3439 = vset.pattern.permute.xlu0 6
    %3440 = vperm.xlu0 %3439, %v3312
    %v3441 = vpop.permute.xlu0 %3440
    %v3443 = vmul.f32 %v3382, %v3441
    %3445 = vrot.lane.b32.xlu0 %v3443, 64
    %v3446 = vpop.permute.xlu0 %3445
    %v3448 = vadd.f32 %v3438, %v3446
    %3449 = vset.pattern.permute.xlu0 7
    %3450 = vperm.xlu0 %3449, %v3312
    %v3451 = vpop.permute.xlu0 %3450
    %v3453 = vmul.f32 %v3382, %v3451
    %3455 = vrot.lane.b32.xlu0 %v3453, 32
    %v3456 = vpop.permute.xlu0 %3455
    %v3458 = vadd.f32 %v3448, %v3456
    %v3459 = vld [vmem:[#allocation2 + $0x8] sm:$0xff]
    %v3460 = vld [vmem:[#allocation2 + $0x28] sm:$0xff]
    %v3461 = vld [vmem:[#allocation2 + $0x48] sm:$0xff]
    %v3462 = vld [vmem:[#allocation2 + $0x68] sm:$0xff]
    %v3467 = vunpack.c.l.b16 %v3459
    %v3468 = vunpack.c.h.b16 %v3459
    %v3469 = vunpack.c.l.b16 %v3460
    %v3470 = vunpack.c.h.b16 %v3460
    %v3471 = vunpack.c.l.b16 %v3461
    %v3472 = vunpack.c.h.b16 %v3461
    %v3473 = vunpack.c.l.b16 %v3462
    %v3474 = vunpack.c.h.b16 %v3462
    %v3475 = vpack.c.b16 %v3469, %v3467
    %v3476 = vpack.c.b16 %v3470, %v3468
    %v3477 = vpack.c.b16 %v3473, %v3471
    %v3478 = vpack.c.b16 %v3474, %v3472
    %3483 = vmatprep.subr.bf16.mxu0 0
    %3484 = vmatpush1.bf16.msra.mxu0 0
    %3485 = vmatprep.subr.bf16.mxu0 0
    %3486 = vmatpush1.bf16.msra.mxu0 0
    %3487 = vmatprep.subr.bf16.mxu0 0
    %3488 = vmatpush1.bf16.msra.mxu0 0
    %3489 = vmatprep.subr.bf16.mxu0 0
    %3490 = vmatpush1.bf16.msra.mxu0 0
    %3491 = vmatprep.subr.bf16.mxu0 0
    %3492 = vmatpush1.bf16.msra.mxu0 0
    %3493 = vmatprep.subr.bf16.mxu0 0
    %3494 = vmatpush1.bf16.msra.mxu0 0
    %3495 = vmatprep.subr.bf16.mxu0 %v3478
    %3496 = vmatpush1.bf16.msra.mxu0 %v3477
    %3497 = vmatprep.subr.bf16.mxu0 %v3476
    %3498 = vmatpush1.bf16.msra.mxu0 %v3475
    %3499 = vmatprep.subr.bf16.mxu0 0
    %3500 = vmatpush2.bf16.msra.mxu0 0
    %3501 = vmatprep.subr.bf16.mxu0 0
    %3502 = vmatpush2.bf16.msra.mxu0 0
    %3503 = vmatprep.subr.bf16.mxu0 0
    %3504 = vmatpush2.bf16.msra.mxu0 0
    %3505 = vmatprep.subr.bf16.mxu0 0
    %3506 = vmatpush2.bf16.msra.mxu0 0
    %3507 = vmatprep.subr.bf16.mxu0 0
    %3508 = vmatpush2.bf16.msra.mxu0 0
    %3509 = vmatprep.subr.bf16.mxu0 0
    %3510 = vmatpush2.bf16.msra.mxu0 0
    %3511 = vmatprep.subr.bf16.mxu0 0
    %3512 = vmatpush2.bf16.msra.mxu0 0
    %3513 = vmatprep.subr.bf16.mxu0 0
    %3514 = vmatpush2.bf16.msra.mxu0 0
    %3515 = vmatprep.mubr.bf16.mxu0 0
    %3516 = vmatmul.mubr.bf16.gmra.mxu0 %v3343
    %v3517 = vpop.f32.mrf.mxu0
    %v3518 = vadd.f32 0.0, %v3517
    %v3519 = vpop.f32.mrf.mxu0
    %v3520 = vadd.f32 0.0, %v3519
    %v3521 = vpop.f32.mrf.mxu0
    %v3522 = vpop.f32.mrf.mxu0
    %3523 = vdwg.mxu0
    %3524 = vset.pattern.permute.xlu0 8
    %3525 = vperm.xlu0 %3524, %v3312
    %v3526 = vpop.permute.xlu0 %3525
    %v3528 = vmul.f32 %v3518, %v3526
    %v3529 = vadd.f32 %v3458, %v3528
    %3530 = vset.pattern.permute.xlu0 9
    %3531 = vperm.xlu0 %3530, %v3312
    %v3532 = vpop.permute.xlu0 %3531
    %v3534 = vmul.f32 %v3518, %v3532
    %3536 = vrot.lane.b32.xlu0 %v3534, 96
    %v3537 = vpop.permute.xlu0 %3536
    %v3539 = vadd.f32 %v3529, %v3537
    %3540 = vset.pattern.permute.xlu0 10
    %3541 = vperm.xlu0 %3540, %v3312
    %v3542 = vpop.permute.xlu0 %3541
    %v3544 = vmul.f32 %v3518, %v3542
    %3546 = vrot.lane.b32.xlu0 %v3544, 64
    %v3547 = vpop.permute.xlu0 %3546
    %v3549 = vadd.f32 %v3539, %v3547
    %3550 = vset.pattern.permute.xlu0 11
    %3551 = vperm.xlu0 %3550, %v3312
    %v3552 = vpop.permute.xlu0 %3551
    %v3554 = vmul.f32 %v3518, %v3552
    %3556 = vrot.lane.b32.xlu0 %v3554, 32
    %v3557 = vpop.permute.xlu0 %3556
    %v3559 = vadd.f32 %v3549, %v3557
    %3560 = vset.pattern.permute.xlu0 12
    %3561 = vperm.xlu0 %3560, %v3312
    %v3562 = vpop.permute.xlu0 %3561
    %v3564 = vmul.f32 %v3520, %v3562
    %v3565 = vadd.f32 %v3559, %v3564
    %3566 = vset.pattern.permute.xlu0 13
    %3567 = vperm.xlu0 %3566, %v3312
    %v3568 = vpop.permute.xlu0 %3567
    %v3570 = vmul.f32 %v3520, %v3568
    %3572 = vrot.lane.b32.xlu0 %v3570, 96
    %v3573 = vpop.permute.xlu0 %3572
    %v3575 = vadd.f32 %v3565, %v3573
    %3576 = vset.pattern.permute.xlu0 14
    %3577 = vperm.xlu0 %3576, %v3312
    %v3578 = vpop.permute.xlu0 %3577
    %v3580 = vmul.f32 %v3520, %v3578
    %3582 = vrot.lane.b32.xlu0 %v3580, 64
    %v3583 = vpop.permute.xlu0 %3582
    %v3585 = vadd.f32 %v3575, %v3583
    %3586 = vset.pattern.permute.xlu0 15
    %3587 = vperm.xlu0 %3586, %v3312
    %v3588 = vpop.permute.xlu0 %3587
    %v3590 = vmul.f32 %v3520, %v3588
    %3592 = vrot.lane.b32.xlu0 %v3590, 32
    %v3593 = vpop.permute.xlu0 %3592
    %v3595 = vadd.f32 %v3585, %v3593
    %v3596 = vld [vmem:[#allocation2 + $0x10] sm:$0xff]
    %v3597 = vld [vmem:[#allocation2 + $0x30] sm:$0xff]
    %v3598 = vld [vmem:[#allocation2 + $0x50] sm:$0xff]
    %v3599 = vld [vmem:[#allocation2 + $0x70] sm:$0xff]
    %v3604 = vunpack.c.l.b16 %v3596
    %v3605 = vunpack.c.h.b16 %v3596
    %v3606 = vunpack.c.l.b16 %v3597
    %v3607 = vunpack.c.h.b16 %v3597
    %v3608 = vunpack.c.l.b16 %v3598
    %v3609 = vunpack.c.h.b16 %v3598
    %v3610 = vunpack.c.l.b16 %v3599
    %v3611 = vunpack.c.h.b16 %v3599
    %v3612 = vpack.c.b16 %v3606, %v3604
    %v3613 = vpack.c.b16 %v3607, %v3605
    %v3614 = vpack.c.b16 %v3610, %v3608
    %v3615 = vpack.c.b16 %v3611, %v3609
    %3620 = vmatprep.subr.bf16.mxu0 0
    %3621 = vmatpush1.bf16.msra.mxu0 0
    %3622 = vmatprep.subr.bf16.mxu0 0
    %3623 = vmatpush1.bf16.msra.mxu0 0
    %3624 = vmatprep.subr.bf16.mxu0 0
    %3625 = vmatpush1.bf16.msra.mxu0 0
    %3626 = vmatprep.subr.bf16.mxu0 0
    %3627 = vmatpush1.bf16.msra.mxu0 0
    %3628 = vmatprep.subr.bf16.mxu0 0
    %3629 = vmatpush1.bf16.msra.mxu0 0
    %3630 = vmatprep.subr.bf16.mxu0 0
    %3631 = vmatpush1.bf16.msra.mxu0 0
    %3632 = vmatprep.subr.bf16.mxu0 %v3615
    %3633 = vmatpush1.bf16.msra.mxu0 %v3614
    %3634 = vmatprep.subr.bf16.mxu0 %v3613
    %3635 = vmatpush1.bf16.msra.mxu0 %v3612
    %3636 = vmatprep.subr.bf16.mxu0 0
    %3637 = vmatpush2.bf16.msra.mxu0 0
    %3638 = vmatprep.subr.bf16.mxu0 0
    %3639 = vmatpush2.bf16.msra.mxu0 0
    %3640 = vmatprep.subr.bf16.mxu0 0
    %3641 = vmatpush2.bf16.msra.mxu0 0
    %3642 = vmatprep.subr.bf16.mxu0 0
    %3643 = vmatpush2.bf16.msra.mxu0 0
    %3644 = vmatprep.subr.bf16.mxu0 0
    %3645 = vmatpush2.bf16.msra.mxu0 0
    %3646 = vmatprep.subr.bf16.mxu0 0
    %3647 = vmatpush2.bf16.msra.mxu0 0
    %3648 = vmatprep.subr.bf16.mxu0 0
    %3649 = vmatpush2.bf16.msra.mxu0 0
    %3650 = vmatprep.subr.bf16.mxu0 0
    %3651 = vmatpush2.bf16.msra.mxu0 0
    %3652 = vmatprep.mubr.bf16.mxu0 0
    %3653 = vmatmul.mubr.bf16.gmra.mxu0 %v3343
    %v3654 = vpop.f32.mrf.mxu0
    %v3655 = vadd.f32 0.0, %v3654
    %v3656 = vpop.f32.mrf.mxu0
    %v3657 = vadd.f32 0.0, %v3656
    %v3658 = vpop.f32.mrf.mxu0
    %v3659 = vpop.f32.mrf.mxu0
    %3660 = vdwg.mxu0
    %3661 = vset.pattern.permute.xlu0 16
    %3662 = vperm.xlu0 %3661, %v3312
    %v3663 = vpop.permute.xlu0 %3662
    %v3665 = vmul.f32 %v3655, %v3663
    %v3666 = vadd.f32 %v3595, %v3665
    %3667 = vset.pattern.permute.xlu0 17
    %3668 = vperm.xlu0 %3667, %v3312
    %v3669 = vpop.permute.xlu0 %3668
    %v3671 = vmul.f32 %v3655, %v3669
    %3673 = vrot.lane.b32.xlu0 %v3671, 96
    %v3674 = vpop.permute.xlu0 %3673
    %v3676 = vadd.f32 %v3666, %v3674
    %3677 = vset.pattern.permute.xlu0 18
    %3678 = vperm.xlu0 %3677, %v3312
    %v3679 = vpop.permute.xlu0 %3678
    %v3681 = vmul.f32 %v3655, %v3679
    %3683 = vrot.lane.b32.xlu0 %v3681, 64
    %v3684 = vpop.permute.xlu0 %3683
    %v3686 = vadd.f32 %v3676, %v3684
    %3687 = vset.pattern.permute.xlu0 19
    %3688 = vperm.xlu0 %3687, %v3312
    %v3689 = vpop.permute.xlu0 %3688
    %v3691 = vmul.f32 %v3655, %v3689
    %3693 = vrot.lane.b32.xlu0 %v3691, 32
    %v3694 = vpop.permute.xlu0 %3693
    %v3696 = vadd.f32 %v3686, %v3694
    %3697 = vset.pattern.permute.xlu0 20
    %3698 = vperm.xlu0 %3697, %v3312
    %v3699 = vpop.permute.xlu0 %3698
    %v3701 = vmul.f32 %v3657, %v3699
    %v3702 = vadd.f32 %v3696, %v3701
    %3703 = vset.pattern.permute.xlu0 21
    %3704 = vperm.xlu0 %3703, %v3312
    %v3705 = vpop.permute.xlu0 %3704
    %v3707 = vmul.f32 %v3657, %v3705
    %3709 = vrot.lane.b32.xlu0 %v3707, 96
    %v3710 = vpop.permute.xlu0 %3709
    %v3712 = vadd.f32 %v3702, %v3710
    %3713 = vset.pattern.permute.xlu0 22
    %3714 = vperm.xlu0 %3713, %v3312
    %v3715 = vpop.permute.xlu0 %3714
    %v3717 = vmul.f32 %v3657, %v3715
    %3719 = vrot.lane.b32.xlu0 %v3717, 64
    %v3720 = vpop.permute.xlu0 %3719
    %v3722 = vadd.f32 %v3712, %v3720
    %3723 = vset.pattern.permute.xlu0 23
    %3724 = vperm.xlu0 %3723, %v3312
    %v3725 = vpop.permute.xlu0 %3724
    %v3727 = vmul.f32 %v3657, %v3725
    %3729 = vrot.lane.b32.xlu0 %v3727, 32
    %v3730 = vpop.permute.xlu0 %3729
    %v3732 = vadd.f32 %v3722, %v3730
    %v3733 = vld [vmem:[#allocation2 + $0x18] sm:$0xff]
    %v3734 = vld [vmem:[#allocation2 + $0x38] sm:$0xff]
    %v3735 = vld [vmem:[#allocation2 + $0x58] sm:$0xff]
    %v3736 = vld [vmem:[#allocation2 + $0x78] sm:$0xff]
    %v3741 = vunpack.c.l.b16 %v3733
    %v3742 = vunpack.c.h.b16 %v3733
    %v3743 = vunpack.c.l.b16 %v3734
    %v3744 = vunpack.c.h.b16 %v3734
    %v3745 = vunpack.c.l.b16 %v3735
    %v3746 = vunpack.c.h.b16 %v3735
    %v3747 = vunpack.c.l.b16 %v3736
    %v3748 = vunpack.c.h.b16 %v3736
    %v3749 = vpack.c.b16 %v3743, %v3741
    %v3750 = vpack.c.b16 %v3744, %v3742
    %v3751 = vpack.c.b16 %v3747, %v3745
    %v3752 = vpack.c.b16 %v3748, %v3746
    %3757 = vmatprep.subr.bf16.mxu0 0
    %3758 = vmatpush1.bf16.msra.mxu0 0
    %3759 = vmatprep.subr.bf16.mxu0 0
    %3760 = vmatpush1.bf16.msra.mxu0 0
    %3761 = vmatprep.subr.bf16.mxu0 0
    %3762 = vmatpush1.bf16.msra.mxu0 0
    %3763 = vmatprep.subr.bf16.mxu0 0
    %3764 = vmatpush1.bf16.msra.mxu0 0
    %3765 = vmatprep.subr.bf16.mxu0 0
    %3766 = vmatpush1.bf16.msra.mxu0 0
    %3767 = vmatprep.subr.bf16.mxu0 0
    %3768 = vmatpush1.bf16.msra.mxu0 0
    %3769 = vmatprep.subr.bf16.mxu0 %v3752
    %3770 = vmatpush1.bf16.msra.mxu0 %v3751
    %3771 = vmatprep.subr.bf16.mxu0 %v3750
    %3772 = vmatpush1.bf16.msra.mxu0 %v3749
    %3773 = vmatprep.subr.bf16.mxu0 0
    %3774 = vmatpush2.bf16.msra.mxu0 0
    %3775 = vmatprep.subr.bf16.mxu0 0
    %3776 = vmatpush2.bf16.msra.mxu0 0
    %3777 = vmatprep.subr.bf16.mxu0 0
    %3778 = vmatpush2.bf16.msra.mxu0 0
    %3779 = vmatprep.subr.bf16.mxu0 0
    %3780 = vmatpush2.bf16.msra.mxu0 0
    %3781 = vmatprep.subr.bf16.mxu0 0
    %3782 = vmatpush2.bf16.msra.mxu0 0
    %3783 = vmatprep.subr.bf16.mxu0 0
    %3784 = vmatpush2.bf16.msra.mxu0 0
    %3785 = vmatprep.subr.bf16.mxu0 0
    %3786 = vmatpush2.bf16.msra.mxu0 0
    %3787 = vmatprep.subr.bf16.mxu0 0
    %3788 = vmatpush2.bf16.msra.mxu0 0
    %3789 = vmatprep.mubr.bf16.mxu0 0
    %3790 = vmatmul.mubr.bf16.gmra.mxu0 %v3343
    %v3791 = vpop.f32.mrf.mxu0
    %v3792 = vadd.f32 0.0, %v3791
    %v3793 = vpop.f32.mrf.mxu0
    %v3794 = vadd.f32 0.0, %v3793
    %v3795 = vpop.f32.mrf.mxu0
    %v3796 = vpop.f32.mrf.mxu0
    %3797 = vdwg.mxu0
    %3798 = vset.pattern.permute.xlu0 24
    %3799 = vperm.xlu0 %3798, %v3312
    %v3800 = vpop.permute.xlu0 %3799
    %v3802 = vmul.f32 %v3792, %v3800
    %v3803 = vadd.f32 %v3732, %v3802
    %3804 = vset.pattern.permute.xlu0 25
    %3805 = vperm.xlu0 %3804, %v3312
    %v3806 = vpop.permute.xlu0 %3805
    %v3808 = vmul.f32 %v3792, %v3806
    %3810 = vrot.lane.b32.xlu0 %v3808, 96
    %v3811 = vpop.permute.xlu0 %3810
    %v3813 = vadd.f32 %v3803, %v3811
    %3814 = vset.pattern.permute.xlu0 26
    %3815 = vperm.xlu0 %3814, %v3312
    %v3816 = vpop.permute.xlu0 %3815
    %v3818 = vmul.f32 %v3792, %v3816
    %3820 = vrot.lane.b32.xlu0 %v3818, 64
    %v3821 = vpop.permute.xlu0 %3820
    %v3823 = vadd.f32 %v3813, %v3821
    %3824 = vset.pattern.permute.xlu0 27
    %3825 = vperm.xlu0 %3824, %v3312
    %v3826 = vpop.permute.xlu0 %3825
    %v3828 = vmul.f32 %v3792, %v3826
    %3830 = vrot.lane.b32.xlu0 %v3828, 32
    %v3831 = vpop.permute.xlu0 %3830
    %v3833 = vadd.f32 %v3823, %v3831
    %3834 = vset.pattern.permute.xlu0 28
    %3835 = vperm.xlu0 %3834, %v3312
    %v3836 = vpop.permute.xlu0 %3835
    %v3838 = vmul.f32 %v3794, %v3836
    %v3839 = vadd.f32 %v3833, %v3838
    %3840 = vset.pattern.permute.xlu0 29
    %3841 = vperm.xlu0 %3840, %v3312
    %v3842 = vpop.permute.xlu0 %3841
    %v3844 = vmul.f32 %v3794, %v3842
    %3846 = vrot.lane.b32.xlu0 %v3844, 96
    %v3847 = vpop.permute.xlu0 %3846
    %v3849 = vadd.f32 %v3839, %v3847
    %3850 = vset.pattern.permute.xlu0 30
    %3851 = vperm.xlu0 %3850, %v3312
    %v3852 = vpop.permute.xlu0 %3851
    %v3854 = vmul.f32 %v3794, %v3852
    %3856 = vrot.lane.b32.xlu0 %v3854, 64
    %v3857 = vpop.permute.xlu0 %3856
    %v3859 = vadd.f32 %v3849, %v3857
    %3860 = vset.pattern.permute.xlu0 31
    %3861 = vperm.xlu0 %3860, %v3312
    %v3862 = vpop.permute.xlu0 %3861
    %v3864 = vmul.f32 %v3794, %v3862
    %3866 = vrot.lane.b32.xlu0 %v3864, 32
    %v3867 = vpop.permute.xlu0 %3866
    %v3869 = vadd.f32 %v3859, %v3867
    %v3871 = vsel %vm152, %v3308, 0
    %3873 = vmatprep.subr.mxu0 0.0
    %3874 = vmatpush1.msra.mxu0 0.0
    %3875 = vmatprep.subr.mxu0 0.0
    %3876 = vmatpush1.msra.mxu0 0.0
    %3877 = vmatprep.subr.mxu0 0.0
    %3878 = vmatpush1.msra.mxu0 0.0
    %3879 = vmatprep.subr.mxu0 0.0
    %3880 = vmatpush1.msra.mxu0 0.0
    %3881 = vmatprep.subr.mxu0 0.0
    %3882 = vmatpush1.msra.mxu0 0.0
    %3883 = vmatprep.subr.mxu0 0.0
    %3884 = vmatpush1.msra.mxu0 0.0
    %3885 = vmatprep.subr.mxu0 0.0
    %3886 = vmatpush1.msra.mxu0 0.0
    %3887 = vmatprep.subr.mxu0 0.0
    %3888 = vmatpush1.msra.mxu0 0.0
    %3889 = vmatprep.subr.mxu0 0.0
    %3890 = vmatpush1.msra.mxu0 0.0
    %3891 = vmatprep.subr.mxu0 0.0
    %3892 = vmatpush1.msra.mxu0 0.0
    %3893 = vmatprep.subr.mxu0 0.0
    %3894 = vmatpush1.msra.mxu0 0.0
    %3895 = vmatprep.subr.mxu0 0.0
    %3896 = vmatpush1.msra.mxu0 0.0
    %3897 = vmatprep.subr.mxu0 0.0
    %3898 = vmatpush1.msra.mxu0 %v115
    %3899 = vmatprep.subr.mxu0 0.0
    %3900 = vmatpush1.msra.mxu0 %v114
    %3901 = vmatprep.subr.mxu0 0.0
    %3902 = vmatpush1.msra.mxu0 %v113
    %3903 = vmatprep.subr.mxu0 0.0
    %3904 = vmatpush1.msra.mxu0 %v112
    %3905 = vmatprep.subr.mxu0 0.0
    %3906 = vmatpush2.msra.mxu0 0.0
    %3907 = vmatprep.subr.mxu0 0.0
    %3908 = vmatpush2.msra.mxu0 0.0
    %3909 = vmatprep.subr.mxu0 0.0
    %3910 = vmatpush2.msra.mxu0 0.0
    %3911 = vmatprep.subr.mxu0 0.0
    %3912 = vmatpush2.msra.mxu0 0.0
    %3913 = vmatprep.subr.mxu0 0.0
    %3914 = vmatpush2.msra.mxu0 0.0
    %3915 = vmatprep.subr.mxu0 0.0
    %3916 = vmatpush2.msra.mxu0 0.0
    %3917 = vmatprep.subr.mxu0 0.0
    %3918 = vmatpush2.msra.mxu0 0.0
    %3919 = vmatprep.subr.mxu0 0.0
    %3920 = vmatpush2.msra.mxu0 0.0
    %3921 = vmatprep.subr.mxu0 0.0
    %3922 = vmatpush2.msra.mxu0 0.0
    %3923 = vmatprep.subr.mxu0 0.0
    %3924 = vmatpush2.msra.mxu0 0.0
    %3925 = vmatprep.subr.mxu0 0.0
    %3926 = vmatpush2.msra.mxu0 0.0
    %3927 = vmatprep.subr.mxu0 0.0
    %3928 = vmatpush2.msra.mxu0 0.0
    %3929 = vmatprep.subr.mxu0 0.0
    %3930 = vmatpush2.msra.mxu0 0.0
    %3931 = vmatprep.subr.mxu0 0.0
    %3932 = vmatpush2.msra.mxu0 0.0
    %3933 = vmatprep.subr.mxu0 0.0
    %3934 = vmatpush2.msra.mxu0 0.0
    %3935 = vmatprep.subr.mxu0 0.0
    %3936 = vmatpush2.msra.mxu0 0.0
    %3937 = vmatprep.mubr.f32.mxu0 0.0
    %3938 = vmatmul.mubr.f32.gmra.mxu0 %v3871
    %v3939 = vpop.f32.mrf.mxu0
    %v3940 = vadd.f32 %v121, %v3939
    %v3941 = vpop.f32.mrf.mxu0
    %3942 = vdwg.mxu0
    %v3943 = vadd.f32 %v3940, %v3314
    %v3944 = vmax.f32 %v3943, 0.0
    %v3945 = vmul.f32 %v3308, 0.0
    %v3946 = vadd.f32 %v3945, %v3944
    %s3947 = scalar_lea.vmem %s7, 40
    %3948 = vst.msk [vmem:[%s3947] sm:$0xff] %vm152, %v3869
    %s3949 = scalar_lea.vmem %s0, 48
    %v3950 = vld [vmem:[%s3949] sm:$0xff]
    %s3951 = scalar_lea.vmem %s1, 48
    %v3952 = vld [vmem:[%s3951] sm:$0xff]
    %s3953 = scalar_lea.vmem %s2, 48
    %v3954 = vld [vmem:[%s3953] sm:$0xff]
    %v3955 = vpack.c.bf16 %v3946, %v3946
    %v3956 = vld [vmem:[#allocation2] sm:$0xff]
    %v3957 = vld [vmem:[#allocation2 + $0x20] sm:$0xff]
    %v3958 = vld [vmem:[#allocation2 + $0x40] sm:$0xff]
    %v3959 = vld [vmem:[#allocation2 + $0x60] sm:$0xff]
    %v3964 = vunpack.c.l.b16 %v3956
    %v3965 = vunpack.c.h.b16 %v3956
    %v3966 = vunpack.c.l.b16 %v3957
    %v3967 = vunpack.c.h.b16 %v3957
    %v3968 = vunpack.c.l.b16 %v3958
    %v3969 = vunpack.c.h.b16 %v3958
    %v3970 = vunpack.c.l.b16 %v3959
    %v3971 = vunpack.c.h.b16 %v3959
    %v3972 = vpack.c.b16 %v3966, %v3964
    %v3973 = vpack.c.b16 %v3967, %v3965
    %v3974 = vpack.c.b16 %v3970, %v3968
    %v3975 = vpack.c.b16 %v3971, %v3969
    %v3981 = vsel %vm152, %v3955, 0
    %3983 = vmatprep.subr.bf16.mxu0 0
    %3984 = vmatpush1.bf16.msra.mxu0 0
    %3985 = vmatprep.subr.bf16.mxu0 0
    %3986 = vmatpush1.bf16.msra.mxu0 0
    %3987 = vmatprep.subr.bf16.mxu0 0
    %3988 = vmatpush1.bf16.msra.mxu0 0
    %3989 = vmatprep.subr.bf16.mxu0 0
    %3990 = vmatpush1.bf16.msra.mxu0 0
    %3991 = vmatprep.subr.bf16.mxu0 0
    %3992 = vmatpush1.bf16.msra.mxu0 0
    %3993 = vmatprep.subr.bf16.mxu0 0
    %3994 = vmatpush1.bf16.msra.mxu0 0
    %3995 = vmatprep.subr.bf16.mxu0 %v3975
    %3996 = vmatpush1.bf16.msra.mxu0 %v3974
    %3997 = vmatprep.subr.bf16.mxu0 %v3973
    %3998 = vmatpush1.bf16.msra.mxu0 %v3972
    %3999 = vmatprep.subr.bf16.mxu0 0
    %4000 = vmatpush2.bf16.msra.mxu0 0
    %4001 = vmatprep.subr.bf16.mxu0 0
    %4002 = vmatpush2.bf16.msra.mxu0 0
    %4003 = vmatprep.subr.bf16.mxu0 0
    %4004 = vmatpush2.bf16.msra.mxu0 0
    %4005 = vmatprep.subr.bf16.mxu0 0
    %4006 = vmatpush2.bf16.msra.mxu0 0
    %4007 = vmatprep.subr.bf16.mxu0 0
    %4008 = vmatpush2.bf16.msra.mxu0 0
    %4009 = vmatprep.subr.bf16.mxu0 0
    %4010 = vmatpush2.bf16.msra.mxu0 0
    %4011 = vmatprep.subr.bf16.mxu0 0
    %4012 = vmatpush2.bf16.msra.mxu0 0
    %4013 = vmatprep.subr.bf16.mxu0 0
    %4014 = vmatpush2.bf16.msra.mxu0 0
    %4015 = vmatprep.mubr.bf16.mxu0 0
    %4016 = vmatmul.mubr.bf16.gmra.mxu0 %v3981
    %v4017 = vpop.f32.mrf.mxu0
    %v4018 = vadd.f32 0.0, %v4017
    %v4019 = vpop.f32.mrf.mxu0
    %v4020 = vadd.f32 0.0, %v4019
    %v4021 = vpop.f32.mrf.mxu0
    %v4022 = vpop.f32.mrf.mxu0
    %4023 = vdwg.mxu0
    %4025 = vset.pattern.permute.xlu0 0
    %4026 = vperm.xlu0 %4025, %v3950
    %v4027 = vpop.permute.xlu0 %4026
    %v4029 = vmul.f32 %v4018, %v4027
    %v4030 = vadd.f32 %v3954, %v4029
    %4031 = vset.pattern.permute.xlu0 1
    %4032 = vperm.xlu0 %4031, %v3950
    %v4033 = vpop.permute.xlu0 %4032
    %v4035 = vmul.f32 %v4018, %v4033
    %4037 = vrot.lane.b32.xlu0 %v4035, 96
    %v4038 = vpop.permute.xlu0 %4037
    %v4040 = vadd.f32 %v4030, %v4038
    %4041 = vset.pattern.permute.xlu0 2
    %4042 = vperm.xlu0 %4041, %v3950
    %v4043 = vpop.permute.xlu0 %4042
    %v4045 = vmul.f32 %v4018, %v4043
    %4047 = vrot.lane.b32.xlu0 %v4045, 64
    %v4048 = vpop.permute.xlu0 %4047
    %v4050 = vadd.f32 %v4040, %v4048
    %4051 = vset.pattern.permute.xlu0 3
    %4052 = vperm.xlu0 %4051, %v3950
    %v4053 = vpop.permute.xlu0 %4052
    %v4055 = vmul.f32 %v4018, %v4053
    %4057 = vrot.lane.b32.xlu0 %v4055, 32
    %v4058 = vpop.permute.xlu0 %4057
    %v4060 = vadd.f32 %v4050, %v4058
    %4061 = vset.pattern.permute.xlu0 4
    %4062 = vperm.xlu0 %4061, %v3950
    %v4063 = vpop.permute.xlu0 %4062
    %v4065 = vmul.f32 %v4020, %v4063
    %v4066 = vadd.f32 %v4060, %v4065
    %4067 = vset.pattern.permute.xlu0 5
    %4068 = vperm.xlu0 %4067, %v3950
    %v4069 = vpop.permute.xlu0 %4068
    %v4071 = vmul.f32 %v4020, %v4069
    %4073 = vrot.lane.b32.xlu0 %v4071, 96
    %v4074 = vpop.permute.xlu0 %4073
    %v4076 = vadd.f32 %v4066, %v4074
    %4077 = vset.pattern.permute.xlu0 6
    %4078 = vperm.xlu0 %4077, %v3950
    %v4079 = vpop.permute.xlu0 %4078
    %v4081 = vmul.f32 %v4020, %v4079
    %4083 = vrot.lane.b32.xlu0 %v4081, 64
    %v4084 = vpop.permute.xlu0 %4083
    %v4086 = vadd.f32 %v4076, %v4084
    %4087 = vset.pattern.permute.xlu0 7
    %4088 = vperm.xlu0 %4087, %v3950
    %v4089 = vpop.permute.xlu0 %4088
    %v4091 = vmul.f32 %v4020, %v4089
    %4093 = vrot.lane.b32.xlu0 %v4091, 32
    %v4094 = vpop.permute.xlu0 %4093
    %v4096 = vadd.f32 %v4086, %v4094
    %v4097 = vld [vmem:[#allocation2 + $0x8] sm:$0xff]
    %v4098 = vld [vmem:[#allocation2 + $0x28] sm:$0xff]
    %v4099 = vld [vmem:[#allocation2 + $0x48] sm:$0xff]
    %v4100 = vld [vmem:[#allocation2 + $0x68] sm:$0xff]
    %v4105 = vunpack.c.l.b16 %v4097
    %v4106 = vunpack.c.h.b16 %v4097
    %v4107 = vunpack.c.l.b16 %v4098
    %v4108 = vunpack.c.h.b16 %v4098
    %v4109 = vunpack.c.l.b16 %v4099
    %v4110 = vunpack.c.h.b16 %v4099
    %v4111 = vunpack.c.l.b16 %v4100
    %v4112 = vunpack.c.h.b16 %v4100
    %v4113 = vpack.c.b16 %v4107, %v4105
    %v4114 = vpack.c.b16 %v4108, %v4106
    %v4115 = vpack.c.b16 %v4111, %v4109
    %v4116 = vpack.c.b16 %v4112, %v4110
    %4121 = vmatprep.subr.bf16.mxu0 0
    %4122 = vmatpush1.bf16.msra.mxu0 0
    %4123 = vmatprep.subr.bf16.mxu0 0
    %4124 = vmatpush1.bf16.msra.mxu0 0
    %4125 = vmatprep.subr.bf16.mxu0 0
    %4126 = vmatpush1.bf16.msra.mxu0 0
    %4127 = vmatprep.subr.bf16.mxu0 0
    %4128 = vmatpush1.bf16.msra.mxu0 0
    %4129 = vmatprep.subr.bf16.mxu0 0
    %4130 = vmatpush1.bf16.msra.mxu0 0
    %4131 = vmatprep.subr.bf16.mxu0 0
    %4132 = vmatpush1.bf16.msra.mxu0 0
    %4133 = vmatprep.subr.bf16.mxu0 %v4116
    %4134 = vmatpush1.bf16.msra.mxu0 %v4115
    %4135 = vmatprep.subr.bf16.mxu0 %v4114
    %4136 = vmatpush1.bf16.msra.mxu0 %v4113
    %4137 = vmatprep.subr.bf16.mxu0 0
    %4138 = vmatpush2.bf16.msra.mxu0 0
    %4139 = vmatprep.subr.bf16.mxu0 0
    %4140 = vmatpush2.bf16.msra.mxu0 0
    %4141 = vmatprep.subr.bf16.mxu0 0
    %4142 = vmatpush2.bf16.msra.mxu0 0
    %4143 = vmatprep.subr.bf16.mxu0 0
    %4144 = vmatpush2.bf16.msra.mxu0 0
    %4145 = vmatprep.subr.bf16.mxu0 0
    %4146 = vmatpush2.bf16.msra.mxu0 0
    %4147 = vmatprep.subr.bf16.mxu0 0
    %4148 = vmatpush2.bf16.msra.mxu0 0
    %4149 = vmatprep.subr.bf16.mxu0 0
    %4150 = vmatpush2.bf16.msra.mxu0 0
    %4151 = vmatprep.subr.bf16.mxu0 0
    %4152 = vmatpush2.bf16.msra.mxu0 0
    %4153 = vmatprep.mubr.bf16.mxu0 0
    %4154 = vmatmul.mubr.bf16.gmra.mxu0 %v3981
    %v4155 = vpop.f32.mrf.mxu0
    %v4156 = vadd.f32 0.0, %v4155
    %v4157 = vpop.f32.mrf.mxu0
    %v4158 = vadd.f32 0.0, %v4157
    %v4159 = vpop.f32.mrf.mxu0
    %v4160 = vpop.f32.mrf.mxu0
    %4161 = vdwg.mxu0
    %4162 = vset.pattern.permute.xlu0 8
    %4163 = vperm.xlu0 %4162, %v3950
    %v4164 = vpop.permute.xlu0 %4163
    %v4166 = vmul.f32 %v4156, %v4164
    %v4167 = vadd.f32 %v4096, %v4166
    %4168 = vset.pattern.permute.xlu0 9
    %4169 = vperm.xlu0 %4168, %v3950
    %v4170 = vpop.permute.xlu0 %4169
    %v4172 = vmul.f32 %v4156, %v4170
    %4174 = vrot.lane.b32.xlu0 %v4172, 96
    %v4175 = vpop.permute.xlu0 %4174
    %v4177 = vadd.f32 %v4167, %v4175
    %4178 = vset.pattern.permute.xlu0 10
    %4179 = vperm.xlu0 %4178, %v3950
    %v4180 = vpop.permute.xlu0 %4179
    %v4182 = vmul.f32 %v4156, %v4180
    %4184 = vrot.lane.b32.xlu0 %v4182, 64
    %v4185 = vpop.permute.xlu0 %4184
    %v4187 = vadd.f32 %v4177, %v4185
    %4188 = vset.pattern.permute.xlu0 11
    %4189 = vperm.xlu0 %4188, %v3950
    %v4190 = vpop.permute.xlu0 %4189
    %v4192 = vmul.f32 %v4156, %v4190
    %4194 = vrot.lane.b32.xlu0 %v4192, 32
    %v4195 = vpop.permute.xlu0 %4194
    %v4197 = vadd.f32 %v4187, %v4195
    %4198 = vset.pattern.permute.xlu0 12
    %4199 = vperm.xlu0 %4198, %v3950
    %v4200 = vpop.permute.xlu0 %4199
    %v4202 = vmul.f32 %v4158, %v4200
    %v4203 = vadd.f32 %v4197, %v4202
    %4204 = vset.pattern.permute.xlu0 13
    %4205 = vperm.xlu0 %4204, %v3950
    %v4206 = vpop.permute.xlu0 %4205
    %v4208 = vmul.f32 %v4158, %v4206
    %4210 = vrot.lane.b32.xlu0 %v4208, 96
    %v4211 = vpop.permute.xlu0 %4210
    %v4213 = vadd.f32 %v4203, %v4211
    %4214 = vset.pattern.permute.xlu0 14
    %4215 = vperm.xlu0 %4214, %v3950
    %v4216 = vpop.permute.xlu0 %4215
    %v4218 = vmul.f32 %v4158, %v4216
    %4220 = vrot.lane.b32.xlu0 %v4218, 64
    %v4221 = vpop.permute.xlu0 %4220
    %v4223 = vadd.f32 %v4213, %v4221
    %4224 = vset.pattern.permute.xlu0 15
    %4225 = vperm.xlu0 %4224, %v3950
    %v4226 = vpop.permute.xlu0 %4225
    %v4228 = vmul.f32 %v4158, %v4226
    %4230 = vrot.lane.b32.xlu0 %v4228, 32
    %v4231 = vpop.permute.xlu0 %4230
    %v4233 = vadd.f32 %v4223, %v4231
    %v4234 = vld [vmem:[#allocation2 + $0x10] sm:$0xff]
    %v4235 = vld [vmem:[#allocation2 + $0x30] sm:$0xff]
    %v4236 = vld [vmem:[#allocation2 + $0x50] sm:$0xff]
    %v4237 = vld [vmem:[#allocation2 + $0x70] sm:$0xff]
    %v4242 = vunpack.c.l.b16 %v4234
    %v4243 = vunpack.c.h.b16 %v4234
    %v4244 = vunpack.c.l.b16 %v4235
    %v4245 = vunpack.c.h.b16 %v4235
    %v4246 = vunpack.c.l.b16 %v4236
    %v4247 = vunpack.c.h.b16 %v4236
    %v4248 = vunpack.c.l.b16 %v4237
    %v4249 = vunpack.c.h.b16 %v4237
    %v4250 = vpack.c.b16 %v4244, %v4242
    %v4251 = vpack.c.b16 %v4245, %v4243
    %v4252 = vpack.c.b16 %v4248, %v4246
    %v4253 = vpack.c.b16 %v4249, %v4247
    %4258 = vmatprep.subr.bf16.mxu0 0
    %4259 = vmatpush1.bf16.msra.mxu0 0
    %4260 = vmatprep.subr.bf16.mxu0 0
    %4261 = vmatpush1.bf16.msra.mxu0 0
    %4262 = vmatprep.subr.bf16.mxu0 0
    %4263 = vmatpush1.bf16.msra.mxu0 0
    %4264 = vmatprep.subr.bf16.mxu0 0
    %4265 = vmatpush1.bf16.msra.mxu0 0
    %4266 = vmatprep.subr.bf16.mxu0 0
    %4267 = vmatpush1.bf16.msra.mxu0 0
    %4268 = vmatprep.subr.bf16.mxu0 0
    %4269 = vmatpush1.bf16.msra.mxu0 0
    %4270 = vmatprep.subr.bf16.mxu0 %v4253
    %4271 = vmatpush1.bf16.msra.mxu0 %v4252
    %4272 = vmatprep.subr.bf16.mxu0 %v4251
    %4273 = vmatpush1.bf16.msra.mxu0 %v4250
    %4274 = vmatprep.subr.bf16.mxu0 0
    %4275 = vmatpush2.bf16.msra.mxu0 0
    %4276 = vmatprep.subr.bf16.mxu0 0
    %4277 = vmatpush2.bf16.msra.mxu0 0
    %4278 = vmatprep.subr.bf16.mxu0 0
    %4279 = vmatpush2.bf16.msra.mxu0 0
    %4280 = vmatprep.subr.bf16.mxu0 0
    %4281 = vmatpush2.bf16.msra.mxu0 0
    %4282 = vmatprep.subr.bf16.mxu0 0
    %4283 = vmatpush2.bf16.msra.mxu0 0
    %4284 = vmatprep.subr.bf16.mxu0 0
    %4285 = vmatpush2.bf16.msra.mxu0 0
    %4286 = vmatprep.subr.bf16.mxu0 0
    %4287 = vmatpush2.bf16.msra.mxu0 0
    %4288 = vmatprep.subr.bf16.mxu0 0
    %4289 = vmatpush2.bf16.msra.mxu0 0
    %4290 = vmatprep.mubr.bf16.mxu0 0
    %4291 = vmatmul.mubr.bf16.gmra.mxu0 %v3981
    %v4292 = vpop.f32.mrf.mxu0
    %v4293 = vadd.f32 0.0, %v4292
    %v4294 = vpop.f32.mrf.mxu0
    %v4295 = vadd.f32 0.0, %v4294
    %v4296 = vpop.f32.mrf.mxu0
    %v4297 = vpop.f32.mrf.mxu0
    %4298 = vdwg.mxu0
    %4299 = vset.pattern.permute.xlu0 16
    %4300 = vperm.xlu0 %4299, %v3950
    %v4301 = vpop.permute.xlu0 %4300
    %v4303 = vmul.f32 %v4293, %v4301
    %v4304 = vadd.f32 %v4233, %v4303
    %4305 = vset.pattern.permute.xlu0 17
    %4306 = vperm.xlu0 %4305, %v3950
    %v4307 = vpop.permute.xlu0 %4306
    %v4309 = vmul.f32 %v4293, %v4307
    %4311 = vrot.lane.b32.xlu0 %v4309, 96
    %v4312 = vpop.permute.xlu0 %4311
    %v4314 = vadd.f32 %v4304, %v4312
    %4315 = vset.pattern.permute.xlu0 18
    %4316 = vperm.xlu0 %4315, %v3950
    %v4317 = vpop.permute.xlu0 %4316
    %v4319 = vmul.f32 %v4293, %v4317
    %4321 = vrot.lane.b32.xlu0 %v4319, 64
    %v4322 = vpop.permute.xlu0 %4321
    %v4324 = vadd.f32 %v4314, %v4322
    %4325 = vset.pattern.permute.xlu0 19
    %4326 = vperm.xlu0 %4325, %v3950
    %v4327 = vpop.permute.xlu0 %4326
    %v4329 = vmul.f32 %v4293, %v4327
    %4331 = vrot.lane.b32.xlu0 %v4329, 32
    %v4332 = vpop.permute.xlu0 %4331
    %v4334 = vadd.f32 %v4324, %v4332
    %4335 = vset.pattern.permute.xlu0 20
    %4336 = vperm.xlu0 %4335, %v3950
    %v4337 = vpop.permute.xlu0 %4336
    %v4339 = vmul.f32 %v4295, %v4337
    %v4340 = vadd.f32 %v4334, %v4339
    %4341 = vset.pattern.permute.xlu0 21
    %4342 = vperm.xlu0 %4341, %v3950
    %v4343 = vpop.permute.xlu0 %4342
    %v4345 = vmul.f32 %v4295, %v4343
    %4347 = vrot.lane.b32.xlu0 %v4345, 96
    %v4348 = vpop.permute.xlu0 %4347
    %v4350 = vadd.f32 %v4340, %v4348
    %4351 = vset.pattern.permute.xlu0 22
    %4352 = vperm.xlu0 %4351, %v3950
    %v4353 = vpop.permute.xlu0 %4352
    %v4355 = vmul.f32 %v4295, %v4353
    %4357 = vrot.lane.b32.xlu0 %v4355, 64
    %v4358 = vpop.permute.xlu0 %4357
    %v4360 = vadd.f32 %v4350, %v4358
    %4361 = vset.pattern.permute.xlu0 23
    %4362 = vperm.xlu0 %4361, %v3950
    %v4363 = vpop.permute.xlu0 %4362
    %v4365 = vmul.f32 %v4295, %v4363
    %4367 = vrot.lane.b32.xlu0 %v4365, 32
    %v4368 = vpop.permute.xlu0 %4367
    %v4370 = vadd.f32 %v4360, %v4368
    %v4371 = vld [vmem:[#allocation2 + $0x18] sm:$0xff]
    %v4372 = vld [vmem:[#allocation2 + $0x38] sm:$0xff]
    %v4373 = vld [vmem:[#allocation2 + $0x58] sm:$0xff]
    %v4374 = vld [vmem:[#allocation2 + $0x78] sm:$0xff]
    %v4379 = vunpack.c.l.b16 %v4371
    %v4380 = vunpack.c.h.b16 %v4371
    %v4381 = vunpack.c.l.b16 %v4372
    %v4382 = vunpack.c.h.b16 %v4372
    %v4383 = vunpack.c.l.b16 %v4373
    %v4384 = vunpack.c.h.b16 %v4373
    %v4385 = vunpack.c.l.b16 %v4374
    %v4386 = vunpack.c.h.b16 %v4374
    %v4387 = vpack.c.b16 %v4381, %v4379
    %v4388 = vpack.c.b16 %v4382, %v4380
    %v4389 = vpack.c.b16 %v4385, %v4383
    %v4390 = vpack.c.b16 %v4386, %v4384
    %4395 = vmatprep.subr.bf16.mxu0 0
    %4396 = vmatpush1.bf16.msra.mxu0 0
    %4397 = vmatprep.subr.bf16.mxu0 0
    %4398 = vmatpush1.bf16.msra.mxu0 0
    %4399 = vmatprep.subr.bf16.mxu0 0
    %4400 = vmatpush1.bf16.msra.mxu0 0
    %4401 = vmatprep.subr.bf16.mxu0 0
    %4402 = vmatpush1.bf16.msra.mxu0 0
    %4403 = vmatprep.subr.bf16.mxu0 0
    %4404 = vmatpush1.bf16.msra.mxu0 0
    %4405 = vmatprep.subr.bf16.mxu0 0
    %4406 = vmatpush1.bf16.msra.mxu0 0
    %4407 = vmatprep.subr.bf16.mxu0 %v4390
    %4408 = vmatpush1.bf16.msra.mxu0 %v4389
    %4409 = vmatprep.subr.bf16.mxu0 %v4388
    %4410 = vmatpush1.bf16.msra.mxu0 %v4387
    %4411 = vmatprep.subr.bf16.mxu0 0
    %4412 = vmatpush2.bf16.msra.mxu0 0
    %4413 = vmatprep.subr.bf16.mxu0 0
    %4414 = vmatpush2.bf16.msra.mxu0 0
    %4415 = vmatprep.subr.bf16.mxu0 0
    %4416 = vmatpush2.bf16.msra.mxu0 0
    %4417 = vmatprep.subr.bf16.mxu0 0
    %4418 = vmatpush2.bf16.msra.mxu0 0
    %4419 = vmatprep.subr.bf16.mxu0 0
    %4420 = vmatpush2.bf16.msra.mxu0 0
    %4421 = vmatprep.subr.bf16.mxu0 0
    %4422 = vmatpush2.bf16.msra.mxu0 0
    %4423 = vmatprep.subr.bf16.mxu0 0
    %4424 = vmatpush2.bf16.msra.mxu0 0
    %4425 = vmatprep.subr.bf16.mxu0 0
    %4426 = vmatpush2.bf16.msra.mxu0 0
    %4427 = vmatprep.mubr.bf16.mxu0 0
    %4428 = vmatmul.mubr.bf16.gmra.mxu0 %v3981
    %v4429 = vpop.f32.mrf.mxu0
    %v4430 = vadd.f32 0.0, %v4429
    %v4431 = vpop.f32.mrf.mxu0
    %v4432 = vadd.f32 0.0, %v4431
    %v4433 = vpop.f32.mrf.mxu0
    %v4434 = vpop.f32.mrf.mxu0
    %4435 = vdwg.mxu0
    %4436 = vset.pattern.permute.xlu0 24
    %4437 = vperm.xlu0 %4436, %v3950
    %v4438 = vpop.permute.xlu0 %4437
    %v4440 = vmul.f32 %v4430, %v4438
    %v4441 = vadd.f32 %v4370, %v4440
    %4442 = vset.pattern.permute.xlu0 25
    %4443 = vperm.xlu0 %4442, %v3950
    %v4444 = vpop.permute.xlu0 %4443
    %v4446 = vmul.f32 %v4430, %v4444
    %4448 = vrot.lane.b32.xlu0 %v4446, 96
    %v4449 = vpop.permute.xlu0 %4448
    %v4451 = vadd.f32 %v4441, %v4449
    %4452 = vset.pattern.permute.xlu0 26
    %4453 = vperm.xlu0 %4452, %v3950
    %v4454 = vpop.permute.xlu0 %4453
    %v4456 = vmul.f32 %v4430, %v4454
    %4458 = vrot.lane.b32.xlu0 %v4456, 64
    %v4459 = vpop.permute.xlu0 %4458
    %v4461 = vadd.f32 %v4451, %v4459
    %4462 = vset.pattern.permute.xlu0 27
    %4463 = vperm.xlu0 %4462, %v3950
    %v4464 = vpop.permute.xlu0 %4463
    %v4466 = vmul.f32 %v4430, %v4464
    %4468 = vrot.lane.b32.xlu0 %v4466, 32
    %v4469 = vpop.permute.xlu0 %4468
    %v4471 = vadd.f32 %v4461, %v4469
    %4472 = vset.pattern.permute.xlu0 28
    %4473 = vperm.xlu0 %4472, %v3950
    %v4474 = vpop.permute.xlu0 %4473
    %v4476 = vmul.f32 %v4432, %v4474
    %v4477 = vadd.f32 %v4471, %v4476
    %4478 = vset.pattern.permute.xlu0 29
    %4479 = vperm.xlu0 %4478, %v3950
    %v4480 = vpop.permute.xlu0 %4479
    %v4482 = vmul.f32 %v4432, %v4480
    %4484 = vrot.lane.b32.xlu0 %v4482, 96
    %v4485 = vpop.permute.xlu0 %4484
    %v4487 = vadd.f32 %v4477, %v4485
    %4488 = vset.pattern.permute.xlu0 30
    %4489 = vperm.xlu0 %4488, %v3950
    %v4490 = vpop.permute.xlu0 %4489
    %v4492 = vmul.f32 %v4432, %v4490
    %4494 = vrot.lane.b32.xlu0 %v4492, 64
    %v4495 = vpop.permute.xlu0 %4494
    %v4497 = vadd.f32 %v4487, %v4495
    %4498 = vset.pattern.permute.xlu0 31
    %4499 = vperm.xlu0 %4498, %v3950
    %v4500 = vpop.permute.xlu0 %4499
    %v4502 = vmul.f32 %v4432, %v4500
    %4504 = vrot.lane.b32.xlu0 %v4502, 32
    %v4505 = vpop.permute.xlu0 %4504
    %v4507 = vadd.f32 %v4497, %v4505
    %v4509 = vsel %vm152, %v3946, 0
    %4511 = vmatprep.subr.mxu0 0.0
    %4512 = vmatpush1.msra.mxu0 0.0
    %4513 = vmatprep.subr.mxu0 0.0
    %4514 = vmatpush1.msra.mxu0 0.0
    %4515 = vmatprep.subr.mxu0 0.0
    %4516 = vmatpush1.msra.mxu0 0.0
    %4517 = vmatprep.subr.mxu0 0.0
    %4518 = vmatpush1.msra.mxu0 0.0
    %4519 = vmatprep.subr.mxu0 0.0
    %4520 = vmatpush1.msra.mxu0 0.0
    %4521 = vmatprep.subr.mxu0 0.0
    %4522 = vmatpush1.msra.mxu0 0.0
    %4523 = vmatprep.subr.mxu0 0.0
    %4524 = vmatpush1.msra.mxu0 0.0
    %4525 = vmatprep.subr.mxu0 0.0
    %4526 = vmatpush1.msra.mxu0 0.0
    %4527 = vmatprep.subr.mxu0 0.0
    %4528 = vmatpush1.msra.mxu0 0.0
    %4529 = vmatprep.subr.mxu0 0.0
    %4530 = vmatpush1.msra.mxu0 0.0
    %4531 = vmatprep.subr.mxu0 0.0
    %4532 = vmatpush1.msra.mxu0 0.0
    %4533 = vmatprep.subr.mxu0 0.0
    %4534 = vmatpush1.msra.mxu0 0.0
    %4535 = vmatprep.subr.mxu0 0.0
    %4536 = vmatpush1.msra.mxu0 %v115
    %4537 = vmatprep.subr.mxu0 0.0
    %4538 = vmatpush1.msra.mxu0 %v114
    %4539 = vmatprep.subr.mxu0 0.0
    %4540 = vmatpush1.msra.mxu0 %v113
    %4541 = vmatprep.subr.mxu0 0.0
    %4542 = vmatpush1.msra.mxu0 %v112
    %4543 = vmatprep.subr.mxu0 0.0
    %4544 = vmatpush2.msra.mxu0 0.0
    %4545 = vmatprep.subr.mxu0 0.0
    %4546 = vmatpush2.msra.mxu0 0.0
    %4547 = vmatprep.subr.mxu0 0.0
    %4548 = vmatpush2.msra.mxu0 0.0
    %4549 = vmatprep.subr.mxu0 0.0
    %4550 = vmatpush2.msra.mxu0 0.0
    %4551 = vmatprep.subr.mxu0 0.0
    %4552 = vmatpush2.msra.mxu0 0.0
    %4553 = vmatprep.subr.mxu0 0.0
    %4554 = vmatpush2.msra.mxu0 0.0
    %4555 = vmatprep.subr.mxu0 0.0
    %4556 = vmatpush2.msra.mxu0 0.0
    %4557 = vmatprep.subr.mxu0 0.0
    %4558 = vmatpush2.msra.mxu0 0.0
    %4559 = vmatprep.subr.mxu0 0.0
    %4560 = vmatpush2.msra.mxu0 0.0
    %4561 = vmatprep.subr.mxu0 0.0
    %4562 = vmatpush2.msra.mxu0 0.0
    %4563 = vmatprep.subr.mxu0 0.0
    %4564 = vmatpush2.msra.mxu0 0.0
    %4565 = vmatprep.subr.mxu0 0.0
    %4566 = vmatpush2.msra.mxu0 0.0
    %4567 = vmatprep.subr.mxu0 0.0
    %4568 = vmatpush2.msra.mxu0 0.0
    %4569 = vmatprep.subr.mxu0 0.0
    %4570 = vmatpush2.msra.mxu0 0.0
    %4571 = vmatprep.subr.mxu0 0.0
    %4572 = vmatpush2.msra.mxu0 0.0
    %4573 = vmatprep.subr.mxu0 0.0
    %4574 = vmatpush2.msra.mxu0 0.0
    %4575 = vmatprep.mubr.f32.mxu0 0.0
    %4576 = vmatmul.mubr.f32.gmra.mxu0 %v4509
    %v4577 = vpop.f32.mrf.mxu0
    %v4578 = vadd.f32 %v121, %v4577
    %v4579 = vpop.f32.mrf.mxu0
    %4580 = vdwg.mxu0
    %v4581 = vadd.f32 %v4578, %v3952
    %v4582 = vmax.f32 %v4581, 0.0
    %v4583 = vmul.f32 %v3946, 0.0
    %v4584 = vadd.f32 %v4583, %v4582
    %s4585 = scalar_lea.vmem %s7, 48
    %4586 = vst.msk [vmem:[%s4585] sm:$0xff] %vm152, %v4507
    %s4587 = scalar_lea.vmem %s0, 56
    %v4588 = vld [vmem:[%s4587] sm:$0xff]
    %s4589 = scalar_lea.vmem %s1, 56
    %v4590 = vld [vmem:[%s4589] sm:$0xff]
    %s4591 = scalar_lea.vmem %s2, 56
    %v4592 = vld [vmem:[%s4591] sm:$0xff]
    %v4593 = vpack.c.bf16 %v4584, %v4584
    %v4594 = vld [vmem:[#allocation2] sm:$0xff]
    %v4595 = vld [vmem:[#allocation2 + $0x20] sm:$0xff]
    %v4596 = vld [vmem:[#allocation2 + $0x40] sm:$0xff]
    %v4597 = vld [vmem:[#allocation2 + $0x60] sm:$0xff]
    %v4602 = vunpack.c.l.b16 %v4594
    %v4603 = vunpack.c.h.b16 %v4594
    %v4604 = vunpack.c.l.b16 %v4595
    %v4605 = vunpack.c.h.b16 %v4595
    %v4606 = vunpack.c.l.b16 %v4596
    %v4607 = vunpack.c.h.b16 %v4596
    %v4608 = vunpack.c.l.b16 %v4597
    %v4609 = vunpack.c.h.b16 %v4597
    %v4610 = vpack.c.b16 %v4604, %v4602
    %v4611 = vpack.c.b16 %v4605, %v4603
    %v4612 = vpack.c.b16 %v4608, %v4606
    %v4613 = vpack.c.b16 %v4609, %v4607
    %v4619 = vsel %vm152, %v4593, 0
    %4621 = vmatprep.subr.bf16.mxu0 0
    %4622 = vmatpush1.bf16.msra.mxu0 0
    %4623 = vmatprep.subr.bf16.mxu0 0
    %4624 = vmatpush1.bf16.msra.mxu0 0
    %4625 = vmatprep.subr.bf16.mxu0 0
    %4626 = vmatpush1.bf16.msra.mxu0 0
    %4627 = vmatprep.subr.bf16.mxu0 0
    %4628 = vmatpush1.bf16.msra.mxu0 0
    %4629 = vmatprep.subr.bf16.mxu0 0
    %4630 = vmatpush1.bf16.msra.mxu0 0
    %4631 = vmatprep.subr.bf16.mxu0 0
    %4632 = vmatpush1.bf16.msra.mxu0 0
    %4633 = vmatprep.subr.bf16.mxu0 %v4613
    %4634 = vmatpush1.bf16.msra.mxu0 %v4612
    %4635 = vmatprep.subr.bf16.mxu0 %v4611
    %4636 = vmatpush1.bf16.msra.mxu0 %v4610
    %4637 = vmatprep.subr.bf16.mxu0 0
    %4638 = vmatpush2.bf16.msra.mxu0 0
    %4639 = vmatprep.subr.bf16.mxu0 0
    %4640 = vmatpush2.bf16.msra.mxu0 0
    %4641 = vmatprep.subr.bf16.mxu0 0
    %4642 = vmatpush2.bf16.msra.mxu0 0
    %4643 = vmatprep.subr.bf16.mxu0 0
    %4644 = vmatpush2.bf16.msra.mxu0 0
    %4645 = vmatprep.subr.bf16.mxu0 0
    %4646 = vmatpush2.bf16.msra.mxu0 0
    %4647 = vmatprep.subr.bf16.mxu0 0
    %4648 = vmatpush2.bf16.msra.mxu0 0
    %4649 = vmatprep.subr.bf16.mxu0 0
    %4650 = vmatpush2.bf16.msra.mxu0 0
    %4651 = vmatprep.subr.bf16.mxu0 0
    %4652 = vmatpush2.bf16.msra.mxu0 0
    %4653 = vmatprep.mubr.bf16.mxu0 0
    %4654 = vmatmul.mubr.bf16.gmra.mxu0 %v4619
    %v4655 = vpop.f32.mrf.mxu0
    %v4656 = vadd.f32 0.0, %v4655
    %v4657 = vpop.f32.mrf.mxu0
    %v4658 = vadd.f32 0.0, %v4657
    %v4659 = vpop.f32.mrf.mxu0
    %v4660 = vpop.f32.mrf.mxu0
    %4661 = vdwg.mxu0
    %4663 = vset.pattern.permute.xlu0 0
    %4664 = vperm.xlu0 %4663, %v4588
    %v4665 = vpop.permute.xlu0 %4664
    %v4667 = vmul.f32 %v4656, %v4665
    %v4668 = vadd.f32 %v4592, %v4667
    %4669 = vset.pattern.permute.xlu0 1
    %4670 = vperm.xlu0 %4669, %v4588
    %v4671 = vpop.permute.xlu0 %4670
    %v4673 = vmul.f32 %v4656, %v4671
    %4675 = vrot.lane.b32.xlu0 %v4673, 96
    %v4676 = vpop.permute.xlu0 %4675
    %v4678 = vadd.f32 %v4668, %v4676
    %4679 = vset.pattern.permute.xlu0 2
    %4680 = vperm.xlu0 %4679, %v4588
    %v4681 = vpop.permute.xlu0 %4680
    %v4683 = vmul.f32 %v4656, %v4681
    %4685 = vrot.lane.b32.xlu0 %v4683, 64
    %v4686 = vpop.permute.xlu0 %4685
    %v4688 = vadd.f32 %v4678, %v4686
    %4689 = vset.pattern.permute.xlu0 3
    %4690 = vperm.xlu0 %4689, %v4588
    %v4691 = vpop.permute.xlu0 %4690
    %v4693 = vmul.f32 %v4656, %v4691
    %4695 = vrot.lane.b32.xlu0 %v4693, 32
    %v4696 = vpop.permute.xlu0 %4695
    %v4698 = vadd.f32 %v4688, %v4696
    %4699 = vset.pattern.permute.xlu0 4
    %4700 = vperm.xlu0 %4699, %v4588
    %v4701 = vpop.permute.xlu0 %4700
    %v4703 = vmul.f32 %v4658, %v4701
    %v4704 = vadd.f32 %v4698, %v4703
    %4705 = vset.pattern.permute.xlu0 5
    %4706 = vperm.xlu0 %4705, %v4588
    %v4707 = vpop.permute.xlu0 %4706
    %v4709 = vmul.f32 %v4658, %v4707
    %4711 = vrot.lane.b32.xlu0 %v4709, 96
    %v4712 = vpop.permute.xlu0 %4711
    %v4714 = vadd.f32 %v4704, %v4712
    %4715 = vset.pattern.permute.xlu0 6
    %4716 = vperm.xlu0 %4715, %v4588
    %v4717 = vpop.permute.xlu0 %4716
    %v4719 = vmul.f32 %v4658, %v4717
    %4721 = vrot.lane.b32.xlu0 %v4719, 64
    %v4722 = vpop.permute.xlu0 %4721
    %v4724 = vadd.f32 %v4714, %v4722
    %4725 = vset.pattern.permute.xlu0 7
    %4726 = vperm.xlu0 %4725, %v4588
    %v4727 = vpop.permute.xlu0 %4726
    %v4729 = vmul.f32 %v4658, %v4727
    %4731 = vrot.lane.b32.xlu0 %v4729, 32
    %v4732 = vpop.permute.xlu0 %4731
    %v4734 = vadd.f32 %v4724, %v4732
    %v4735 = vld [vmem:[#allocation2 + $0x8] sm:$0xff]
    %v4736 = vld [vmem:[#allocation2 + $0x28] sm:$0xff]
    %v4737 = vld [vmem:[#allocation2 + $0x48] sm:$0xff]
    %v4738 = vld [vmem:[#allocation2 + $0x68] sm:$0xff]
    %v4743 = vunpack.c.l.b16 %v4735
    %v4744 = vunpack.c.h.b16 %v4735
    %v4745 = vunpack.c.l.b16 %v4736
    %v4746 = vunpack.c.h.b16 %v4736
    %v4747 = vunpack.c.l.b16 %v4737
    %v4748 = vunpack.c.h.b16 %v4737
    %v4749 = vunpack.c.l.b16 %v4738
    %v4750 = vunpack.c.h.b16 %v4738
    %v4751 = vpack.c.b16 %v4745, %v4743
    %v4752 = vpack.c.b16 %v4746, %v4744
    %v4753 = vpack.c.b16 %v4749, %v4747
    %v4754 = vpack.c.b16 %v4750, %v4748
    %4759 = vmatprep.subr.bf16.mxu0 0
    %4760 = vmatpush1.bf16.msra.mxu0 0
    %4761 = vmatprep.subr.bf16.mxu0 0
    %4762 = vmatpush1.bf16.msra.mxu0 0
    %4763 = vmatprep.subr.bf16.mxu0 0
    %4764 = vmatpush1.bf16.msra.mxu0 0
    %4765 = vmatprep.subr.bf16.mxu0 0
    %4766 = vmatpush1.bf16.msra.mxu0 0
    %4767 = vmatprep.subr.bf16.mxu0 0
    %4768 = vmatpush1.bf16.msra.mxu0 0
    %4769 = vmatprep.subr.bf16.mxu0 0
    %4770 = vmatpush1.bf16.msra.mxu0 0
    %4771 = vmatprep.subr.bf16.mxu0 %v4754
    %4772 = vmatpush1.bf16.msra.mxu0 %v4753
    %4773 = vmatprep.subr.bf16.mxu0 %v4752
    %4774 = vmatpush1.bf16.msra.mxu0 %v4751
    %4775 = vmatprep.subr.bf16.mxu0 0
    %4776 = vmatpush2.bf16.msra.mxu0 0
    %4777 = vmatprep.subr.bf16.mxu0 0
    %4778 = vmatpush2.bf16.msra.mxu0 0
    %4779 = vmatprep.subr.bf16.mxu0 0
    %4780 = vmatpush2.bf16.msra.mxu0 0
    %4781 = vmatprep.subr.bf16.mxu0 0
    %4782 = vmatpush2.bf16.msra.mxu0 0
    %4783 = vmatprep.subr.bf16.mxu0 0
    %4784 = vmatpush2.bf16.msra.mxu0 0
    %4785 = vmatprep.subr.bf16.mxu0 0
    %4786 = vmatpush2.bf16.msra.mxu0 0
    %4787 = vmatprep.subr.bf16.mxu0 0
    %4788 = vmatpush2.bf16.msra.mxu0 0
    %4789 = vmatprep.subr.bf16.mxu0 0
    %4790 = vmatpush2.bf16.msra.mxu0 0
    %4791 = vmatprep.mubr.bf16.mxu0 0
    %4792 = vmatmul.mubr.bf16.gmra.mxu0 %v4619
    %v4793 = vpop.f32.mrf.mxu0
    %v4794 = vadd.f32 0.0, %v4793
    %v4795 = vpop.f32.mrf.mxu0
    %v4796 = vadd.f32 0.0, %v4795
    %v4797 = vpop.f32.mrf.mxu0
    %v4798 = vpop.f32.mrf.mxu0
    %4799 = vdwg.mxu0
    %4800 = vset.pattern.permute.xlu0 8
    %4801 = vperm.xlu0 %4800, %v4588
    %v4802 = vpop.permute.xlu0 %4801
    %v4804 = vmul.f32 %v4794, %v4802
    %v4805 = vadd.f32 %v4734, %v4804
    %4806 = vset.pattern.permute.xlu0 9
    %4807 = vperm.xlu0 %4806, %v4588
    %v4808 = vpop.permute.xlu0 %4807
    %v4810 = vmul.f32 %v4794, %v4808
    %4812 = vrot.lane.b32.xlu0 %v4810, 96
    %v4813 = vpop.permute.xlu0 %4812
    %v4815 = vadd.f32 %v4805, %v4813
    %4816 = vset.pattern.permute.xlu0 10
    %4817 = vperm.xlu0 %4816, %v4588
    %v4818 = vpop.permute.xlu0 %4817
    %v4820 = vmul.f32 %v4794, %v4818
    %4822 = vrot.lane.b32.xlu0 %v4820, 64
    %v4823 = vpop.permute.xlu0 %4822
    %v4825 = vadd.f32 %v4815, %v4823
    %4826 = vset.pattern.permute.xlu0 11
    %4827 = vperm.xlu0 %4826, %v4588
    %v4828 = vpop.permute.xlu0 %4827
    %v4830 = vmul.f32 %v4794, %v4828
    %4832 = vrot.lane.b32.xlu0 %v4830, 32
    %v4833 = vpop.permute.xlu0 %4832
    %v4835 = vadd.f32 %v4825, %v4833
    %4836 = vset.pattern.permute.xlu0 12
    %4837 = vperm.xlu0 %4836, %v4588
    %v4838 = vpop.permute.xlu0 %4837
    %v4840 = vmul.f32 %v4796, %v4838
    %v4841 = vadd.f32 %v4835, %v4840
    %4842 = vset.pattern.permute.xlu0 13
    %4843 = vperm.xlu0 %4842, %v4588
    %v4844 = vpop.permute.xlu0 %4843
    %v4846 = vmul.f32 %v4796, %v4844
    %4848 = vrot.lane.b32.xlu0 %v4846, 96
    %v4849 = vpop.permute.xlu0 %4848
    %v4851 = vadd.f32 %v4841, %v4849
    %4852 = vset.pattern.permute.xlu0 14
    %4853 = vperm.xlu0 %4852, %v4588
    %v4854 = vpop.permute.xlu0 %4853
    %v4856 = vmul.f32 %v4796, %v4854
    %4858 = vrot.lane.b32.xlu0 %v4856, 64
    %v4859 = vpop.permute.xlu0 %4858
    %v4861 = vadd.f32 %v4851, %v4859
    %4862 = vset.pattern.permute.xlu0 15
    %4863 = vperm.xlu0 %4862, %v4588
    %v4864 = vpop.permute.xlu0 %4863
    %v4866 = vmul.f32 %v4796, %v4864
    %4868 = vrot.lane.b32.xlu0 %v4866, 32
    %v4869 = vpop.permute.xlu0 %4868
    %v4871 = vadd.f32 %v4861, %v4869
    %v4872 = vld [vmem:[#allocation2 + $0x10] sm:$0xff]
    %v4873 = vld [vmem:[#allocation2 + $0x30] sm:$0xff]
    %v4874 = vld [vmem:[#allocation2 + $0x50] sm:$0xff]
    %v4875 = vld [vmem:[#allocation2 + $0x70] sm:$0xff]
    %v4880 = vunpack.c.l.b16 %v4872
    %v4881 = vunpack.c.h.b16 %v4872
    %v4882 = vunpack.c.l.b16 %v4873
    %v4883 = vunpack.c.h.b16 %v4873
    %v4884 = vunpack.c.l.b16 %v4874
    %v4885 = vunpack.c.h.b16 %v4874
    %v4886 = vunpack.c.l.b16 %v4875
    %v4887 = vunpack.c.h.b16 %v4875
    %v4888 = vpack.c.b16 %v4882, %v4880
    %v4889 = vpack.c.b16 %v4883, %v4881
    %v4890 = vpack.c.b16 %v4886, %v4884
    %v4891 = vpack.c.b16 %v4887, %v4885
    %4896 = vmatprep.subr.bf16.mxu0 0
    %4897 = vmatpush1.bf16.msra.mxu0 0
    %4898 = vmatprep.subr.bf16.mxu0 0
    %4899 = vmatpush1.bf16.msra.mxu0 0
    %4900 = vmatprep.subr.bf16.mxu0 0
    %4901 = vmatpush1.bf16.msra.mxu0 0
    %4902 = vmatprep.subr.bf16.mxu0 0
    %4903 = vmatpush1.bf16.msra.mxu0 0
    %4904 = vmatprep.subr.bf16.mxu0 0
    %4905 = vmatpush1.bf16.msra.mxu0 0
    %4906 = vmatprep.subr.bf16.mxu0 0
    %4907 = vmatpush1.bf16.msra.mxu0 0
    %4908 = vmatprep.subr.bf16.mxu0 %v4891
    %4909 = vmatpush1.bf16.msra.mxu0 %v4890
    %4910 = vmatprep.subr.bf16.mxu0 %v4889
    %4911 = vmatpush1.bf16.msra.mxu0 %v4888
    %4912 = vmatprep.subr.bf16.mxu0 0
    %4913 = vmatpush2.bf16.msra.mxu0 0
    %4914 = vmatprep.subr.bf16.mxu0 0
    %4915 = vmatpush2.bf16.msra.mxu0 0
    %4916 = vmatprep.subr.bf16.mxu0 0
    %4917 = vmatpush2.bf16.msra.mxu0 0
    %4918 = vmatprep.subr.bf16.mxu0 0
    %4919 = vmatpush2.bf16.msra.mxu0 0
    %4920 = vmatprep.subr.bf16.mxu0 0
    %4921 = vmatpush2.bf16.msra.mxu0 0
    %4922 = vmatprep.subr.bf16.mxu0 0
    %4923 = vmatpush2.bf16.msra.mxu0 0
    %4924 = vmatprep.subr.bf16.mxu0 0
    %4925 = vmatpush2.bf16.msra.mxu0 0
    %4926 = vmatprep.subr.bf16.mxu0 0
    %4927 = vmatpush2.bf16.msra.mxu0 0
    %4928 = vmatprep.mubr.bf16.mxu0 0
    %4929 = vmatmul.mubr.bf16.gmra.mxu0 %v4619
    %v4930 = vpop.f32.mrf.mxu0
    %v4931 = vadd.f32 0.0, %v4930
    %v4932 = vpop.f32.mrf.mxu0
    %v4933 = vadd.f32 0.0, %v4932
    %v4934 = vpop.f32.mrf.mxu0
    %v4935 = vpop.f32.mrf.mxu0
    %4936 = vdwg.mxu0
    %4937 = vset.pattern.permute.xlu0 16
    %4938 = vperm.xlu0 %4937, %v4588
    %v4939 = vpop.permute.xlu0 %4938
    %v4941 = vmul.f32 %v4931, %v4939
    %v4942 = vadd.f32 %v4871, %v4941
    %4943 = vset.pattern.permute.xlu0 17
    %4944 = vperm.xlu0 %4943, %v4588
    %v4945 = vpop.permute.xlu0 %4944
    %v4947 = vmul.f32 %v4931, %v4945
    %4949 = vrot.lane.b32.xlu0 %v4947, 96
    %v4950 = vpop.permute.xlu0 %4949
    %v4952 = vadd.f32 %v4942, %v4950
    %4953 = vset.pattern.permute.xlu0 18
    %4954 = vperm.xlu0 %4953, %v4588
    %v4955 = vpop.permute.xlu0 %4954
    %v4957 = vmul.f32 %v4931, %v4955
    %4959 = vrot.lane.b32.xlu0 %v4957, 64
    %v4960 = vpop.permute.xlu0 %4959
    %v4962 = vadd.f32 %v4952, %v4960
    %4963 = vset.pattern.permute.xlu0 19
    %4964 = vperm.xlu0 %4963, %v4588
    %v4965 = vpop.permute.xlu0 %4964
    %v4967 = vmul.f32 %v4931, %v4965
    %4969 = vrot.lane.b32.xlu0 %v4967, 32
    %v4970 = vpop.permute.xlu0 %4969
    %v4972 = vadd.f32 %v4962, %v4970
    %4973 = vset.pattern.permute.xlu0 20
    %4974 = vperm.xlu0 %4973, %v4588
    %v4975 = vpop.permute.xlu0 %4974
    %v4977 = vmul.f32 %v4933, %v4975
    %v4978 = vadd.f32 %v4972, %v4977
    %4979 = vset.pattern.permute.xlu0 21
    %4980 = vperm.xlu0 %4979, %v4588
    %v4981 = vpop.permute.xlu0 %4980
    %v4983 = vmul.f32 %v4933, %v4981
    %4985 = vrot.lane.b32.xlu0 %v4983, 96
    %v4986 = vpop.permute.xlu0 %4985
    %v4988 = vadd.f32 %v4978, %v4986
    %4989 = vset.pattern.permute.xlu0 22
    %4990 = vperm.xlu0 %4989, %v4588
    %v4991 = vpop.permute.xlu0 %4990
    %v4993 = vmul.f32 %v4933, %v4991
    %4995 = vrot.lane.b32.xlu0 %v4993, 64
    %v4996 = vpop.permute.xlu0 %4995
    %v4998 = vadd.f32 %v4988, %v4996
    %4999 = vset.pattern.permute.xlu0 23
    %5000 = vperm.xlu0 %4999, %v4588
    %v5001 = vpop.permute.xlu0 %5000
    %v5003 = vmul.f32 %v4933, %v5001
    %5005 = vrot.lane.b32.xlu0 %v5003, 32
    %v5006 = vpop.permute.xlu0 %5005
    %v5008 = vadd.f32 %v4998, %v5006
    %v5009 = vld [vmem:[#allocation2 + $0x18] sm:$0xff]
    %v5010 = vld [vmem:[#allocation2 + $0x38] sm:$0xff]
    %v5011 = vld [vmem:[#allocation2 + $0x58] sm:$0xff]
    %v5012 = vld [vmem:[#allocation2 + $0x78] sm:$0xff]
    %v5017 = vunpack.c.l.b16 %v5009
    %v5018 = vunpack.c.h.b16 %v5009
    %v5019 = vunpack.c.l.b16 %v5010
    %v5020 = vunpack.c.h.b16 %v5010
    %v5021 = vunpack.c.l.b16 %v5011
    %v5022 = vunpack.c.h.b16 %v5011
    %v5023 = vunpack.c.l.b16 %v5012
    %v5024 = vunpack.c.h.b16 %v5012
    %v5025 = vpack.c.b16 %v5019, %v5017
    %v5026 = vpack.c.b16 %v5020, %v5018
    %v5027 = vpack.c.b16 %v5023, %v5021
    %v5028 = vpack.c.b16 %v5024, %v5022
    %5033 = vmatprep.subr.bf16.mxu0 0
    %5034 = vmatpush1.bf16.msra.mxu0 0
    %5035 = vmatprep.subr.bf16.mxu0 0
    %5036 = vmatpush1.bf16.msra.mxu0 0
    %5037 = vmatprep.subr.bf16.mxu0 0
    %5038 = vmatpush1.bf16.msra.mxu0 0
    %5039 = vmatprep.subr.bf16.mxu0 0
    %5040 = vmatpush1.bf16.msra.mxu0 0
    %5041 = vmatprep.subr.bf16.mxu0 0
    %5042 = vmatpush1.bf16.msra.mxu0 0
    %5043 = vmatprep.subr.bf16.mxu0 0
    %5044 = vmatpush1.bf16.msra.mxu0 0
    %5045 = vmatprep.subr.bf16.mxu0 %v5028
    %5046 = vmatpush1.bf16.msra.mxu0 %v5027
    %5047 = vmatprep.subr.bf16.mxu0 %v5026
    %5048 = vmatpush1.bf16.msra.mxu0 %v5025
    %5049 = vmatprep.subr.bf16.mxu0 0
    %5050 = vmatpush2.bf16.msra.mxu0 0
    %5051 = vmatprep.subr.bf16.mxu0 0
    %5052 = vmatpush2.bf16.msra.mxu0 0
    %5053 = vmatprep.subr.bf16.mxu0 0
    %5054 = vmatpush2.bf16.msra.mxu0 0
    %5055 = vmatprep.subr.bf16.mxu0 0
    %5056 = vmatpush2.bf16.msra.mxu0 0
    %5057 = vmatprep.subr.bf16.mxu0 0
    %5058 = vmatpush2.bf16.msra.mxu0 0
    %5059 = vmatprep.subr.bf16.mxu0 0
    %5060 = vmatpush2.bf16.msra.mxu0 0
    %5061 = vmatprep.subr.bf16.mxu0 0
    %5062 = vmatpush2.bf16.msra.mxu0 0
    %5063 = vmatprep.subr.bf16.mxu0 0
    %5064 = vmatpush2.bf16.msra.mxu0 0
    %5065 = vmatprep.mubr.bf16.mxu0 0
    %5066 = vmatmul.mubr.bf16.gmra.mxu0 %v4619
    %v5067 = vpop.f32.mrf.mxu0
    %v5068 = vadd.f32 0.0, %v5067
    %v5069 = vpop.f32.mrf.mxu0
    %v5070 = vadd.f32 0.0, %v5069
    %v5071 = vpop.f32.mrf.mxu0
    %v5072 = vpop.f32.mrf.mxu0
    %5073 = vdwg.mxu0
    %5074 = vset.pattern.permute.xlu0 24
    %5075 = vperm.xlu0 %5074, %v4588
    %v5076 = vpop.permute.xlu0 %5075
    %v5078 = vmul.f32 %v5068, %v5076
    %v5079 = vadd.f32 %v5008, %v5078
    %5080 = vset.pattern.permute.xlu0 25
    %5081 = vperm.xlu0 %5080, %v4588
    %v5082 = vpop.permute.xlu0 %5081
    %v5084 = vmul.f32 %v5068, %v5082
    %5086 = vrot.lane.b32.xlu0 %v5084, 96
    %v5087 = vpop.permute.xlu0 %5086
    %v5089 = vadd.f32 %v5079, %v5087
    %5090 = vset.pattern.permute.xlu0 26
    %5091 = vperm.xlu0 %5090, %v4588
    %v5092 = vpop.permute.xlu0 %5091
    %v5094 = vmul.f32 %v5068, %v5092
    %5096 = vrot.lane.b32.xlu0 %v5094, 64
    %v5097 = vpop.permute.xlu0 %5096
    %v5099 = vadd.f32 %v5089, %v5097
    %5100 = vset.pattern.permute.xlu0 27
    %5101 = vperm.xlu0 %5100, %v4588
    %v5102 = vpop.permute.xlu0 %5101
    %v5104 = vmul.f32 %v5068, %v5102
    %5106 = vrot.lane.b32.xlu0 %v5104, 32
    %v5107 = vpop.permute.xlu0 %5106
    %v5109 = vadd.f32 %v5099, %v5107
    %5110 = vset.pattern.permute.xlu0 28
    %5111 = vperm.xlu0 %5110, %v4588
    %v5112 = vpop.permute.xlu0 %5111
    %v5114 = vmul.f32 %v5070, %v5112
    %v5115 = vadd.f32 %v5109, %v5114
    %5116 = vset.pattern.permute.xlu0 29
    %5117 = vperm.xlu0 %5116, %v4588
    %v5118 = vpop.permute.xlu0 %5117
    %v5120 = vmul.f32 %v5070, %v5118
    %5122 = vrot.lane.b32.xlu0 %v5120, 96
    %v5123 = vpop.permute.xlu0 %5122
    %v5125 = vadd.f32 %v5115, %v5123
    %5126 = vset.pattern.permute.xlu0 30
    %5127 = vperm.xlu0 %5126, %v4588
    %v5128 = vpop.permute.xlu0 %5127
    %v5130 = vmul.f32 %v5070, %v5128
    %5132 = vrot.lane.b32.xlu0 %v5130, 64
    %v5133 = vpop.permute.xlu0 %5132
    %v5135 = vadd.f32 %v5125, %v5133
    %5136 = vset.pattern.permute.xlu0 31
    %5137 = vperm.xlu0 %5136, %v4588
    %v5138 = vpop.permute.xlu0 %5137
    %v5140 = vmul.f32 %v5070, %v5138
    %5142 = vrot.lane.b32.xlu0 %v5140, 32
    %v5143 = vpop.permute.xlu0 %5142
    %v5145 = vadd.f32 %v5135, %v5143
    %v5147 = vsel %vm152, %v4584, 0
    %5149 = vmatprep.subr.mxu0 0.0
    %5150 = vmatpush1.msra.mxu0 0.0
    %5151 = vmatprep.subr.mxu0 0.0
    %5152 = vmatpush1.msra.mxu0 0.0
    %5153 = vmatprep.subr.mxu0 0.0
    %5154 = vmatpush1.msra.mxu0 0.0
    %5155 = vmatprep.subr.mxu0 0.0
    %5156 = vmatpush1.msra.mxu0 0.0
    %5157 = vmatprep.subr.mxu0 0.0
    %5158 = vmatpush1.msra.mxu0 0.0
    %5159 = vmatprep.subr.mxu0 0.0
    %5160 = vmatpush1.msra.mxu0 0.0
    %5161 = vmatprep.subr.mxu0 0.0
    %5162 = vmatpush1.msra.mxu0 0.0
    %5163 = vmatprep.subr.mxu0 0.0
    %5164 = vmatpush1.msra.mxu0 0.0
    %5165 = vmatprep.subr.mxu0 0.0
    %5166 = vmatpush1.msra.mxu0 0.0
    %5167 = vmatprep.subr.mxu0 0.0
    %5168 = vmatpush1.msra.mxu0 0.0
    %5169 = vmatprep.subr.mxu0 0.0
    %5170 = vmatpush1.msra.mxu0 0.0
    %5171 = vmatprep.subr.mxu0 0.0
    %5172 = vmatpush1.msra.mxu0 0.0
    %5173 = vmatprep.subr.mxu0 0.0
    %5174 = vmatpush1.msra.mxu0 %v115
    %5175 = vmatprep.subr.mxu0 0.0
    %5176 = vmatpush1.msra.mxu0 %v114
    %5177 = vmatprep.subr.mxu0 0.0
    %5178 = vmatpush1.msra.mxu0 %v113
    %5179 = vmatprep.subr.mxu0 0.0
    %5180 = vmatpush1.msra.mxu0 %v112
    %5181 = vmatprep.subr.mxu0 0.0
    %5182 = vmatpush2.msra.mxu0 0.0
    %5183 = vmatprep.subr.mxu0 0.0
    %5184 = vmatpush2.msra.mxu0 0.0
    %5185 = vmatprep.subr.mxu0 0.0
    %5186 = vmatpush2.msra.mxu0 0.0
    %5187 = vmatprep.subr.mxu0 0.0
    %5188 = vmatpush2.msra.mxu0 0.0
    %5189 = vmatprep.subr.mxu0 0.0
    %5190 = vmatpush2.msra.mxu0 0.0
    %5191 = vmatprep.subr.mxu0 0.0
    %5192 = vmatpush2.msra.mxu0 0.0
    %5193 = vmatprep.subr.mxu0 0.0
    %5194 = vmatpush2.msra.mxu0 0.0
    %5195 = vmatprep.subr.mxu0 0.0
    %5196 = vmatpush2.msra.mxu0 0.0
    %5197 = vmatprep.subr.mxu0 0.0
    %5198 = vmatpush2.msra.mxu0 0.0
    %5199 = vmatprep.subr.mxu0 0.0
    %5200 = vmatpush2.msra.mxu0 0.0
    %5201 = vmatprep.subr.mxu0 0.0
    %5202 = vmatpush2.msra.mxu0 0.0
    %5203 = vmatprep.subr.mxu0 0.0
    %5204 = vmatpush2.msra.mxu0 0.0
    %5205 = vmatprep.subr.mxu0 0.0
    %5206 = vmatpush2.msra.mxu0 0.0
    %5207 = vmatprep.subr.mxu0 0.0
    %5208 = vmatpush2.msra.mxu0 0.0
    %5209 = vmatprep.subr.mxu0 0.0
    %5210 = vmatpush2.msra.mxu0 0.0
    %5211 = vmatprep.subr.mxu0 0.0
    %5212 = vmatpush2.msra.mxu0 0.0
    %5213 = vmatprep.mubr.f32.mxu0 0.0
    %5214 = vmatmul.mubr.f32.gmra.mxu0 %v5147
    %v5215 = vpop.f32.mrf.mxu0
    %v5216 = vadd.f32 %v121, %v5215
    %v5217 = vpop.f32.mrf.mxu0
    %5218 = vdwg.mxu0
    %v5219 = vadd.f32 %v5216, %v4590
    %v5220 = vmax.f32 %v5219, 0.0
    %v5221 = vmul.f32 %v4584, 0.0
    %v5222 = vadd.f32 %v5221, %v5220
    %s5223 = scalar_lea.vmem %s7, 56
    %5224 = vst.msk [vmem:[%s5223] sm:$0xff] %vm152, %v5145
    %5225 = vst.msk [vmem:[#allocation4] sm:$0xff] %vm152, %v5222
    // Predicated region
    $region64: #{context_transform_rnn_forward.1} parent=1 // pred_check
      _
    $region65: #{context_transform_rnn_forward.1} parent=1 // pred_check_branch
      %5227 = sbr.rel (0) target = $region67
    $region66: #{context_transform_rnn_forward.1} parent=1 // pred_region
      _
    $region67: #{context_transform_rnn_forward.1} parent=1 // pred_fallthru
      _
    // Predicated region
    $region68: #{context_transform_rnn_forward.1} parent=1 // pred_check
      _
    $region69: #{context_transform_rnn_forward.1} parent=1 // pred_check_branch
      %5229 = sbr.rel (0) target = $region71
    $region70: #{context_transform_rnn_forward.1} parent=1 // pred_region
      %s5231 = ssub.s32 128, 128
      %5232 = vsyncadd [#allocation5], %s5231
      %s5234 = sshll.u32 [#allocation4], 4
      %s5235 = int_to_ptr.vmem [resolvable:$true] %s5234
      %5237 = dma.vmem_to_hbm [thread:$0]  %s5235, 128, %s8, [#allocation5]
    $region71: #{context_transform_rnn_forward.1} parent=1 // pred_fallthru
      _
    // Predicated region
    $region72: #{context_transform_rnn_forward.1} parent=1 // pred_check
      _
    $region73: #{context_transform_rnn_forward.1} parent=1 // pred_check_branch
      %5239 = sbr.rel (0) target = $region75
    $region74: #{context_transform_rnn_forward.1} parent=1 // pred_region
      _
    $region75: #{context_transform_rnn_forward.1} parent=1 // pred_fallthru
      _
    // Predicated region
    $region76: #{context_transform_rnn_forward.1} parent=1 // pred_check
      _
    $region77: #{context_transform_rnn_forward.1} parent=1 // pred_check_branch
      %5241 = sbr.rel (0) target = $region79
    $region78: #{context_transform_rnn_forward.1} parent=1 // pred_region
      %5242 = dma.done [#allocation5], 128
    $region79: #{context_transform_rnn_forward.1} parent=1 // pred_fallthru
      _
    %5243 = vsyncpa [#allocation5], 1
  %5244 = vsyncmov [#allocation3]
  %s5245 = vpop.sfrf %5244
  %p5246 = scmp.eq.s32.totalorder %s5245, 0
  %p5247 = pneg %p5246
  %5249 = shalt.err (%p5247)

</llo_original>
